<compile_context>
chip_gen: v5e
topology: v5e:2x2
jax: 0.10.0
libtpu: 0.0.40
codegen_flags: <defaults>
</compile_context>

<pallas_src>
import math

import jax
import jax.numpy as jnp
import numpy as np
from jax.experimental import pallas as pl
from jax.experimental.pallas import tpu as pltpu


def _round_up(n, m):
    return ((n + m - 1) // m) * m


def _gfp_kernel(x_ref, w_ref, out_ref):
    # x_ref: (b_tile, 1), w_ref: (1, D), out_ref: (b_tile, 2*D)
    D = w_ref.shape[1]
    x = x_ref[...].astype(jnp.float32)                 # (b_tile, 1)
    w = w_ref[...].astype(jnp.float32)                 # (1, D)
    # Work in "turns": t = x*W, so proj = 2*pi*t.  Shared range reduction for
    # sin AND cos: r in [-0.5, 0.5) with t - round(t) (exact in f32 here),
    # which is both cheaper than two independent large-argument reductions and
    # far more accurate when |t| is tens of turns (scale=10).
    t = x * w                                          # (b_tile, D) turns
    r = t - jnp.floor(t + 0.5)                         # reduced turns
    theta = r * jnp.float32(2.0 * math.pi)             # |theta| <= pi
    # Two unmasked, lane-dense half-stores (D % 128 == 0 keeps them full-width).
    out_ref[:, :D] = jnp.sin(theta).astype(out_ref.dtype)
    out_ref[:, D:] = jnp.cos(theta).astype(out_ref.dtype)


def _pick_b_tile(B, D, out_itemsize, b_tile=None):
    """Pick a batch tile: big enough to amortize per-step overhead, small enough
    for every generation's VMEM, and leaving >= 2 grid steps for megacore."""
    sub = 16 if out_itemsize < 4 else 8          # bf16 packs 2 rows / sublane
    row_out_bytes = 2 * D * out_itemsize
    if b_tile is None:
        b_tile = max(sub, (4 << 20) // row_out_bytes)    # ~4 MiB output block
    # Never exceed the (sublane-rounded) batch.
    b_tile = min(b_tile, _round_up(B, sub))
    # Keep >= 2 grid steps so dimension_semantics=("parallel",) can shard the
    # batch across both TensorCores on v7x (no-op on single-TC v5e/v6e).
    if B >= 2 * sub:
        b_tile = min(b_tile, _round_up(pl.cdiv(B, 2), sub))
    b_tile = max(sub, (b_tile // sub) * sub)

    # Per-step VMEM (double buffered): output block + lane-padded (b_tile, 1)
    # x block (pads to b_tile x 128 f32) + the W row.  Keep under ~12 MiB so it
    # fits v5e's 16 MiB scoped-VMEM default and leaves headroom on v7x (64 MiB).
    def vmem_bytes(bt):
        return 2 * bt * row_out_bytes + 2 * bt * 128 * 4 + 8 * max(D, 128) * 4

    while b_tile > sub and vmem_bytes(b_tile) > (12 << 20):
        b_tile -= sub
    return b_tile


def gaussian_fourier_projection(x, W, *, b_tile=None, out_dtype=None):
    """x: (B,) float, W: (D,) float  ->  (B, 2*D), matching the PyTorch module.

    out_dtype: optional reduced-precision output (e.g. jnp.bfloat16); the sin/cos
    math is always done in f32 and only the stores are cast.
    """
    B = x.shape[0]
    D = W.shape[0]
    out_dtype = jnp.dtype(out_dtype if out_dtype is not None else x.dtype)
    bt = _pick_b_tile(B, D, out_dtype.itemsize, b_tile)

    x2 = x.reshape(B, 1)
    w2 = W.reshape(1, D)
    grid = (pl.cdiv(B, bt),)     # ragged last block is masked; no pad, no slice

    return pl.pallas_call(
        _gfp_kernel,
        out_shape=jax.ShapeDtypeStruct((B, 2 * D), out_dtype),
        grid_spec=pltpu.PrefetchScalarGridSpec(
            num_scalar_prefetch=0,
            grid=grid,
            in_specs=[
                pl.BlockSpec((bt, 1), lambda i: (i, 0)),
                pl.BlockSpec((1, D), lambda i: (0, 0)),
            ],
            out_specs=pl.BlockSpec((bt, 2 * D), lambda i: (i, 0)),
        ),
        compiler_params=pltpu.CompilerParams(
            dimension_semantics=("parallel",),
        ),
    )(x2, w2)


if __name__ == "__main__":
    embed_dim = 768     # matches the module-level spec; 2*D = 1536 (128-aligned)
    scale = 10.0
    B = 72              # not a multiple of the chosen tile -> ragged masked block
                        # and a 2-step grid (exercises megacore split + masking)

    key = jax.random.PRNGKey(0)
    kx, kw = jax.random.split(key)

    # Deterministic parameter init mirroring torch.randn(embed_dim) * scale.
    W = jax.random.normal(kw, (embed_dim,), dtype=jnp.float32) * scale
    # A batch of scalar "time" values.
    x = jax.random.uniform(kx, (B,), dtype=jnp.float32)

    out = gaussian_fourier_projection(x, W)
    out = jax.block_until_ready(out)
    assert out.shape == (B, 2 * embed_dim), out.shape

    # Float64 ground-truth reference.  The kernel's error vs. this is dominated
    # by the f32 rounding of x*W (|x*W| up to ~30 turns -> ~1e-5 absolute in
    # sin/cos), so 1e-3 is a comfortable, non-flaky bound.
    x64 = np.asarray(x, np.float64)
    W64 = np.asarray(W, np.float64)
    proj64 = x64[:, None] * W64[None, :] * 2.0 * np.pi
    ref = np.concatenate([np.sin(proj64), np.cos(proj64)], axis=-1)
    err = np.max(np.abs(np.asarray(out, np.float64) - ref))
    assert err < 1e-3, f"max abs err {err}"

    print("KERNEL_OK")
</pallas_src>

<mosaic_0001>
module attributes {stable_mosaic.version = 11 : i64} {
  func.func @_gfp_kernel(%arg0: i32, %arg1: memref<40x1xf32, #tpu.memory_space<vmem>>, %arg2: memref<1x768xf32, #tpu.memory_space<vmem>>, %arg3: memref<40x1536xf32, #tpu.memory_space<vmem>>) attributes {dimension_semantics = [#tpu.dimension_semantics<parallel>], iteration_bounds = array<i64: 2>, scalar_prefetch = 0 : i64, scratch_operands = 0 : i64, tpu.core_type = #tpu.core_type<tc>, window_params = [{transform_indices = @transform_0, window_bounds = array<i64: 40, 1>}, {pipeline_mode = #tpu.pipeline_mode<synchronous>, transform_indices = @transform_1, window_bounds = array<i64: 1, 768>}, {transform_indices = @transform_2, window_bounds = array<i64: 40, 1536>}]} {
    %c0 = arith.constant 0 : index
    %c0_0 = arith.constant 0 : index
    %0 = vector.load %arg1[%c0, %c0_0] : memref<40x1xf32, #tpu.memory_space<vmem>>, vector<40x1xf32>
    %c0_1 = arith.constant 0 : index
    %c0_2 = arith.constant 0 : index
    %1 = vector.load %arg2[%c0_1, %c0_2] : memref<1x768xf32, #tpu.memory_space<vmem>>, vector<1x768xf32>
    %2 = vector.broadcast %0 : vector<40x1xf32> to vector<40x768xf32>
    %3 = vector.broadcast %1 : vector<1x768xf32> to vector<40x768xf32>
    %4 = arith.mulf %2, %3 : vector<40x768xf32>
    %cst = arith.constant 5.000000e-01 : f32
    %5 = vector.broadcast %cst : f32 to vector<40x768xf32>
    %6 = arith.addf %4, %5 : vector<40x768xf32>
    %7 = math.floor %6 : vector<40x768xf32>
    %8 = arith.subf %4, %7 : vector<40x768xf32>
    %cst_3 = arith.constant 6.28318548 : f32
    %9 = vector.broadcast %cst_3 : f32 to vector<40x768xf32>
    %10 = arith.mulf %8, %9 : vector<40x768xf32>
    %11 = math.sin %10 : vector<40x768xf32>
    %c0_4 = arith.constant 0 : index
    %c0_5 = arith.constant 0 : index
    %12 = vector.load %arg3[%c0_4, %c0_5] : memref<40x1536xf32, #tpu.memory_space<vmem>>, vector<40x768xf32>
    tpu.vector_store %arg3[%c0_4, %c0_5], %11 {strides = array<i32>} : memref<40x1536xf32, #tpu.memory_space<vmem>>, vector<40x768xf32>,
    %13 = math.cos %10 : vector<40x768xf32>
    %c0_6 = arith.constant 0 : index
    %c768 = arith.constant 768 : index
    %14 = vector.load %arg3[%c0_6, %c768] : memref<40x1536xf32, #tpu.memory_space<vmem>>, vector<40x768xf32>
    tpu.vector_store %arg3[%c0_6, %c768], %13 {strides = array<i32>} : memref<40x1536xf32, #tpu.memory_space<vmem>>, vector<40x768xf32>,
    return
  }
  func.func @transform_0(%arg0: i32) -> (i32, i32) {
    %c0_i32 = arith.constant 0 : i32
    %c0_i32_0 = arith.constant 0 : i32
    return %arg0, %c0_i32 : i32, i32
  }
  func.func @transform_1(%arg0: i32) -> (i32, i32) {
    %c0_i32 = arith.constant 0 : i32
    %c0_i32_0 = arith.constant 0 : i32
    %c0_i32_1 = arith.constant 0 : i32
    return %c0_i32, %c0_i32_0 : i32, i32
  }
  func.func @transform_2(%arg0: i32) -> (i32, i32) {
    %c0_i32 = arith.constant 0 : i32
    %c0_i32_0 = arith.constant 0 : i32
    return %arg0, %c0_i32 : i32, i32
  }
}

</mosaic_0001>

<llo_original>
// kernel: tpu_custom_call.1
$region0: #{tpu_custom_call.1}
  #allocation0 [shape = 'u32[]', space=smem, size = 0x4, offset = 0x4, fixed_abs, tag = 'smem constant byte address 0x4 - core index']
  #allocation1 [shape = 'u32[72,128]{1,0:T(1,128)}', space=vmem, size = 0x9000, scoped, tag = 'internal scratch']
  %s0 = inlined_call_operand.vmem [shape: f32[72,1], index: 0, kind: input, shape index: {}]
  %s1 = inlined_call_operand.vmem [shape: f32[1,768], index: 1, kind: input, shape index: {}]
  %s2 = inlined_call_operand.hbm [shape: f32[72,1536], index: 2, kind: output, shape index: {}]
  %s3 = sld [smem:[#allocation0]]
  $region41: #{tpu_custom_call.1} parent=0
    _
  %s5 = ssub.s32 1, %s3
  %s6 = scalar_select 0, %s5, %s3
  $region1: #{tpu_custom_call.1} parent=0
    #allocation2 [shape = 'u8[491520]{0}', space=vmem, size = 0x78000, scoped, tag = 'output window, operand 0']
    #allocation3 [shape = 's32[2]{0}', space=sflag, size = 0x8, scoped, tag = 'scoped memory for tpu_custom_call.1']
    %7 = vsyncpa [#allocation3], 0
    %s8 = scalar_lea.sflag [#allocation3], 1
    %9 = vsyncpa %s8, 0
    loop: start=0, step=1, limit=4
    $region2: #{tpu_custom_call.1} parent=1 // loop_pre_header
      _
    $region3: #{tpu_custom_call.1} parent=1 // loop_header
      %s11 = sphi 0, %s15
      %p12 = scmp.ge.s32.totalorder %s11, 4
      %s21 = sphi 0, %s23
      %s24 = sphi 0, %s21
      %s25 = sphi 0, %s24
      %s41 = sphi 0, %s25
      %s45 = sphi 0, %s45
      %s47 = sphi 0, %s45
      %s48 = sphi 0, %s47
      %s62 = sphi 0, %s48
      %s68 = sphi 0, %s70
      %s71 = sphi 0, %s68
      %s72 = sphi 0, %s71
      %s88 = sphi 0, %s72
    $region4: #{tpu_custom_call.1} parent=1 // loop_header_branch
      %14 = sbr.rel (%p12) target = $region8
    $region5: #{tpu_custom_call.1} parent=1 // loop_body
      %s16 = ssub.s32 %s11, 1
      %s17 = ssub.s32 %s11, 2
      %s18 = sadd.s32 %s11, 1
      %s19 = ssub.s32 %s11, %s18
      %p20 = scmp.eq.s32.totalorder %s19, 0
      %s22 = sadd.s32 %s21, 1
      %s23 = scalar_select %p20, %s21, %s22
      %p26 = pneg %p20
      %p27 = scmp.eq.s32.totalorder %s11, 1
      %p28 = por %p26, %p27
      %p29 = scmp.ne.s32.totalorder %s21, %s24
      %p30 = scmp.eq.s32.totalorder %s11, 0
      %p31 = por %p29, %p30
      %p32 = scmp.ne.s32.totalorder %s21, %s24
      %p33 = scmp.eq.s32.totalorder %s16, 1
      %p34 = por %p32, %p33
      %p35 = scmp.ne.s32.totalorder %s24, %s25
      %p36 = scmp.eq.s32.totalorder %s16, 0
      %p37 = por %p35, %p36
      %p38 = scmp.ne.s32.totalorder %s24, %s25
      %p39 = scmp.eq.s32.totalorder %s17, 1
      %p40 = por %p38, %p39
      %p42 = scmp.ne.s32.totalorder %s25, %s41
      %p43 = scmp.eq.s32.totalorder %s17, 0
      %p44 = por %p42, %p43
      %s46 = sadd.s32 %s45, 1
      %p49 = scmp.eq.s32.totalorder %s11, 1
      %p50 = scmp.ne.s32.totalorder %s45, %s47
      %p51 = scmp.eq.s32.totalorder %s11, 0
      %p52 = por %p50, %p51
      %p53 = scmp.ne.s32.totalorder %s45, %s47
      %p54 = scmp.eq.s32.totalorder %s16, 1
      %p55 = por %p53, %p54
      %p56 = scmp.ne.s32.totalorder %s47, %s48
      %p57 = scmp.eq.s32.totalorder %s16, 0
      %p58 = por %p56, %p57
      %p59 = scmp.ne.s32.totalorder %s47, %s48
      %p60 = scmp.eq.s32.totalorder %s17, 1
      %p61 = por %p59, %p60
      %p63 = scmp.ne.s32.totalorder %s48, %s62
      %p64 = scmp.eq.s32.totalorder %s17, 0
      %p65 = por %p63, %p64
      %s66 = ssub.s32 %s11, %s18
      %p67 = scmp.eq.s32.totalorder %s66, 0
      %s69 = sadd.s32 %s68, 1
      %s70 = scalar_select %p67, %s68, %s69
      %p73 = pneg %p67
      %p74 = scmp.eq.s32.totalorder %s11, 1
      %p75 = por %p73, %p74
      %p76 = scmp.ne.s32.totalorder %s68, %s71
      %p77 = scmp.eq.s32.totalorder %s11, 0
      %p78 = por %p76, %p77
      %p79 = scmp.ne.s32.totalorder %s68, %s71
      %p80 = scmp.eq.s32.totalorder %s16, 1
      %p81 = por %p79, %p80
      %p82 = scmp.ne.s32.totalorder %s71, %s72
      %p83 = scmp.eq.s32.totalorder %s16, 0
      %p84 = por %p82, %p83
      %p85 = scmp.ne.s32.totalorder %s71, %s72
      %p86 = scmp.eq.s32.totalorder %s17, 1
      %p87 = por %p85, %p86
      %p89 = scmp.ne.s32.totalorder %s72, %s88
      %p90 = scmp.eq.s32.totalorder %s17, 0
      %p91 = por %p89, %p90
      %p92 = scmp.le.s32.totalorder 1, %s11
      %p93 = scmp.lt.s32.totalorder %s11, 3
      %p94 = pnand %p92, %p93
      %p95 = pneg %p94
      // Predicated region
      $region9: #{tpu_custom_call.1} parent=5 // pred_check
        _
      $region10: #{tpu_custom_call.1} parent=5 // pred_check_branch
        %97 = sbr.rel (%p94) target = $region12
      $region11: #{tpu_custom_call.1} parent=5 // pred_region
        %s98 = ssub.s32 %s11, 1
        // Predicated region
        $region13: #{tpu_custom_call.1} parent=11 // pred_check
          %p99 = pneg %p58
        $region14: #{tpu_custom_call.1} parent=11 // pred_check_branch
          %101 = sbr.rel (%p99) target = $region16
        $region15: #{tpu_custom_call.1} parent=11 // pred_region
          _
        $region16: #{tpu_custom_call.1} parent=11 // pred_fallthru
          _
      $region12: #{tpu_custom_call.1} parent=5 // pred_fallthru
        _
      %p102 = scmp.lt.s32.totalorder %s11, 2
      // Predicated region
      $region17: #{tpu_custom_call.1} parent=5 // pred_check
        %p103 = pneg %p102
      $region18: #{tpu_custom_call.1} parent=5 // pred_check_branch
        %105 = sbr.rel (%p103) target = $region20
      $region19: #{tpu_custom_call.1} parent=5 // pred_region
        // Predicated region
        $region21: #{tpu_custom_call.1} parent=19 // pred_check
          %p106 = pneg %p31
        $region22: #{tpu_custom_call.1} parent=19 // pred_check_branch
          %108 = sbr.rel (%p106) target = $region24
        $region23: #{tpu_custom_call.1} parent=19 // pred_region
          %s109 = smul.u32 5, %s11
          %s110 = ssub.s32 9, %s109
          %p111 = scmp.lt.s32.totalorder %s110, 5
          %s112 = scalar_select %p111, %s110, 5
          %s113 = smul.u32 8, %s112
          %p114 = scmp.lt.s32.totalorder %s109, 8
          %s115 = scalar_select %p114, %s109, 8
          %s116 = smul.addr %s115, 8
          %s117 = scalar_lea.vmem %s0, %s116
          %s118 = smul.u32 5, %s11
          %s119 = ssub.s32 9, %s118
          %p120 = scmp.lt.s32.totalorder %s119, 5
          %s121 = scalar_select %p120, %s119, 5
          %s122 = smul.u32 8, %s121
        $region24: #{tpu_custom_call.1} parent=19 // pred_fallthru
          _
      $region20: #{tpu_custom_call.1} parent=5 // pred_fallthru
        _
      %p123 = scmp.le.s32.totalorder 1, %s11
      %p124 = scmp.lt.s32.totalorder %s11, 3
      %p125 = pnand %p123, %p124
      %p126 = pneg %p125
      // Predicated region
      $region25: #{tpu_custom_call.1} parent=5 // pred_check
        _
      $region26: #{tpu_custom_call.1} parent=5 // pred_check_branch
        %128 = sbr.rel (%p125) target = $region28
      $region27: #{tpu_custom_call.1} parent=5 // pred_region
        %s129 = ssub.s32 %s11, 1
        %s130 = smul.u32 5, %s16
        %s131 = ssub.s32 9, %s130
        %p132 = scmp.lt.s32.totalorder %s131, 5
        %s133 = scalar_select %p132, %s131, 5
        %s134 = smul.u32 8, %s133
        %p135 = scmp.lt.s32.totalorder %s130, 8
        %s136 = scalar_select %p135, %s130, 8
        %s137 = smul.addr %s136, 8
        %s138 = scalar_lea.vmem %s0, %s137
        %p139 = pneg %p37
        %p140 = pneg %p34
        %p141 = pneg %p58
        %p142 = pneg %p55
        %p143 = pneg %p84
        %p144 = pneg %p81
        %s145 = sand.u32 %s71, 1
        %s146 = scalar_lea.sflag [#allocation3], %s145
        %s147 = sand.u32 %s71, 1
        %s148 = smul.addr %s147, 480
        %s149 = scalar_lea.vmem [#allocation2], %s148
        %s150 = smul.u32 5, %s16
        %s151 = ssub.s32 9, %s150
        %p152 = scmp.lt.s32.totalorder %s151, 5
        %s153 = scalar_select %p152, %s151, 5
        %s154 = smul.u32 8, %s153
        %p155 = scmp.lt.s32.totalorder %s150, 8
        %s156 = scalar_select %p155, %s150, 8
        %s157 = smul.addr %s156, 8
        %s158 = scalar_lea.vmem %s0, %s157
        %s159 = smul.u32 5, %s16
        %s160 = ssub.s32 9, %s159
        %p161 = scmp.lt.s32.totalorder %s160, 5
        %s162 = scalar_select %p161, %s160, 5
        %s163 = smul.u32 8, %s162
        %s164 = smul.u32 5, %s16
        %s165 = ssub.s32 9, %s164
        %p166 = scmp.lt.s32.totalorder %s165, 5
        %s167 = scalar_select %p166, %s165, 5
        %s168 = smul.u32 8, %s167
        %s169 = smul.u32 %s168, 12
        %v170 = vld [vmem:[%s158] sm:$0xff]
        %v171 = vld [vmem:[%s158 + $0x8] sm:$0xff]
        %v172 = vld [vmem:[%s158 + $0x10] sm:$0xff]
        %v173 = vld [vmem:[%s158 + $0x18] sm:$0xff]
        %v174 = vld [vmem:[%s158 + $0x20] sm:$0xff]
        %v175 = vld [vmem:[%s1] sm:$0x3f]
        %177 = vset.pattern.permute.xlu0 0
        %178 = vperm.xlu0 %177, %v170
        %v179 = vpop.permute.xlu0 %178
        %182 = vset.pattern.permute.xlu0 0
        %183 = vperm.xlu0 %182, %v171
        %v184 = vpop.permute.xlu0 %183
        %187 = vset.pattern.permute.xlu0 0
        %188 = vperm.xlu0 %187, %v172
        %v189 = vpop.permute.xlu0 %188
        %192 = vset.pattern.permute.xlu0 0
        %193 = vperm.xlu0 %192, %v173
        %v194 = vpop.permute.xlu0 %193
        %197 = vset.pattern.permute.xlu0 0
        %198 = vperm.xlu0 %197, %v174
        %v199 = vpop.permute.xlu0 %198
        %v202 = vperm.slane %v175, 0
        %v203 = vperm.slane %v175, 1
        %v204 = vperm.slane %v175, 2
        %v205 = vperm.slane %v175, 3
        %v206 = vperm.slane %v175, 4
        %v207 = vperm.slane %v175, 5
        %v214 = vmul.f32 %v179, %v202
        %v215 = vmul.f32 %v179, %v203
        %v216 = vmul.f32 %v179, %v204
        %v217 = vmul.f32 %v179, %v205
        %v218 = vmul.f32 %v179, %v206
        %v219 = vmul.f32 %v179, %v207
        %v220 = vmul.f32 %v184, %v202
        %v221 = vmul.f32 %v184, %v203
        %v222 = vmul.f32 %v184, %v204
        %v223 = vmul.f32 %v184, %v205
        %v224 = vmul.f32 %v184, %v206
        %v225 = vmul.f32 %v184, %v207
        %v226 = vmul.f32 %v189, %v202
        %v227 = vmul.f32 %v189, %v203
        %v228 = vmul.f32 %v189, %v204
        %v229 = vmul.f32 %v189, %v205
        %v230 = vmul.f32 %v189, %v206
        %v231 = vmul.f32 %v189, %v207
        %v232 = vmul.f32 %v194, %v202
        %v233 = vmul.f32 %v194, %v203
        %v234 = vmul.f32 %v194, %v204
        %v235 = vmul.f32 %v194, %v205
        %v236 = vmul.f32 %v194, %v206
        %v237 = vmul.f32 %v194, %v207
        %v238 = vmul.f32 %v199, %v202
        %v239 = vmul.f32 %v199, %v203
        %v240 = vmul.f32 %v199, %v204
        %v241 = vmul.f32 %v199, %v205
        %v242 = vmul.f32 %v199, %v206
        %v243 = vmul.f32 %v199, %v207
        %v244 = vadd.f32 %v214, 0.5
        %v245 = vadd.f32 %v215, 0.5
        %v246 = vadd.f32 %v216, 0.5
        %v247 = vadd.f32 %v217, 0.5
        %v248 = vadd.f32 %v218, 0.5
        %v249 = vadd.f32 %v219, 0.5
        %v250 = vadd.f32 %v220, 0.5
        %v251 = vadd.f32 %v221, 0.5
        %v252 = vadd.f32 %v222, 0.5
        %v253 = vadd.f32 %v223, 0.5
        %v254 = vadd.f32 %v224, 0.5
        %v255 = vadd.f32 %v225, 0.5
        %v256 = vadd.f32 %v226, 0.5
        %v257 = vadd.f32 %v227, 0.5
        %v258 = vadd.f32 %v228, 0.5
        %v259 = vadd.f32 %v229, 0.5
        %v260 = vadd.f32 %v230, 0.5
        %v261 = vadd.f32 %v231, 0.5
        %v262 = vadd.f32 %v232, 0.5
        %v263 = vadd.f32 %v233, 0.5
        %v264 = vadd.f32 %v234, 0.5
        %v265 = vadd.f32 %v235, 0.5
        %v266 = vadd.f32 %v236, 0.5
        %v267 = vadd.f32 %v237, 0.5
        %v268 = vadd.f32 %v238, 0.5
        %v269 = vadd.f32 %v239, 0.5
        %v270 = vadd.f32 %v240, 0.5
        %v271 = vadd.f32 %v241, 0.5
        %v272 = vadd.f32 %v242, 0.5
        %v273 = vadd.f32 %v243, 0.5
        %v274 = vfloor.f32 %v244
        %v275 = vfloor.f32 %v245
        %v276 = vfloor.f32 %v246
        %v277 = vfloor.f32 %v247
        %v278 = vfloor.f32 %v248
        %v279 = vfloor.f32 %v249
        %v280 = vfloor.f32 %v250
        %v281 = vfloor.f32 %v251
        %v282 = vfloor.f32 %v252
        %v283 = vfloor.f32 %v253
        %v284 = vfloor.f32 %v254
        %v285 = vfloor.f32 %v255
        %v286 = vfloor.f32 %v256
        %v287 = vfloor.f32 %v257
        %v288 = vfloor.f32 %v258
        %v289 = vfloor.f32 %v259
        %v290 = vfloor.f32 %v260
        %v291 = vfloor.f32 %v261
        %v292 = vfloor.f32 %v262
        %v293 = vfloor.f32 %v263
        %v294 = vfloor.f32 %v264
        %v295 = vfloor.f32 %v265
        %v296 = vfloor.f32 %v266
        %v297 = vfloor.f32 %v267
        %v298 = vfloor.f32 %v268
        %v299 = vfloor.f32 %v269
        %v300 = vfloor.f32 %v270
        %v301 = vfloor.f32 %v271
        %v302 = vfloor.f32 %v272
        %v303 = vfloor.f32 %v273
        %v304 = vsub.f32 %v214, %v274
        %v305 = vsub.f32 %v215, %v275
        %v306 = vsub.f32 %v216, %v276
        %v307 = vsub.f32 %v217, %v277
        %v308 = vsub.f32 %v218, %v278
        %v309 = vsub.f32 %v219, %v279
        %v310 = vsub.f32 %v220, %v280
        %v311 = vsub.f32 %v221, %v281
        %v312 = vsub.f32 %v222, %v282
        %v313 = vsub.f32 %v223, %v283
        %v314 = vsub.f32 %v224, %v284
        %v315 = vsub.f32 %v225, %v285
        %v316 = vsub.f32 %v226, %v286
        %v317 = vsub.f32 %v227, %v287
        %v318 = vsub.f32 %v228, %v288
        %v319 = vsub.f32 %v229, %v289
        %v320 = vsub.f32 %v230, %v290
        %v321 = vsub.f32 %v231, %v291
        %v322 = vsub.f32 %v232, %v292
        %v323 = vsub.f32 %v233, %v293
        %v324 = vsub.f32 %v234, %v294
        %v325 = vsub.f32 %v235, %v295
        %v326 = vsub.f32 %v236, %v296
        %v327 = vsub.f32 %v237, %v297
        %v328 = vsub.f32 %v238, %v298
        %v329 = vsub.f32 %v239, %v299
        %v330 = vsub.f32 %v240, %v300
        %v331 = vsub.f32 %v241, %v301
        %v332 = vsub.f32 %v242, %v302
        %v333 = vsub.f32 %v243, %v303
        %v334 = vmul.f32 %v304, 6.2831855
        %v335 = vmul.f32 %v305, 6.2831855
        %v336 = vmul.f32 %v306, 6.2831855
        %v337 = vmul.f32 %v307, 6.2831855
        %v338 = vmul.f32 %v308, 6.2831855
        %v339 = vmul.f32 %v309, 6.2831855
        %v340 = vmul.f32 %v310, 6.2831855
        %v341 = vmul.f32 %v311, 6.2831855
        %v342 = vmul.f32 %v312, 6.2831855
        %v343 = vmul.f32 %v313, 6.2831855
        %v344 = vmul.f32 %v314, 6.2831855
        %v345 = vmul.f32 %v315, 6.2831855
        %v346 = vmul.f32 %v316, 6.2831855
        %v347 = vmul.f32 %v317, 6.2831855
        %v348 = vmul.f32 %v318, 6.2831855
        %v349 = vmul.f32 %v319, 6.2831855
        %v350 = vmul.f32 %v320, 6.2831855
        %v351 = vmul.f32 %v321, 6.2831855
        %v352 = vmul.f32 %v322, 6.2831855
        %v353 = vmul.f32 %v323, 6.2831855
        %v354 = vmul.f32 %v324, 6.2831855
        %v355 = vmul.f32 %v325, 6.2831855
        %v356 = vmul.f32 %v326, 6.2831855
        %v357 = vmul.f32 %v327, 6.2831855
        %v358 = vmul.f32 %v328, 6.2831855
        %v359 = vmul.f32 %v329, 6.2831855
        %v360 = vmul.f32 %v330, 6.2831855
        %v361 = vmul.f32 %v331, 6.2831855
        %v362 = vmul.f32 %v332, 6.2831855
        %v363 = vmul.f32 %v333, 6.2831855
        %v364 = vand.u32 2147483647, %v334
        %vm365 = vcmp.le.f32.partialorder %v364, 0.7853982
        %vm366 = vcmp.lt.s32.totalorder %v334, 0
        %v367 = vand.u32 %v334, 2139095040
        %v368 = vshrl.u32 %v367, 23
        %v369 = vsub.s32 %v368, 127
        %v370 = vand.u32 2147483647, %v334
        %v371 = vand.u32 %v370, 8388607
        %v372 = vor.u32 %v371, 8388608
        %v373 = vsub.s32 0, %v372
        %v374 = vadd.s32 %v369, 1
        %vm375 = vcmp.gt.s32.totalorder %v374, 0
        %v376 = vsel %vm375, %v374, 0
        %v377 = vshrl.u32 %v376, 5
        %v378 = vand.u32 %v376, 31
        %v379 = vsub.s32 32, %v378
        %v380 = vshrl.u32 683565275, %v379
        %v381 = vshll.u32 683565275, %v378
        %v382 = vshrl.u32 2475754826, %v379
        %v383 = vor.u32 %v381, %v382
        %v384 = vshll.u32 2475754826, %v378
        %v385 = vshrl.u32 2131351028, %v379
        %v386 = vor.u32 %v384, %v385
        %v387 = vshll.u32 2131351028, %v378
        %v388 = vshrl.u32 2102212464, %v379
        %v389 = vor.u32 %v387, %v388
        %v390 = vshll.u32 2102212464, %v378
        %v391 = vshrl.u32 920167782, %v379
        %v392 = vor.u32 %v390, %v391
        %v393 = vshll.u32 920167782, %v378
        %v394 = vshrl.u32 1326507024, %v379
        %v395 = vor.u32 %v393, %v394
        %vm396 = vcmp.lt.s32.totalorder %v377, 1
        %vm397 = vcmp.lt.s32.totalorder %v377, 2
        %vm398 = vcmp.lt.s32.totalorder %v377, 3
        %vm399 = vcmp.lt.s32.totalorder %v377, 4
        %v400 = vsel %vm396, %v380, %v383
        %v401 = vsel %vm399, %v389, 2102212464
        %v402 = vsel %vm398, %v386, %v401
        %v403 = vsel %vm397, %v400, %v402
        %v404 = vsel %vm396, %v383, %v386
        %v405 = vsel %vm399, %v392, 920167782
        %v406 = vsel %vm398, %v389, %v405
        %v407 = vsel %vm397, %v404, %v406
        %v408 = vsel %vm396, %v386, %v389
        %v409 = vsel %vm399, %v395, 1326507024
        %v410 = vsel %vm398, %v392, %v409
        %v411 = vsel %vm397, %v408, %v410
        %v412 = vshll.u32 %v372, 8
        %v413 = vand.u32 %v412, 65535
        %v414 = vshrl.u32 %v412, 16
        %v415 = vand.u32 %v411, 65535
        %v416 = vshrl.u32 %v411, 16
        %v417 = vmul.u32 %v413, %v415
        %v418 = vmul.u32 %v413, %v416
        %v419 = vmul.u32 %v414, %v415
        %v420 = vmul.u32 %v414, %v416
        %v421 = vshll.u32 %v418, 16
        %v422 = vshrl.u32 %v418, 16
        %v423 = vshll.u32 %v419, 16
        %v424 = vshrl.u32 %v419, 16
        %vm425 = vc.u32 %v417, %v421
        %v426 = vsel %vm425, 1, 0
        %v427 = vadd.s32 %v417, %v421
        %v428 = vadd.s32 %v420, %v426
        %vm429 = vc.u32 %v427, %v423
        %v430 = vsel %vm429, 1, 0
        %v431 = vadd.s32 %v427, %v423
        %v432 = vadd.s32 %v428, %v430
        %v433 = vadd.s32 %v432, %v422
        %v434 = vadd.s32 %v433, %v424
        %v435 = vand.u32 %v412, 65535
        %v436 = vshrl.u32 %v412, 16
        %v437 = vand.u32 %v407, 65535
        %v438 = vshrl.u32 %v407, 16
        %v439 = vmul.u32 %v435, %v437
        %v440 = vmul.u32 %v435, %v438
        %v441 = vmul.u32 %v436, %v437
        %v442 = vmul.u32 %v436, %v438
        %v443 = vshll.u32 %v440, 16
        %v444 = vshrl.u32 %v440, 16
        %v445 = vshll.u32 %v441, 16
        %v446 = vshrl.u32 %v441, 16
        %vm447 = vc.u32 %v439, %v443
        %v448 = vsel %vm447, 1, 0
        %v449 = vadd.s32 %v439, %v443
        %v450 = vadd.s32 %v442, %v448
        %vm451 = vc.u32 %v449, %v445
        %v452 = vsel %vm451, 1, 0
        %v453 = vadd.s32 %v449, %v445
        %v454 = vadd.s32 %v450, %v452
        %v455 = vadd.s32 %v454, %v444
        %v456 = vadd.s32 %v455, %v446
        %v457 = vmul.u32 %v412, %v403
        %v458 = vadd.s32 %v434, %v453
        %vm459 = vc.u32 %v434, %v453
        %v460 = vadd.s32 %v456, 1
        %v461 = vsel %vm459, %v460, %v456
        %v462 = vadd.s32 %v457, %v461
        %v463 = vadd.s32 %v462, 536870912
        %v464 = vshrl.u32 %v463, 30
        %v465 = vshll.u32 %v464, 30
        %v466 = vsub.s32 %v462, %v465
        %vm467 = vcmp.lt.s32.totalorder %v466, 0
        %v468 = vsub.s32 0, %v466
        %v469 = vsel %vm467, %v468, %v466
        %v470 = vclz %v469
        %v471 = vsub.s32 %v470, 2
        %vm472 = vcmp.gt.s32.totalorder 0, %v471
        %v473 = vsel %vm472, 0, %v471
        %v474 = vsub.s32 32, %v473
        %v475 = vshll.u32 %v466, %v473
        %v476 = vshrl.u32 %v458, %v474
        %v477 = vor.u32 %v475, %v476
        %v478 = vsub.s32 4294967266, %v473
        %v479 = vadd.s32 %v478, 127
        %v480 = vshll.u32 %v479, 23
        %v481 = vor.u32 4788187, %v480
        %v482 = vand.u32 2147483647, %v481
        %v484 = vcvt.s32.f32 %v477
        %v485 = vmul.f32 %v484, %v482
        %v486 = vxor.u32 %v485, 2147483648
        %v487 = vsel %vm366, %v486, %v485
        %v488 = vsub.s32 4, %v464
        %v489 = vsel %vm366, %v488, %v464
        %v490 = vsel %vm365, %v334, %v487
        %v491 = vsel %vm365, 0, %v489
        %v492 = vmul.f32 %v490, %v490
        %v493 = vmul.f32 %v492, -0.001358992
        %v494 = vadd.f32 %v493, 0.041655596
        %v495 = vmul.f32 %v492, %v494
        %v496 = vadd.f32 %v495, -0.4999988
        %v497 = vmul.f32 %v492, %v496
        %v498 = vadd.f32 1.0, %v497
        %v499 = vmul.f32 %v490, %v490
        %v500 = vmul.f32 %v499, -0.00019511016
        %v501 = vadd.f32 %v500, 0.008332121
        %v502 = vmul.f32 %v499, %v501
        %v503 = vadd.f32 %v502, -0.16666654
        %v504 = vmul.f32 %v499, %v503
        %v505 = vadd.f32 %v504, 1.0
        %v506 = vmul.f32 %v505, %v490
        %vm507 = vweird.f32 %v334
        %v508 = vadd.s32 %v491, 3
        %v509 = vand.u32 %v508, 3
        %vm510 = vcmp.lt.s32.totalorder %v509, 2
        %vm511 = vcmp.eq.s32.totalorder %v509, 0
        %v512 = vxor.u32 %v506, 2147483648
        %v513 = vsel %vm511, %v498, %v512
        %vm514 = vcmp.eq.s32.totalorder %v509, 2
        %v515 = vxor.u32 %v498, 2147483648
        %v516 = vsel %vm514, %v515, %v506
        %v517 = vsel %vm510, %v513, %v516
        %v518 = vsel %vm507, nan, %v517
        %v519 = vand.u32 2147483647, %v335
        %vm520 = vcmp.le.f32.partialorder %v519, 0.7853982
        %vm521 = vcmp.lt.s32.totalorder %v335, 0
        %v522 = vand.u32 %v335, 2139095040
        %v523 = vshrl.u32 %v522, 23
        %v524 = vsub.s32 %v523, 127
        %v525 = vand.u32 2147483647, %v335
        %v526 = vand.u32 %v525, 8388607
        %v527 = vor.u32 %v526, 8388608
        %v528 = vsub.s32 0, %v527
        %v529 = vadd.s32 %v524, 1
        %vm530 = vcmp.gt.s32.totalorder %v529, 0
        %v531 = vsel %vm530, %v529, 0
        %v532 = vshrl.u32 %v531, 5
        %v533 = vand.u32 %v531, 31
        %v534 = vsub.s32 32, %v533
        %v535 = vshrl.u32 683565275, %v534
        %v536 = vshll.u32 683565275, %v533
        %v537 = vshrl.u32 2475754826, %v534
        %v538 = vor.u32 %v536, %v537
        %v539 = vshll.u32 2475754826, %v533
        %v540 = vshrl.u32 2131351028, %v534
        %v541 = vor.u32 %v539, %v540
        %v542 = vshll.u32 2131351028, %v533
        %v543 = vshrl.u32 2102212464, %v534
        %v544 = vor.u32 %v542, %v543
        %v545 = vshll.u32 2102212464, %v533
        %v546 = vshrl.u32 920167782, %v534
        %v547 = vor.u32 %v545, %v546
        %v548 = vshll.u32 920167782, %v533
        %v549 = vshrl.u32 1326507024, %v534
        %v550 = vor.u32 %v548, %v549
        %vm551 = vcmp.lt.s32.totalorder %v532, 1
        %vm552 = vcmp.lt.s32.totalorder %v532, 2
        %vm553 = vcmp.lt.s32.totalorder %v532, 3
        %vm554 = vcmp.lt.s32.totalorder %v532, 4
        %v555 = vsel %vm551, %v535, %v538
        %v556 = vsel %vm554, %v544, 2102212464
        %v557 = vsel %vm553, %v541, %v556
        %v558 = vsel %vm552, %v555, %v557
        %v559 = vsel %vm551, %v538, %v541
        %v560 = vsel %vm554, %v547, 920167782
        %v561 = vsel %vm553, %v544, %v560
        %v562 = vsel %vm552, %v559, %v561
        %v563 = vsel %vm551, %v541, %v544
        %v564 = vsel %vm554, %v550, 1326507024
        %v565 = vsel %vm553, %v547, %v564
        %v566 = vsel %vm552, %v563, %v565
        %v567 = vshll.u32 %v527, 8
        %v568 = vand.u32 %v567, 65535
        %v569 = vshrl.u32 %v567, 16
        %v570 = vand.u32 %v566, 65535
        %v571 = vshrl.u32 %v566, 16
        %v572 = vmul.u32 %v568, %v570
        %v573 = vmul.u32 %v568, %v571
        %v574 = vmul.u32 %v569, %v570
        %v575 = vmul.u32 %v569, %v571
        %v576 = vshll.u32 %v573, 16
        %v577 = vshrl.u32 %v573, 16
        %v578 = vshll.u32 %v574, 16
        %v579 = vshrl.u32 %v574, 16
        %vm580 = vc.u32 %v572, %v576
        %v581 = vsel %vm580, 1, 0
        %v582 = vadd.s32 %v572, %v576
        %v583 = vadd.s32 %v575, %v581
        %vm584 = vc.u32 %v582, %v578
        %v585 = vsel %vm584, 1, 0
        %v586 = vadd.s32 %v582, %v578
        %v587 = vadd.s32 %v583, %v585
        %v588 = vadd.s32 %v587, %v577
        %v589 = vadd.s32 %v588, %v579
        %v590 = vand.u32 %v567, 65535
        %v591 = vshrl.u32 %v567, 16
        %v592 = vand.u32 %v562, 65535
        %v593 = vshrl.u32 %v562, 16
        %v594 = vmul.u32 %v590, %v592
        %v595 = vmul.u32 %v590, %v593
        %v596 = vmul.u32 %v591, %v592
        %v597 = vmul.u32 %v591, %v593
        %v598 = vshll.u32 %v595, 16
        %v599 = vshrl.u32 %v595, 16
        %v600 = vshll.u32 %v596, 16
        %v601 = vshrl.u32 %v596, 16
        %vm602 = vc.u32 %v594, %v598
        %v603 = vsel %vm602, 1, 0
        %v604 = vadd.s32 %v594, %v598
        %v605 = vadd.s32 %v597, %v603
        %vm606 = vc.u32 %v604, %v600
        %v607 = vsel %vm606, 1, 0
        %v608 = vadd.s32 %v604, %v600
        %v609 = vadd.s32 %v605, %v607
        %v610 = vadd.s32 %v609, %v599
        %v611 = vadd.s32 %v610, %v601
        %v612 = vmul.u32 %v567, %v558
        %v613 = vadd.s32 %v589, %v608
        %vm614 = vc.u32 %v589, %v608
        %v615 = vadd.s32 %v611, 1
        %v616 = vsel %vm614, %v615, %v611
        %v617 = vadd.s32 %v612, %v616
        %v618 = vadd.s32 %v617, 536870912
        %v619 = vshrl.u32 %v618, 30
        %v620 = vshll.u32 %v619, 30
        %v621 = vsub.s32 %v617, %v620
        %vm622 = vcmp.lt.s32.totalorder %v621, 0
        %v623 = vsub.s32 0, %v621
        %v624 = vsel %vm622, %v623, %v621
        %v625 = vclz %v624
        %v626 = vsub.s32 %v625, 2
        %vm627 = vcmp.gt.s32.totalorder 0, %v626
        %v628 = vsel %vm627, 0, %v626
        %v629 = vsub.s32 32, %v628
        %v630 = vshll.u32 %v621, %v628
        %v631 = vshrl.u32 %v613, %v629
        %v632 = vor.u32 %v630, %v631
        %v633 = vsub.s32 4294967266, %v628
        %v634 = vadd.s32 %v633, 127
        %v635 = vshll.u32 %v634, 23
        %v636 = vor.u32 4788187, %v635
        %v637 = vand.u32 2147483647, %v636
        %v639 = vcvt.s32.f32 %v632
        %v640 = vmul.f32 %v639, %v637
        %v641 = vxor.u32 %v640, 2147483648
        %v642 = vsel %vm521, %v641, %v640
        %v643 = vsub.s32 4, %v619
        %v644 = vsel %vm521, %v643, %v619
        %v645 = vsel %vm520, %v335, %v642
        %v646 = vsel %vm520, 0, %v644
        %v647 = vmul.f32 %v645, %v645
        %v648 = vmul.f32 %v647, -0.001358992
        %v649 = vadd.f32 %v648, 0.041655596
        %v650 = vmul.f32 %v647, %v649
        %v651 = vadd.f32 %v650, -0.4999988
        %v652 = vmul.f32 %v647, %v651
        %v653 = vadd.f32 1.0, %v652
        %v654 = vmul.f32 %v645, %v645
        %v655 = vmul.f32 %v654, -0.00019511016
        %v656 = vadd.f32 %v655, 0.008332121
        %v657 = vmul.f32 %v654, %v656
        %v658 = vadd.f32 %v657, -0.16666654
        %v659 = vmul.f32 %v654, %v658
        %v660 = vadd.f32 %v659, 1.0
        %v661 = vmul.f32 %v660, %v645
        %vm662 = vweird.f32 %v335
        %v663 = vadd.s32 %v646, 3
        %v664 = vand.u32 %v663, 3
        %vm665 = vcmp.lt.s32.totalorder %v664, 2
        %vm666 = vcmp.eq.s32.totalorder %v664, 0
        %v667 = vxor.u32 %v661, 2147483648
        %v668 = vsel %vm666, %v653, %v667
        %vm669 = vcmp.eq.s32.totalorder %v664, 2
        %v670 = vxor.u32 %v653, 2147483648
        %v671 = vsel %vm669, %v670, %v661
        %v672 = vsel %vm665, %v668, %v671
        %v673 = vsel %vm662, nan, %v672
        %v674 = vand.u32 2147483647, %v336
        %vm675 = vcmp.le.f32.partialorder %v674, 0.7853982
        %vm676 = vcmp.lt.s32.totalorder %v336, 0
        %v677 = vand.u32 %v336, 2139095040
        %v678 = vshrl.u32 %v677, 23
        %v679 = vsub.s32 %v678, 127
        %v680 = vand.u32 2147483647, %v336
        %v681 = vand.u32 %v680, 8388607
        %v682 = vor.u32 %v681, 8388608
        %v683 = vsub.s32 0, %v682
        %v684 = vadd.s32 %v679, 1
        %vm685 = vcmp.gt.s32.totalorder %v684, 0
        %v686 = vsel %vm685, %v684, 0
        %v687 = vshrl.u32 %v686, 5
        %v688 = vand.u32 %v686, 31
        %v689 = vsub.s32 32, %v688
        %v690 = vshrl.u32 683565275, %v689
        %v691 = vshll.u32 683565275, %v688
        %v692 = vshrl.u32 2475754826, %v689
        %v693 = vor.u32 %v691, %v692
        %v694 = vshll.u32 2475754826, %v688
        %v695 = vshrl.u32 2131351028, %v689
        %v696 = vor.u32 %v694, %v695
        %v697 = vshll.u32 2131351028, %v688
        %v698 = vshrl.u32 2102212464, %v689
        %v699 = vor.u32 %v697, %v698
        %v700 = vshll.u32 2102212464, %v688
        %v701 = vshrl.u32 920167782, %v689
        %v702 = vor.u32 %v700, %v701
        %v703 = vshll.u32 920167782, %v688
        %v704 = vshrl.u32 1326507024, %v689
        %v705 = vor.u32 %v703, %v704
        %vm706 = vcmp.lt.s32.totalorder %v687, 1
        %vm707 = vcmp.lt.s32.totalorder %v687, 2
        %vm708 = vcmp.lt.s32.totalorder %v687, 3
        %vm709 = vcmp.lt.s32.totalorder %v687, 4
        %v710 = vsel %vm706, %v690, %v693
        %v711 = vsel %vm709, %v699, 2102212464
        %v712 = vsel %vm708, %v696, %v711
        %v713 = vsel %vm707, %v710, %v712
        %v714 = vsel %vm706, %v693, %v696
        %v715 = vsel %vm709, %v702, 920167782
        %v716 = vsel %vm708, %v699, %v715
        %v717 = vsel %vm707, %v714, %v716
        %v718 = vsel %vm706, %v696, %v699
        %v719 = vsel %vm709, %v705, 1326507024
        %v720 = vsel %vm708, %v702, %v719
        %v721 = vsel %vm707, %v718, %v720
        %v722 = vshll.u32 %v682, 8
        %v723 = vand.u32 %v722, 65535
        %v724 = vshrl.u32 %v722, 16
        %v725 = vand.u32 %v721, 65535
        %v726 = vshrl.u32 %v721, 16
        %v727 = vmul.u32 %v723, %v725
        %v728 = vmul.u32 %v723, %v726
        %v729 = vmul.u32 %v724, %v725
        %v730 = vmul.u32 %v724, %v726
        %v731 = vshll.u32 %v728, 16
        %v732 = vshrl.u32 %v728, 16
        %v733 = vshll.u32 %v729, 16
        %v734 = vshrl.u32 %v729, 16
        %vm735 = vc.u32 %v727, %v731
        %v736 = vsel %vm735, 1, 0
        %v737 = vadd.s32 %v727, %v731
        %v738 = vadd.s32 %v730, %v736
        %vm739 = vc.u32 %v737, %v733
        %v740 = vsel %vm739, 1, 0
        %v741 = vadd.s32 %v737, %v733
        %v742 = vadd.s32 %v738, %v740
        %v743 = vadd.s32 %v742, %v732
        %v744 = vadd.s32 %v743, %v734
        %v745 = vand.u32 %v722, 65535
        %v746 = vshrl.u32 %v722, 16
        %v747 = vand.u32 %v717, 65535
        %v748 = vshrl.u32 %v717, 16
        %v749 = vmul.u32 %v745, %v747
        %v750 = vmul.u32 %v745, %v748
        %v751 = vmul.u32 %v746, %v747
        %v752 = vmul.u32 %v746, %v748
        %v753 = vshll.u32 %v750, 16
        %v754 = vshrl.u32 %v750, 16
        %v755 = vshll.u32 %v751, 16
        %v756 = vshrl.u32 %v751, 16
        %vm757 = vc.u32 %v749, %v753
        %v758 = vsel %vm757, 1, 0
        %v759 = vadd.s32 %v749, %v753
        %v760 = vadd.s32 %v752, %v758
        %vm761 = vc.u32 %v759, %v755
        %v762 = vsel %vm761, 1, 0
        %v763 = vadd.s32 %v759, %v755
        %v764 = vadd.s32 %v760, %v762
        %v765 = vadd.s32 %v764, %v754
        %v766 = vadd.s32 %v765, %v756
        %v767 = vmul.u32 %v722, %v713
        %v768 = vadd.s32 %v744, %v763
        %vm769 = vc.u32 %v744, %v763
        %v770 = vadd.s32 %v766, 1
        %v771 = vsel %vm769, %v770, %v766
        %v772 = vadd.s32 %v767, %v771
        %v773 = vadd.s32 %v772, 536870912
        %v774 = vshrl.u32 %v773, 30
        %v775 = vshll.u32 %v774, 30
        %v776 = vsub.s32 %v772, %v775
        %vm777 = vcmp.lt.s32.totalorder %v776, 0
        %v778 = vsub.s32 0, %v776
        %v779 = vsel %vm777, %v778, %v776
        %v780 = vclz %v779
        %v781 = vsub.s32 %v780, 2
        %vm782 = vcmp.gt.s32.totalorder 0, %v781
        %v783 = vsel %vm782, 0, %v781
        %v784 = vsub.s32 32, %v783
        %v785 = vshll.u32 %v776, %v783
        %v786 = vshrl.u32 %v768, %v784
        %v787 = vor.u32 %v785, %v786
        %v788 = vsub.s32 4294967266, %v783
        %v789 = vadd.s32 %v788, 127
        %v790 = vshll.u32 %v789, 23
        %v791 = vor.u32 4788187, %v790
        %v792 = vand.u32 2147483647, %v791
        %v794 = vcvt.s32.f32 %v787
        %v795 = vmul.f32 %v794, %v792
        %v796 = vxor.u32 %v795, 2147483648
        %v797 = vsel %vm676, %v796, %v795
        %v798 = vsub.s32 4, %v774
        %v799 = vsel %vm676, %v798, %v774
        %v800 = vsel %vm675, %v336, %v797
        %v801 = vsel %vm675, 0, %v799
        %v802 = vmul.f32 %v800, %v800
        %v803 = vmul.f32 %v802, -0.001358992
        %v804 = vadd.f32 %v803, 0.041655596
        %v805 = vmul.f32 %v802, %v804
        %v806 = vadd.f32 %v805, -0.4999988
        %v807 = vmul.f32 %v802, %v806
        %v808 = vadd.f32 1.0, %v807
        %v809 = vmul.f32 %v800, %v800
        %v810 = vmul.f32 %v809, -0.00019511016
        %v811 = vadd.f32 %v810, 0.008332121
        %v812 = vmul.f32 %v809, %v811
        %v813 = vadd.f32 %v812, -0.16666654
        %v814 = vmul.f32 %v809, %v813
        %v815 = vadd.f32 %v814, 1.0
        %v816 = vmul.f32 %v815, %v800
        %vm817 = vweird.f32 %v336
        %v818 = vadd.s32 %v801, 3
        %v819 = vand.u32 %v818, 3
        %vm820 = vcmp.lt.s32.totalorder %v819, 2
        %vm821 = vcmp.eq.s32.totalorder %v819, 0
        %v822 = vxor.u32 %v816, 2147483648
        %v823 = vsel %vm821, %v808, %v822
        %vm824 = vcmp.eq.s32.totalorder %v819, 2
        %v825 = vxor.u32 %v808, 2147483648
        %v826 = vsel %vm824, %v825, %v816
        %v827 = vsel %vm820, %v823, %v826
        %v828 = vsel %vm817, nan, %v827
        %v829 = vand.u32 2147483647, %v337
        %vm830 = vcmp.le.f32.partialorder %v829, 0.7853982
        %vm831 = vcmp.lt.s32.totalorder %v337, 0
        %v832 = vand.u32 %v337, 2139095040
        %v833 = vshrl.u32 %v832, 23
        %v834 = vsub.s32 %v833, 127
        %v835 = vand.u32 2147483647, %v337
        %v836 = vand.u32 %v835, 8388607
        %v837 = vor.u32 %v836, 8388608
        %v838 = vsub.s32 0, %v837
        %v839 = vadd.s32 %v834, 1
        %vm840 = vcmp.gt.s32.totalorder %v839, 0
        %v841 = vsel %vm840, %v839, 0
        %v842 = vshrl.u32 %v841, 5
        %v843 = vand.u32 %v841, 31
        %v844 = vsub.s32 32, %v843
        %v845 = vshrl.u32 683565275, %v844
        %v846 = vshll.u32 683565275, %v843
        %v847 = vshrl.u32 2475754826, %v844
        %v848 = vor.u32 %v846, %v847
        %v849 = vshll.u32 2475754826, %v843
        %v850 = vshrl.u32 2131351028, %v844
        %v851 = vor.u32 %v849, %v850
        %v852 = vshll.u32 2131351028, %v843
        %v853 = vshrl.u32 2102212464, %v844
        %v854 = vor.u32 %v852, %v853
        %v855 = vshll.u32 2102212464, %v843
        %v856 = vshrl.u32 920167782, %v844
        %v857 = vor.u32 %v855, %v856
        %v858 = vshll.u32 920167782, %v843
        %v859 = vshrl.u32 1326507024, %v844
        %v860 = vor.u32 %v858, %v859
        %vm861 = vcmp.lt.s32.totalorder %v842, 1
        %vm862 = vcmp.lt.s32.totalorder %v842, 2
        %vm863 = vcmp.lt.s32.totalorder %v842, 3
        %vm864 = vcmp.lt.s32.totalorder %v842, 4
        %v865 = vsel %vm861, %v845, %v848
        %v866 = vsel %vm864, %v854, 2102212464
        %v867 = vsel %vm863, %v851, %v866
        %v868 = vsel %vm862, %v865, %v867
        %v869 = vsel %vm861, %v848, %v851
        %v870 = vsel %vm864, %v857, 920167782
        %v871 = vsel %vm863, %v854, %v870
        %v872 = vsel %vm862, %v869, %v871
        %v873 = vsel %vm861, %v851, %v854
        %v874 = vsel %vm864, %v860, 1326507024
        %v875 = vsel %vm863, %v857, %v874
        %v876 = vsel %vm862, %v873, %v875
        %v877 = vshll.u32 %v837, 8
        %v878 = vand.u32 %v877, 65535
        %v879 = vshrl.u32 %v877, 16
        %v880 = vand.u32 %v876, 65535
        %v881 = vshrl.u32 %v876, 16
        %v882 = vmul.u32 %v878, %v880
        %v883 = vmul.u32 %v878, %v881
        %v884 = vmul.u32 %v879, %v880
        %v885 = vmul.u32 %v879, %v881
        %v886 = vshll.u32 %v883, 16
        %v887 = vshrl.u32 %v883, 16
        %v888 = vshll.u32 %v884, 16
        %v889 = vshrl.u32 %v884, 16
        %vm890 = vc.u32 %v882, %v886
        %v891 = vsel %vm890, 1, 0
        %v892 = vadd.s32 %v882, %v886
        %v893 = vadd.s32 %v885, %v891
        %vm894 = vc.u32 %v892, %v888
        %v895 = vsel %vm894, 1, 0
        %v896 = vadd.s32 %v892, %v888
        %v897 = vadd.s32 %v893, %v895
        %v898 = vadd.s32 %v897, %v887
        %v899 = vadd.s32 %v898, %v889
        %v900 = vand.u32 %v877, 65535
        %v901 = vshrl.u32 %v877, 16
        %v902 = vand.u32 %v872, 65535
        %v903 = vshrl.u32 %v872, 16
        %v904 = vmul.u32 %v900, %v902
        %v905 = vmul.u32 %v900, %v903
        %v906 = vmul.u32 %v901, %v902
        %v907 = vmul.u32 %v901, %v903
        %v908 = vshll.u32 %v905, 16
        %v909 = vshrl.u32 %v905, 16
        %v910 = vshll.u32 %v906, 16
        %v911 = vshrl.u32 %v906, 16
        %vm912 = vc.u32 %v904, %v908
        %v913 = vsel %vm912, 1, 0
        %v914 = vadd.s32 %v904, %v908
        %v915 = vadd.s32 %v907, %v913
        %vm916 = vc.u32 %v914, %v910
        %v917 = vsel %vm916, 1, 0
        %v918 = vadd.s32 %v914, %v910
        %v919 = vadd.s32 %v915, %v917
        %v920 = vadd.s32 %v919, %v909
        %v921 = vadd.s32 %v920, %v911
        %v922 = vmul.u32 %v877, %v868
        %v923 = vadd.s32 %v899, %v918
        %vm924 = vc.u32 %v899, %v918
        %v925 = vadd.s32 %v921, 1
        %v926 = vsel %vm924, %v925, %v921
        %v927 = vadd.s32 %v922, %v926
        %v928 = vadd.s32 %v927, 536870912
        %v929 = vshrl.u32 %v928, 30
        %v930 = vshll.u32 %v929, 30
        %v931 = vsub.s32 %v927, %v930
        %vm932 = vcmp.lt.s32.totalorder %v931, 0
        %v933 = vsub.s32 0, %v931
        %v934 = vsel %vm932, %v933, %v931
        %v935 = vclz %v934
        %v936 = vsub.s32 %v935, 2
        %vm937 = vcmp.gt.s32.totalorder 0, %v936
        %v938 = vsel %vm937, 0, %v936
        %v939 = vsub.s32 32, %v938
        %v940 = vshll.u32 %v931, %v938
        %v941 = vshrl.u32 %v923, %v939
        %v942 = vor.u32 %v940, %v941
        %v943 = vsub.s32 4294967266, %v938
        %v944 = vadd.s32 %v943, 127
        %v945 = vshll.u32 %v944, 23
        %v946 = vor.u32 4788187, %v945
        %v947 = vand.u32 2147483647, %v946
        %v949 = vcvt.s32.f32 %v942
        %v950 = vmul.f32 %v949, %v947
        %v951 = vxor.u32 %v950, 2147483648
        %v952 = vsel %vm831, %v951, %v950
        %v953 = vsub.s32 4, %v929
        %v954 = vsel %vm831, %v953, %v929
        %v955 = vsel %vm830, %v337, %v952
        %v956 = vsel %vm830, 0, %v954
        %v957 = vmul.f32 %v955, %v955
        %v958 = vmul.f32 %v957, -0.001358992
        %v959 = vadd.f32 %v958, 0.041655596
        %v960 = vmul.f32 %v957, %v959
        %v961 = vadd.f32 %v960, -0.4999988
        %v962 = vmul.f32 %v957, %v961
        %v963 = vadd.f32 1.0, %v962
        %v964 = vmul.f32 %v955, %v955
        %v965 = vmul.f32 %v964, -0.00019511016
        %v966 = vadd.f32 %v965, 0.008332121
        %v967 = vmul.f32 %v964, %v966
        %v968 = vadd.f32 %v967, -0.16666654
        %v969 = vmul.f32 %v964, %v968
        %v970 = vadd.f32 %v969, 1.0
        %v971 = vmul.f32 %v970, %v955
        %vm972 = vweird.f32 %v337
        %v973 = vadd.s32 %v956, 3
        %v974 = vand.u32 %v973, 3
        %vm975 = vcmp.lt.s32.totalorder %v974, 2
        %vm976 = vcmp.eq.s32.totalorder %v974, 0
        %v977 = vxor.u32 %v971, 2147483648
        %v978 = vsel %vm976, %v963, %v977
        %vm979 = vcmp.eq.s32.totalorder %v974, 2
        %v980 = vxor.u32 %v963, 2147483648
        %v981 = vsel %vm979, %v980, %v971
        %v982 = vsel %vm975, %v978, %v981
        %v983 = vsel %vm972, nan, %v982
        %v984 = vand.u32 2147483647, %v338
        %vm985 = vcmp.le.f32.partialorder %v984, 0.7853982
        %vm986 = vcmp.lt.s32.totalorder %v338, 0
        %v987 = vand.u32 %v338, 2139095040
        %v988 = vshrl.u32 %v987, 23
        %v989 = vsub.s32 %v988, 127
        %v990 = vand.u32 2147483647, %v338
        %v991 = vand.u32 %v990, 8388607
        %v992 = vor.u32 %v991, 8388608
        %v993 = vsub.s32 0, %v992
        %v994 = vadd.s32 %v989, 1
        %vm995 = vcmp.gt.s32.totalorder %v994, 0
        %v996 = vsel %vm995, %v994, 0
        %v997 = vshrl.u32 %v996, 5
        %v998 = vand.u32 %v996, 31
        %v999 = vsub.s32 32, %v998
        %v1000 = vshrl.u32 683565275, %v999
        %v1001 = vshll.u32 683565275, %v998
        %v1002 = vshrl.u32 2475754826, %v999
        %v1003 = vor.u32 %v1001, %v1002
        %v1004 = vshll.u32 2475754826, %v998
        %v1005 = vshrl.u32 2131351028, %v999
        %v1006 = vor.u32 %v1004, %v1005
        %v1007 = vshll.u32 2131351028, %v998
        %v1008 = vshrl.u32 2102212464, %v999
        %v1009 = vor.u32 %v1007, %v1008
        %v1010 = vshll.u32 2102212464, %v998
        %v1011 = vshrl.u32 920167782, %v999
        %v1012 = vor.u32 %v1010, %v1011
        %v1013 = vshll.u32 920167782, %v998
        %v1014 = vshrl.u32 1326507024, %v999
        %v1015 = vor.u32 %v1013, %v1014
        %vm1016 = vcmp.lt.s32.totalorder %v997, 1
        %vm1017 = vcmp.lt.s32.totalorder %v997, 2
        %vm1018 = vcmp.lt.s32.totalorder %v997, 3
        %vm1019 = vcmp.lt.s32.totalorder %v997, 4
        %v1020 = vsel %vm1016, %v1000, %v1003
        %v1021 = vsel %vm1019, %v1009, 2102212464
        %v1022 = vsel %vm1018, %v1006, %v1021
        %v1023 = vsel %vm1017, %v1020, %v1022
        %v1024 = vsel %vm1016, %v1003, %v1006
        %v1025 = vsel %vm1019, %v1012, 920167782
        %v1026 = vsel %vm1018, %v1009, %v1025
        %v1027 = vsel %vm1017, %v1024, %v1026
        %v1028 = vsel %vm1016, %v1006, %v1009
        %v1029 = vsel %vm1019, %v1015, 1326507024
        %v1030 = vsel %vm1018, %v1012, %v1029
        %v1031 = vsel %vm1017, %v1028, %v1030
        %v1032 = vshll.u32 %v992, 8
        %v1033 = vand.u32 %v1032, 65535
        %v1034 = vshrl.u32 %v1032, 16
        %v1035 = vand.u32 %v1031, 65535
        %v1036 = vshrl.u32 %v1031, 16
        %v1037 = vmul.u32 %v1033, %v1035
        %v1038 = vmul.u32 %v1033, %v1036
        %v1039 = vmul.u32 %v1034, %v1035
        %v1040 = vmul.u32 %v1034, %v1036
        %v1041 = vshll.u32 %v1038, 16
        %v1042 = vshrl.u32 %v1038, 16
        %v1043 = vshll.u32 %v1039, 16
        %v1044 = vshrl.u32 %v1039, 16
        %vm1045 = vc.u32 %v1037, %v1041
        %v1046 = vsel %vm1045, 1, 0
        %v1047 = vadd.s32 %v1037, %v1041
        %v1048 = vadd.s32 %v1040, %v1046
        %vm1049 = vc.u32 %v1047, %v1043
        %v1050 = vsel %vm1049, 1, 0
        %v1051 = vadd.s32 %v1047, %v1043
        %v1052 = vadd.s32 %v1048, %v1050
        %v1053 = vadd.s32 %v1052, %v1042
        %v1054 = vadd.s32 %v1053, %v1044
        %v1055 = vand.u32 %v1032, 65535
        %v1056 = vshrl.u32 %v1032, 16
        %v1057 = vand.u32 %v1027, 65535
        %v1058 = vshrl.u32 %v1027, 16
        %v1059 = vmul.u32 %v1055, %v1057
        %v1060 = vmul.u32 %v1055, %v1058
        %v1061 = vmul.u32 %v1056, %v1057
        %v1062 = vmul.u32 %v1056, %v1058
        %v1063 = vshll.u32 %v1060, 16
        %v1064 = vshrl.u32 %v1060, 16
        %v1065 = vshll.u32 %v1061, 16
        %v1066 = vshrl.u32 %v1061, 16
        %vm1067 = vc.u32 %v1059, %v1063
        %v1068 = vsel %vm1067, 1, 0
        %v1069 = vadd.s32 %v1059, %v1063
        %v1070 = vadd.s32 %v1062, %v1068
        %vm1071 = vc.u32 %v1069, %v1065
        %v1072 = vsel %vm1071, 1, 0
        %v1073 = vadd.s32 %v1069, %v1065
        %v1074 = vadd.s32 %v1070, %v1072
        %v1075 = vadd.s32 %v1074, %v1064
        %v1076 = vadd.s32 %v1075, %v1066
        %v1077 = vmul.u32 %v1032, %v1023
        %v1078 = vadd.s32 %v1054, %v1073
        %vm1079 = vc.u32 %v1054, %v1073
        %v1080 = vadd.s32 %v1076, 1
        %v1081 = vsel %vm1079, %v1080, %v1076
        %v1082 = vadd.s32 %v1077, %v1081
        %v1083 = vadd.s32 %v1082, 536870912
        %v1084 = vshrl.u32 %v1083, 30
        %v1085 = vshll.u32 %v1084, 30
        %v1086 = vsub.s32 %v1082, %v1085
        %vm1087 = vcmp.lt.s32.totalorder %v1086, 0
        %v1088 = vsub.s32 0, %v1086
        %v1089 = vsel %vm1087, %v1088, %v1086
        %v1090 = vclz %v1089
        %v1091 = vsub.s32 %v1090, 2
        %vm1092 = vcmp.gt.s32.totalorder 0, %v1091
        %v1093 = vsel %vm1092, 0, %v1091
        %v1094 = vsub.s32 32, %v1093
        %v1095 = vshll.u32 %v1086, %v1093
        %v1096 = vshrl.u32 %v1078, %v1094
        %v1097 = vor.u32 %v1095, %v1096
        %v1098 = vsub.s32 4294967266, %v1093
        %v1099 = vadd.s32 %v1098, 127
        %v1100 = vshll.u32 %v1099, 23
        %v1101 = vor.u32 4788187, %v1100
        %v1102 = vand.u32 2147483647, %v1101
        %v1104 = vcvt.s32.f32 %v1097
        %v1105 = vmul.f32 %v1104, %v1102
        %v1106 = vxor.u32 %v1105, 2147483648
        %v1107 = vsel %vm986, %v1106, %v1105
        %v1108 = vsub.s32 4, %v1084
        %v1109 = vsel %vm986, %v1108, %v1084
        %v1110 = vsel %vm985, %v338, %v1107
        %v1111 = vsel %vm985, 0, %v1109
        %v1112 = vmul.f32 %v1110, %v1110
        %v1113 = vmul.f32 %v1112, -0.001358992
        %v1114 = vadd.f32 %v1113, 0.041655596
        %v1115 = vmul.f32 %v1112, %v1114
        %v1116 = vadd.f32 %v1115, -0.4999988
        %v1117 = vmul.f32 %v1112, %v1116
        %v1118 = vadd.f32 1.0, %v1117
        %v1119 = vmul.f32 %v1110, %v1110
        %v1120 = vmul.f32 %v1119, -0.00019511016
        %v1121 = vadd.f32 %v1120, 0.008332121
        %v1122 = vmul.f32 %v1119, %v1121
        %v1123 = vadd.f32 %v1122, -0.16666654
        %v1124 = vmul.f32 %v1119, %v1123
        %v1125 = vadd.f32 %v1124, 1.0
        %v1126 = vmul.f32 %v1125, %v1110
        %vm1127 = vweird.f32 %v338
        %v1128 = vadd.s32 %v1111, 3
        %v1129 = vand.u32 %v1128, 3
        %vm1130 = vcmp.lt.s32.totalorder %v1129, 2
        %vm1131 = vcmp.eq.s32.totalorder %v1129, 0
        %v1132 = vxor.u32 %v1126, 2147483648
        %v1133 = vsel %vm1131, %v1118, %v1132
        %vm1134 = vcmp.eq.s32.totalorder %v1129, 2
        %v1135 = vxor.u32 %v1118, 2147483648
        %v1136 = vsel %vm1134, %v1135, %v1126
        %v1137 = vsel %vm1130, %v1133, %v1136
        %v1138 = vsel %vm1127, nan, %v1137
        %v1139 = vand.u32 2147483647, %v339
        %vm1140 = vcmp.le.f32.partialorder %v1139, 0.7853982
        %vm1141 = vcmp.lt.s32.totalorder %v339, 0
        %v1142 = vand.u32 %v339, 2139095040
        %v1143 = vshrl.u32 %v1142, 23
        %v1144 = vsub.s32 %v1143, 127
        %v1145 = vand.u32 2147483647, %v339
        %v1146 = vand.u32 %v1145, 8388607
        %v1147 = vor.u32 %v1146, 8388608
        %v1148 = vsub.s32 0, %v1147
        %v1149 = vadd.s32 %v1144, 1
        %vm1150 = vcmp.gt.s32.totalorder %v1149, 0
        %v1151 = vsel %vm1150, %v1149, 0
        %v1152 = vshrl.u32 %v1151, 5
        %v1153 = vand.u32 %v1151, 31
        %v1154 = vsub.s32 32, %v1153
        %v1155 = vshrl.u32 683565275, %v1154
        %v1156 = vshll.u32 683565275, %v1153
        %v1157 = vshrl.u32 2475754826, %v1154
        %v1158 = vor.u32 %v1156, %v1157
        %v1159 = vshll.u32 2475754826, %v1153
        %v1160 = vshrl.u32 2131351028, %v1154
        %v1161 = vor.u32 %v1159, %v1160
        %v1162 = vshll.u32 2131351028, %v1153
        %v1163 = vshrl.u32 2102212464, %v1154
        %v1164 = vor.u32 %v1162, %v1163
        %v1165 = vshll.u32 2102212464, %v1153
        %v1166 = vshrl.u32 920167782, %v1154
        %v1167 = vor.u32 %v1165, %v1166
        %v1168 = vshll.u32 920167782, %v1153
        %v1169 = vshrl.u32 1326507024, %v1154
        %v1170 = vor.u32 %v1168, %v1169
        %vm1171 = vcmp.lt.s32.totalorder %v1152, 1
        %vm1172 = vcmp.lt.s32.totalorder %v1152, 2
        %vm1173 = vcmp.lt.s32.totalorder %v1152, 3
        %vm1174 = vcmp.lt.s32.totalorder %v1152, 4
        %v1175 = vsel %vm1171, %v1155, %v1158
        %v1176 = vsel %vm1174, %v1164, 2102212464
        %v1177 = vsel %vm1173, %v1161, %v1176
        %v1178 = vsel %vm1172, %v1175, %v1177
        %v1179 = vsel %vm1171, %v1158, %v1161
        %v1180 = vsel %vm1174, %v1167, 920167782
        %v1181 = vsel %vm1173, %v1164, %v1180
        %v1182 = vsel %vm1172, %v1179, %v1181
        %v1183 = vsel %vm1171, %v1161, %v1164
        %v1184 = vsel %vm1174, %v1170, 1326507024
        %v1185 = vsel %vm1173, %v1167, %v1184
        %v1186 = vsel %vm1172, %v1183, %v1185
        %v1187 = vshll.u32 %v1147, 8
        %v1188 = vand.u32 %v1187, 65535
        %v1189 = vshrl.u32 %v1187, 16
        %v1190 = vand.u32 %v1186, 65535
        %v1191 = vshrl.u32 %v1186, 16
        %v1192 = vmul.u32 %v1188, %v1190
        %v1193 = vmul.u32 %v1188, %v1191
        %v1194 = vmul.u32 %v1189, %v1190
        %v1195 = vmul.u32 %v1189, %v1191
        %v1196 = vshll.u32 %v1193, 16
        %v1197 = vshrl.u32 %v1193, 16
        %v1198 = vshll.u32 %v1194, 16
        %v1199 = vshrl.u32 %v1194, 16
        %vm1200 = vc.u32 %v1192, %v1196
        %v1201 = vsel %vm1200, 1, 0
        %v1202 = vadd.s32 %v1192, %v1196
        %v1203 = vadd.s32 %v1195, %v1201
        %vm1204 = vc.u32 %v1202, %v1198
        %v1205 = vsel %vm1204, 1, 0
        %v1206 = vadd.s32 %v1202, %v1198
        %v1207 = vadd.s32 %v1203, %v1205
        %v1208 = vadd.s32 %v1207, %v1197
        %v1209 = vadd.s32 %v1208, %v1199
        %v1210 = vand.u32 %v1187, 65535
        %v1211 = vshrl.u32 %v1187, 16
        %v1212 = vand.u32 %v1182, 65535
        %v1213 = vshrl.u32 %v1182, 16
        %v1214 = vmul.u32 %v1210, %v1212
        %v1215 = vmul.u32 %v1210, %v1213
        %v1216 = vmul.u32 %v1211, %v1212
        %v1217 = vmul.u32 %v1211, %v1213
        %v1218 = vshll.u32 %v1215, 16
        %v1219 = vshrl.u32 %v1215, 16
        %v1220 = vshll.u32 %v1216, 16
        %v1221 = vshrl.u32 %v1216, 16
        %vm1222 = vc.u32 %v1214, %v1218
        %v1223 = vsel %vm1222, 1, 0
        %v1224 = vadd.s32 %v1214, %v1218
        %v1225 = vadd.s32 %v1217, %v1223
        %vm1226 = vc.u32 %v1224, %v1220
        %v1227 = vsel %vm1226, 1, 0
        %v1228 = vadd.s32 %v1224, %v1220
        %v1229 = vadd.s32 %v1225, %v1227
        %v1230 = vadd.s32 %v1229, %v1219
        %v1231 = vadd.s32 %v1230, %v1221
        %v1232 = vmul.u32 %v1187, %v1178
        %v1233 = vadd.s32 %v1209, %v1228
        %vm1234 = vc.u32 %v1209, %v1228
        %v1235 = vadd.s32 %v1231, 1
        %v1236 = vsel %vm1234, %v1235, %v1231
        %v1237 = vadd.s32 %v1232, %v1236
        %v1238 = vadd.s32 %v1237, 536870912
        %v1239 = vshrl.u32 %v1238, 30
        %v1240 = vshll.u32 %v1239, 30
        %v1241 = vsub.s32 %v1237, %v1240
        %vm1242 = vcmp.lt.s32.totalorder %v1241, 0
        %v1243 = vsub.s32 0, %v1241
        %v1244 = vsel %vm1242, %v1243, %v1241
        %v1245 = vclz %v1244
        %v1246 = vsub.s32 %v1245, 2
        %vm1247 = vcmp.gt.s32.totalorder 0, %v1246
        %v1248 = vsel %vm1247, 0, %v1246
        %v1249 = vsub.s32 32, %v1248
        %v1250 = vshll.u32 %v1241, %v1248
        %v1251 = vshrl.u32 %v1233, %v1249
        %v1252 = vor.u32 %v1250, %v1251
        %v1253 = vsub.s32 4294967266, %v1248
        %v1254 = vadd.s32 %v1253, 127
        %v1255 = vshll.u32 %v1254, 23
        %v1256 = vor.u32 4788187, %v1255
        %v1257 = vand.u32 2147483647, %v1256
        %v1259 = vcvt.s32.f32 %v1252
        %v1260 = vmul.f32 %v1259, %v1257
        %v1261 = vxor.u32 %v1260, 2147483648
        %v1262 = vsel %vm1141, %v1261, %v1260
        %v1263 = vsub.s32 4, %v1239
        %v1264 = vsel %vm1141, %v1263, %v1239
        %v1265 = vsel %vm1140, %v339, %v1262
        %v1266 = vsel %vm1140, 0, %v1264
        %v1267 = vmul.f32 %v1265, %v1265
        %v1268 = vmul.f32 %v1267, -0.001358992
        %v1269 = vadd.f32 %v1268, 0.041655596
        %v1270 = vmul.f32 %v1267, %v1269
        %v1271 = vadd.f32 %v1270, -0.4999988
        %v1272 = vmul.f32 %v1267, %v1271
        %v1273 = vadd.f32 1.0, %v1272
        %v1274 = vmul.f32 %v1265, %v1265
        %v1275 = vmul.f32 %v1274, -0.00019511016
        %v1276 = vadd.f32 %v1275, 0.008332121
        %v1277 = vmul.f32 %v1274, %v1276
        %v1278 = vadd.f32 %v1277, -0.16666654
        %v1279 = vmul.f32 %v1274, %v1278
        %v1280 = vadd.f32 %v1279, 1.0
        %v1281 = vmul.f32 %v1280, %v1265
        %vm1282 = vweird.f32 %v339
        %v1283 = vadd.s32 %v1266, 3
        %v1284 = vand.u32 %v1283, 3
        %vm1285 = vcmp.lt.s32.totalorder %v1284, 2
        %vm1286 = vcmp.eq.s32.totalorder %v1284, 0
        %v1287 = vxor.u32 %v1281, 2147483648
        %v1288 = vsel %vm1286, %v1273, %v1287
        %vm1289 = vcmp.eq.s32.totalorder %v1284, 2
        %v1290 = vxor.u32 %v1273, 2147483648
        %v1291 = vsel %vm1289, %v1290, %v1281
        %v1292 = vsel %vm1285, %v1288, %v1291
        %v1293 = vsel %vm1282, nan, %v1292
        %v1294 = vand.u32 2147483647, %v340
        %vm1295 = vcmp.le.f32.partialorder %v1294, 0.7853982
        %vm1296 = vcmp.lt.s32.totalorder %v340, 0
        %v1297 = vand.u32 %v340, 2139095040
        %v1298 = vshrl.u32 %v1297, 23
        %v1299 = vsub.s32 %v1298, 127
        %v1300 = vand.u32 2147483647, %v340
        %v1301 = vand.u32 %v1300, 8388607
        %v1302 = vor.u32 %v1301, 8388608
        %v1303 = vsub.s32 0, %v1302
        %v1304 = vadd.s32 %v1299, 1
        %vm1305 = vcmp.gt.s32.totalorder %v1304, 0
        %v1306 = vsel %vm1305, %v1304, 0
        %v1307 = vshrl.u32 %v1306, 5
        %v1308 = vand.u32 %v1306, 31
        %v1309 = vsub.s32 32, %v1308
        %v1310 = vshrl.u32 683565275, %v1309
        %v1311 = vshll.u32 683565275, %v1308
        %v1312 = vshrl.u32 2475754826, %v1309
        %v1313 = vor.u32 %v1311, %v1312
        %v1314 = vshll.u32 2475754826, %v1308
        %v1315 = vshrl.u32 2131351028, %v1309
        %v1316 = vor.u32 %v1314, %v1315
        %v1317 = vshll.u32 2131351028, %v1308
        %v1318 = vshrl.u32 2102212464, %v1309
        %v1319 = vor.u32 %v1317, %v1318
        %v1320 = vshll.u32 2102212464, %v1308
        %v1321 = vshrl.u32 920167782, %v1309
        %v1322 = vor.u32 %v1320, %v1321
        %v1323 = vshll.u32 920167782, %v1308
        %v1324 = vshrl.u32 1326507024, %v1309
        %v1325 = vor.u32 %v1323, %v1324
        %vm1326 = vcmp.lt.s32.totalorder %v1307, 1
        %vm1327 = vcmp.lt.s32.totalorder %v1307, 2
        %vm1328 = vcmp.lt.s32.totalorder %v1307, 3
        %vm1329 = vcmp.lt.s32.totalorder %v1307, 4
        %v1330 = vsel %vm1326, %v1310, %v1313
        %v1331 = vsel %vm1329, %v1319, 2102212464
        %v1332 = vsel %vm1328, %v1316, %v1331
        %v1333 = vsel %vm1327, %v1330, %v1332
        %v1334 = vsel %vm1326, %v1313, %v1316
        %v1335 = vsel %vm1329, %v1322, 920167782
        %v1336 = vsel %vm1328, %v1319, %v1335
        %v1337 = vsel %vm1327, %v1334, %v1336
        %v1338 = vsel %vm1326, %v1316, %v1319
        %v1339 = vsel %vm1329, %v1325, 1326507024
        %v1340 = vsel %vm1328, %v1322, %v1339
        %v1341 = vsel %vm1327, %v1338, %v1340
        %v1342 = vshll.u32 %v1302, 8
        %v1343 = vand.u32 %v1342, 65535
        %v1344 = vshrl.u32 %v1342, 16
        %v1345 = vand.u32 %v1341, 65535
        %v1346 = vshrl.u32 %v1341, 16
        %v1347 = vmul.u32 %v1343, %v1345
        %v1348 = vmul.u32 %v1343, %v1346
        %v1349 = vmul.u32 %v1344, %v1345
        %v1350 = vmul.u32 %v1344, %v1346
        %v1351 = vshll.u32 %v1348, 16
        %v1352 = vshrl.u32 %v1348, 16
        %v1353 = vshll.u32 %v1349, 16
        %v1354 = vshrl.u32 %v1349, 16
        %vm1355 = vc.u32 %v1347, %v1351
        %v1356 = vsel %vm1355, 1, 0
        %v1357 = vadd.s32 %v1347, %v1351
        %v1358 = vadd.s32 %v1350, %v1356
        %vm1359 = vc.u32 %v1357, %v1353
        %v1360 = vsel %vm1359, 1, 0
        %v1361 = vadd.s32 %v1357, %v1353
        %v1362 = vadd.s32 %v1358, %v1360
        %v1363 = vadd.s32 %v1362, %v1352
        %v1364 = vadd.s32 %v1363, %v1354
        %v1365 = vand.u32 %v1342, 65535
        %v1366 = vshrl.u32 %v1342, 16
        %v1367 = vand.u32 %v1337, 65535
        %v1368 = vshrl.u32 %v1337, 16
        %v1369 = vmul.u32 %v1365, %v1367
        %v1370 = vmul.u32 %v1365, %v1368
        %v1371 = vmul.u32 %v1366, %v1367
        %v1372 = vmul.u32 %v1366, %v1368
        %v1373 = vshll.u32 %v1370, 16
        %v1374 = vshrl.u32 %v1370, 16
        %v1375 = vshll.u32 %v1371, 16
        %v1376 = vshrl.u32 %v1371, 16
        %vm1377 = vc.u32 %v1369, %v1373
        %v1378 = vsel %vm1377, 1, 0
        %v1379 = vadd.s32 %v1369, %v1373
        %v1380 = vadd.s32 %v1372, %v1378
        %vm1381 = vc.u32 %v1379, %v1375
        %v1382 = vsel %vm1381, 1, 0
        %v1383 = vadd.s32 %v1379, %v1375
        %v1384 = vadd.s32 %v1380, %v1382
        %v1385 = vadd.s32 %v1384, %v1374
        %v1386 = vadd.s32 %v1385, %v1376
        %v1387 = vmul.u32 %v1342, %v1333
        %v1388 = vadd.s32 %v1364, %v1383
        %vm1389 = vc.u32 %v1364, %v1383
        %v1390 = vadd.s32 %v1386, 1
        %v1391 = vsel %vm1389, %v1390, %v1386
        %v1392 = vadd.s32 %v1387, %v1391
        %v1393 = vadd.s32 %v1392, 536870912
        %v1394 = vshrl.u32 %v1393, 30
        %v1395 = vshll.u32 %v1394, 30
        %v1396 = vsub.s32 %v1392, %v1395
        %vm1397 = vcmp.lt.s32.totalorder %v1396, 0
        %v1398 = vsub.s32 0, %v1396
        %v1399 = vsel %vm1397, %v1398, %v1396
        %v1400 = vclz %v1399
        %v1401 = vsub.s32 %v1400, 2
        %vm1402 = vcmp.gt.s32.totalorder 0, %v1401
        %v1403 = vsel %vm1402, 0, %v1401
        %v1404 = vsub.s32 32, %v1403
        %v1405 = vshll.u32 %v1396, %v1403
        %v1406 = vshrl.u32 %v1388, %v1404
        %v1407 = vor.u32 %v1405, %v1406
        %v1408 = vsub.s32 4294967266, %v1403
        %v1409 = vadd.s32 %v1408, 127
        %v1410 = vshll.u32 %v1409, 23
        %v1411 = vor.u32 4788187, %v1410
        %v1412 = vand.u32 2147483647, %v1411
        %v1414 = vcvt.s32.f32 %v1407
        %v1415 = vmul.f32 %v1414, %v1412
        %v1416 = vxor.u32 %v1415, 2147483648
        %v1417 = vsel %vm1296, %v1416, %v1415
        %v1418 = vsub.s32 4, %v1394
        %v1419 = vsel %vm1296, %v1418, %v1394
        %v1420 = vsel %vm1295, %v340, %v1417
        %v1421 = vsel %vm1295, 0, %v1419
        %v1422 = vmul.f32 %v1420, %v1420
        %v1423 = vmul.f32 %v1422, -0.001358992
        %v1424 = vadd.f32 %v1423, 0.041655596
        %v1425 = vmul.f32 %v1422, %v1424
        %v1426 = vadd.f32 %v1425, -0.4999988
        %v1427 = vmul.f32 %v1422, %v1426
        %v1428 = vadd.f32 1.0, %v1427
        %v1429 = vmul.f32 %v1420, %v1420
        %v1430 = vmul.f32 %v1429, -0.00019511016
        %v1431 = vadd.f32 %v1430, 0.008332121
        %v1432 = vmul.f32 %v1429, %v1431
        %v1433 = vadd.f32 %v1432, -0.16666654
        %v1434 = vmul.f32 %v1429, %v1433
        %v1435 = vadd.f32 %v1434, 1.0
        %v1436 = vmul.f32 %v1435, %v1420
        %vm1437 = vweird.f32 %v340
        %v1438 = vadd.s32 %v1421, 3
        %v1439 = vand.u32 %v1438, 3
        %vm1440 = vcmp.lt.s32.totalorder %v1439, 2
        %vm1441 = vcmp.eq.s32.totalorder %v1439, 0
        %v1442 = vxor.u32 %v1436, 2147483648
        %v1443 = vsel %vm1441, %v1428, %v1442
        %vm1444 = vcmp.eq.s32.totalorder %v1439, 2
        %v1445 = vxor.u32 %v1428, 2147483648
        %v1446 = vsel %vm1444, %v1445, %v1436
        %v1447 = vsel %vm1440, %v1443, %v1446
        %v1448 = vsel %vm1437, nan, %v1447
        %v1449 = vand.u32 2147483647, %v341
        %vm1450 = vcmp.le.f32.partialorder %v1449, 0.7853982
        %vm1451 = vcmp.lt.s32.totalorder %v341, 0
        %v1452 = vand.u32 %v341, 2139095040
        %v1453 = vshrl.u32 %v1452, 23
        %v1454 = vsub.s32 %v1453, 127
        %v1455 = vand.u32 2147483647, %v341
        %v1456 = vand.u32 %v1455, 8388607
        %v1457 = vor.u32 %v1456, 8388608
        %v1458 = vsub.s32 0, %v1457
        %v1459 = vadd.s32 %v1454, 1
        %vm1460 = vcmp.gt.s32.totalorder %v1459, 0
        %v1461 = vsel %vm1460, %v1459, 0
        %v1462 = vshrl.u32 %v1461, 5
        %v1463 = vand.u32 %v1461, 31
        %v1464 = vsub.s32 32, %v1463
        %v1465 = vshrl.u32 683565275, %v1464
        %v1466 = vshll.u32 683565275, %v1463
        %v1467 = vshrl.u32 2475754826, %v1464
        %v1468 = vor.u32 %v1466, %v1467
        %v1469 = vshll.u32 2475754826, %v1463
        %v1470 = vshrl.u32 2131351028, %v1464
        %v1471 = vor.u32 %v1469, %v1470
        %v1472 = vshll.u32 2131351028, %v1463
        %v1473 = vshrl.u32 2102212464, %v1464
        %v1474 = vor.u32 %v1472, %v1473
        %v1475 = vshll.u32 2102212464, %v1463
        %v1476 = vshrl.u32 920167782, %v1464
        %v1477 = vor.u32 %v1475, %v1476
        %v1478 = vshll.u32 920167782, %v1463
        %v1479 = vshrl.u32 1326507024, %v1464
        %v1480 = vor.u32 %v1478, %v1479
        %vm1481 = vcmp.lt.s32.totalorder %v1462, 1
        %vm1482 = vcmp.lt.s32.totalorder %v1462, 2
        %vm1483 = vcmp.lt.s32.totalorder %v1462, 3
        %vm1484 = vcmp.lt.s32.totalorder %v1462, 4
        %v1485 = vsel %vm1481, %v1465, %v1468
        %v1486 = vsel %vm1484, %v1474, 2102212464
        %v1487 = vsel %vm1483, %v1471, %v1486
        %v1488 = vsel %vm1482, %v1485, %v1487
        %v1489 = vsel %vm1481, %v1468, %v1471
        %v1490 = vsel %vm1484, %v1477, 920167782
        %v1491 = vsel %vm1483, %v1474, %v1490
        %v1492 = vsel %vm1482, %v1489, %v1491
        %v1493 = vsel %vm1481, %v1471, %v1474
        %v1494 = vsel %vm1484, %v1480, 1326507024
        %v1495 = vsel %vm1483, %v1477, %v1494
        %v1496 = vsel %vm1482, %v1493, %v1495
        %v1497 = vshll.u32 %v1457, 8
        %v1498 = vand.u32 %v1497, 65535
        %v1499 = vshrl.u32 %v1497, 16
        %v1500 = vand.u32 %v1496, 65535
        %v1501 = vshrl.u32 %v1496, 16
        %v1502 = vmul.u32 %v1498, %v1500
        %v1503 = vmul.u32 %v1498, %v1501
        %v1504 = vmul.u32 %v1499, %v1500
        %v1505 = vmul.u32 %v1499, %v1501
        %v1506 = vshll.u32 %v1503, 16
        %v1507 = vshrl.u32 %v1503, 16
        %v1508 = vshll.u32 %v1504, 16
        %v1509 = vshrl.u32 %v1504, 16
        %vm1510 = vc.u32 %v1502, %v1506
        %v1511 = vsel %vm1510, 1, 0
        %v1512 = vadd.s32 %v1502, %v1506
        %v1513 = vadd.s32 %v1505, %v1511
        %vm1514 = vc.u32 %v1512, %v1508
        %v1515 = vsel %vm1514, 1, 0
        %v1516 = vadd.s32 %v1512, %v1508
        %v1517 = vadd.s32 %v1513, %v1515
        %v1518 = vadd.s32 %v1517, %v1507
        %v1519 = vadd.s32 %v1518, %v1509
        %v1520 = vand.u32 %v1497, 65535
        %v1521 = vshrl.u32 %v1497, 16
        %v1522 = vand.u32 %v1492, 65535
        %v1523 = vshrl.u32 %v1492, 16
        %v1524 = vmul.u32 %v1520, %v1522
        %v1525 = vmul.u32 %v1520, %v1523
        %v1526 = vmul.u32 %v1521, %v1522
        %v1527 = vmul.u32 %v1521, %v1523
        %v1528 = vshll.u32 %v1525, 16
        %v1529 = vshrl.u32 %v1525, 16
        %v1530 = vshll.u32 %v1526, 16
        %v1531 = vshrl.u32 %v1526, 16
        %vm1532 = vc.u32 %v1524, %v1528
        %v1533 = vsel %vm1532, 1, 0
        %v1534 = vadd.s32 %v1524, %v1528
        %v1535 = vadd.s32 %v1527, %v1533
        %vm1536 = vc.u32 %v1534, %v1530
        %v1537 = vsel %vm1536, 1, 0
        %v1538 = vadd.s32 %v1534, %v1530
        %v1539 = vadd.s32 %v1535, %v1537
        %v1540 = vadd.s32 %v1539, %v1529
        %v1541 = vadd.s32 %v1540, %v1531
        %v1542 = vmul.u32 %v1497, %v1488
        %v1543 = vadd.s32 %v1519, %v1538
        %vm1544 = vc.u32 %v1519, %v1538
        %v1545 = vadd.s32 %v1541, 1
        %v1546 = vsel %vm1544, %v1545, %v1541
        %v1547 = vadd.s32 %v1542, %v1546
        %v1548 = vadd.s32 %v1547, 536870912
        %v1549 = vshrl.u32 %v1548, 30
        %v1550 = vshll.u32 %v1549, 30
        %v1551 = vsub.s32 %v1547, %v1550
        %vm1552 = vcmp.lt.s32.totalorder %v1551, 0
        %v1553 = vsub.s32 0, %v1551
        %v1554 = vsel %vm1552, %v1553, %v1551
        %v1555 = vclz %v1554
        %v1556 = vsub.s32 %v1555, 2
        %vm1557 = vcmp.gt.s32.totalorder 0, %v1556
        %v1558 = vsel %vm1557, 0, %v1556
        %v1559 = vsub.s32 32, %v1558
        %v1560 = vshll.u32 %v1551, %v1558
        %v1561 = vshrl.u32 %v1543, %v1559
        %v1562 = vor.u32 %v1560, %v1561
        %v1563 = vsub.s32 4294967266, %v1558
        %v1564 = vadd.s32 %v1563, 127
        %v1565 = vshll.u32 %v1564, 23
        %v1566 = vor.u32 4788187, %v1565
        %v1567 = vand.u32 2147483647, %v1566
        %v1569 = vcvt.s32.f32 %v1562
        %v1570 = vmul.f32 %v1569, %v1567
        %v1571 = vxor.u32 %v1570, 2147483648
        %v1572 = vsel %vm1451, %v1571, %v1570
        %v1573 = vsub.s32 4, %v1549
        %v1574 = vsel %vm1451, %v1573, %v1549
        %v1575 = vsel %vm1450, %v341, %v1572
        %v1576 = vsel %vm1450, 0, %v1574
        %v1577 = vmul.f32 %v1575, %v1575
        %v1578 = vmul.f32 %v1577, -0.001358992
        %v1579 = vadd.f32 %v1578, 0.041655596
        %v1580 = vmul.f32 %v1577, %v1579
        %v1581 = vadd.f32 %v1580, -0.4999988
        %v1582 = vmul.f32 %v1577, %v1581
        %v1583 = vadd.f32 1.0, %v1582
        %v1584 = vmul.f32 %v1575, %v1575
        %v1585 = vmul.f32 %v1584, -0.00019511016
        %v1586 = vadd.f32 %v1585, 0.008332121
        %v1587 = vmul.f32 %v1584, %v1586
        %v1588 = vadd.f32 %v1587, -0.16666654
        %v1589 = vmul.f32 %v1584, %v1588
        %v1590 = vadd.f32 %v1589, 1.0
        %v1591 = vmul.f32 %v1590, %v1575
        %vm1592 = vweird.f32 %v341
        %v1593 = vadd.s32 %v1576, 3
        %v1594 = vand.u32 %v1593, 3
        %vm1595 = vcmp.lt.s32.totalorder %v1594, 2
        %vm1596 = vcmp.eq.s32.totalorder %v1594, 0
        %v1597 = vxor.u32 %v1591, 2147483648
        %v1598 = vsel %vm1596, %v1583, %v1597
        %vm1599 = vcmp.eq.s32.totalorder %v1594, 2
        %v1600 = vxor.u32 %v1583, 2147483648
        %v1601 = vsel %vm1599, %v1600, %v1591
        %v1602 = vsel %vm1595, %v1598, %v1601
        %v1603 = vsel %vm1592, nan, %v1602
        %v1604 = vand.u32 2147483647, %v342
        %vm1605 = vcmp.le.f32.partialorder %v1604, 0.7853982
        %vm1606 = vcmp.lt.s32.totalorder %v342, 0
        %v1607 = vand.u32 %v342, 2139095040
        %v1608 = vshrl.u32 %v1607, 23
        %v1609 = vsub.s32 %v1608, 127
        %v1610 = vand.u32 2147483647, %v342
        %v1611 = vand.u32 %v1610, 8388607
        %v1612 = vor.u32 %v1611, 8388608
        %v1613 = vsub.s32 0, %v1612
        %v1614 = vadd.s32 %v1609, 1
        %vm1615 = vcmp.gt.s32.totalorder %v1614, 0
        %v1616 = vsel %vm1615, %v1614, 0
        %v1617 = vshrl.u32 %v1616, 5
        %v1618 = vand.u32 %v1616, 31
        %v1619 = vsub.s32 32, %v1618
        %v1620 = vshrl.u32 683565275, %v1619
        %v1621 = vshll.u32 683565275, %v1618
        %v1622 = vshrl.u32 2475754826, %v1619
        %v1623 = vor.u32 %v1621, %v1622
        %v1624 = vshll.u32 2475754826, %v1618
        %v1625 = vshrl.u32 2131351028, %v1619
        %v1626 = vor.u32 %v1624, %v1625
        %v1627 = vshll.u32 2131351028, %v1618
        %v1628 = vshrl.u32 2102212464, %v1619
        %v1629 = vor.u32 %v1627, %v1628
        %v1630 = vshll.u32 2102212464, %v1618
        %v1631 = vshrl.u32 920167782, %v1619
        %v1632 = vor.u32 %v1630, %v1631
        %v1633 = vshll.u32 920167782, %v1618
        %v1634 = vshrl.u32 1326507024, %v1619
        %v1635 = vor.u32 %v1633, %v1634
        %vm1636 = vcmp.lt.s32.totalorder %v1617, 1
        %vm1637 = vcmp.lt.s32.totalorder %v1617, 2
        %vm1638 = vcmp.lt.s32.totalorder %v1617, 3
        %vm1639 = vcmp.lt.s32.totalorder %v1617, 4
        %v1640 = vsel %vm1636, %v1620, %v1623
        %v1641 = vsel %vm1639, %v1629, 2102212464
        %v1642 = vsel %vm1638, %v1626, %v1641
        %v1643 = vsel %vm1637, %v1640, %v1642
        %v1644 = vsel %vm1636, %v1623, %v1626
        %v1645 = vsel %vm1639, %v1632, 920167782
        %v1646 = vsel %vm1638, %v1629, %v1645
        %v1647 = vsel %vm1637, %v1644, %v1646
        %v1648 = vsel %vm1636, %v1626, %v1629
        %v1649 = vsel %vm1639, %v1635, 1326507024
        %v1650 = vsel %vm1638, %v1632, %v1649
        %v1651 = vsel %vm1637, %v1648, %v1650
        %v1652 = vshll.u32 %v1612, 8
        %v1653 = vand.u32 %v1652, 65535
        %v1654 = vshrl.u32 %v1652, 16
        %v1655 = vand.u32 %v1651, 65535
        %v1656 = vshrl.u32 %v1651, 16
        %v1657 = vmul.u32 %v1653, %v1655
        %v1658 = vmul.u32 %v1653, %v1656
        %v1659 = vmul.u32 %v1654, %v1655
        %v1660 = vmul.u32 %v1654, %v1656
        %v1661 = vshll.u32 %v1658, 16
        %v1662 = vshrl.u32 %v1658, 16
        %v1663 = vshll.u32 %v1659, 16
        %v1664 = vshrl.u32 %v1659, 16
        %vm1665 = vc.u32 %v1657, %v1661
        %v1666 = vsel %vm1665, 1, 0
        %v1667 = vadd.s32 %v1657, %v1661
        %v1668 = vadd.s32 %v1660, %v1666
        %vm1669 = vc.u32 %v1667, %v1663
        %v1670 = vsel %vm1669, 1, 0
        %v1671 = vadd.s32 %v1667, %v1663
        %v1672 = vadd.s32 %v1668, %v1670
        %v1673 = vadd.s32 %v1672, %v1662
        %v1674 = vadd.s32 %v1673, %v1664
        %v1675 = vand.u32 %v1652, 65535
        %v1676 = vshrl.u32 %v1652, 16
        %v1677 = vand.u32 %v1647, 65535
        %v1678 = vshrl.u32 %v1647, 16
        %v1679 = vmul.u32 %v1675, %v1677
        %v1680 = vmul.u32 %v1675, %v1678
        %v1681 = vmul.u32 %v1676, %v1677
        %v1682 = vmul.u32 %v1676, %v1678
        %v1683 = vshll.u32 %v1680, 16
        %v1684 = vshrl.u32 %v1680, 16
        %v1685 = vshll.u32 %v1681, 16
        %v1686 = vshrl.u32 %v1681, 16
        %vm1687 = vc.u32 %v1679, %v1683
        %v1688 = vsel %vm1687, 1, 0
        %v1689 = vadd.s32 %v1679, %v1683
        %v1690 = vadd.s32 %v1682, %v1688
        %vm1691 = vc.u32 %v1689, %v1685
        %v1692 = vsel %vm1691, 1, 0
        %v1693 = vadd.s32 %v1689, %v1685
        %v1694 = vadd.s32 %v1690, %v1692
        %v1695 = vadd.s32 %v1694, %v1684
        %v1696 = vadd.s32 %v1695, %v1686
        %v1697 = vmul.u32 %v1652, %v1643
        %v1698 = vadd.s32 %v1674, %v1693
        %vm1699 = vc.u32 %v1674, %v1693
        %v1700 = vadd.s32 %v1696, 1
        %v1701 = vsel %vm1699, %v1700, %v1696
        %v1702 = vadd.s32 %v1697, %v1701
        %v1703 = vadd.s32 %v1702, 536870912
        %v1704 = vshrl.u32 %v1703, 30
        %v1705 = vshll.u32 %v1704, 30
        %v1706 = vsub.s32 %v1702, %v1705
        %vm1707 = vcmp.lt.s32.totalorder %v1706, 0
        %v1708 = vsub.s32 0, %v1706
        %v1709 = vsel %vm1707, %v1708, %v1706
        %v1710 = vclz %v1709
        %v1711 = vsub.s32 %v1710, 2
        %vm1712 = vcmp.gt.s32.totalorder 0, %v1711
        %v1713 = vsel %vm1712, 0, %v1711
        %v1714 = vsub.s32 32, %v1713
        %v1715 = vshll.u32 %v1706, %v1713
        %v1716 = vshrl.u32 %v1698, %v1714
        %v1717 = vor.u32 %v1715, %v1716
        %v1718 = vsub.s32 4294967266, %v1713
        %v1719 = vadd.s32 %v1718, 127
        %v1720 = vshll.u32 %v1719, 23
        %v1721 = vor.u32 4788187, %v1720
        %v1722 = vand.u32 2147483647, %v1721
        %v1724 = vcvt.s32.f32 %v1717
        %v1725 = vmul.f32 %v1724, %v1722
        %v1726 = vxor.u32 %v1725, 2147483648
        %v1727 = vsel %vm1606, %v1726, %v1725
        %v1728 = vsub.s32 4, %v1704
        %v1729 = vsel %vm1606, %v1728, %v1704
        %v1730 = vsel %vm1605, %v342, %v1727
        %v1731 = vsel %vm1605, 0, %v1729
        %v1732 = vmul.f32 %v1730, %v1730
        %v1733 = vmul.f32 %v1732, -0.001358992
        %v1734 = vadd.f32 %v1733, 0.041655596
        %v1735 = vmul.f32 %v1732, %v1734
        %v1736 = vadd.f32 %v1735, -0.4999988
        %v1737 = vmul.f32 %v1732, %v1736
        %v1738 = vadd.f32 1.0, %v1737
        %v1739 = vmul.f32 %v1730, %v1730
        %v1740 = vmul.f32 %v1739, -0.00019511016
        %v1741 = vadd.f32 %v1740, 0.008332121
        %v1742 = vmul.f32 %v1739, %v1741
        %v1743 = vadd.f32 %v1742, -0.16666654
        %v1744 = vmul.f32 %v1739, %v1743
        %v1745 = vadd.f32 %v1744, 1.0
        %v1746 = vmul.f32 %v1745, %v1730
        %vm1747 = vweird.f32 %v342
        %v1748 = vadd.s32 %v1731, 3
        %v1749 = vand.u32 %v1748, 3
        %vm1750 = vcmp.lt.s32.totalorder %v1749, 2
        %vm1751 = vcmp.eq.s32.totalorder %v1749, 0
        %v1752 = vxor.u32 %v1746, 2147483648
        %v1753 = vsel %vm1751, %v1738, %v1752
        %vm1754 = vcmp.eq.s32.totalorder %v1749, 2
        %v1755 = vxor.u32 %v1738, 2147483648
        %v1756 = vsel %vm1754, %v1755, %v1746
        %v1757 = vsel %vm1750, %v1753, %v1756
        %v1758 = vsel %vm1747, nan, %v1757
        %v1759 = vand.u32 2147483647, %v343
        %vm1760 = vcmp.le.f32.partialorder %v1759, 0.7853982
        %vm1761 = vcmp.lt.s32.totalorder %v343, 0
        %v1762 = vand.u32 %v343, 2139095040
        %v1763 = vshrl.u32 %v1762, 23
        %v1764 = vsub.s32 %v1763, 127
        %v1765 = vand.u32 2147483647, %v343
        %v1766 = vand.u32 %v1765, 8388607
        %v1767 = vor.u32 %v1766, 8388608
        %v1768 = vsub.s32 0, %v1767
        %v1769 = vadd.s32 %v1764, 1
        %vm1770 = vcmp.gt.s32.totalorder %v1769, 0
        %v1771 = vsel %vm1770, %v1769, 0
        %v1772 = vshrl.u32 %v1771, 5
        %v1773 = vand.u32 %v1771, 31
        %v1774 = vsub.s32 32, %v1773
        %v1775 = vshrl.u32 683565275, %v1774
        %v1776 = vshll.u32 683565275, %v1773
        %v1777 = vshrl.u32 2475754826, %v1774
        %v1778 = vor.u32 %v1776, %v1777
        %v1779 = vshll.u32 2475754826, %v1773
        %v1780 = vshrl.u32 2131351028, %v1774
        %v1781 = vor.u32 %v1779, %v1780
        %v1782 = vshll.u32 2131351028, %v1773
        %v1783 = vshrl.u32 2102212464, %v1774
        %v1784 = vor.u32 %v1782, %v1783
        %v1785 = vshll.u32 2102212464, %v1773
        %v1786 = vshrl.u32 920167782, %v1774
        %v1787 = vor.u32 %v1785, %v1786
        %v1788 = vshll.u32 920167782, %v1773
        %v1789 = vshrl.u32 1326507024, %v1774
        %v1790 = vor.u32 %v1788, %v1789
        %vm1791 = vcmp.lt.s32.totalorder %v1772, 1
        %vm1792 = vcmp.lt.s32.totalorder %v1772, 2
        %vm1793 = vcmp.lt.s32.totalorder %v1772, 3
        %vm1794 = vcmp.lt.s32.totalorder %v1772, 4
        %v1795 = vsel %vm1791, %v1775, %v1778
        %v1796 = vsel %vm1794, %v1784, 2102212464
        %v1797 = vsel %vm1793, %v1781, %v1796
        %v1798 = vsel %vm1792, %v1795, %v1797
        %v1799 = vsel %vm1791, %v1778, %v1781
        %v1800 = vsel %vm1794, %v1787, 920167782
        %v1801 = vsel %vm1793, %v1784, %v1800
        %v1802 = vsel %vm1792, %v1799, %v1801
        %v1803 = vsel %vm1791, %v1781, %v1784
        %v1804 = vsel %vm1794, %v1790, 1326507024
        %v1805 = vsel %vm1793, %v1787, %v1804
        %v1806 = vsel %vm1792, %v1803, %v1805
        %v1807 = vshll.u32 %v1767, 8
        %v1808 = vand.u32 %v1807, 65535
        %v1809 = vshrl.u32 %v1807, 16
        %v1810 = vand.u32 %v1806, 65535
        %v1811 = vshrl.u32 %v1806, 16
        %v1812 = vmul.u32 %v1808, %v1810
        %v1813 = vmul.u32 %v1808, %v1811
        %v1814 = vmul.u32 %v1809, %v1810
        %v1815 = vmul.u32 %v1809, %v1811
        %v1816 = vshll.u32 %v1813, 16
        %v1817 = vshrl.u32 %v1813, 16
        %v1818 = vshll.u32 %v1814, 16
        %v1819 = vshrl.u32 %v1814, 16
        %vm1820 = vc.u32 %v1812, %v1816
        %v1821 = vsel %vm1820, 1, 0
        %v1822 = vadd.s32 %v1812, %v1816
        %v1823 = vadd.s32 %v1815, %v1821
        %vm1824 = vc.u32 %v1822, %v1818
        %v1825 = vsel %vm1824, 1, 0
        %v1826 = vadd.s32 %v1822, %v1818
        %v1827 = vadd.s32 %v1823, %v1825
        %v1828 = vadd.s32 %v1827, %v1817
        %v1829 = vadd.s32 %v1828, %v1819
        %v1830 = vand.u32 %v1807, 65535
        %v1831 = vshrl.u32 %v1807, 16
        %v1832 = vand.u32 %v1802, 65535
        %v1833 = vshrl.u32 %v1802, 16
        %v1834 = vmul.u32 %v1830, %v1832
        %v1835 = vmul.u32 %v1830, %v1833
        %v1836 = vmul.u32 %v1831, %v1832
        %v1837 = vmul.u32 %v1831, %v1833
        %v1838 = vshll.u32 %v1835, 16
        %v1839 = vshrl.u32 %v1835, 16
        %v1840 = vshll.u32 %v1836, 16
        %v1841 = vshrl.u32 %v1836, 16
        %vm1842 = vc.u32 %v1834, %v1838
        %v1843 = vsel %vm1842, 1, 0
        %v1844 = vadd.s32 %v1834, %v1838
        %v1845 = vadd.s32 %v1837, %v1843
        %vm1846 = vc.u32 %v1844, %v1840
        %v1847 = vsel %vm1846, 1, 0
        %v1848 = vadd.s32 %v1844, %v1840
        %v1849 = vadd.s32 %v1845, %v1847
        %v1850 = vadd.s32 %v1849, %v1839
        %v1851 = vadd.s32 %v1850, %v1841
        %v1852 = vmul.u32 %v1807, %v1798
        %v1853 = vadd.s32 %v1829, %v1848
        %vm1854 = vc.u32 %v1829, %v1848
        %v1855 = vadd.s32 %v1851, 1
        %v1856 = vsel %vm1854, %v1855, %v1851
        %v1857 = vadd.s32 %v1852, %v1856
        %v1858 = vadd.s32 %v1857, 536870912
        %v1859 = vshrl.u32 %v1858, 30
        %v1860 = vshll.u32 %v1859, 30
        %v1861 = vsub.s32 %v1857, %v1860
        %vm1862 = vcmp.lt.s32.totalorder %v1861, 0
        %v1863 = vsub.s32 0, %v1861
        %v1864 = vsel %vm1862, %v1863, %v1861
        %v1865 = vclz %v1864
        %v1866 = vsub.s32 %v1865, 2
        %vm1867 = vcmp.gt.s32.totalorder 0, %v1866
        %v1868 = vsel %vm1867, 0, %v1866
        %v1869 = vsub.s32 32, %v1868
        %v1870 = vshll.u32 %v1861, %v1868
        %v1871 = vshrl.u32 %v1853, %v1869
        %v1872 = vor.u32 %v1870, %v1871
        %v1873 = vsub.s32 4294967266, %v1868
        %v1874 = vadd.s32 %v1873, 127
        %v1875 = vshll.u32 %v1874, 23
        %v1876 = vor.u32 4788187, %v1875
        %v1877 = vand.u32 2147483647, %v1876
        %v1879 = vcvt.s32.f32 %v1872
        %v1880 = vmul.f32 %v1879, %v1877
        %v1881 = vxor.u32 %v1880, 2147483648
        %v1882 = vsel %vm1761, %v1881, %v1880
        %v1883 = vsub.s32 4, %v1859
        %v1884 = vsel %vm1761, %v1883, %v1859
        %v1885 = vsel %vm1760, %v343, %v1882
        %v1886 = vsel %vm1760, 0, %v1884
        %v1887 = vmul.f32 %v1885, %v1885
        %v1888 = vmul.f32 %v1887, -0.001358992
        %v1889 = vadd.f32 %v1888, 0.041655596
        %v1890 = vmul.f32 %v1887, %v1889
        %v1891 = vadd.f32 %v1890, -0.4999988
        %v1892 = vmul.f32 %v1887, %v1891
        %v1893 = vadd.f32 1.0, %v1892
        %v1894 = vmul.f32 %v1885, %v1885
        %v1895 = vmul.f32 %v1894, -0.00019511016
        %v1896 = vadd.f32 %v1895, 0.008332121
        %v1897 = vmul.f32 %v1894, %v1896
        %v1898 = vadd.f32 %v1897, -0.16666654
        %v1899 = vmul.f32 %v1894, %v1898
        %v1900 = vadd.f32 %v1899, 1.0
        %v1901 = vmul.f32 %v1900, %v1885
        %vm1902 = vweird.f32 %v343
        %v1903 = vadd.s32 %v1886, 3
        %v1904 = vand.u32 %v1903, 3
        %vm1905 = vcmp.lt.s32.totalorder %v1904, 2
        %vm1906 = vcmp.eq.s32.totalorder %v1904, 0
        %v1907 = vxor.u32 %v1901, 2147483648
        %v1908 = vsel %vm1906, %v1893, %v1907
        %vm1909 = vcmp.eq.s32.totalorder %v1904, 2
        %v1910 = vxor.u32 %v1893, 2147483648
        %v1911 = vsel %vm1909, %v1910, %v1901
        %v1912 = vsel %vm1905, %v1908, %v1911
        %v1913 = vsel %vm1902, nan, %v1912
        %v1914 = vand.u32 2147483647, %v344
        %vm1915 = vcmp.le.f32.partialorder %v1914, 0.7853982
        %vm1916 = vcmp.lt.s32.totalorder %v344, 0
        %v1917 = vand.u32 %v344, 2139095040
        %v1918 = vshrl.u32 %v1917, 23
        %v1919 = vsub.s32 %v1918, 127
        %v1920 = vand.u32 2147483647, %v344
        %v1921 = vand.u32 %v1920, 8388607
        %v1922 = vor.u32 %v1921, 8388608
        %v1923 = vsub.s32 0, %v1922
        %v1924 = vadd.s32 %v1919, 1
        %vm1925 = vcmp.gt.s32.totalorder %v1924, 0
        %v1926 = vsel %vm1925, %v1924, 0
        %v1927 = vshrl.u32 %v1926, 5
        %v1928 = vand.u32 %v1926, 31
        %v1929 = vsub.s32 32, %v1928
        %v1930 = vshrl.u32 683565275, %v1929
        %v1931 = vshll.u32 683565275, %v1928
        %v1932 = vshrl.u32 2475754826, %v1929
        %v1933 = vor.u32 %v1931, %v1932
        %v1934 = vshll.u32 2475754826, %v1928
        %v1935 = vshrl.u32 2131351028, %v1929
        %v1936 = vor.u32 %v1934, %v1935
        %v1937 = vshll.u32 2131351028, %v1928
        %v1938 = vshrl.u32 2102212464, %v1929
        %v1939 = vor.u32 %v1937, %v1938
        %v1940 = vshll.u32 2102212464, %v1928
        %v1941 = vshrl.u32 920167782, %v1929
        %v1942 = vor.u32 %v1940, %v1941
        %v1943 = vshll.u32 920167782, %v1928
        %v1944 = vshrl.u32 1326507024, %v1929
        %v1945 = vor.u32 %v1943, %v1944
        %vm1946 = vcmp.lt.s32.totalorder %v1927, 1
        %vm1947 = vcmp.lt.s32.totalorder %v1927, 2
        %vm1948 = vcmp.lt.s32.totalorder %v1927, 3
        %vm1949 = vcmp.lt.s32.totalorder %v1927, 4
        %v1950 = vsel %vm1946, %v1930, %v1933
        %v1951 = vsel %vm1949, %v1939, 2102212464
        %v1952 = vsel %vm1948, %v1936, %v1951
        %v1953 = vsel %vm1947, %v1950, %v1952
        %v1954 = vsel %vm1946, %v1933, %v1936
        %v1955 = vsel %vm1949, %v1942, 920167782
        %v1956 = vsel %vm1948, %v1939, %v1955
        %v1957 = vsel %vm1947, %v1954, %v1956
        %v1958 = vsel %vm1946, %v1936, %v1939
        %v1959 = vsel %vm1949, %v1945, 1326507024
        %v1960 = vsel %vm1948, %v1942, %v1959
        %v1961 = vsel %vm1947, %v1958, %v1960
        %v1962 = vshll.u32 %v1922, 8
        %v1963 = vand.u32 %v1962, 65535
        %v1964 = vshrl.u32 %v1962, 16
        %v1965 = vand.u32 %v1961, 65535
        %v1966 = vshrl.u32 %v1961, 16
        %v1967 = vmul.u32 %v1963, %v1965
        %v1968 = vmul.u32 %v1963, %v1966
        %v1969 = vmul.u32 %v1964, %v1965
        %v1970 = vmul.u32 %v1964, %v1966
        %v1971 = vshll.u32 %v1968, 16
        %v1972 = vshrl.u32 %v1968, 16
        %v1973 = vshll.u32 %v1969, 16
        %v1974 = vshrl.u32 %v1969, 16
        %vm1975 = vc.u32 %v1967, %v1971
        %v1976 = vsel %vm1975, 1, 0
        %v1977 = vadd.s32 %v1967, %v1971
        %v1978 = vadd.s32 %v1970, %v1976
        %vm1979 = vc.u32 %v1977, %v1973
        %v1980 = vsel %vm1979, 1, 0
        %v1981 = vadd.s32 %v1977, %v1973
        %v1982 = vadd.s32 %v1978, %v1980
        %v1983 = vadd.s32 %v1982, %v1972
        %v1984 = vadd.s32 %v1983, %v1974
        %v1985 = vand.u32 %v1962, 65535
        %v1986 = vshrl.u32 %v1962, 16
        %v1987 = vand.u32 %v1957, 65535
        %v1988 = vshrl.u32 %v1957, 16
        %v1989 = vmul.u32 %v1985, %v1987
        %v1990 = vmul.u32 %v1985, %v1988
        %v1991 = vmul.u32 %v1986, %v1987
        %v1992 = vmul.u32 %v1986, %v1988
        %v1993 = vshll.u32 %v1990, 16
        %v1994 = vshrl.u32 %v1990, 16
        %v1995 = vshll.u32 %v1991, 16
        %v1996 = vshrl.u32 %v1991, 16
        %vm1997 = vc.u32 %v1989, %v1993
        %v1998 = vsel %vm1997, 1, 0
        %v1999 = vadd.s32 %v1989, %v1993
        %v2000 = vadd.s32 %v1992, %v1998
        %vm2001 = vc.u32 %v1999, %v1995
        %v2002 = vsel %vm2001, 1, 0
        %v2003 = vadd.s32 %v1999, %v1995
        %v2004 = vadd.s32 %v2000, %v2002
        %v2005 = vadd.s32 %v2004, %v1994
        %v2006 = vadd.s32 %v2005, %v1996
        %v2007 = vmul.u32 %v1962, %v1953
        %v2008 = vadd.s32 %v1984, %v2003
        %vm2009 = vc.u32 %v1984, %v2003
        %v2010 = vadd.s32 %v2006, 1
        %v2011 = vsel %vm2009, %v2010, %v2006
        %v2012 = vadd.s32 %v2007, %v2011
        %v2013 = vadd.s32 %v2012, 536870912
        %v2014 = vshrl.u32 %v2013, 30
        %v2015 = vshll.u32 %v2014, 30
        %v2016 = vsub.s32 %v2012, %v2015
        %vm2017 = vcmp.lt.s32.totalorder %v2016, 0
        %v2018 = vsub.s32 0, %v2016
        %v2019 = vsel %vm2017, %v2018, %v2016
        %v2020 = vclz %v2019
        %v2021 = vsub.s32 %v2020, 2
        %vm2022 = vcmp.gt.s32.totalorder 0, %v2021
        %v2023 = vsel %vm2022, 0, %v2021
        %v2024 = vsub.s32 32, %v2023
        %v2025 = vshll.u32 %v2016, %v2023
        %v2026 = vshrl.u32 %v2008, %v2024
        %v2027 = vor.u32 %v2025, %v2026
        %v2028 = vsub.s32 4294967266, %v2023
        %v2029 = vadd.s32 %v2028, 127
        %v2030 = vshll.u32 %v2029, 23
        %v2031 = vor.u32 4788187, %v2030
        %v2032 = vand.u32 2147483647, %v2031
        %v2034 = vcvt.s32.f32 %v2027
        %v2035 = vmul.f32 %v2034, %v2032
        %v2036 = vxor.u32 %v2035, 2147483648
        %v2037 = vsel %vm1916, %v2036, %v2035
        %v2038 = vsub.s32 4, %v2014
        %v2039 = vsel %vm1916, %v2038, %v2014
        %v2040 = vsel %vm1915, %v344, %v2037
        %v2041 = vsel %vm1915, 0, %v2039
        %v2042 = vmul.f32 %v2040, %v2040
        %v2043 = vmul.f32 %v2042, -0.001358992
        %v2044 = vadd.f32 %v2043, 0.041655596
        %v2045 = vmul.f32 %v2042, %v2044
        %v2046 = vadd.f32 %v2045, -0.4999988
        %v2047 = vmul.f32 %v2042, %v2046
        %v2048 = vadd.f32 1.0, %v2047
        %v2049 = vmul.f32 %v2040, %v2040
        %v2050 = vmul.f32 %v2049, -0.00019511016
        %v2051 = vadd.f32 %v2050, 0.008332121
        %v2052 = vmul.f32 %v2049, %v2051
        %v2053 = vadd.f32 %v2052, -0.16666654
        %v2054 = vmul.f32 %v2049, %v2053
        %v2055 = vadd.f32 %v2054, 1.0
        %v2056 = vmul.f32 %v2055, %v2040
        %vm2057 = vweird.f32 %v344
        %v2058 = vadd.s32 %v2041, 3
        %v2059 = vand.u32 %v2058, 3
        %vm2060 = vcmp.lt.s32.totalorder %v2059, 2
        %vm2061 = vcmp.eq.s32.totalorder %v2059, 0
        %v2062 = vxor.u32 %v2056, 2147483648
        %v2063 = vsel %vm2061, %v2048, %v2062
        %vm2064 = vcmp.eq.s32.totalorder %v2059, 2
        %v2065 = vxor.u32 %v2048, 2147483648
        %v2066 = vsel %vm2064, %v2065, %v2056
        %v2067 = vsel %vm2060, %v2063, %v2066
        %v2068 = vsel %vm2057, nan, %v2067
        %v2069 = vand.u32 2147483647, %v345
        %vm2070 = vcmp.le.f32.partialorder %v2069, 0.7853982
        %vm2071 = vcmp.lt.s32.totalorder %v345, 0
        %v2072 = vand.u32 %v345, 2139095040
        %v2073 = vshrl.u32 %v2072, 23
        %v2074 = vsub.s32 %v2073, 127
        %v2075 = vand.u32 2147483647, %v345
        %v2076 = vand.u32 %v2075, 8388607
        %v2077 = vor.u32 %v2076, 8388608
        %v2078 = vsub.s32 0, %v2077
        %v2079 = vadd.s32 %v2074, 1
        %vm2080 = vcmp.gt.s32.totalorder %v2079, 0
        %v2081 = vsel %vm2080, %v2079, 0
        %v2082 = vshrl.u32 %v2081, 5
        %v2083 = vand.u32 %v2081, 31
        %v2084 = vsub.s32 32, %v2083
        %v2085 = vshrl.u32 683565275, %v2084
        %v2086 = vshll.u32 683565275, %v2083
        %v2087 = vshrl.u32 2475754826, %v2084
        %v2088 = vor.u32 %v2086, %v2087
        %v2089 = vshll.u32 2475754826, %v2083
        %v2090 = vshrl.u32 2131351028, %v2084
        %v2091 = vor.u32 %v2089, %v2090
        %v2092 = vshll.u32 2131351028, %v2083
        %v2093 = vshrl.u32 2102212464, %v2084
        %v2094 = vor.u32 %v2092, %v2093
        %v2095 = vshll.u32 2102212464, %v2083
        %v2096 = vshrl.u32 920167782, %v2084
        %v2097 = vor.u32 %v2095, %v2096
        %v2098 = vshll.u32 920167782, %v2083
        %v2099 = vshrl.u32 1326507024, %v2084
        %v2100 = vor.u32 %v2098, %v2099
        %vm2101 = vcmp.lt.s32.totalorder %v2082, 1
        %vm2102 = vcmp.lt.s32.totalorder %v2082, 2
        %vm2103 = vcmp.lt.s32.totalorder %v2082, 3
        %vm2104 = vcmp.lt.s32.totalorder %v2082, 4
        %v2105 = vsel %vm2101, %v2085, %v2088
        %v2106 = vsel %vm2104, %v2094, 2102212464
        %v2107 = vsel %vm2103, %v2091, %v2106
        %v2108 = vsel %vm2102, %v2105, %v2107
        %v2109 = vsel %vm2101, %v2088, %v2091
        %v2110 = vsel %vm2104, %v2097, 920167782
        %v2111 = vsel %vm2103, %v2094, %v2110
        %v2112 = vsel %vm2102, %v2109, %v2111
        %v2113 = vsel %vm2101, %v2091, %v2094
        %v2114 = vsel %vm2104, %v2100, 1326507024
        %v2115 = vsel %vm2103, %v2097, %v2114
        %v2116 = vsel %vm2102, %v2113, %v2115
        %v2117 = vshll.u32 %v2077, 8
        %v2118 = vand.u32 %v2117, 65535
        %v2119 = vshrl.u32 %v2117, 16
        %v2120 = vand.u32 %v2116, 65535
        %v2121 = vshrl.u32 %v2116, 16
        %v2122 = vmul.u32 %v2118, %v2120
        %v2123 = vmul.u32 %v2118, %v2121
        %v2124 = vmul.u32 %v2119, %v2120
        %v2125 = vmul.u32 %v2119, %v2121
        %v2126 = vshll.u32 %v2123, 16
        %v2127 = vshrl.u32 %v2123, 16
        %v2128 = vshll.u32 %v2124, 16
        %v2129 = vshrl.u32 %v2124, 16
        %vm2130 = vc.u32 %v2122, %v2126
        %v2131 = vsel %vm2130, 1, 0
        %v2132 = vadd.s32 %v2122, %v2126
        %v2133 = vadd.s32 %v2125, %v2131
        %vm2134 = vc.u32 %v2132, %v2128
        %v2135 = vsel %vm2134, 1, 0
        %v2136 = vadd.s32 %v2132, %v2128
        %v2137 = vadd.s32 %v2133, %v2135
        %v2138 = vadd.s32 %v2137, %v2127
        %v2139 = vadd.s32 %v2138, %v2129
        %v2140 = vand.u32 %v2117, 65535
        %v2141 = vshrl.u32 %v2117, 16
        %v2142 = vand.u32 %v2112, 65535
        %v2143 = vshrl.u32 %v2112, 16
        %v2144 = vmul.u32 %v2140, %v2142
        %v2145 = vmul.u32 %v2140, %v2143
        %v2146 = vmul.u32 %v2141, %v2142
        %v2147 = vmul.u32 %v2141, %v2143
        %v2148 = vshll.u32 %v2145, 16
        %v2149 = vshrl.u32 %v2145, 16
        %v2150 = vshll.u32 %v2146, 16
        %v2151 = vshrl.u32 %v2146, 16
        %vm2152 = vc.u32 %v2144, %v2148
        %v2153 = vsel %vm2152, 1, 0
        %v2154 = vadd.s32 %v2144, %v2148
        %v2155 = vadd.s32 %v2147, %v2153
        %vm2156 = vc.u32 %v2154, %v2150
        %v2157 = vsel %vm2156, 1, 0
        %v2158 = vadd.s32 %v2154, %v2150
        %v2159 = vadd.s32 %v2155, %v2157
        %v2160 = vadd.s32 %v2159, %v2149
        %v2161 = vadd.s32 %v2160, %v2151
        %v2162 = vmul.u32 %v2117, %v2108
        %v2163 = vadd.s32 %v2139, %v2158
        %vm2164 = vc.u32 %v2139, %v2158
        %v2165 = vadd.s32 %v2161, 1
        %v2166 = vsel %vm2164, %v2165, %v2161
        %v2167 = vadd.s32 %v2162, %v2166
        %v2168 = vadd.s32 %v2167, 536870912
        %v2169 = vshrl.u32 %v2168, 30
        %v2170 = vshll.u32 %v2169, 30
        %v2171 = vsub.s32 %v2167, %v2170
        %vm2172 = vcmp.lt.s32.totalorder %v2171, 0
        %v2173 = vsub.s32 0, %v2171
        %v2174 = vsel %vm2172, %v2173, %v2171
        %v2175 = vclz %v2174
        %v2176 = vsub.s32 %v2175, 2
        %vm2177 = vcmp.gt.s32.totalorder 0, %v2176
        %v2178 = vsel %vm2177, 0, %v2176
        %v2179 = vsub.s32 32, %v2178
        %v2180 = vshll.u32 %v2171, %v2178
        %v2181 = vshrl.u32 %v2163, %v2179
        %v2182 = vor.u32 %v2180, %v2181
        %v2183 = vsub.s32 4294967266, %v2178
        %v2184 = vadd.s32 %v2183, 127
        %v2185 = vshll.u32 %v2184, 23
        %v2186 = vor.u32 4788187, %v2185
        %v2187 = vand.u32 2147483647, %v2186
        %v2189 = vcvt.s32.f32 %v2182
        %v2190 = vmul.f32 %v2189, %v2187
        %v2191 = vxor.u32 %v2190, 2147483648
        %v2192 = vsel %vm2071, %v2191, %v2190
        %v2193 = vsub.s32 4, %v2169
        %v2194 = vsel %vm2071, %v2193, %v2169
        %v2195 = vsel %vm2070, %v345, %v2192
        %v2196 = vsel %vm2070, 0, %v2194
        %v2197 = vmul.f32 %v2195, %v2195
        %v2198 = vmul.f32 %v2197, -0.001358992
        %v2199 = vadd.f32 %v2198, 0.041655596
        %v2200 = vmul.f32 %v2197, %v2199
        %v2201 = vadd.f32 %v2200, -0.4999988
        %v2202 = vmul.f32 %v2197, %v2201
        %v2203 = vadd.f32 1.0, %v2202
        %v2204 = vmul.f32 %v2195, %v2195
        %v2205 = vmul.f32 %v2204, -0.00019511016
        %v2206 = vadd.f32 %v2205, 0.008332121
        %v2207 = vmul.f32 %v2204, %v2206
        %v2208 = vadd.f32 %v2207, -0.16666654
        %v2209 = vmul.f32 %v2204, %v2208
        %v2210 = vadd.f32 %v2209, 1.0
        %v2211 = vmul.f32 %v2210, %v2195
        %vm2212 = vweird.f32 %v345
        %v2213 = vadd.s32 %v2196, 3
        %v2214 = vand.u32 %v2213, 3
        %vm2215 = vcmp.lt.s32.totalorder %v2214, 2
        %vm2216 = vcmp.eq.s32.totalorder %v2214, 0
        %v2217 = vxor.u32 %v2211, 2147483648
        %v2218 = vsel %vm2216, %v2203, %v2217
        %vm2219 = vcmp.eq.s32.totalorder %v2214, 2
        %v2220 = vxor.u32 %v2203, 2147483648
        %v2221 = vsel %vm2219, %v2220, %v2211
        %v2222 = vsel %vm2215, %v2218, %v2221
        %v2223 = vsel %vm2212, nan, %v2222
        %v2224 = vand.u32 2147483647, %v346
        %vm2225 = vcmp.le.f32.partialorder %v2224, 0.7853982
        %vm2226 = vcmp.lt.s32.totalorder %v346, 0
        %v2227 = vand.u32 %v346, 2139095040
        %v2228 = vshrl.u32 %v2227, 23
        %v2229 = vsub.s32 %v2228, 127
        %v2230 = vand.u32 2147483647, %v346
        %v2231 = vand.u32 %v2230, 8388607
        %v2232 = vor.u32 %v2231, 8388608
        %v2233 = vsub.s32 0, %v2232
        %v2234 = vadd.s32 %v2229, 1
        %vm2235 = vcmp.gt.s32.totalorder %v2234, 0
        %v2236 = vsel %vm2235, %v2234, 0
        %v2237 = vshrl.u32 %v2236, 5
        %v2238 = vand.u32 %v2236, 31
        %v2239 = vsub.s32 32, %v2238
        %v2240 = vshrl.u32 683565275, %v2239
        %v2241 = vshll.u32 683565275, %v2238
        %v2242 = vshrl.u32 2475754826, %v2239
        %v2243 = vor.u32 %v2241, %v2242
        %v2244 = vshll.u32 2475754826, %v2238
        %v2245 = vshrl.u32 2131351028, %v2239
        %v2246 = vor.u32 %v2244, %v2245
        %v2247 = vshll.u32 2131351028, %v2238
        %v2248 = vshrl.u32 2102212464, %v2239
        %v2249 = vor.u32 %v2247, %v2248
        %v2250 = vshll.u32 2102212464, %v2238
        %v2251 = vshrl.u32 920167782, %v2239
        %v2252 = vor.u32 %v2250, %v2251
        %v2253 = vshll.u32 920167782, %v2238
        %v2254 = vshrl.u32 1326507024, %v2239
        %v2255 = vor.u32 %v2253, %v2254
        %vm2256 = vcmp.lt.s32.totalorder %v2237, 1
        %vm2257 = vcmp.lt.s32.totalorder %v2237, 2
        %vm2258 = vcmp.lt.s32.totalorder %v2237, 3
        %vm2259 = vcmp.lt.s32.totalorder %v2237, 4
        %v2260 = vsel %vm2256, %v2240, %v2243
        %v2261 = vsel %vm2259, %v2249, 2102212464
        %v2262 = vsel %vm2258, %v2246, %v2261
        %v2263 = vsel %vm2257, %v2260, %v2262
        %v2264 = vsel %vm2256, %v2243, %v2246
        %v2265 = vsel %vm2259, %v2252, 920167782
        %v2266 = vsel %vm2258, %v2249, %v2265
        %v2267 = vsel %vm2257, %v2264, %v2266
        %v2268 = vsel %vm2256, %v2246, %v2249
        %v2269 = vsel %vm2259, %v2255, 1326507024
        %v2270 = vsel %vm2258, %v2252, %v2269
        %v2271 = vsel %vm2257, %v2268, %v2270
        %v2272 = vshll.u32 %v2232, 8
        %v2273 = vand.u32 %v2272, 65535
        %v2274 = vshrl.u32 %v2272, 16
        %v2275 = vand.u32 %v2271, 65535
        %v2276 = vshrl.u32 %v2271, 16
        %v2277 = vmul.u32 %v2273, %v2275
        %v2278 = vmul.u32 %v2273, %v2276
        %v2279 = vmul.u32 %v2274, %v2275
        %v2280 = vmul.u32 %v2274, %v2276
        %v2281 = vshll.u32 %v2278, 16
        %v2282 = vshrl.u32 %v2278, 16
        %v2283 = vshll.u32 %v2279, 16
        %v2284 = vshrl.u32 %v2279, 16
        %vm2285 = vc.u32 %v2277, %v2281
        %v2286 = vsel %vm2285, 1, 0
        %v2287 = vadd.s32 %v2277, %v2281
        %v2288 = vadd.s32 %v2280, %v2286
        %vm2289 = vc.u32 %v2287, %v2283
        %v2290 = vsel %vm2289, 1, 0
        %v2291 = vadd.s32 %v2287, %v2283
        %v2292 = vadd.s32 %v2288, %v2290
        %v2293 = vadd.s32 %v2292, %v2282
        %v2294 = vadd.s32 %v2293, %v2284
        %v2295 = vand.u32 %v2272, 65535
        %v2296 = vshrl.u32 %v2272, 16
        %v2297 = vand.u32 %v2267, 65535
        %v2298 = vshrl.u32 %v2267, 16
        %v2299 = vmul.u32 %v2295, %v2297
        %v2300 = vmul.u32 %v2295, %v2298
        %v2301 = vmul.u32 %v2296, %v2297
        %v2302 = vmul.u32 %v2296, %v2298
        %v2303 = vshll.u32 %v2300, 16
        %v2304 = vshrl.u32 %v2300, 16
        %v2305 = vshll.u32 %v2301, 16
        %v2306 = vshrl.u32 %v2301, 16
        %vm2307 = vc.u32 %v2299, %v2303
        %v2308 = vsel %vm2307, 1, 0
        %v2309 = vadd.s32 %v2299, %v2303
        %v2310 = vadd.s32 %v2302, %v2308
        %vm2311 = vc.u32 %v2309, %v2305
        %v2312 = vsel %vm2311, 1, 0
        %v2313 = vadd.s32 %v2309, %v2305
        %v2314 = vadd.s32 %v2310, %v2312
        %v2315 = vadd.s32 %v2314, %v2304
        %v2316 = vadd.s32 %v2315, %v2306
        %v2317 = vmul.u32 %v2272, %v2263
        %v2318 = vadd.s32 %v2294, %v2313
        %vm2319 = vc.u32 %v2294, %v2313
        %v2320 = vadd.s32 %v2316, 1
        %v2321 = vsel %vm2319, %v2320, %v2316
        %v2322 = vadd.s32 %v2317, %v2321
        %v2323 = vadd.s32 %v2322, 536870912
        %v2324 = vshrl.u32 %v2323, 30
        %v2325 = vshll.u32 %v2324, 30
        %v2326 = vsub.s32 %v2322, %v2325
        %vm2327 = vcmp.lt.s32.totalorder %v2326, 0
        %v2328 = vsub.s32 0, %v2326
        %v2329 = vsel %vm2327, %v2328, %v2326
        %v2330 = vclz %v2329
        %v2331 = vsub.s32 %v2330, 2
        %vm2332 = vcmp.gt.s32.totalorder 0, %v2331
        %v2333 = vsel %vm2332, 0, %v2331
        %v2334 = vsub.s32 32, %v2333
        %v2335 = vshll.u32 %v2326, %v2333
        %v2336 = vshrl.u32 %v2318, %v2334
        %v2337 = vor.u32 %v2335, %v2336
        %v2338 = vsub.s32 4294967266, %v2333
        %v2339 = vadd.s32 %v2338, 127
        %v2340 = vshll.u32 %v2339, 23
        %v2341 = vor.u32 4788187, %v2340
        %v2342 = vand.u32 2147483647, %v2341
        %v2344 = vcvt.s32.f32 %v2337
        %v2345 = vmul.f32 %v2344, %v2342
        %v2346 = vxor.u32 %v2345, 2147483648
        %v2347 = vsel %vm2226, %v2346, %v2345
        %v2348 = vsub.s32 4, %v2324
        %v2349 = vsel %vm2226, %v2348, %v2324
        %v2350 = vsel %vm2225, %v346, %v2347
        %v2351 = vsel %vm2225, 0, %v2349
        %v2352 = vmul.f32 %v2350, %v2350
        %v2353 = vmul.f32 %v2352, -0.001358992
        %v2354 = vadd.f32 %v2353, 0.041655596
        %v2355 = vmul.f32 %v2352, %v2354
        %v2356 = vadd.f32 %v2355, -0.4999988
        %v2357 = vmul.f32 %v2352, %v2356
        %v2358 = vadd.f32 1.0, %v2357
        %v2359 = vmul.f32 %v2350, %v2350
        %v2360 = vmul.f32 %v2359, -0.00019511016
        %v2361 = vadd.f32 %v2360, 0.008332121
        %v2362 = vmul.f32 %v2359, %v2361
        %v2363 = vadd.f32 %v2362, -0.16666654
        %v2364 = vmul.f32 %v2359, %v2363
        %v2365 = vadd.f32 %v2364, 1.0
        %v2366 = vmul.f32 %v2365, %v2350
        %vm2367 = vweird.f32 %v346
        %v2368 = vadd.s32 %v2351, 3
        %v2369 = vand.u32 %v2368, 3
        %vm2370 = vcmp.lt.s32.totalorder %v2369, 2
        %vm2371 = vcmp.eq.s32.totalorder %v2369, 0
        %v2372 = vxor.u32 %v2366, 2147483648
        %v2373 = vsel %vm2371, %v2358, %v2372
        %vm2374 = vcmp.eq.s32.totalorder %v2369, 2
        %v2375 = vxor.u32 %v2358, 2147483648
        %v2376 = vsel %vm2374, %v2375, %v2366
        %v2377 = vsel %vm2370, %v2373, %v2376
        %v2378 = vsel %vm2367, nan, %v2377
        %v2379 = vand.u32 2147483647, %v347
        %vm2380 = vcmp.le.f32.partialorder %v2379, 0.7853982
        %vm2381 = vcmp.lt.s32.totalorder %v347, 0
        %v2382 = vand.u32 %v347, 2139095040
        %v2383 = vshrl.u32 %v2382, 23
        %v2384 = vsub.s32 %v2383, 127
        %v2385 = vand.u32 2147483647, %v347
        %v2386 = vand.u32 %v2385, 8388607
        %v2387 = vor.u32 %v2386, 8388608
        %v2388 = vsub.s32 0, %v2387
        %v2389 = vadd.s32 %v2384, 1
        %vm2390 = vcmp.gt.s32.totalorder %v2389, 0
        %v2391 = vsel %vm2390, %v2389, 0
        %v2392 = vshrl.u32 %v2391, 5
        %v2393 = vand.u32 %v2391, 31
        %v2394 = vsub.s32 32, %v2393
        %v2395 = vshrl.u32 683565275, %v2394
        %v2396 = vshll.u32 683565275, %v2393
        %v2397 = vshrl.u32 2475754826, %v2394
        %v2398 = vor.u32 %v2396, %v2397
        %v2399 = vshll.u32 2475754826, %v2393
        %v2400 = vshrl.u32 2131351028, %v2394
        %v2401 = vor.u32 %v2399, %v2400
        %v2402 = vshll.u32 2131351028, %v2393
        %v2403 = vshrl.u32 2102212464, %v2394
        %v2404 = vor.u32 %v2402, %v2403
        %v2405 = vshll.u32 2102212464, %v2393
        %v2406 = vshrl.u32 920167782, %v2394
        %v2407 = vor.u32 %v2405, %v2406
        %v2408 = vshll.u32 920167782, %v2393
        %v2409 = vshrl.u32 1326507024, %v2394
        %v2410 = vor.u32 %v2408, %v2409
        %vm2411 = vcmp.lt.s32.totalorder %v2392, 1
        %vm2412 = vcmp.lt.s32.totalorder %v2392, 2
        %vm2413 = vcmp.lt.s32.totalorder %v2392, 3
        %vm2414 = vcmp.lt.s32.totalorder %v2392, 4
        %v2415 = vsel %vm2411, %v2395, %v2398
        %v2416 = vsel %vm2414, %v2404, 2102212464
        %v2417 = vsel %vm2413, %v2401, %v2416
        %v2418 = vsel %vm2412, %v2415, %v2417
        %v2419 = vsel %vm2411, %v2398, %v2401
        %v2420 = vsel %vm2414, %v2407, 920167782
        %v2421 = vsel %vm2413, %v2404, %v2420
        %v2422 = vsel %vm2412, %v2419, %v2421
        %v2423 = vsel %vm2411, %v2401, %v2404
        %v2424 = vsel %vm2414, %v2410, 1326507024
        %v2425 = vsel %vm2413, %v2407, %v2424
        %v2426 = vsel %vm2412, %v2423, %v2425
        %v2427 = vshll.u32 %v2387, 8
        %v2428 = vand.u32 %v2427, 65535
        %v2429 = vshrl.u32 %v2427, 16
        %v2430 = vand.u32 %v2426, 65535
        %v2431 = vshrl.u32 %v2426, 16
        %v2432 = vmul.u32 %v2428, %v2430
        %v2433 = vmul.u32 %v2428, %v2431
        %v2434 = vmul.u32 %v2429, %v2430
        %v2435 = vmul.u32 %v2429, %v2431
        %v2436 = vshll.u32 %v2433, 16
        %v2437 = vshrl.u32 %v2433, 16
        %v2438 = vshll.u32 %v2434, 16
        %v2439 = vshrl.u32 %v2434, 16
        %vm2440 = vc.u32 %v2432, %v2436
        %v2441 = vsel %vm2440, 1, 0
        %v2442 = vadd.s32 %v2432, %v2436
        %v2443 = vadd.s32 %v2435, %v2441
        %vm2444 = vc.u32 %v2442, %v2438
        %v2445 = vsel %vm2444, 1, 0
        %v2446 = vadd.s32 %v2442, %v2438
        %v2447 = vadd.s32 %v2443, %v2445
        %v2448 = vadd.s32 %v2447, %v2437
        %v2449 = vadd.s32 %v2448, %v2439
        %v2450 = vand.u32 %v2427, 65535
        %v2451 = vshrl.u32 %v2427, 16
        %v2452 = vand.u32 %v2422, 65535
        %v2453 = vshrl.u32 %v2422, 16
        %v2454 = vmul.u32 %v2450, %v2452
        %v2455 = vmul.u32 %v2450, %v2453
        %v2456 = vmul.u32 %v2451, %v2452
        %v2457 = vmul.u32 %v2451, %v2453
        %v2458 = vshll.u32 %v2455, 16
        %v2459 = vshrl.u32 %v2455, 16
        %v2460 = vshll.u32 %v2456, 16
        %v2461 = vshrl.u32 %v2456, 16
        %vm2462 = vc.u32 %v2454, %v2458
        %v2463 = vsel %vm2462, 1, 0
        %v2464 = vadd.s32 %v2454, %v2458
        %v2465 = vadd.s32 %v2457, %v2463
        %vm2466 = vc.u32 %v2464, %v2460
        %v2467 = vsel %vm2466, 1, 0
        %v2468 = vadd.s32 %v2464, %v2460
        %v2469 = vadd.s32 %v2465, %v2467
        %v2470 = vadd.s32 %v2469, %v2459
        %v2471 = vadd.s32 %v2470, %v2461
        %v2472 = vmul.u32 %v2427, %v2418
        %v2473 = vadd.s32 %v2449, %v2468
        %vm2474 = vc.u32 %v2449, %v2468
        %v2475 = vadd.s32 %v2471, 1
        %v2476 = vsel %vm2474, %v2475, %v2471
        %v2477 = vadd.s32 %v2472, %v2476
        %v2478 = vadd.s32 %v2477, 536870912
        %v2479 = vshrl.u32 %v2478, 30
        %v2480 = vshll.u32 %v2479, 30
        %v2481 = vsub.s32 %v2477, %v2480
        %vm2482 = vcmp.lt.s32.totalorder %v2481, 0
        %v2483 = vsub.s32 0, %v2481
        %v2484 = vsel %vm2482, %v2483, %v2481
        %v2485 = vclz %v2484
        %v2486 = vsub.s32 %v2485, 2
        %vm2487 = vcmp.gt.s32.totalorder 0, %v2486
        %v2488 = vsel %vm2487, 0, %v2486
        %v2489 = vsub.s32 32, %v2488
        %v2490 = vshll.u32 %v2481, %v2488
        %v2491 = vshrl.u32 %v2473, %v2489
        %v2492 = vor.u32 %v2490, %v2491
        %v2493 = vsub.s32 4294967266, %v2488
        %v2494 = vadd.s32 %v2493, 127
        %v2495 = vshll.u32 %v2494, 23
        %v2496 = vor.u32 4788187, %v2495
        %v2497 = vand.u32 2147483647, %v2496
        %v2499 = vcvt.s32.f32 %v2492
        %v2500 = vmul.f32 %v2499, %v2497
        %v2501 = vxor.u32 %v2500, 2147483648
        %v2502 = vsel %vm2381, %v2501, %v2500
        %v2503 = vsub.s32 4, %v2479
        %v2504 = vsel %vm2381, %v2503, %v2479
        %v2505 = vsel %vm2380, %v347, %v2502
        %v2506 = vsel %vm2380, 0, %v2504
        %v2507 = vmul.f32 %v2505, %v2505
        %v2508 = vmul.f32 %v2507, -0.001358992
        %v2509 = vadd.f32 %v2508, 0.041655596
        %v2510 = vmul.f32 %v2507, %v2509
        %v2511 = vadd.f32 %v2510, -0.4999988
        %v2512 = vmul.f32 %v2507, %v2511
        %v2513 = vadd.f32 1.0, %v2512
        %v2514 = vmul.f32 %v2505, %v2505
        %v2515 = vmul.f32 %v2514, -0.00019511016
        %v2516 = vadd.f32 %v2515, 0.008332121
        %v2517 = vmul.f32 %v2514, %v2516
        %v2518 = vadd.f32 %v2517, -0.16666654
        %v2519 = vmul.f32 %v2514, %v2518
        %v2520 = vadd.f32 %v2519, 1.0
        %v2521 = vmul.f32 %v2520, %v2505
        %vm2522 = vweird.f32 %v347
        %v2523 = vadd.s32 %v2506, 3
        %v2524 = vand.u32 %v2523, 3
        %vm2525 = vcmp.lt.s32.totalorder %v2524, 2
        %vm2526 = vcmp.eq.s32.totalorder %v2524, 0
        %v2527 = vxor.u32 %v2521, 2147483648
        %v2528 = vsel %vm2526, %v2513, %v2527
        %vm2529 = vcmp.eq.s32.totalorder %v2524, 2
        %v2530 = vxor.u32 %v2513, 2147483648
        %v2531 = vsel %vm2529, %v2530, %v2521
        %v2532 = vsel %vm2525, %v2528, %v2531
        %v2533 = vsel %vm2522, nan, %v2532
        %v2534 = vand.u32 2147483647, %v348
        %vm2535 = vcmp.le.f32.partialorder %v2534, 0.7853982
        %vm2536 = vcmp.lt.s32.totalorder %v348, 0
        %v2537 = vand.u32 %v348, 2139095040
        %v2538 = vshrl.u32 %v2537, 23
        %v2539 = vsub.s32 %v2538, 127
        %v2540 = vand.u32 2147483647, %v348
        %v2541 = vand.u32 %v2540, 8388607
        %v2542 = vor.u32 %v2541, 8388608
        %v2543 = vsub.s32 0, %v2542
        %v2544 = vadd.s32 %v2539, 1
        %vm2545 = vcmp.gt.s32.totalorder %v2544, 0
        %v2546 = vsel %vm2545, %v2544, 0
        %v2547 = vshrl.u32 %v2546, 5
        %v2548 = vand.u32 %v2546, 31
        %v2549 = vsub.s32 32, %v2548
        %v2550 = vshrl.u32 683565275, %v2549
        %v2551 = vshll.u32 683565275, %v2548
        %v2552 = vshrl.u32 2475754826, %v2549
        %v2553 = vor.u32 %v2551, %v2552
        %v2554 = vshll.u32 2475754826, %v2548
        %v2555 = vshrl.u32 2131351028, %v2549
        %v2556 = vor.u32 %v2554, %v2555
        %v2557 = vshll.u32 2131351028, %v2548
        %v2558 = vshrl.u32 2102212464, %v2549
        %v2559 = vor.u32 %v2557, %v2558
        %v2560 = vshll.u32 2102212464, %v2548
        %v2561 = vshrl.u32 920167782, %v2549
        %v2562 = vor.u32 %v2560, %v2561
        %v2563 = vshll.u32 920167782, %v2548
        %v2564 = vshrl.u32 1326507024, %v2549
        %v2565 = vor.u32 %v2563, %v2564
        %vm2566 = vcmp.lt.s32.totalorder %v2547, 1
        %vm2567 = vcmp.lt.s32.totalorder %v2547, 2
        %vm2568 = vcmp.lt.s32.totalorder %v2547, 3
        %vm2569 = vcmp.lt.s32.totalorder %v2547, 4
        %v2570 = vsel %vm2566, %v2550, %v2553
        %v2571 = vsel %vm2569, %v2559, 2102212464
        %v2572 = vsel %vm2568, %v2556, %v2571
        %v2573 = vsel %vm2567, %v2570, %v2572
        %v2574 = vsel %vm2566, %v2553, %v2556
        %v2575 = vsel %vm2569, %v2562, 920167782
        %v2576 = vsel %vm2568, %v2559, %v2575
        %v2577 = vsel %vm2567, %v2574, %v2576
        %v2578 = vsel %vm2566, %v2556, %v2559
        %v2579 = vsel %vm2569, %v2565, 1326507024
        %v2580 = vsel %vm2568, %v2562, %v2579
        %v2581 = vsel %vm2567, %v2578, %v2580
        %v2582 = vshll.u32 %v2542, 8
        %v2583 = vand.u32 %v2582, 65535
        %v2584 = vshrl.u32 %v2582, 16
        %v2585 = vand.u32 %v2581, 65535
        %v2586 = vshrl.u32 %v2581, 16
        %v2587 = vmul.u32 %v2583, %v2585
        %v2588 = vmul.u32 %v2583, %v2586
        %v2589 = vmul.u32 %v2584, %v2585
        %v2590 = vmul.u32 %v2584, %v2586
        %v2591 = vshll.u32 %v2588, 16
        %v2592 = vshrl.u32 %v2588, 16
        %v2593 = vshll.u32 %v2589, 16
        %v2594 = vshrl.u32 %v2589, 16
        %vm2595 = vc.u32 %v2587, %v2591
        %v2596 = vsel %vm2595, 1, 0
        %v2597 = vadd.s32 %v2587, %v2591
        %v2598 = vadd.s32 %v2590, %v2596
        %vm2599 = vc.u32 %v2597, %v2593
        %v2600 = vsel %vm2599, 1, 0
        %v2601 = vadd.s32 %v2597, %v2593
        %v2602 = vadd.s32 %v2598, %v2600
        %v2603 = vadd.s32 %v2602, %v2592
        %v2604 = vadd.s32 %v2603, %v2594
        %v2605 = vand.u32 %v2582, 65535
        %v2606 = vshrl.u32 %v2582, 16
        %v2607 = vand.u32 %v2577, 65535
        %v2608 = vshrl.u32 %v2577, 16
        %v2609 = vmul.u32 %v2605, %v2607
        %v2610 = vmul.u32 %v2605, %v2608
        %v2611 = vmul.u32 %v2606, %v2607
        %v2612 = vmul.u32 %v2606, %v2608
        %v2613 = vshll.u32 %v2610, 16
        %v2614 = vshrl.u32 %v2610, 16
        %v2615 = vshll.u32 %v2611, 16
        %v2616 = vshrl.u32 %v2611, 16
        %vm2617 = vc.u32 %v2609, %v2613
        %v2618 = vsel %vm2617, 1, 0
        %v2619 = vadd.s32 %v2609, %v2613
        %v2620 = vadd.s32 %v2612, %v2618
        %vm2621 = vc.u32 %v2619, %v2615
        %v2622 = vsel %vm2621, 1, 0
        %v2623 = vadd.s32 %v2619, %v2615
        %v2624 = vadd.s32 %v2620, %v2622
        %v2625 = vadd.s32 %v2624, %v2614
        %v2626 = vadd.s32 %v2625, %v2616
        %v2627 = vmul.u32 %v2582, %v2573
        %v2628 = vadd.s32 %v2604, %v2623
        %vm2629 = vc.u32 %v2604, %v2623
        %v2630 = vadd.s32 %v2626, 1
        %v2631 = vsel %vm2629, %v2630, %v2626
        %v2632 = vadd.s32 %v2627, %v2631
        %v2633 = vadd.s32 %v2632, 536870912
        %v2634 = vshrl.u32 %v2633, 30
        %v2635 = vshll.u32 %v2634, 30
        %v2636 = vsub.s32 %v2632, %v2635
        %vm2637 = vcmp.lt.s32.totalorder %v2636, 0
        %v2638 = vsub.s32 0, %v2636
        %v2639 = vsel %vm2637, %v2638, %v2636
        %v2640 = vclz %v2639
        %v2641 = vsub.s32 %v2640, 2
        %vm2642 = vcmp.gt.s32.totalorder 0, %v2641
        %v2643 = vsel %vm2642, 0, %v2641
        %v2644 = vsub.s32 32, %v2643
        %v2645 = vshll.u32 %v2636, %v2643
        %v2646 = vshrl.u32 %v2628, %v2644
        %v2647 = vor.u32 %v2645, %v2646
        %v2648 = vsub.s32 4294967266, %v2643
        %v2649 = vadd.s32 %v2648, 127
        %v2650 = vshll.u32 %v2649, 23
        %v2651 = vor.u32 4788187, %v2650
        %v2652 = vand.u32 2147483647, %v2651
        %v2654 = vcvt.s32.f32 %v2647
        %v2655 = vmul.f32 %v2654, %v2652
        %v2656 = vxor.u32 %v2655, 2147483648
        %v2657 = vsel %vm2536, %v2656, %v2655
        %v2658 = vsub.s32 4, %v2634
        %v2659 = vsel %vm2536, %v2658, %v2634
        %v2660 = vsel %vm2535, %v348, %v2657
        %v2661 = vsel %vm2535, 0, %v2659
        %v2662 = vmul.f32 %v2660, %v2660
        %v2663 = vmul.f32 %v2662, -0.001358992
        %v2664 = vadd.f32 %v2663, 0.041655596
        %v2665 = vmul.f32 %v2662, %v2664
        %v2666 = vadd.f32 %v2665, -0.4999988
        %v2667 = vmul.f32 %v2662, %v2666
        %v2668 = vadd.f32 1.0, %v2667
        %v2669 = vmul.f32 %v2660, %v2660
        %v2670 = vmul.f32 %v2669, -0.00019511016
        %v2671 = vadd.f32 %v2670, 0.008332121
        %v2672 = vmul.f32 %v2669, %v2671
        %v2673 = vadd.f32 %v2672, -0.16666654
        %v2674 = vmul.f32 %v2669, %v2673
        %v2675 = vadd.f32 %v2674, 1.0
        %v2676 = vmul.f32 %v2675, %v2660
        %vm2677 = vweird.f32 %v348
        %v2678 = vadd.s32 %v2661, 3
        %v2679 = vand.u32 %v2678, 3
        %vm2680 = vcmp.lt.s32.totalorder %v2679, 2
        %vm2681 = vcmp.eq.s32.totalorder %v2679, 0
        %v2682 = vxor.u32 %v2676, 2147483648
        %v2683 = vsel %vm2681, %v2668, %v2682
        %vm2684 = vcmp.eq.s32.totalorder %v2679, 2
        %v2685 = vxor.u32 %v2668, 2147483648
        %v2686 = vsel %vm2684, %v2685, %v2676
        %v2687 = vsel %vm2680, %v2683, %v2686
        %v2688 = vsel %vm2677, nan, %v2687
        %v2689 = vand.u32 2147483647, %v349
        %vm2690 = vcmp.le.f32.partialorder %v2689, 0.7853982
        %vm2691 = vcmp.lt.s32.totalorder %v349, 0
        %v2692 = vand.u32 %v349, 2139095040
        %v2693 = vshrl.u32 %v2692, 23
        %v2694 = vsub.s32 %v2693, 127
        %v2695 = vand.u32 2147483647, %v349
        %v2696 = vand.u32 %v2695, 8388607
        %v2697 = vor.u32 %v2696, 8388608
        %v2698 = vsub.s32 0, %v2697
        %v2699 = vadd.s32 %v2694, 1
        %vm2700 = vcmp.gt.s32.totalorder %v2699, 0
        %v2701 = vsel %vm2700, %v2699, 0
        %v2702 = vshrl.u32 %v2701, 5
        %v2703 = vand.u32 %v2701, 31
        %v2704 = vsub.s32 32, %v2703
        %v2705 = vshrl.u32 683565275, %v2704
        %v2706 = vshll.u32 683565275, %v2703
        %v2707 = vshrl.u32 2475754826, %v2704
        %v2708 = vor.u32 %v2706, %v2707
        %v2709 = vshll.u32 2475754826, %v2703
        %v2710 = vshrl.u32 2131351028, %v2704
        %v2711 = vor.u32 %v2709, %v2710
        %v2712 = vshll.u32 2131351028, %v2703
        %v2713 = vshrl.u32 2102212464, %v2704
        %v2714 = vor.u32 %v2712, %v2713
        %v2715 = vshll.u32 2102212464, %v2703
        %v2716 = vshrl.u32 920167782, %v2704
        %v2717 = vor.u32 %v2715, %v2716
        %v2718 = vshll.u32 920167782, %v2703
        %v2719 = vshrl.u32 1326507024, %v2704
        %v2720 = vor.u32 %v2718, %v2719
        %vm2721 = vcmp.lt.s32.totalorder %v2702, 1
        %vm2722 = vcmp.lt.s32.totalorder %v2702, 2
        %vm2723 = vcmp.lt.s32.totalorder %v2702, 3
        %vm2724 = vcmp.lt.s32.totalorder %v2702, 4
        %v2725 = vsel %vm2721, %v2705, %v2708
        %v2726 = vsel %vm2724, %v2714, 2102212464
        %v2727 = vsel %vm2723, %v2711, %v2726
        %v2728 = vsel %vm2722, %v2725, %v2727
        %v2729 = vsel %vm2721, %v2708, %v2711
        %v2730 = vsel %vm2724, %v2717, 920167782
        %v2731 = vsel %vm2723, %v2714, %v2730
        %v2732 = vsel %vm2722, %v2729, %v2731
        %v2733 = vsel %vm2721, %v2711, %v2714
        %v2734 = vsel %vm2724, %v2720, 1326507024
        %v2735 = vsel %vm2723, %v2717, %v2734
        %v2736 = vsel %vm2722, %v2733, %v2735
        %v2737 = vshll.u32 %v2697, 8
        %v2738 = vand.u32 %v2737, 65535
        %v2739 = vshrl.u32 %v2737, 16
        %v2740 = vand.u32 %v2736, 65535
        %v2741 = vshrl.u32 %v2736, 16
        %v2742 = vmul.u32 %v2738, %v2740
        %v2743 = vmul.u32 %v2738, %v2741
        %v2744 = vmul.u32 %v2739, %v2740
        %v2745 = vmul.u32 %v2739, %v2741
        %v2746 = vshll.u32 %v2743, 16
        %v2747 = vshrl.u32 %v2743, 16
        %v2748 = vshll.u32 %v2744, 16
        %v2749 = vshrl.u32 %v2744, 16
        %vm2750 = vc.u32 %v2742, %v2746
        %v2751 = vsel %vm2750, 1, 0
        %v2752 = vadd.s32 %v2742, %v2746
        %v2753 = vadd.s32 %v2745, %v2751
        %vm2754 = vc.u32 %v2752, %v2748
        %v2755 = vsel %vm2754, 1, 0
        %v2756 = vadd.s32 %v2752, %v2748
        %v2757 = vadd.s32 %v2753, %v2755
        %v2758 = vadd.s32 %v2757, %v2747
        %v2759 = vadd.s32 %v2758, %v2749
        %v2760 = vand.u32 %v2737, 65535
        %v2761 = vshrl.u32 %v2737, 16
        %v2762 = vand.u32 %v2732, 65535
        %v2763 = vshrl.u32 %v2732, 16
        %v2764 = vmul.u32 %v2760, %v2762
        %v2765 = vmul.u32 %v2760, %v2763
        %v2766 = vmul.u32 %v2761, %v2762
        %v2767 = vmul.u32 %v2761, %v2763
        %v2768 = vshll.u32 %v2765, 16
        %v2769 = vshrl.u32 %v2765, 16
        %v2770 = vshll.u32 %v2766, 16
        %v2771 = vshrl.u32 %v2766, 16
        %vm2772 = vc.u32 %v2764, %v2768
        %v2773 = vsel %vm2772, 1, 0
        %v2774 = vadd.s32 %v2764, %v2768
        %v2775 = vadd.s32 %v2767, %v2773
        %vm2776 = vc.u32 %v2774, %v2770
        %v2777 = vsel %vm2776, 1, 0
        %v2778 = vadd.s32 %v2774, %v2770
        %v2779 = vadd.s32 %v2775, %v2777
        %v2780 = vadd.s32 %v2779, %v2769
        %v2781 = vadd.s32 %v2780, %v2771
        %v2782 = vmul.u32 %v2737, %v2728
        %v2783 = vadd.s32 %v2759, %v2778
        %vm2784 = vc.u32 %v2759, %v2778
        %v2785 = vadd.s32 %v2781, 1
        %v2786 = vsel %vm2784, %v2785, %v2781
        %v2787 = vadd.s32 %v2782, %v2786
        %v2788 = vadd.s32 %v2787, 536870912
        %v2789 = vshrl.u32 %v2788, 30
        %v2790 = vshll.u32 %v2789, 30
        %v2791 = vsub.s32 %v2787, %v2790
        %vm2792 = vcmp.lt.s32.totalorder %v2791, 0
        %v2793 = vsub.s32 0, %v2791
        %v2794 = vsel %vm2792, %v2793, %v2791
        %v2795 = vclz %v2794
        %v2796 = vsub.s32 %v2795, 2
        %vm2797 = vcmp.gt.s32.totalorder 0, %v2796
        %v2798 = vsel %vm2797, 0, %v2796
        %v2799 = vsub.s32 32, %v2798
        %v2800 = vshll.u32 %v2791, %v2798
        %v2801 = vshrl.u32 %v2783, %v2799
        %v2802 = vor.u32 %v2800, %v2801
        %v2803 = vsub.s32 4294967266, %v2798
        %v2804 = vadd.s32 %v2803, 127
        %v2805 = vshll.u32 %v2804, 23
        %v2806 = vor.u32 4788187, %v2805
        %v2807 = vand.u32 2147483647, %v2806
        %v2809 = vcvt.s32.f32 %v2802
        %v2810 = vmul.f32 %v2809, %v2807
        %v2811 = vxor.u32 %v2810, 2147483648
        %v2812 = vsel %vm2691, %v2811, %v2810
        %v2813 = vsub.s32 4, %v2789
        %v2814 = vsel %vm2691, %v2813, %v2789
        %v2815 = vsel %vm2690, %v349, %v2812
        %v2816 = vsel %vm2690, 0, %v2814
        %v2817 = vmul.f32 %v2815, %v2815
        %v2818 = vmul.f32 %v2817, -0.001358992
        %v2819 = vadd.f32 %v2818, 0.041655596
        %v2820 = vmul.f32 %v2817, %v2819
        %v2821 = vadd.f32 %v2820, -0.4999988
        %v2822 = vmul.f32 %v2817, %v2821
        %v2823 = vadd.f32 1.0, %v2822
        %v2824 = vmul.f32 %v2815, %v2815
        %v2825 = vmul.f32 %v2824, -0.00019511016
        %v2826 = vadd.f32 %v2825, 0.008332121
        %v2827 = vmul.f32 %v2824, %v2826
        %v2828 = vadd.f32 %v2827, -0.16666654
        %v2829 = vmul.f32 %v2824, %v2828
        %v2830 = vadd.f32 %v2829, 1.0
        %v2831 = vmul.f32 %v2830, %v2815
        %vm2832 = vweird.f32 %v349
        %v2833 = vadd.s32 %v2816, 3
        %v2834 = vand.u32 %v2833, 3
        %vm2835 = vcmp.lt.s32.totalorder %v2834, 2
        %vm2836 = vcmp.eq.s32.totalorder %v2834, 0
        %v2837 = vxor.u32 %v2831, 2147483648
        %v2838 = vsel %vm2836, %v2823, %v2837
        %vm2839 = vcmp.eq.s32.totalorder %v2834, 2
        %v2840 = vxor.u32 %v2823, 2147483648
        %v2841 = vsel %vm2839, %v2840, %v2831
        %v2842 = vsel %vm2835, %v2838, %v2841
        %v2843 = vsel %vm2832, nan, %v2842
        %v2844 = vand.u32 2147483647, %v350
        %vm2845 = vcmp.le.f32.partialorder %v2844, 0.7853982
        %vm2846 = vcmp.lt.s32.totalorder %v350, 0
        %v2847 = vand.u32 %v350, 2139095040
        %v2848 = vshrl.u32 %v2847, 23
        %v2849 = vsub.s32 %v2848, 127
        %v2850 = vand.u32 2147483647, %v350
        %v2851 = vand.u32 %v2850, 8388607
        %v2852 = vor.u32 %v2851, 8388608
        %v2853 = vsub.s32 0, %v2852
        %v2854 = vadd.s32 %v2849, 1
        %vm2855 = vcmp.gt.s32.totalorder %v2854, 0
        %v2856 = vsel %vm2855, %v2854, 0
        %v2857 = vshrl.u32 %v2856, 5
        %v2858 = vand.u32 %v2856, 31
        %v2859 = vsub.s32 32, %v2858
        %v2860 = vshrl.u32 683565275, %v2859
        %v2861 = vshll.u32 683565275, %v2858
        %v2862 = vshrl.u32 2475754826, %v2859
        %v2863 = vor.u32 %v2861, %v2862
        %v2864 = vshll.u32 2475754826, %v2858
        %v2865 = vshrl.u32 2131351028, %v2859
        %v2866 = vor.u32 %v2864, %v2865
        %v2867 = vshll.u32 2131351028, %v2858
        %v2868 = vshrl.u32 2102212464, %v2859
        %v2869 = vor.u32 %v2867, %v2868
        %v2870 = vshll.u32 2102212464, %v2858
        %v2871 = vshrl.u32 920167782, %v2859
        %v2872 = vor.u32 %v2870, %v2871
        %v2873 = vshll.u32 920167782, %v2858
        %v2874 = vshrl.u32 1326507024, %v2859
        %v2875 = vor.u32 %v2873, %v2874
        %vm2876 = vcmp.lt.s32.totalorder %v2857, 1
        %vm2877 = vcmp.lt.s32.totalorder %v2857, 2
        %vm2878 = vcmp.lt.s32.totalorder %v2857, 3
        %vm2879 = vcmp.lt.s32.totalorder %v2857, 4
        %v2880 = vsel %vm2876, %v2860, %v2863
        %v2881 = vsel %vm2879, %v2869, 2102212464
        %v2882 = vsel %vm2878, %v2866, %v2881
        %v2883 = vsel %vm2877, %v2880, %v2882
        %v2884 = vsel %vm2876, %v2863, %v2866
        %v2885 = vsel %vm2879, %v2872, 920167782
        %v2886 = vsel %vm2878, %v2869, %v2885
        %v2887 = vsel %vm2877, %v2884, %v2886
        %v2888 = vsel %vm2876, %v2866, %v2869
        %v2889 = vsel %vm2879, %v2875, 1326507024
        %v2890 = vsel %vm2878, %v2872, %v2889
        %v2891 = vsel %vm2877, %v2888, %v2890
        %v2892 = vshll.u32 %v2852, 8
        %v2893 = vand.u32 %v2892, 65535
        %v2894 = vshrl.u32 %v2892, 16
        %v2895 = vand.u32 %v2891, 65535
        %v2896 = vshrl.u32 %v2891, 16
        %v2897 = vmul.u32 %v2893, %v2895
        %v2898 = vmul.u32 %v2893, %v2896
        %v2899 = vmul.u32 %v2894, %v2895
        %v2900 = vmul.u32 %v2894, %v2896
        %v2901 = vshll.u32 %v2898, 16
        %v2902 = vshrl.u32 %v2898, 16
        %v2903 = vshll.u32 %v2899, 16
        %v2904 = vshrl.u32 %v2899, 16
        %vm2905 = vc.u32 %v2897, %v2901
        %v2906 = vsel %vm2905, 1, 0
        %v2907 = vadd.s32 %v2897, %v2901
        %v2908 = vadd.s32 %v2900, %v2906
        %vm2909 = vc.u32 %v2907, %v2903
        %v2910 = vsel %vm2909, 1, 0
        %v2911 = vadd.s32 %v2907, %v2903
        %v2912 = vadd.s32 %v2908, %v2910
        %v2913 = vadd.s32 %v2912, %v2902
        %v2914 = vadd.s32 %v2913, %v2904
        %v2915 = vand.u32 %v2892, 65535
        %v2916 = vshrl.u32 %v2892, 16
        %v2917 = vand.u32 %v2887, 65535
        %v2918 = vshrl.u32 %v2887, 16
        %v2919 = vmul.u32 %v2915, %v2917
        %v2920 = vmul.u32 %v2915, %v2918
        %v2921 = vmul.u32 %v2916, %v2917
        %v2922 = vmul.u32 %v2916, %v2918
        %v2923 = vshll.u32 %v2920, 16
        %v2924 = vshrl.u32 %v2920, 16
        %v2925 = vshll.u32 %v2921, 16
        %v2926 = vshrl.u32 %v2921, 16
        %vm2927 = vc.u32 %v2919, %v2923
        %v2928 = vsel %vm2927, 1, 0
        %v2929 = vadd.s32 %v2919, %v2923
        %v2930 = vadd.s32 %v2922, %v2928
        %vm2931 = vc.u32 %v2929, %v2925
        %v2932 = vsel %vm2931, 1, 0
        %v2933 = vadd.s32 %v2929, %v2925
        %v2934 = vadd.s32 %v2930, %v2932
        %v2935 = vadd.s32 %v2934, %v2924
        %v2936 = vadd.s32 %v2935, %v2926
        %v2937 = vmul.u32 %v2892, %v2883
        %v2938 = vadd.s32 %v2914, %v2933
        %vm2939 = vc.u32 %v2914, %v2933
        %v2940 = vadd.s32 %v2936, 1
        %v2941 = vsel %vm2939, %v2940, %v2936
        %v2942 = vadd.s32 %v2937, %v2941
        %v2943 = vadd.s32 %v2942, 536870912
        %v2944 = vshrl.u32 %v2943, 30
        %v2945 = vshll.u32 %v2944, 30
        %v2946 = vsub.s32 %v2942, %v2945
        %vm2947 = vcmp.lt.s32.totalorder %v2946, 0
        %v2948 = vsub.s32 0, %v2946
        %v2949 = vsel %vm2947, %v2948, %v2946
        %v2950 = vclz %v2949
        %v2951 = vsub.s32 %v2950, 2
        %vm2952 = vcmp.gt.s32.totalorder 0, %v2951
        %v2953 = vsel %vm2952, 0, %v2951
        %v2954 = vsub.s32 32, %v2953
        %v2955 = vshll.u32 %v2946, %v2953
        %v2956 = vshrl.u32 %v2938, %v2954
        %v2957 = vor.u32 %v2955, %v2956
        %v2958 = vsub.s32 4294967266, %v2953
        %v2959 = vadd.s32 %v2958, 127
        %v2960 = vshll.u32 %v2959, 23
        %v2961 = vor.u32 4788187, %v2960
        %v2962 = vand.u32 2147483647, %v2961
        %v2964 = vcvt.s32.f32 %v2957
        %v2965 = vmul.f32 %v2964, %v2962
        %v2966 = vxor.u32 %v2965, 2147483648
        %v2967 = vsel %vm2846, %v2966, %v2965
        %v2968 = vsub.s32 4, %v2944
        %v2969 = vsel %vm2846, %v2968, %v2944
        %v2970 = vsel %vm2845, %v350, %v2967
        %v2971 = vsel %vm2845, 0, %v2969
        %v2972 = vmul.f32 %v2970, %v2970
        %v2973 = vmul.f32 %v2972, -0.001358992
        %v2974 = vadd.f32 %v2973, 0.041655596
        %v2975 = vmul.f32 %v2972, %v2974
        %v2976 = vadd.f32 %v2975, -0.4999988
        %v2977 = vmul.f32 %v2972, %v2976
        %v2978 = vadd.f32 1.0, %v2977
        %v2979 = vmul.f32 %v2970, %v2970
        %v2980 = vmul.f32 %v2979, -0.00019511016
        %v2981 = vadd.f32 %v2980, 0.008332121
        %v2982 = vmul.f32 %v2979, %v2981
        %v2983 = vadd.f32 %v2982, -0.16666654
        %v2984 = vmul.f32 %v2979, %v2983
        %v2985 = vadd.f32 %v2984, 1.0
        %v2986 = vmul.f32 %v2985, %v2970
        %vm2987 = vweird.f32 %v350
        %v2988 = vadd.s32 %v2971, 3
        %v2989 = vand.u32 %v2988, 3
        %vm2990 = vcmp.lt.s32.totalorder %v2989, 2
        %vm2991 = vcmp.eq.s32.totalorder %v2989, 0
        %v2992 = vxor.u32 %v2986, 2147483648
        %v2993 = vsel %vm2991, %v2978, %v2992
        %vm2994 = vcmp.eq.s32.totalorder %v2989, 2
        %v2995 = vxor.u32 %v2978, 2147483648
        %v2996 = vsel %vm2994, %v2995, %v2986
        %v2997 = vsel %vm2990, %v2993, %v2996
        %v2998 = vsel %vm2987, nan, %v2997
        %v2999 = vand.u32 2147483647, %v351
        %vm3000 = vcmp.le.f32.partialorder %v2999, 0.7853982
        %vm3001 = vcmp.lt.s32.totalorder %v351, 0
        %v3002 = vand.u32 %v351, 2139095040
        %v3003 = vshrl.u32 %v3002, 23
        %v3004 = vsub.s32 %v3003, 127
        %v3005 = vand.u32 2147483647, %v351
        %v3006 = vand.u32 %v3005, 8388607
        %v3007 = vor.u32 %v3006, 8388608
        %v3008 = vsub.s32 0, %v3007
        %v3009 = vadd.s32 %v3004, 1
        %vm3010 = vcmp.gt.s32.totalorder %v3009, 0
        %v3011 = vsel %vm3010, %v3009, 0
        %v3012 = vshrl.u32 %v3011, 5
        %v3013 = vand.u32 %v3011, 31
        %v3014 = vsub.s32 32, %v3013
        %v3015 = vshrl.u32 683565275, %v3014
        %v3016 = vshll.u32 683565275, %v3013
        %v3017 = vshrl.u32 2475754826, %v3014
        %v3018 = vor.u32 %v3016, %v3017
        %v3019 = vshll.u32 2475754826, %v3013
        %v3020 = vshrl.u32 2131351028, %v3014
        %v3021 = vor.u32 %v3019, %v3020
        %v3022 = vshll.u32 2131351028, %v3013
        %v3023 = vshrl.u32 2102212464, %v3014
        %v3024 = vor.u32 %v3022, %v3023
        %v3025 = vshll.u32 2102212464, %v3013
        %v3026 = vshrl.u32 920167782, %v3014
        %v3027 = vor.u32 %v3025, %v3026
        %v3028 = vshll.u32 920167782, %v3013
        %v3029 = vshrl.u32 1326507024, %v3014
        %v3030 = vor.u32 %v3028, %v3029
        %vm3031 = vcmp.lt.s32.totalorder %v3012, 1
        %vm3032 = vcmp.lt.s32.totalorder %v3012, 2
        %vm3033 = vcmp.lt.s32.totalorder %v3012, 3
        %vm3034 = vcmp.lt.s32.totalorder %v3012, 4
        %v3035 = vsel %vm3031, %v3015, %v3018
        %v3036 = vsel %vm3034, %v3024, 2102212464
        %v3037 = vsel %vm3033, %v3021, %v3036
        %v3038 = vsel %vm3032, %v3035, %v3037
        %v3039 = vsel %vm3031, %v3018, %v3021
        %v3040 = vsel %vm3034, %v3027, 920167782
        %v3041 = vsel %vm3033, %v3024, %v3040
        %v3042 = vsel %vm3032, %v3039, %v3041
        %v3043 = vsel %vm3031, %v3021, %v3024
        %v3044 = vsel %vm3034, %v3030, 1326507024
        %v3045 = vsel %vm3033, %v3027, %v3044
        %v3046 = vsel %vm3032, %v3043, %v3045
        %v3047 = vshll.u32 %v3007, 8
        %v3048 = vand.u32 %v3047, 65535
        %v3049 = vshrl.u32 %v3047, 16
        %v3050 = vand.u32 %v3046, 65535
        %v3051 = vshrl.u32 %v3046, 16
        %v3052 = vmul.u32 %v3048, %v3050
        %v3053 = vmul.u32 %v3048, %v3051
        %v3054 = vmul.u32 %v3049, %v3050
        %v3055 = vmul.u32 %v3049, %v3051
        %v3056 = vshll.u32 %v3053, 16
        %v3057 = vshrl.u32 %v3053, 16
        %v3058 = vshll.u32 %v3054, 16
        %v3059 = vshrl.u32 %v3054, 16
        %vm3060 = vc.u32 %v3052, %v3056
        %v3061 = vsel %vm3060, 1, 0
        %v3062 = vadd.s32 %v3052, %v3056
        %v3063 = vadd.s32 %v3055, %v3061
        %vm3064 = vc.u32 %v3062, %v3058
        %v3065 = vsel %vm3064, 1, 0
        %v3066 = vadd.s32 %v3062, %v3058
        %v3067 = vadd.s32 %v3063, %v3065
        %v3068 = vadd.s32 %v3067, %v3057
        %v3069 = vadd.s32 %v3068, %v3059
        %v3070 = vand.u32 %v3047, 65535
        %v3071 = vshrl.u32 %v3047, 16
        %v3072 = vand.u32 %v3042, 65535
        %v3073 = vshrl.u32 %v3042, 16
        %v3074 = vmul.u32 %v3070, %v3072
        %v3075 = vmul.u32 %v3070, %v3073
        %v3076 = vmul.u32 %v3071, %v3072
        %v3077 = vmul.u32 %v3071, %v3073
        %v3078 = vshll.u32 %v3075, 16
        %v3079 = vshrl.u32 %v3075, 16
        %v3080 = vshll.u32 %v3076, 16
        %v3081 = vshrl.u32 %v3076, 16
        %vm3082 = vc.u32 %v3074, %v3078
        %v3083 = vsel %vm3082, 1, 0
        %v3084 = vadd.s32 %v3074, %v3078
        %v3085 = vadd.s32 %v3077, %v3083
        %vm3086 = vc.u32 %v3084, %v3080
        %v3087 = vsel %vm3086, 1, 0
        %v3088 = vadd.s32 %v3084, %v3080
        %v3089 = vadd.s32 %v3085, %v3087
        %v3090 = vadd.s32 %v3089, %v3079
        %v3091 = vadd.s32 %v3090, %v3081
        %v3092 = vmul.u32 %v3047, %v3038
        %v3093 = vadd.s32 %v3069, %v3088
        %vm3094 = vc.u32 %v3069, %v3088
        %v3095 = vadd.s32 %v3091, 1
        %v3096 = vsel %vm3094, %v3095, %v3091
        %v3097 = vadd.s32 %v3092, %v3096
        %v3098 = vadd.s32 %v3097, 536870912
        %v3099 = vshrl.u32 %v3098, 30
        %v3100 = vshll.u32 %v3099, 30
        %v3101 = vsub.s32 %v3097, %v3100
        %vm3102 = vcmp.lt.s32.totalorder %v3101, 0
        %v3103 = vsub.s32 0, %v3101
        %v3104 = vsel %vm3102, %v3103, %v3101
        %v3105 = vclz %v3104
        %v3106 = vsub.s32 %v3105, 2
        %vm3107 = vcmp.gt.s32.totalorder 0, %v3106
        %v3108 = vsel %vm3107, 0, %v3106
        %v3109 = vsub.s32 32, %v3108
        %v3110 = vshll.u32 %v3101, %v3108
        %v3111 = vshrl.u32 %v3093, %v3109
        %v3112 = vor.u32 %v3110, %v3111
        %v3113 = vsub.s32 4294967266, %v3108
        %v3114 = vadd.s32 %v3113, 127
        %v3115 = vshll.u32 %v3114, 23
        %v3116 = vor.u32 4788187, %v3115
        %v3117 = vand.u32 2147483647, %v3116
        %v3119 = vcvt.s32.f32 %v3112
        %v3120 = vmul.f32 %v3119, %v3117
        %v3121 = vxor.u32 %v3120, 2147483648
        %v3122 = vsel %vm3001, %v3121, %v3120
        %v3123 = vsub.s32 4, %v3099
        %v3124 = vsel %vm3001, %v3123, %v3099
        %v3125 = vsel %vm3000, %v351, %v3122
        %v3126 = vsel %vm3000, 0, %v3124
        %v3127 = vmul.f32 %v3125, %v3125
        %v3128 = vmul.f32 %v3127, -0.001358992
        %v3129 = vadd.f32 %v3128, 0.041655596
        %v3130 = vmul.f32 %v3127, %v3129
        %v3131 = vadd.f32 %v3130, -0.4999988
        %v3132 = vmul.f32 %v3127, %v3131
        %v3133 = vadd.f32 1.0, %v3132
        %v3134 = vmul.f32 %v3125, %v3125
        %v3135 = vmul.f32 %v3134, -0.00019511016
        %v3136 = vadd.f32 %v3135, 0.008332121
        %v3137 = vmul.f32 %v3134, %v3136
        %v3138 = vadd.f32 %v3137, -0.16666654
        %v3139 = vmul.f32 %v3134, %v3138
        %v3140 = vadd.f32 %v3139, 1.0
        %v3141 = vmul.f32 %v3140, %v3125
        %vm3142 = vweird.f32 %v351
        %v3143 = vadd.s32 %v3126, 3
        %v3144 = vand.u32 %v3143, 3
        %vm3145 = vcmp.lt.s32.totalorder %v3144, 2
        %vm3146 = vcmp.eq.s32.totalorder %v3144, 0
        %v3147 = vxor.u32 %v3141, 2147483648
        %v3148 = vsel %vm3146, %v3133, %v3147
        %vm3149 = vcmp.eq.s32.totalorder %v3144, 2
        %v3150 = vxor.u32 %v3133, 2147483648
        %v3151 = vsel %vm3149, %v3150, %v3141
        %v3152 = vsel %vm3145, %v3148, %v3151
        %v3153 = vsel %vm3142, nan, %v3152
        %v3154 = vand.u32 2147483647, %v352
        %vm3155 = vcmp.le.f32.partialorder %v3154, 0.7853982
        %vm3156 = vcmp.lt.s32.totalorder %v352, 0
        %v3157 = vand.u32 %v352, 2139095040
        %v3158 = vshrl.u32 %v3157, 23
        %v3159 = vsub.s32 %v3158, 127
        %v3160 = vand.u32 2147483647, %v352
        %v3161 = vand.u32 %v3160, 8388607
        %v3162 = vor.u32 %v3161, 8388608
        %v3163 = vsub.s32 0, %v3162
        %v3164 = vadd.s32 %v3159, 1
        %vm3165 = vcmp.gt.s32.totalorder %v3164, 0
        %v3166 = vsel %vm3165, %v3164, 0
        %v3167 = vshrl.u32 %v3166, 5
        %v3168 = vand.u32 %v3166, 31
        %v3169 = vsub.s32 32, %v3168
        %v3170 = vshrl.u32 683565275, %v3169
        %v3171 = vshll.u32 683565275, %v3168
        %v3172 = vshrl.u32 2475754826, %v3169
        %v3173 = vor.u32 %v3171, %v3172
        %v3174 = vshll.u32 2475754826, %v3168
        %v3175 = vshrl.u32 2131351028, %v3169
        %v3176 = vor.u32 %v3174, %v3175
        %v3177 = vshll.u32 2131351028, %v3168
        %v3178 = vshrl.u32 2102212464, %v3169
        %v3179 = vor.u32 %v3177, %v3178
        %v3180 = vshll.u32 2102212464, %v3168
        %v3181 = vshrl.u32 920167782, %v3169
        %v3182 = vor.u32 %v3180, %v3181
        %v3183 = vshll.u32 920167782, %v3168
        %v3184 = vshrl.u32 1326507024, %v3169
        %v3185 = vor.u32 %v3183, %v3184
        %vm3186 = vcmp.lt.s32.totalorder %v3167, 1
        %vm3187 = vcmp.lt.s32.totalorder %v3167, 2
        %vm3188 = vcmp.lt.s32.totalorder %v3167, 3
        %vm3189 = vcmp.lt.s32.totalorder %v3167, 4
        %v3190 = vsel %vm3186, %v3170, %v3173
        %v3191 = vsel %vm3189, %v3179, 2102212464
        %v3192 = vsel %vm3188, %v3176, %v3191
        %v3193 = vsel %vm3187, %v3190, %v3192
        %v3194 = vsel %vm3186, %v3173, %v3176
        %v3195 = vsel %vm3189, %v3182, 920167782
        %v3196 = vsel %vm3188, %v3179, %v3195
        %v3197 = vsel %vm3187, %v3194, %v3196
        %v3198 = vsel %vm3186, %v3176, %v3179
        %v3199 = vsel %vm3189, %v3185, 1326507024
        %v3200 = vsel %vm3188, %v3182, %v3199
        %v3201 = vsel %vm3187, %v3198, %v3200
        %v3202 = vshll.u32 %v3162, 8
        %v3203 = vand.u32 %v3202, 65535
        %v3204 = vshrl.u32 %v3202, 16
        %v3205 = vand.u32 %v3201, 65535
        %v3206 = vshrl.u32 %v3201, 16
        %v3207 = vmul.u32 %v3203, %v3205
        %v3208 = vmul.u32 %v3203, %v3206
        %v3209 = vmul.u32 %v3204, %v3205
        %v3210 = vmul.u32 %v3204, %v3206
        %v3211 = vshll.u32 %v3208, 16
        %v3212 = vshrl.u32 %v3208, 16
        %v3213 = vshll.u32 %v3209, 16
        %v3214 = vshrl.u32 %v3209, 16
        %vm3215 = vc.u32 %v3207, %v3211
        %v3216 = vsel %vm3215, 1, 0
        %v3217 = vadd.s32 %v3207, %v3211
        %v3218 = vadd.s32 %v3210, %v3216
        %vm3219 = vc.u32 %v3217, %v3213
        %v3220 = vsel %vm3219, 1, 0
        %v3221 = vadd.s32 %v3217, %v3213
        %v3222 = vadd.s32 %v3218, %v3220
        %v3223 = vadd.s32 %v3222, %v3212
        %v3224 = vadd.s32 %v3223, %v3214
        %v3225 = vand.u32 %v3202, 65535
        %v3226 = vshrl.u32 %v3202, 16
        %v3227 = vand.u32 %v3197, 65535
        %v3228 = vshrl.u32 %v3197, 16
        %v3229 = vmul.u32 %v3225, %v3227
        %v3230 = vmul.u32 %v3225, %v3228
        %v3231 = vmul.u32 %v3226, %v3227
        %v3232 = vmul.u32 %v3226, %v3228
        %v3233 = vshll.u32 %v3230, 16
        %v3234 = vshrl.u32 %v3230, 16
        %v3235 = vshll.u32 %v3231, 16
        %v3236 = vshrl.u32 %v3231, 16
        %vm3237 = vc.u32 %v3229, %v3233
        %v3238 = vsel %vm3237, 1, 0
        %v3239 = vadd.s32 %v3229, %v3233
        %v3240 = vadd.s32 %v3232, %v3238
        %vm3241 = vc.u32 %v3239, %v3235
        %v3242 = vsel %vm3241, 1, 0
        %v3243 = vadd.s32 %v3239, %v3235
        %v3244 = vadd.s32 %v3240, %v3242
        %v3245 = vadd.s32 %v3244, %v3234
        %v3246 = vadd.s32 %v3245, %v3236
        %v3247 = vmul.u32 %v3202, %v3193
        %v3248 = vadd.s32 %v3224, %v3243
        %vm3249 = vc.u32 %v3224, %v3243
        %v3250 = vadd.s32 %v3246, 1
        %v3251 = vsel %vm3249, %v3250, %v3246
        %v3252 = vadd.s32 %v3247, %v3251
        %v3253 = vadd.s32 %v3252, 536870912
        %v3254 = vshrl.u32 %v3253, 30
        %v3255 = vshll.u32 %v3254, 30
        %v3256 = vsub.s32 %v3252, %v3255
        %vm3257 = vcmp.lt.s32.totalorder %v3256, 0
        %v3258 = vsub.s32 0, %v3256
        %v3259 = vsel %vm3257, %v3258, %v3256
        %v3260 = vclz %v3259
        %v3261 = vsub.s32 %v3260, 2
        %vm3262 = vcmp.gt.s32.totalorder 0, %v3261
        %v3263 = vsel %vm3262, 0, %v3261
        %v3264 = vsub.s32 32, %v3263
        %v3265 = vshll.u32 %v3256, %v3263
        %v3266 = vshrl.u32 %v3248, %v3264
        %v3267 = vor.u32 %v3265, %v3266
        %v3268 = vsub.s32 4294967266, %v3263
        %v3269 = vadd.s32 %v3268, 127
        %v3270 = vshll.u32 %v3269, 23
        %v3271 = vor.u32 4788187, %v3270
        %v3272 = vand.u32 2147483647, %v3271
        %v3274 = vcvt.s32.f32 %v3267
        %v3275 = vmul.f32 %v3274, %v3272
        %v3276 = vxor.u32 %v3275, 2147483648
        %v3277 = vsel %vm3156, %v3276, %v3275
        %v3278 = vsub.s32 4, %v3254
        %v3279 = vsel %vm3156, %v3278, %v3254
        %v3280 = vsel %vm3155, %v352, %v3277
        %v3281 = vsel %vm3155, 0, %v3279
        %v3282 = vmul.f32 %v3280, %v3280
        %v3283 = vmul.f32 %v3282, -0.001358992
        %v3284 = vadd.f32 %v3283, 0.041655596
        %v3285 = vmul.f32 %v3282, %v3284
        %v3286 = vadd.f32 %v3285, -0.4999988
        %v3287 = vmul.f32 %v3282, %v3286
        %v3288 = vadd.f32 1.0, %v3287
        %v3289 = vmul.f32 %v3280, %v3280
        %v3290 = vmul.f32 %v3289, -0.00019511016
        %v3291 = vadd.f32 %v3290, 0.008332121
        %v3292 = vmul.f32 %v3289, %v3291
        %v3293 = vadd.f32 %v3292, -0.16666654
        %v3294 = vmul.f32 %v3289, %v3293
        %v3295 = vadd.f32 %v3294, 1.0
        %v3296 = vmul.f32 %v3295, %v3280
        %vm3297 = vweird.f32 %v352
        %v3298 = vadd.s32 %v3281, 3
        %v3299 = vand.u32 %v3298, 3
        %vm3300 = vcmp.lt.s32.totalorder %v3299, 2
        %vm3301 = vcmp.eq.s32.totalorder %v3299, 0
        %v3302 = vxor.u32 %v3296, 2147483648
        %v3303 = vsel %vm3301, %v3288, %v3302
        %vm3304 = vcmp.eq.s32.totalorder %v3299, 2
        %v3305 = vxor.u32 %v3288, 2147483648
        %v3306 = vsel %vm3304, %v3305, %v3296
        %v3307 = vsel %vm3300, %v3303, %v3306
        %v3308 = vsel %vm3297, nan, %v3307
        %v3309 = vand.u32 2147483647, %v353
        %vm3310 = vcmp.le.f32.partialorder %v3309, 0.7853982
        %vm3311 = vcmp.lt.s32.totalorder %v353, 0
        %v3312 = vand.u32 %v353, 2139095040
        %v3313 = vshrl.u32 %v3312, 23
        %v3314 = vsub.s32 %v3313, 127
        %v3315 = vand.u32 2147483647, %v353
        %v3316 = vand.u32 %v3315, 8388607
        %v3317 = vor.u32 %v3316, 8388608
        %v3318 = vsub.s32 0, %v3317
        %v3319 = vadd.s32 %v3314, 1
        %vm3320 = vcmp.gt.s32.totalorder %v3319, 0
        %v3321 = vsel %vm3320, %v3319, 0
        %v3322 = vshrl.u32 %v3321, 5
        %v3323 = vand.u32 %v3321, 31
        %v3324 = vsub.s32 32, %v3323
        %v3325 = vshrl.u32 683565275, %v3324
        %v3326 = vshll.u32 683565275, %v3323
        %v3327 = vshrl.u32 2475754826, %v3324
        %v3328 = vor.u32 %v3326, %v3327
        %v3329 = vshll.u32 2475754826, %v3323
        %v3330 = vshrl.u32 2131351028, %v3324
        %v3331 = vor.u32 %v3329, %v3330
        %v3332 = vshll.u32 2131351028, %v3323
        %v3333 = vshrl.u32 2102212464, %v3324
        %v3334 = vor.u32 %v3332, %v3333
        %v3335 = vshll.u32 2102212464, %v3323
        %v3336 = vshrl.u32 920167782, %v3324
        %v3337 = vor.u32 %v3335, %v3336
        %v3338 = vshll.u32 920167782, %v3323
        %v3339 = vshrl.u32 1326507024, %v3324
        %v3340 = vor.u32 %v3338, %v3339
        %vm3341 = vcmp.lt.s32.totalorder %v3322, 1
        %vm3342 = vcmp.lt.s32.totalorder %v3322, 2
        %vm3343 = vcmp.lt.s32.totalorder %v3322, 3
        %vm3344 = vcmp.lt.s32.totalorder %v3322, 4
        %v3345 = vsel %vm3341, %v3325, %v3328
        %v3346 = vsel %vm3344, %v3334, 2102212464
        %v3347 = vsel %vm3343, %v3331, %v3346
        %v3348 = vsel %vm3342, %v3345, %v3347
        %v3349 = vsel %vm3341, %v3328, %v3331
        %v3350 = vsel %vm3344, %v3337, 920167782
        %v3351 = vsel %vm3343, %v3334, %v3350
        %v3352 = vsel %vm3342, %v3349, %v3351
        %v3353 = vsel %vm3341, %v3331, %v3334
        %v3354 = vsel %vm3344, %v3340, 1326507024
        %v3355 = vsel %vm3343, %v3337, %v3354
        %v3356 = vsel %vm3342, %v3353, %v3355
        %v3357 = vshll.u32 %v3317, 8
        %v3358 = vand.u32 %v3357, 65535
        %v3359 = vshrl.u32 %v3357, 16
        %v3360 = vand.u32 %v3356, 65535
        %v3361 = vshrl.u32 %v3356, 16
        %v3362 = vmul.u32 %v3358, %v3360
        %v3363 = vmul.u32 %v3358, %v3361
        %v3364 = vmul.u32 %v3359, %v3360
        %v3365 = vmul.u32 %v3359, %v3361
        %v3366 = vshll.u32 %v3363, 16
        %v3367 = vshrl.u32 %v3363, 16
        %v3368 = vshll.u32 %v3364, 16
        %v3369 = vshrl.u32 %v3364, 16
        %vm3370 = vc.u32 %v3362, %v3366
        %v3371 = vsel %vm3370, 1, 0
        %v3372 = vadd.s32 %v3362, %v3366
        %v3373 = vadd.s32 %v3365, %v3371
        %vm3374 = vc.u32 %v3372, %v3368
        %v3375 = vsel %vm3374, 1, 0
        %v3376 = vadd.s32 %v3372, %v3368
        %v3377 = vadd.s32 %v3373, %v3375
        %v3378 = vadd.s32 %v3377, %v3367
        %v3379 = vadd.s32 %v3378, %v3369
        %v3380 = vand.u32 %v3357, 65535
        %v3381 = vshrl.u32 %v3357, 16
        %v3382 = vand.u32 %v3352, 65535
        %v3383 = vshrl.u32 %v3352, 16
        %v3384 = vmul.u32 %v3380, %v3382
        %v3385 = vmul.u32 %v3380, %v3383
        %v3386 = vmul.u32 %v3381, %v3382
        %v3387 = vmul.u32 %v3381, %v3383
        %v3388 = vshll.u32 %v3385, 16
        %v3389 = vshrl.u32 %v3385, 16
        %v3390 = vshll.u32 %v3386, 16
        %v3391 = vshrl.u32 %v3386, 16
        %vm3392 = vc.u32 %v3384, %v3388
        %v3393 = vsel %vm3392, 1, 0
        %v3394 = vadd.s32 %v3384, %v3388
        %v3395 = vadd.s32 %v3387, %v3393
        %vm3396 = vc.u32 %v3394, %v3390
        %v3397 = vsel %vm3396, 1, 0
        %v3398 = vadd.s32 %v3394, %v3390
        %v3399 = vadd.s32 %v3395, %v3397
        %v3400 = vadd.s32 %v3399, %v3389
        %v3401 = vadd.s32 %v3400, %v3391
        %v3402 = vmul.u32 %v3357, %v3348
        %v3403 = vadd.s32 %v3379, %v3398
        %vm3404 = vc.u32 %v3379, %v3398
        %v3405 = vadd.s32 %v3401, 1
        %v3406 = vsel %vm3404, %v3405, %v3401
        %v3407 = vadd.s32 %v3402, %v3406
        %v3408 = vadd.s32 %v3407, 536870912
        %v3409 = vshrl.u32 %v3408, 30
        %v3410 = vshll.u32 %v3409, 30
        %v3411 = vsub.s32 %v3407, %v3410
        %vm3412 = vcmp.lt.s32.totalorder %v3411, 0
        %v3413 = vsub.s32 0, %v3411
        %v3414 = vsel %vm3412, %v3413, %v3411
        %v3415 = vclz %v3414
        %v3416 = vsub.s32 %v3415, 2
        %vm3417 = vcmp.gt.s32.totalorder 0, %v3416
        %v3418 = vsel %vm3417, 0, %v3416
        %v3419 = vsub.s32 32, %v3418
        %v3420 = vshll.u32 %v3411, %v3418
        %v3421 = vshrl.u32 %v3403, %v3419
        %v3422 = vor.u32 %v3420, %v3421
        %v3423 = vsub.s32 4294967266, %v3418
        %v3424 = vadd.s32 %v3423, 127
        %v3425 = vshll.u32 %v3424, 23
        %v3426 = vor.u32 4788187, %v3425
        %v3427 = vand.u32 2147483647, %v3426
        %v3429 = vcvt.s32.f32 %v3422
        %v3430 = vmul.f32 %v3429, %v3427
        %v3431 = vxor.u32 %v3430, 2147483648
        %v3432 = vsel %vm3311, %v3431, %v3430
        %v3433 = vsub.s32 4, %v3409
        %v3434 = vsel %vm3311, %v3433, %v3409
        %v3435 = vsel %vm3310, %v353, %v3432
        %v3436 = vsel %vm3310, 0, %v3434
        %v3437 = vmul.f32 %v3435, %v3435
        %v3438 = vmul.f32 %v3437, -0.001358992
        %v3439 = vadd.f32 %v3438, 0.041655596
        %v3440 = vmul.f32 %v3437, %v3439
        %v3441 = vadd.f32 %v3440, -0.4999988
        %v3442 = vmul.f32 %v3437, %v3441
        %v3443 = vadd.f32 1.0, %v3442
        %v3444 = vmul.f32 %v3435, %v3435
        %v3445 = vmul.f32 %v3444, -0.00019511016
        %v3446 = vadd.f32 %v3445, 0.008332121
        %v3447 = vmul.f32 %v3444, %v3446
        %v3448 = vadd.f32 %v3447, -0.16666654
        %v3449 = vmul.f32 %v3444, %v3448
        %v3450 = vadd.f32 %v3449, 1.0
        %v3451 = vmul.f32 %v3450, %v3435
        %vm3452 = vweird.f32 %v353
        %v3453 = vadd.s32 %v3436, 3
        %v3454 = vand.u32 %v3453, 3
        %vm3455 = vcmp.lt.s32.totalorder %v3454, 2
        %vm3456 = vcmp.eq.s32.totalorder %v3454, 0
        %v3457 = vxor.u32 %v3451, 2147483648
        %v3458 = vsel %vm3456, %v3443, %v3457
        %vm3459 = vcmp.eq.s32.totalorder %v3454, 2
        %v3460 = vxor.u32 %v3443, 2147483648
        %v3461 = vsel %vm3459, %v3460, %v3451
        %v3462 = vsel %vm3455, %v3458, %v3461
        %v3463 = vsel %vm3452, nan, %v3462
        %v3464 = vand.u32 2147483647, %v354
        %vm3465 = vcmp.le.f32.partialorder %v3464, 0.7853982
        %vm3466 = vcmp.lt.s32.totalorder %v354, 0
        %v3467 = vand.u32 %v354, 2139095040
        %v3468 = vshrl.u32 %v3467, 23
        %v3469 = vsub.s32 %v3468, 127
        %v3470 = vand.u32 2147483647, %v354
        %v3471 = vand.u32 %v3470, 8388607
        %v3472 = vor.u32 %v3471, 8388608
        %v3473 = vsub.s32 0, %v3472
        %v3474 = vadd.s32 %v3469, 1
        %vm3475 = vcmp.gt.s32.totalorder %v3474, 0
        %v3476 = vsel %vm3475, %v3474, 0
        %v3477 = vshrl.u32 %v3476, 5
        %v3478 = vand.u32 %v3476, 31
        %v3479 = vsub.s32 32, %v3478
        %v3480 = vshrl.u32 683565275, %v3479
        %v3481 = vshll.u32 683565275, %v3478
        %v3482 = vshrl.u32 2475754826, %v3479
        %v3483 = vor.u32 %v3481, %v3482
        %v3484 = vshll.u32 2475754826, %v3478
        %v3485 = vshrl.u32 2131351028, %v3479
        %v3486 = vor.u32 %v3484, %v3485
        %v3487 = vshll.u32 2131351028, %v3478
        %v3488 = vshrl.u32 2102212464, %v3479
        %v3489 = vor.u32 %v3487, %v3488
        %v3490 = vshll.u32 2102212464, %v3478
        %v3491 = vshrl.u32 920167782, %v3479
        %v3492 = vor.u32 %v3490, %v3491
        %v3493 = vshll.u32 920167782, %v3478
        %v3494 = vshrl.u32 1326507024, %v3479
        %v3495 = vor.u32 %v3493, %v3494
        %vm3496 = vcmp.lt.s32.totalorder %v3477, 1
        %vm3497 = vcmp.lt.s32.totalorder %v3477, 2
        %vm3498 = vcmp.lt.s32.totalorder %v3477, 3
        %vm3499 = vcmp.lt.s32.totalorder %v3477, 4
        %v3500 = vsel %vm3496, %v3480, %v3483
        %v3501 = vsel %vm3499, %v3489, 2102212464
        %v3502 = vsel %vm3498, %v3486, %v3501
        %v3503 = vsel %vm3497, %v3500, %v3502
        %v3504 = vsel %vm3496, %v3483, %v3486
        %v3505 = vsel %vm3499, %v3492, 920167782
        %v3506 = vsel %vm3498, %v3489, %v3505
        %v3507 = vsel %vm3497, %v3504, %v3506
        %v3508 = vsel %vm3496, %v3486, %v3489
        %v3509 = vsel %vm3499, %v3495, 1326507024
        %v3510 = vsel %vm3498, %v3492, %v3509
        %v3511 = vsel %vm3497, %v3508, %v3510
        %v3512 = vshll.u32 %v3472, 8
        %v3513 = vand.u32 %v3512, 65535
        %v3514 = vshrl.u32 %v3512, 16
        %v3515 = vand.u32 %v3511, 65535
        %v3516 = vshrl.u32 %v3511, 16
        %v3517 = vmul.u32 %v3513, %v3515
        %v3518 = vmul.u32 %v3513, %v3516
        %v3519 = vmul.u32 %v3514, %v3515
        %v3520 = vmul.u32 %v3514, %v3516
        %v3521 = vshll.u32 %v3518, 16
        %v3522 = vshrl.u32 %v3518, 16
        %v3523 = vshll.u32 %v3519, 16
        %v3524 = vshrl.u32 %v3519, 16
        %vm3525 = vc.u32 %v3517, %v3521
        %v3526 = vsel %vm3525, 1, 0
        %v3527 = vadd.s32 %v3517, %v3521
        %v3528 = vadd.s32 %v3520, %v3526
        %vm3529 = vc.u32 %v3527, %v3523
        %v3530 = vsel %vm3529, 1, 0
        %v3531 = vadd.s32 %v3527, %v3523
        %v3532 = vadd.s32 %v3528, %v3530
        %v3533 = vadd.s32 %v3532, %v3522
        %v3534 = vadd.s32 %v3533, %v3524
        %v3535 = vand.u32 %v3512, 65535
        %v3536 = vshrl.u32 %v3512, 16
        %v3537 = vand.u32 %v3507, 65535
        %v3538 = vshrl.u32 %v3507, 16
        %v3539 = vmul.u32 %v3535, %v3537
        %v3540 = vmul.u32 %v3535, %v3538
        %v3541 = vmul.u32 %v3536, %v3537
        %v3542 = vmul.u32 %v3536, %v3538
        %v3543 = vshll.u32 %v3540, 16
        %v3544 = vshrl.u32 %v3540, 16
        %v3545 = vshll.u32 %v3541, 16
        %v3546 = vshrl.u32 %v3541, 16
        %vm3547 = vc.u32 %v3539, %v3543
        %v3548 = vsel %vm3547, 1, 0
        %v3549 = vadd.s32 %v3539, %v3543
        %v3550 = vadd.s32 %v3542, %v3548
        %vm3551 = vc.u32 %v3549, %v3545
        %v3552 = vsel %vm3551, 1, 0
        %v3553 = vadd.s32 %v3549, %v3545
        %v3554 = vadd.s32 %v3550, %v3552
        %v3555 = vadd.s32 %v3554, %v3544
        %v3556 = vadd.s32 %v3555, %v3546
        %v3557 = vmul.u32 %v3512, %v3503
        %v3558 = vadd.s32 %v3534, %v3553
        %vm3559 = vc.u32 %v3534, %v3553
        %v3560 = vadd.s32 %v3556, 1
        %v3561 = vsel %vm3559, %v3560, %v3556
        %v3562 = vadd.s32 %v3557, %v3561
        %v3563 = vadd.s32 %v3562, 536870912
        %v3564 = vshrl.u32 %v3563, 30
        %v3565 = vshll.u32 %v3564, 30
        %v3566 = vsub.s32 %v3562, %v3565
        %vm3567 = vcmp.lt.s32.totalorder %v3566, 0
        %v3568 = vsub.s32 0, %v3566
        %v3569 = vsel %vm3567, %v3568, %v3566
        %v3570 = vclz %v3569
        %v3571 = vsub.s32 %v3570, 2
        %vm3572 = vcmp.gt.s32.totalorder 0, %v3571
        %v3573 = vsel %vm3572, 0, %v3571
        %v3574 = vsub.s32 32, %v3573
        %v3575 = vshll.u32 %v3566, %v3573
        %v3576 = vshrl.u32 %v3558, %v3574
        %v3577 = vor.u32 %v3575, %v3576
        %v3578 = vsub.s32 4294967266, %v3573
        %v3579 = vadd.s32 %v3578, 127
        %v3580 = vshll.u32 %v3579, 23
        %v3581 = vor.u32 4788187, %v3580
        %v3582 = vand.u32 2147483647, %v3581
        %v3584 = vcvt.s32.f32 %v3577
        %v3585 = vmul.f32 %v3584, %v3582
        %v3586 = vxor.u32 %v3585, 2147483648
        %v3587 = vsel %vm3466, %v3586, %v3585
        %v3588 = vsub.s32 4, %v3564
        %v3589 = vsel %vm3466, %v3588, %v3564
        %v3590 = vsel %vm3465, %v354, %v3587
        %v3591 = vsel %vm3465, 0, %v3589
        %v3592 = vmul.f32 %v3590, %v3590
        %v3593 = vmul.f32 %v3592, -0.001358992
        %v3594 = vadd.f32 %v3593, 0.041655596
        %v3595 = vmul.f32 %v3592, %v3594
        %v3596 = vadd.f32 %v3595, -0.4999988
        %v3597 = vmul.f32 %v3592, %v3596
        %v3598 = vadd.f32 1.0, %v3597
        %v3599 = vmul.f32 %v3590, %v3590
        %v3600 = vmul.f32 %v3599, -0.00019511016
        %v3601 = vadd.f32 %v3600, 0.008332121
        %v3602 = vmul.f32 %v3599, %v3601
        %v3603 = vadd.f32 %v3602, -0.16666654
        %v3604 = vmul.f32 %v3599, %v3603
        %v3605 = vadd.f32 %v3604, 1.0
        %v3606 = vmul.f32 %v3605, %v3590
        %vm3607 = vweird.f32 %v354
        %v3608 = vadd.s32 %v3591, 3
        %v3609 = vand.u32 %v3608, 3
        %vm3610 = vcmp.lt.s32.totalorder %v3609, 2
        %vm3611 = vcmp.eq.s32.totalorder %v3609, 0
        %v3612 = vxor.u32 %v3606, 2147483648
        %v3613 = vsel %vm3611, %v3598, %v3612
        %vm3614 = vcmp.eq.s32.totalorder %v3609, 2
        %v3615 = vxor.u32 %v3598, 2147483648
        %v3616 = vsel %vm3614, %v3615, %v3606
        %v3617 = vsel %vm3610, %v3613, %v3616
        %v3618 = vsel %vm3607, nan, %v3617
        %v3619 = vand.u32 2147483647, %v355
        %vm3620 = vcmp.le.f32.partialorder %v3619, 0.7853982
        %vm3621 = vcmp.lt.s32.totalorder %v355, 0
        %v3622 = vand.u32 %v355, 2139095040
        %v3623 = vshrl.u32 %v3622, 23
        %v3624 = vsub.s32 %v3623, 127
        %v3625 = vand.u32 2147483647, %v355
        %v3626 = vand.u32 %v3625, 8388607
        %v3627 = vor.u32 %v3626, 8388608
        %v3628 = vsub.s32 0, %v3627
        %v3629 = vadd.s32 %v3624, 1
        %vm3630 = vcmp.gt.s32.totalorder %v3629, 0
        %v3631 = vsel %vm3630, %v3629, 0
        %v3632 = vshrl.u32 %v3631, 5
        %v3633 = vand.u32 %v3631, 31
        %v3634 = vsub.s32 32, %v3633
        %v3635 = vshrl.u32 683565275, %v3634
        %v3636 = vshll.u32 683565275, %v3633
        %v3637 = vshrl.u32 2475754826, %v3634
        %v3638 = vor.u32 %v3636, %v3637
        %v3639 = vshll.u32 2475754826, %v3633
        %v3640 = vshrl.u32 2131351028, %v3634
        %v3641 = vor.u32 %v3639, %v3640
        %v3642 = vshll.u32 2131351028, %v3633
        %v3643 = vshrl.u32 2102212464, %v3634
        %v3644 = vor.u32 %v3642, %v3643
        %v3645 = vshll.u32 2102212464, %v3633
        %v3646 = vshrl.u32 920167782, %v3634
        %v3647 = vor.u32 %v3645, %v3646
        %v3648 = vshll.u32 920167782, %v3633
        %v3649 = vshrl.u32 1326507024, %v3634
        %v3650 = vor.u32 %v3648, %v3649
        %vm3651 = vcmp.lt.s32.totalorder %v3632, 1
        %vm3652 = vcmp.lt.s32.totalorder %v3632, 2
        %vm3653 = vcmp.lt.s32.totalorder %v3632, 3
        %vm3654 = vcmp.lt.s32.totalorder %v3632, 4
        %v3655 = vsel %vm3651, %v3635, %v3638
        %v3656 = vsel %vm3654, %v3644, 2102212464
        %v3657 = vsel %vm3653, %v3641, %v3656
        %v3658 = vsel %vm3652, %v3655, %v3657
        %v3659 = vsel %vm3651, %v3638, %v3641
        %v3660 = vsel %vm3654, %v3647, 920167782
        %v3661 = vsel %vm3653, %v3644, %v3660
        %v3662 = vsel %vm3652, %v3659, %v3661
        %v3663 = vsel %vm3651, %v3641, %v3644
        %v3664 = vsel %vm3654, %v3650, 1326507024
        %v3665 = vsel %vm3653, %v3647, %v3664
        %v3666 = vsel %vm3652, %v3663, %v3665
        %v3667 = vshll.u32 %v3627, 8
        %v3668 = vand.u32 %v3667, 65535
        %v3669 = vshrl.u32 %v3667, 16
        %v3670 = vand.u32 %v3666, 65535
        %v3671 = vshrl.u32 %v3666, 16
        %v3672 = vmul.u32 %v3668, %v3670
        %v3673 = vmul.u32 %v3668, %v3671
        %v3674 = vmul.u32 %v3669, %v3670
        %v3675 = vmul.u32 %v3669, %v3671
        %v3676 = vshll.u32 %v3673, 16
        %v3677 = vshrl.u32 %v3673, 16
        %v3678 = vshll.u32 %v3674, 16
        %v3679 = vshrl.u32 %v3674, 16
        %vm3680 = vc.u32 %v3672, %v3676
        %v3681 = vsel %vm3680, 1, 0
        %v3682 = vadd.s32 %v3672, %v3676
        %v3683 = vadd.s32 %v3675, %v3681
        %vm3684 = vc.u32 %v3682, %v3678
        %v3685 = vsel %vm3684, 1, 0
        %v3686 = vadd.s32 %v3682, %v3678
        %v3687 = vadd.s32 %v3683, %v3685
        %v3688 = vadd.s32 %v3687, %v3677
        %v3689 = vadd.s32 %v3688, %v3679
        %v3690 = vand.u32 %v3667, 65535
        %v3691 = vshrl.u32 %v3667, 16
        %v3692 = vand.u32 %v3662, 65535
        %v3693 = vshrl.u32 %v3662, 16
        %v3694 = vmul.u32 %v3690, %v3692
        %v3695 = vmul.u32 %v3690, %v3693
        %v3696 = vmul.u32 %v3691, %v3692
        %v3697 = vmul.u32 %v3691, %v3693
        %v3698 = vshll.u32 %v3695, 16
        %v3699 = vshrl.u32 %v3695, 16
        %v3700 = vshll.u32 %v3696, 16
        %v3701 = vshrl.u32 %v3696, 16
        %vm3702 = vc.u32 %v3694, %v3698
        %v3703 = vsel %vm3702, 1, 0
        %v3704 = vadd.s32 %v3694, %v3698
        %v3705 = vadd.s32 %v3697, %v3703
        %vm3706 = vc.u32 %v3704, %v3700
        %v3707 = vsel %vm3706, 1, 0
        %v3708 = vadd.s32 %v3704, %v3700
        %v3709 = vadd.s32 %v3705, %v3707
        %v3710 = vadd.s32 %v3709, %v3699
        %v3711 = vadd.s32 %v3710, %v3701
        %v3712 = vmul.u32 %v3667, %v3658
        %v3713 = vadd.s32 %v3689, %v3708
        %vm3714 = vc.u32 %v3689, %v3708
        %v3715 = vadd.s32 %v3711, 1
        %v3716 = vsel %vm3714, %v3715, %v3711
        %v3717 = vadd.s32 %v3712, %v3716
        %v3718 = vadd.s32 %v3717, 536870912
        %v3719 = vshrl.u32 %v3718, 30
        %v3720 = vshll.u32 %v3719, 30
        %v3721 = vsub.s32 %v3717, %v3720
        %vm3722 = vcmp.lt.s32.totalorder %v3721, 0
        %v3723 = vsub.s32 0, %v3721
        %v3724 = vsel %vm3722, %v3723, %v3721
        %v3725 = vclz %v3724
        %v3726 = vsub.s32 %v3725, 2
        %vm3727 = vcmp.gt.s32.totalorder 0, %v3726
        %v3728 = vsel %vm3727, 0, %v3726
        %v3729 = vsub.s32 32, %v3728
        %v3730 = vshll.u32 %v3721, %v3728
        %v3731 = vshrl.u32 %v3713, %v3729
        %v3732 = vor.u32 %v3730, %v3731
        %v3733 = vsub.s32 4294967266, %v3728
        %v3734 = vadd.s32 %v3733, 127
        %v3735 = vshll.u32 %v3734, 23
        %v3736 = vor.u32 4788187, %v3735
        %v3737 = vand.u32 2147483647, %v3736
        %v3739 = vcvt.s32.f32 %v3732
        %v3740 = vmul.f32 %v3739, %v3737
        %v3741 = vxor.u32 %v3740, 2147483648
        %v3742 = vsel %vm3621, %v3741, %v3740
        %v3743 = vsub.s32 4, %v3719
        %v3744 = vsel %vm3621, %v3743, %v3719
        %v3745 = vsel %vm3620, %v355, %v3742
        %v3746 = vsel %vm3620, 0, %v3744
        %v3747 = vmul.f32 %v3745, %v3745
        %v3748 = vmul.f32 %v3747, -0.001358992
        %v3749 = vadd.f32 %v3748, 0.041655596
        %v3750 = vmul.f32 %v3747, %v3749
        %v3751 = vadd.f32 %v3750, -0.4999988
        %v3752 = vmul.f32 %v3747, %v3751
        %v3753 = vadd.f32 1.0, %v3752
        %v3754 = vmul.f32 %v3745, %v3745
        %v3755 = vmul.f32 %v3754, -0.00019511016
        %v3756 = vadd.f32 %v3755, 0.008332121
        %v3757 = vmul.f32 %v3754, %v3756
        %v3758 = vadd.f32 %v3757, -0.16666654
        %v3759 = vmul.f32 %v3754, %v3758
        %v3760 = vadd.f32 %v3759, 1.0
        %v3761 = vmul.f32 %v3760, %v3745
        %vm3762 = vweird.f32 %v355
        %v3763 = vadd.s32 %v3746, 3
        %v3764 = vand.u32 %v3763, 3
        %vm3765 = vcmp.lt.s32.totalorder %v3764, 2
        %vm3766 = vcmp.eq.s32.totalorder %v3764, 0
        %v3767 = vxor.u32 %v3761, 2147483648
        %v3768 = vsel %vm3766, %v3753, %v3767
        %vm3769 = vcmp.eq.s32.totalorder %v3764, 2
        %v3770 = vxor.u32 %v3753, 2147483648
        %v3771 = vsel %vm3769, %v3770, %v3761
        %v3772 = vsel %vm3765, %v3768, %v3771
        %v3773 = vsel %vm3762, nan, %v3772
        %v3774 = vand.u32 2147483647, %v356
        %vm3775 = vcmp.le.f32.partialorder %v3774, 0.7853982
        %vm3776 = vcmp.lt.s32.totalorder %v356, 0
        %v3777 = vand.u32 %v356, 2139095040
        %v3778 = vshrl.u32 %v3777, 23
        %v3779 = vsub.s32 %v3778, 127
        %v3780 = vand.u32 2147483647, %v356
        %v3781 = vand.u32 %v3780, 8388607
        %v3782 = vor.u32 %v3781, 8388608
        %v3783 = vsub.s32 0, %v3782
        %v3784 = vadd.s32 %v3779, 1
        %vm3785 = vcmp.gt.s32.totalorder %v3784, 0
        %v3786 = vsel %vm3785, %v3784, 0
        %v3787 = vshrl.u32 %v3786, 5
        %v3788 = vand.u32 %v3786, 31
        %v3789 = vsub.s32 32, %v3788
        %v3790 = vshrl.u32 683565275, %v3789
        %v3791 = vshll.u32 683565275, %v3788
        %v3792 = vshrl.u32 2475754826, %v3789
        %v3793 = vor.u32 %v3791, %v3792
        %v3794 = vshll.u32 2475754826, %v3788
        %v3795 = vshrl.u32 2131351028, %v3789
        %v3796 = vor.u32 %v3794, %v3795
        %v3797 = vshll.u32 2131351028, %v3788
        %v3798 = vshrl.u32 2102212464, %v3789
        %v3799 = vor.u32 %v3797, %v3798
        %v3800 = vshll.u32 2102212464, %v3788
        %v3801 = vshrl.u32 920167782, %v3789
        %v3802 = vor.u32 %v3800, %v3801
        %v3803 = vshll.u32 920167782, %v3788
        %v3804 = vshrl.u32 1326507024, %v3789
        %v3805 = vor.u32 %v3803, %v3804
        %vm3806 = vcmp.lt.s32.totalorder %v3787, 1
        %vm3807 = vcmp.lt.s32.totalorder %v3787, 2
        %vm3808 = vcmp.lt.s32.totalorder %v3787, 3
        %vm3809 = vcmp.lt.s32.totalorder %v3787, 4
        %v3810 = vsel %vm3806, %v3790, %v3793
        %v3811 = vsel %vm3809, %v3799, 2102212464
        %v3812 = vsel %vm3808, %v3796, %v3811
        %v3813 = vsel %vm3807, %v3810, %v3812
        %v3814 = vsel %vm3806, %v3793, %v3796
        %v3815 = vsel %vm3809, %v3802, 920167782
        %v3816 = vsel %vm3808, %v3799, %v3815
        %v3817 = vsel %vm3807, %v3814, %v3816
        %v3818 = vsel %vm3806, %v3796, %v3799
        %v3819 = vsel %vm3809, %v3805, 1326507024
        %v3820 = vsel %vm3808, %v3802, %v3819
        %v3821 = vsel %vm3807, %v3818, %v3820
        %v3822 = vshll.u32 %v3782, 8
        %v3823 = vand.u32 %v3822, 65535
        %v3824 = vshrl.u32 %v3822, 16
        %v3825 = vand.u32 %v3821, 65535
        %v3826 = vshrl.u32 %v3821, 16
        %v3827 = vmul.u32 %v3823, %v3825
        %v3828 = vmul.u32 %v3823, %v3826
        %v3829 = vmul.u32 %v3824, %v3825
        %v3830 = vmul.u32 %v3824, %v3826
        %v3831 = vshll.u32 %v3828, 16
        %v3832 = vshrl.u32 %v3828, 16
        %v3833 = vshll.u32 %v3829, 16
        %v3834 = vshrl.u32 %v3829, 16
        %vm3835 = vc.u32 %v3827, %v3831
        %v3836 = vsel %vm3835, 1, 0
        %v3837 = vadd.s32 %v3827, %v3831
        %v3838 = vadd.s32 %v3830, %v3836
        %vm3839 = vc.u32 %v3837, %v3833
        %v3840 = vsel %vm3839, 1, 0
        %v3841 = vadd.s32 %v3837, %v3833
        %v3842 = vadd.s32 %v3838, %v3840
        %v3843 = vadd.s32 %v3842, %v3832
        %v3844 = vadd.s32 %v3843, %v3834
        %v3845 = vand.u32 %v3822, 65535
        %v3846 = vshrl.u32 %v3822, 16
        %v3847 = vand.u32 %v3817, 65535
        %v3848 = vshrl.u32 %v3817, 16
        %v3849 = vmul.u32 %v3845, %v3847
        %v3850 = vmul.u32 %v3845, %v3848
        %v3851 = vmul.u32 %v3846, %v3847
        %v3852 = vmul.u32 %v3846, %v3848
        %v3853 = vshll.u32 %v3850, 16
        %v3854 = vshrl.u32 %v3850, 16
        %v3855 = vshll.u32 %v3851, 16
        %v3856 = vshrl.u32 %v3851, 16
        %vm3857 = vc.u32 %v3849, %v3853
        %v3858 = vsel %vm3857, 1, 0
        %v3859 = vadd.s32 %v3849, %v3853
        %v3860 = vadd.s32 %v3852, %v3858
        %vm3861 = vc.u32 %v3859, %v3855
        %v3862 = vsel %vm3861, 1, 0
        %v3863 = vadd.s32 %v3859, %v3855
        %v3864 = vadd.s32 %v3860, %v3862
        %v3865 = vadd.s32 %v3864, %v3854
        %v3866 = vadd.s32 %v3865, %v3856
        %v3867 = vmul.u32 %v3822, %v3813
        %v3868 = vadd.s32 %v3844, %v3863
        %vm3869 = vc.u32 %v3844, %v3863
        %v3870 = vadd.s32 %v3866, 1
        %v3871 = vsel %vm3869, %v3870, %v3866
        %v3872 = vadd.s32 %v3867, %v3871
        %v3873 = vadd.s32 %v3872, 536870912
        %v3874 = vshrl.u32 %v3873, 30
        %v3875 = vshll.u32 %v3874, 30
        %v3876 = vsub.s32 %v3872, %v3875
        %vm3877 = vcmp.lt.s32.totalorder %v3876, 0
        %v3878 = vsub.s32 0, %v3876
        %v3879 = vsel %vm3877, %v3878, %v3876
        %v3880 = vclz %v3879
        %v3881 = vsub.s32 %v3880, 2
        %vm3882 = vcmp.gt.s32.totalorder 0, %v3881
        %v3883 = vsel %vm3882, 0, %v3881
        %v3884 = vsub.s32 32, %v3883
        %v3885 = vshll.u32 %v3876, %v3883
        %v3886 = vshrl.u32 %v3868, %v3884
        %v3887 = vor.u32 %v3885, %v3886
        %v3888 = vsub.s32 4294967266, %v3883
        %v3889 = vadd.s32 %v3888, 127
        %v3890 = vshll.u32 %v3889, 23
        %v3891 = vor.u32 4788187, %v3890
        %v3892 = vand.u32 2147483647, %v3891
        %v3894 = vcvt.s32.f32 %v3887
        %v3895 = vmul.f32 %v3894, %v3892
        %v3896 = vxor.u32 %v3895, 2147483648
        %v3897 = vsel %vm3776, %v3896, %v3895
        %v3898 = vsub.s32 4, %v3874
        %v3899 = vsel %vm3776, %v3898, %v3874
        %v3900 = vsel %vm3775, %v356, %v3897
        %v3901 = vsel %vm3775, 0, %v3899
        %v3902 = vmul.f32 %v3900, %v3900
        %v3903 = vmul.f32 %v3902, -0.001358992
        %v3904 = vadd.f32 %v3903, 0.041655596
        %v3905 = vmul.f32 %v3902, %v3904
        %v3906 = vadd.f32 %v3905, -0.4999988
        %v3907 = vmul.f32 %v3902, %v3906
        %v3908 = vadd.f32 1.0, %v3907
        %v3909 = vmul.f32 %v3900, %v3900
        %v3910 = vmul.f32 %v3909, -0.00019511016
        %v3911 = vadd.f32 %v3910, 0.008332121
        %v3912 = vmul.f32 %v3909, %v3911
        %v3913 = vadd.f32 %v3912, -0.16666654
        %v3914 = vmul.f32 %v3909, %v3913
        %v3915 = vadd.f32 %v3914, 1.0
        %v3916 = vmul.f32 %v3915, %v3900
        %vm3917 = vweird.f32 %v356
        %v3918 = vadd.s32 %v3901, 3
        %v3919 = vand.u32 %v3918, 3
        %vm3920 = vcmp.lt.s32.totalorder %v3919, 2
        %vm3921 = vcmp.eq.s32.totalorder %v3919, 0
        %v3922 = vxor.u32 %v3916, 2147483648
        %v3923 = vsel %vm3921, %v3908, %v3922
        %vm3924 = vcmp.eq.s32.totalorder %v3919, 2
        %v3925 = vxor.u32 %v3908, 2147483648
        %v3926 = vsel %vm3924, %v3925, %v3916
        %v3927 = vsel %vm3920, %v3923, %v3926
        %v3928 = vsel %vm3917, nan, %v3927
        %v3929 = vand.u32 2147483647, %v357
        %vm3930 = vcmp.le.f32.partialorder %v3929, 0.7853982
        %vm3931 = vcmp.lt.s32.totalorder %v357, 0
        %v3932 = vand.u32 %v357, 2139095040
        %v3933 = vshrl.u32 %v3932, 23
        %v3934 = vsub.s32 %v3933, 127
        %v3935 = vand.u32 2147483647, %v357
        %v3936 = vand.u32 %v3935, 8388607
        %v3937 = vor.u32 %v3936, 8388608
        %v3938 = vsub.s32 0, %v3937
        %v3939 = vadd.s32 %v3934, 1
        %vm3940 = vcmp.gt.s32.totalorder %v3939, 0
        %v3941 = vsel %vm3940, %v3939, 0
        %v3942 = vshrl.u32 %v3941, 5
        %v3943 = vand.u32 %v3941, 31
        %v3944 = vsub.s32 32, %v3943
        %v3945 = vshrl.u32 683565275, %v3944
        %v3946 = vshll.u32 683565275, %v3943
        %v3947 = vshrl.u32 2475754826, %v3944
        %v3948 = vor.u32 %v3946, %v3947
        %v3949 = vshll.u32 2475754826, %v3943
        %v3950 = vshrl.u32 2131351028, %v3944
        %v3951 = vor.u32 %v3949, %v3950
        %v3952 = vshll.u32 2131351028, %v3943
        %v3953 = vshrl.u32 2102212464, %v3944
        %v3954 = vor.u32 %v3952, %v3953
        %v3955 = vshll.u32 2102212464, %v3943
        %v3956 = vshrl.u32 920167782, %v3944
        %v3957 = vor.u32 %v3955, %v3956
        %v3958 = vshll.u32 920167782, %v3943
        %v3959 = vshrl.u32 1326507024, %v3944
        %v3960 = vor.u32 %v3958, %v3959
        %vm3961 = vcmp.lt.s32.totalorder %v3942, 1
        %vm3962 = vcmp.lt.s32.totalorder %v3942, 2
        %vm3963 = vcmp.lt.s32.totalorder %v3942, 3
        %vm3964 = vcmp.lt.s32.totalorder %v3942, 4
        %v3965 = vsel %vm3961, %v3945, %v3948
        %v3966 = vsel %vm3964, %v3954, 2102212464
        %v3967 = vsel %vm3963, %v3951, %v3966
        %v3968 = vsel %vm3962, %v3965, %v3967
        %v3969 = vsel %vm3961, %v3948, %v3951
        %v3970 = vsel %vm3964, %v3957, 920167782
        %v3971 = vsel %vm3963, %v3954, %v3970
        %v3972 = vsel %vm3962, %v3969, %v3971
        %v3973 = vsel %vm3961, %v3951, %v3954
        %v3974 = vsel %vm3964, %v3960, 1326507024
        %v3975 = vsel %vm3963, %v3957, %v3974
        %v3976 = vsel %vm3962, %v3973, %v3975
        %v3977 = vshll.u32 %v3937, 8
        %v3978 = vand.u32 %v3977, 65535
        %v3979 = vshrl.u32 %v3977, 16
        %v3980 = vand.u32 %v3976, 65535
        %v3981 = vshrl.u32 %v3976, 16
        %v3982 = vmul.u32 %v3978, %v3980
        %v3983 = vmul.u32 %v3978, %v3981
        %v3984 = vmul.u32 %v3979, %v3980
        %v3985 = vmul.u32 %v3979, %v3981
        %v3986 = vshll.u32 %v3983, 16
        %v3987 = vshrl.u32 %v3983, 16
        %v3988 = vshll.u32 %v3984, 16
        %v3989 = vshrl.u32 %v3984, 16
        %vm3990 = vc.u32 %v3982, %v3986
        %v3991 = vsel %vm3990, 1, 0
        %v3992 = vadd.s32 %v3982, %v3986
        %v3993 = vadd.s32 %v3985, %v3991
        %vm3994 = vc.u32 %v3992, %v3988
        %v3995 = vsel %vm3994, 1, 0
        %v3996 = vadd.s32 %v3992, %v3988
        %v3997 = vadd.s32 %v3993, %v3995
        %v3998 = vadd.s32 %v3997, %v3987
        %v3999 = vadd.s32 %v3998, %v3989
        %v4000 = vand.u32 %v3977, 65535
        %v4001 = vshrl.u32 %v3977, 16
        %v4002 = vand.u32 %v3972, 65535
        %v4003 = vshrl.u32 %v3972, 16
        %v4004 = vmul.u32 %v4000, %v4002
        %v4005 = vmul.u32 %v4000, %v4003
        %v4006 = vmul.u32 %v4001, %v4002
        %v4007 = vmul.u32 %v4001, %v4003
        %v4008 = vshll.u32 %v4005, 16
        %v4009 = vshrl.u32 %v4005, 16
        %v4010 = vshll.u32 %v4006, 16
        %v4011 = vshrl.u32 %v4006, 16
        %vm4012 = vc.u32 %v4004, %v4008
        %v4013 = vsel %vm4012, 1, 0
        %v4014 = vadd.s32 %v4004, %v4008
        %v4015 = vadd.s32 %v4007, %v4013
        %vm4016 = vc.u32 %v4014, %v4010
        %v4017 = vsel %vm4016, 1, 0
        %v4018 = vadd.s32 %v4014, %v4010
        %v4019 = vadd.s32 %v4015, %v4017
        %v4020 = vadd.s32 %v4019, %v4009
        %v4021 = vadd.s32 %v4020, %v4011
        %v4022 = vmul.u32 %v3977, %v3968
        %v4023 = vadd.s32 %v3999, %v4018
        %vm4024 = vc.u32 %v3999, %v4018
        %v4025 = vadd.s32 %v4021, 1
        %v4026 = vsel %vm4024, %v4025, %v4021
        %v4027 = vadd.s32 %v4022, %v4026
        %v4028 = vadd.s32 %v4027, 536870912
        %v4029 = vshrl.u32 %v4028, 30
        %v4030 = vshll.u32 %v4029, 30
        %v4031 = vsub.s32 %v4027, %v4030
        %vm4032 = vcmp.lt.s32.totalorder %v4031, 0
        %v4033 = vsub.s32 0, %v4031
        %v4034 = vsel %vm4032, %v4033, %v4031
        %v4035 = vclz %v4034
        %v4036 = vsub.s32 %v4035, 2
        %vm4037 = vcmp.gt.s32.totalorder 0, %v4036
        %v4038 = vsel %vm4037, 0, %v4036
        %v4039 = vsub.s32 32, %v4038
        %v4040 = vshll.u32 %v4031, %v4038
        %v4041 = vshrl.u32 %v4023, %v4039
        %v4042 = vor.u32 %v4040, %v4041
        %v4043 = vsub.s32 4294967266, %v4038
        %v4044 = vadd.s32 %v4043, 127
        %v4045 = vshll.u32 %v4044, 23
        %v4046 = vor.u32 4788187, %v4045
        %v4047 = vand.u32 2147483647, %v4046
        %v4049 = vcvt.s32.f32 %v4042
        %v4050 = vmul.f32 %v4049, %v4047
        %v4051 = vxor.u32 %v4050, 2147483648
        %v4052 = vsel %vm3931, %v4051, %v4050
        %v4053 = vsub.s32 4, %v4029
        %v4054 = vsel %vm3931, %v4053, %v4029
        %v4055 = vsel %vm3930, %v357, %v4052
        %v4056 = vsel %vm3930, 0, %v4054
        %v4057 = vmul.f32 %v4055, %v4055
        %v4058 = vmul.f32 %v4057, -0.001358992
        %v4059 = vadd.f32 %v4058, 0.041655596
        %v4060 = vmul.f32 %v4057, %v4059
        %v4061 = vadd.f32 %v4060, -0.4999988
        %v4062 = vmul.f32 %v4057, %v4061
        %v4063 = vadd.f32 1.0, %v4062
        %v4064 = vmul.f32 %v4055, %v4055
        %v4065 = vmul.f32 %v4064, -0.00019511016
        %v4066 = vadd.f32 %v4065, 0.008332121
        %v4067 = vmul.f32 %v4064, %v4066
        %v4068 = vadd.f32 %v4067, -0.16666654
        %v4069 = vmul.f32 %v4064, %v4068
        %v4070 = vadd.f32 %v4069, 1.0
        %v4071 = vmul.f32 %v4070, %v4055
        %vm4072 = vweird.f32 %v357
        %v4073 = vadd.s32 %v4056, 3
        %v4074 = vand.u32 %v4073, 3
        %vm4075 = vcmp.lt.s32.totalorder %v4074, 2
        %vm4076 = vcmp.eq.s32.totalorder %v4074, 0
        %v4077 = vxor.u32 %v4071, 2147483648
        %v4078 = vsel %vm4076, %v4063, %v4077
        %vm4079 = vcmp.eq.s32.totalorder %v4074, 2
        %v4080 = vxor.u32 %v4063, 2147483648
        %v4081 = vsel %vm4079, %v4080, %v4071
        %v4082 = vsel %vm4075, %v4078, %v4081
        %v4083 = vsel %vm4072, nan, %v4082
        %v4084 = vand.u32 2147483647, %v358
        %vm4085 = vcmp.le.f32.partialorder %v4084, 0.7853982
        %vm4086 = vcmp.lt.s32.totalorder %v358, 0
        %v4087 = vand.u32 %v358, 2139095040
        %v4088 = vshrl.u32 %v4087, 23
        %v4089 = vsub.s32 %v4088, 127
        %v4090 = vand.u32 2147483647, %v358
        %v4091 = vand.u32 %v4090, 8388607
        %v4092 = vor.u32 %v4091, 8388608
        %v4093 = vsub.s32 0, %v4092
        %v4094 = vadd.s32 %v4089, 1
        %vm4095 = vcmp.gt.s32.totalorder %v4094, 0
        %v4096 = vsel %vm4095, %v4094, 0
        %v4097 = vshrl.u32 %v4096, 5
        %v4098 = vand.u32 %v4096, 31
        %v4099 = vsub.s32 32, %v4098
        %v4100 = vshrl.u32 683565275, %v4099
        %v4101 = vshll.u32 683565275, %v4098
        %v4102 = vshrl.u32 2475754826, %v4099
        %v4103 = vor.u32 %v4101, %v4102
        %v4104 = vshll.u32 2475754826, %v4098
        %v4105 = vshrl.u32 2131351028, %v4099
        %v4106 = vor.u32 %v4104, %v4105
        %v4107 = vshll.u32 2131351028, %v4098
        %v4108 = vshrl.u32 2102212464, %v4099
        %v4109 = vor.u32 %v4107, %v4108
        %v4110 = vshll.u32 2102212464, %v4098
        %v4111 = vshrl.u32 920167782, %v4099
        %v4112 = vor.u32 %v4110, %v4111
        %v4113 = vshll.u32 920167782, %v4098
        %v4114 = vshrl.u32 1326507024, %v4099
        %v4115 = vor.u32 %v4113, %v4114
        %vm4116 = vcmp.lt.s32.totalorder %v4097, 1
        %vm4117 = vcmp.lt.s32.totalorder %v4097, 2
        %vm4118 = vcmp.lt.s32.totalorder %v4097, 3
        %vm4119 = vcmp.lt.s32.totalorder %v4097, 4
        %v4120 = vsel %vm4116, %v4100, %v4103
        %v4121 = vsel %vm4119, %v4109, 2102212464
        %v4122 = vsel %vm4118, %v4106, %v4121
        %v4123 = vsel %vm4117, %v4120, %v4122
        %v4124 = vsel %vm4116, %v4103, %v4106
        %v4125 = vsel %vm4119, %v4112, 920167782
        %v4126 = vsel %vm4118, %v4109, %v4125
        %v4127 = vsel %vm4117, %v4124, %v4126
        %v4128 = vsel %vm4116, %v4106, %v4109
        %v4129 = vsel %vm4119, %v4115, 1326507024
        %v4130 = vsel %vm4118, %v4112, %v4129
        %v4131 = vsel %vm4117, %v4128, %v4130
        %v4132 = vshll.u32 %v4092, 8
        %v4133 = vand.u32 %v4132, 65535
        %v4134 = vshrl.u32 %v4132, 16
        %v4135 = vand.u32 %v4131, 65535
        %v4136 = vshrl.u32 %v4131, 16
        %v4137 = vmul.u32 %v4133, %v4135
        %v4138 = vmul.u32 %v4133, %v4136
        %v4139 = vmul.u32 %v4134, %v4135
        %v4140 = vmul.u32 %v4134, %v4136
        %v4141 = vshll.u32 %v4138, 16
        %v4142 = vshrl.u32 %v4138, 16
        %v4143 = vshll.u32 %v4139, 16
        %v4144 = vshrl.u32 %v4139, 16
        %vm4145 = vc.u32 %v4137, %v4141
        %v4146 = vsel %vm4145, 1, 0
        %v4147 = vadd.s32 %v4137, %v4141
        %v4148 = vadd.s32 %v4140, %v4146
        %vm4149 = vc.u32 %v4147, %v4143
        %v4150 = vsel %vm4149, 1, 0
        %v4151 = vadd.s32 %v4147, %v4143
        %v4152 = vadd.s32 %v4148, %v4150
        %v4153 = vadd.s32 %v4152, %v4142
        %v4154 = vadd.s32 %v4153, %v4144
        %v4155 = vand.u32 %v4132, 65535
        %v4156 = vshrl.u32 %v4132, 16
        %v4157 = vand.u32 %v4127, 65535
        %v4158 = vshrl.u32 %v4127, 16
        %v4159 = vmul.u32 %v4155, %v4157
        %v4160 = vmul.u32 %v4155, %v4158
        %v4161 = vmul.u32 %v4156, %v4157
        %v4162 = vmul.u32 %v4156, %v4158
        %v4163 = vshll.u32 %v4160, 16
        %v4164 = vshrl.u32 %v4160, 16
        %v4165 = vshll.u32 %v4161, 16
        %v4166 = vshrl.u32 %v4161, 16
        %vm4167 = vc.u32 %v4159, %v4163
        %v4168 = vsel %vm4167, 1, 0
        %v4169 = vadd.s32 %v4159, %v4163
        %v4170 = vadd.s32 %v4162, %v4168
        %vm4171 = vc.u32 %v4169, %v4165
        %v4172 = vsel %vm4171, 1, 0
        %v4173 = vadd.s32 %v4169, %v4165
        %v4174 = vadd.s32 %v4170, %v4172
        %v4175 = vadd.s32 %v4174, %v4164
        %v4176 = vadd.s32 %v4175, %v4166
        %v4177 = vmul.u32 %v4132, %v4123
        %v4178 = vadd.s32 %v4154, %v4173
        %vm4179 = vc.u32 %v4154, %v4173
        %v4180 = vadd.s32 %v4176, 1
        %v4181 = vsel %vm4179, %v4180, %v4176
        %v4182 = vadd.s32 %v4177, %v4181
        %v4183 = vadd.s32 %v4182, 536870912
        %v4184 = vshrl.u32 %v4183, 30
        %v4185 = vshll.u32 %v4184, 30
        %v4186 = vsub.s32 %v4182, %v4185
        %vm4187 = vcmp.lt.s32.totalorder %v4186, 0
        %v4188 = vsub.s32 0, %v4186
        %v4189 = vsel %vm4187, %v4188, %v4186
        %v4190 = vclz %v4189
        %v4191 = vsub.s32 %v4190, 2
        %vm4192 = vcmp.gt.s32.totalorder 0, %v4191
        %v4193 = vsel %vm4192, 0, %v4191
        %v4194 = vsub.s32 32, %v4193
        %v4195 = vshll.u32 %v4186, %v4193
        %v4196 = vshrl.u32 %v4178, %v4194
        %v4197 = vor.u32 %v4195, %v4196
        %v4198 = vsub.s32 4294967266, %v4193
        %v4199 = vadd.s32 %v4198, 127
        %v4200 = vshll.u32 %v4199, 23
        %v4201 = vor.u32 4788187, %v4200
        %v4202 = vand.u32 2147483647, %v4201
        %v4204 = vcvt.s32.f32 %v4197
        %v4205 = vmul.f32 %v4204, %v4202
        %v4206 = vxor.u32 %v4205, 2147483648
        %v4207 = vsel %vm4086, %v4206, %v4205
        %v4208 = vsub.s32 4, %v4184
        %v4209 = vsel %vm4086, %v4208, %v4184
        %v4210 = vsel %vm4085, %v358, %v4207
        %v4211 = vsel %vm4085, 0, %v4209
        %v4212 = vmul.f32 %v4210, %v4210
        %v4213 = vmul.f32 %v4212, -0.001358992
        %v4214 = vadd.f32 %v4213, 0.041655596
        %v4215 = vmul.f32 %v4212, %v4214
        %v4216 = vadd.f32 %v4215, -0.4999988
        %v4217 = vmul.f32 %v4212, %v4216
        %v4218 = vadd.f32 1.0, %v4217
        %v4219 = vmul.f32 %v4210, %v4210
        %v4220 = vmul.f32 %v4219, -0.00019511016
        %v4221 = vadd.f32 %v4220, 0.008332121
        %v4222 = vmul.f32 %v4219, %v4221
        %v4223 = vadd.f32 %v4222, -0.16666654
        %v4224 = vmul.f32 %v4219, %v4223
        %v4225 = vadd.f32 %v4224, 1.0
        %v4226 = vmul.f32 %v4225, %v4210
        %vm4227 = vweird.f32 %v358
        %v4228 = vadd.s32 %v4211, 3
        %v4229 = vand.u32 %v4228, 3
        %vm4230 = vcmp.lt.s32.totalorder %v4229, 2
        %vm4231 = vcmp.eq.s32.totalorder %v4229, 0
        %v4232 = vxor.u32 %v4226, 2147483648
        %v4233 = vsel %vm4231, %v4218, %v4232
        %vm4234 = vcmp.eq.s32.totalorder %v4229, 2
        %v4235 = vxor.u32 %v4218, 2147483648
        %v4236 = vsel %vm4234, %v4235, %v4226
        %v4237 = vsel %vm4230, %v4233, %v4236
        %v4238 = vsel %vm4227, nan, %v4237
        %v4239 = vand.u32 2147483647, %v359
        %vm4240 = vcmp.le.f32.partialorder %v4239, 0.7853982
        %vm4241 = vcmp.lt.s32.totalorder %v359, 0
        %v4242 = vand.u32 %v359, 2139095040
        %v4243 = vshrl.u32 %v4242, 23
        %v4244 = vsub.s32 %v4243, 127
        %v4245 = vand.u32 2147483647, %v359
        %v4246 = vand.u32 %v4245, 8388607
        %v4247 = vor.u32 %v4246, 8388608
        %v4248 = vsub.s32 0, %v4247
        %v4249 = vadd.s32 %v4244, 1
        %vm4250 = vcmp.gt.s32.totalorder %v4249, 0
        %v4251 = vsel %vm4250, %v4249, 0
        %v4252 = vshrl.u32 %v4251, 5
        %v4253 = vand.u32 %v4251, 31
        %v4254 = vsub.s32 32, %v4253
        %v4255 = vshrl.u32 683565275, %v4254
        %v4256 = vshll.u32 683565275, %v4253
        %v4257 = vshrl.u32 2475754826, %v4254
        %v4258 = vor.u32 %v4256, %v4257
        %v4259 = vshll.u32 2475754826, %v4253
        %v4260 = vshrl.u32 2131351028, %v4254
        %v4261 = vor.u32 %v4259, %v4260
        %v4262 = vshll.u32 2131351028, %v4253
        %v4263 = vshrl.u32 2102212464, %v4254
        %v4264 = vor.u32 %v4262, %v4263
        %v4265 = vshll.u32 2102212464, %v4253
        %v4266 = vshrl.u32 920167782, %v4254
        %v4267 = vor.u32 %v4265, %v4266
        %v4268 = vshll.u32 920167782, %v4253
        %v4269 = vshrl.u32 1326507024, %v4254
        %v4270 = vor.u32 %v4268, %v4269
        %vm4271 = vcmp.lt.s32.totalorder %v4252, 1
        %vm4272 = vcmp.lt.s32.totalorder %v4252, 2
        %vm4273 = vcmp.lt.s32.totalorder %v4252, 3
        %vm4274 = vcmp.lt.s32.totalorder %v4252, 4
        %v4275 = vsel %vm4271, %v4255, %v4258
        %v4276 = vsel %vm4274, %v4264, 2102212464
        %v4277 = vsel %vm4273, %v4261, %v4276
        %v4278 = vsel %vm4272, %v4275, %v4277
        %v4279 = vsel %vm4271, %v4258, %v4261
        %v4280 = vsel %vm4274, %v4267, 920167782
        %v4281 = vsel %vm4273, %v4264, %v4280
        %v4282 = vsel %vm4272, %v4279, %v4281
        %v4283 = vsel %vm4271, %v4261, %v4264
        %v4284 = vsel %vm4274, %v4270, 1326507024
        %v4285 = vsel %vm4273, %v4267, %v4284
        %v4286 = vsel %vm4272, %v4283, %v4285
        %v4287 = vshll.u32 %v4247, 8
        %v4288 = vand.u32 %v4287, 65535
        %v4289 = vshrl.u32 %v4287, 16
        %v4290 = vand.u32 %v4286, 65535
        %v4291 = vshrl.u32 %v4286, 16
        %v4292 = vmul.u32 %v4288, %v4290
        %v4293 = vmul.u32 %v4288, %v4291
        %v4294 = vmul.u32 %v4289, %v4290
        %v4295 = vmul.u32 %v4289, %v4291
        %v4296 = vshll.u32 %v4293, 16
        %v4297 = vshrl.u32 %v4293, 16
        %v4298 = vshll.u32 %v4294, 16
        %v4299 = vshrl.u32 %v4294, 16
        %vm4300 = vc.u32 %v4292, %v4296
        %v4301 = vsel %vm4300, 1, 0
        %v4302 = vadd.s32 %v4292, %v4296
        %v4303 = vadd.s32 %v4295, %v4301
        %vm4304 = vc.u32 %v4302, %v4298
        %v4305 = vsel %vm4304, 1, 0
        %v4306 = vadd.s32 %v4302, %v4298
        %v4307 = vadd.s32 %v4303, %v4305
        %v4308 = vadd.s32 %v4307, %v4297
        %v4309 = vadd.s32 %v4308, %v4299
        %v4310 = vand.u32 %v4287, 65535
        %v4311 = vshrl.u32 %v4287, 16
        %v4312 = vand.u32 %v4282, 65535
        %v4313 = vshrl.u32 %v4282, 16
        %v4314 = vmul.u32 %v4310, %v4312
        %v4315 = vmul.u32 %v4310, %v4313
        %v4316 = vmul.u32 %v4311, %v4312
        %v4317 = vmul.u32 %v4311, %v4313
        %v4318 = vshll.u32 %v4315, 16
        %v4319 = vshrl.u32 %v4315, 16
        %v4320 = vshll.u32 %v4316, 16
        %v4321 = vshrl.u32 %v4316, 16
        %vm4322 = vc.u32 %v4314, %v4318
        %v4323 = vsel %vm4322, 1, 0
        %v4324 = vadd.s32 %v4314, %v4318
        %v4325 = vadd.s32 %v4317, %v4323
        %vm4326 = vc.u32 %v4324, %v4320
        %v4327 = vsel %vm4326, 1, 0
        %v4328 = vadd.s32 %v4324, %v4320
        %v4329 = vadd.s32 %v4325, %v4327
        %v4330 = vadd.s32 %v4329, %v4319
        %v4331 = vadd.s32 %v4330, %v4321
        %v4332 = vmul.u32 %v4287, %v4278
        %v4333 = vadd.s32 %v4309, %v4328
        %vm4334 = vc.u32 %v4309, %v4328
        %v4335 = vadd.s32 %v4331, 1
        %v4336 = vsel %vm4334, %v4335, %v4331
        %v4337 = vadd.s32 %v4332, %v4336
        %v4338 = vadd.s32 %v4337, 536870912
        %v4339 = vshrl.u32 %v4338, 30
        %v4340 = vshll.u32 %v4339, 30
        %v4341 = vsub.s32 %v4337, %v4340
        %vm4342 = vcmp.lt.s32.totalorder %v4341, 0
        %v4343 = vsub.s32 0, %v4341
        %v4344 = vsel %vm4342, %v4343, %v4341
        %v4345 = vclz %v4344
        %v4346 = vsub.s32 %v4345, 2
        %vm4347 = vcmp.gt.s32.totalorder 0, %v4346
        %v4348 = vsel %vm4347, 0, %v4346
        %v4349 = vsub.s32 32, %v4348
        %v4350 = vshll.u32 %v4341, %v4348
        %v4351 = vshrl.u32 %v4333, %v4349
        %v4352 = vor.u32 %v4350, %v4351
        %v4353 = vsub.s32 4294967266, %v4348
        %v4354 = vadd.s32 %v4353, 127
        %v4355 = vshll.u32 %v4354, 23
        %v4356 = vor.u32 4788187, %v4355
        %v4357 = vand.u32 2147483647, %v4356
        %v4359 = vcvt.s32.f32 %v4352
        %v4360 = vmul.f32 %v4359, %v4357
        %v4361 = vxor.u32 %v4360, 2147483648
        %v4362 = vsel %vm4241, %v4361, %v4360
        %v4363 = vsub.s32 4, %v4339
        %v4364 = vsel %vm4241, %v4363, %v4339
        %v4365 = vsel %vm4240, %v359, %v4362
        %v4366 = vsel %vm4240, 0, %v4364
        %v4367 = vmul.f32 %v4365, %v4365
        %v4368 = vmul.f32 %v4367, -0.001358992
        %v4369 = vadd.f32 %v4368, 0.041655596
        %v4370 = vmul.f32 %v4367, %v4369
        %v4371 = vadd.f32 %v4370, -0.4999988
        %v4372 = vmul.f32 %v4367, %v4371
        %v4373 = vadd.f32 1.0, %v4372
        %v4374 = vmul.f32 %v4365, %v4365
        %v4375 = vmul.f32 %v4374, -0.00019511016
        %v4376 = vadd.f32 %v4375, 0.008332121
        %v4377 = vmul.f32 %v4374, %v4376
        %v4378 = vadd.f32 %v4377, -0.16666654
        %v4379 = vmul.f32 %v4374, %v4378
        %v4380 = vadd.f32 %v4379, 1.0
        %v4381 = vmul.f32 %v4380, %v4365
        %vm4382 = vweird.f32 %v359
        %v4383 = vadd.s32 %v4366, 3
        %v4384 = vand.u32 %v4383, 3
        %vm4385 = vcmp.lt.s32.totalorder %v4384, 2
        %vm4386 = vcmp.eq.s32.totalorder %v4384, 0
        %v4387 = vxor.u32 %v4381, 2147483648
        %v4388 = vsel %vm4386, %v4373, %v4387
        %vm4389 = vcmp.eq.s32.totalorder %v4384, 2
        %v4390 = vxor.u32 %v4373, 2147483648
        %v4391 = vsel %vm4389, %v4390, %v4381
        %v4392 = vsel %vm4385, %v4388, %v4391
        %v4393 = vsel %vm4382, nan, %v4392
        %v4394 = vand.u32 2147483647, %v360
        %vm4395 = vcmp.le.f32.partialorder %v4394, 0.7853982
        %vm4396 = vcmp.lt.s32.totalorder %v360, 0
        %v4397 = vand.u32 %v360, 2139095040
        %v4398 = vshrl.u32 %v4397, 23
        %v4399 = vsub.s32 %v4398, 127
        %v4400 = vand.u32 2147483647, %v360
        %v4401 = vand.u32 %v4400, 8388607
        %v4402 = vor.u32 %v4401, 8388608
        %v4403 = vsub.s32 0, %v4402
        %v4404 = vadd.s32 %v4399, 1
        %vm4405 = vcmp.gt.s32.totalorder %v4404, 0
        %v4406 = vsel %vm4405, %v4404, 0
        %v4407 = vshrl.u32 %v4406, 5
        %v4408 = vand.u32 %v4406, 31
        %v4409 = vsub.s32 32, %v4408
        %v4410 = vshrl.u32 683565275, %v4409
        %v4411 = vshll.u32 683565275, %v4408
        %v4412 = vshrl.u32 2475754826, %v4409
        %v4413 = vor.u32 %v4411, %v4412
        %v4414 = vshll.u32 2475754826, %v4408
        %v4415 = vshrl.u32 2131351028, %v4409
        %v4416 = vor.u32 %v4414, %v4415
        %v4417 = vshll.u32 2131351028, %v4408
        %v4418 = vshrl.u32 2102212464, %v4409
        %v4419 = vor.u32 %v4417, %v4418
        %v4420 = vshll.u32 2102212464, %v4408
        %v4421 = vshrl.u32 920167782, %v4409
        %v4422 = vor.u32 %v4420, %v4421
        %v4423 = vshll.u32 920167782, %v4408
        %v4424 = vshrl.u32 1326507024, %v4409
        %v4425 = vor.u32 %v4423, %v4424
        %vm4426 = vcmp.lt.s32.totalorder %v4407, 1
        %vm4427 = vcmp.lt.s32.totalorder %v4407, 2
        %vm4428 = vcmp.lt.s32.totalorder %v4407, 3
        %vm4429 = vcmp.lt.s32.totalorder %v4407, 4
        %v4430 = vsel %vm4426, %v4410, %v4413
        %v4431 = vsel %vm4429, %v4419, 2102212464
        %v4432 = vsel %vm4428, %v4416, %v4431
        %v4433 = vsel %vm4427, %v4430, %v4432
        %v4434 = vsel %vm4426, %v4413, %v4416
        %v4435 = vsel %vm4429, %v4422, 920167782
        %v4436 = vsel %vm4428, %v4419, %v4435
        %v4437 = vsel %vm4427, %v4434, %v4436
        %v4438 = vsel %vm4426, %v4416, %v4419
        %v4439 = vsel %vm4429, %v4425, 1326507024
        %v4440 = vsel %vm4428, %v4422, %v4439
        %v4441 = vsel %vm4427, %v4438, %v4440
        %v4442 = vshll.u32 %v4402, 8
        %v4443 = vand.u32 %v4442, 65535
        %v4444 = vshrl.u32 %v4442, 16
        %v4445 = vand.u32 %v4441, 65535
        %v4446 = vshrl.u32 %v4441, 16
        %v4447 = vmul.u32 %v4443, %v4445
        %v4448 = vmul.u32 %v4443, %v4446
        %v4449 = vmul.u32 %v4444, %v4445
        %v4450 = vmul.u32 %v4444, %v4446
        %v4451 = vshll.u32 %v4448, 16
        %v4452 = vshrl.u32 %v4448, 16
        %v4453 = vshll.u32 %v4449, 16
        %v4454 = vshrl.u32 %v4449, 16
        %vm4455 = vc.u32 %v4447, %v4451
        %v4456 = vsel %vm4455, 1, 0
        %v4457 = vadd.s32 %v4447, %v4451
        %v4458 = vadd.s32 %v4450, %v4456
        %vm4459 = vc.u32 %v4457, %v4453
        %v4460 = vsel %vm4459, 1, 0
        %v4461 = vadd.s32 %v4457, %v4453
        %v4462 = vadd.s32 %v4458, %v4460
        %v4463 = vadd.s32 %v4462, %v4452
        %v4464 = vadd.s32 %v4463, %v4454
        %v4465 = vand.u32 %v4442, 65535
        %v4466 = vshrl.u32 %v4442, 16
        %v4467 = vand.u32 %v4437, 65535
        %v4468 = vshrl.u32 %v4437, 16
        %v4469 = vmul.u32 %v4465, %v4467
        %v4470 = vmul.u32 %v4465, %v4468
        %v4471 = vmul.u32 %v4466, %v4467
        %v4472 = vmul.u32 %v4466, %v4468
        %v4473 = vshll.u32 %v4470, 16
        %v4474 = vshrl.u32 %v4470, 16
        %v4475 = vshll.u32 %v4471, 16
        %v4476 = vshrl.u32 %v4471, 16
        %vm4477 = vc.u32 %v4469, %v4473
        %v4478 = vsel %vm4477, 1, 0
        %v4479 = vadd.s32 %v4469, %v4473
        %v4480 = vadd.s32 %v4472, %v4478
        %vm4481 = vc.u32 %v4479, %v4475
        %v4482 = vsel %vm4481, 1, 0
        %v4483 = vadd.s32 %v4479, %v4475
        %v4484 = vadd.s32 %v4480, %v4482
        %v4485 = vadd.s32 %v4484, %v4474
        %v4486 = vadd.s32 %v4485, %v4476
        %v4487 = vmul.u32 %v4442, %v4433
        %v4488 = vadd.s32 %v4464, %v4483
        %vm4489 = vc.u32 %v4464, %v4483
        %v4490 = vadd.s32 %v4486, 1
        %v4491 = vsel %vm4489, %v4490, %v4486
        %v4492 = vadd.s32 %v4487, %v4491
        %v4493 = vadd.s32 %v4492, 536870912
        %v4494 = vshrl.u32 %v4493, 30
        %v4495 = vshll.u32 %v4494, 30
        %v4496 = vsub.s32 %v4492, %v4495
        %vm4497 = vcmp.lt.s32.totalorder %v4496, 0
        %v4498 = vsub.s32 0, %v4496
        %v4499 = vsel %vm4497, %v4498, %v4496
        %v4500 = vclz %v4499
        %v4501 = vsub.s32 %v4500, 2
        %vm4502 = vcmp.gt.s32.totalorder 0, %v4501
        %v4503 = vsel %vm4502, 0, %v4501
        %v4504 = vsub.s32 32, %v4503
        %v4505 = vshll.u32 %v4496, %v4503
        %v4506 = vshrl.u32 %v4488, %v4504
        %v4507 = vor.u32 %v4505, %v4506
        %v4508 = vsub.s32 4294967266, %v4503
        %v4509 = vadd.s32 %v4508, 127
        %v4510 = vshll.u32 %v4509, 23
        %v4511 = vor.u32 4788187, %v4510
        %v4512 = vand.u32 2147483647, %v4511
        %v4514 = vcvt.s32.f32 %v4507
        %v4515 = vmul.f32 %v4514, %v4512
        %v4516 = vxor.u32 %v4515, 2147483648
        %v4517 = vsel %vm4396, %v4516, %v4515
        %v4518 = vsub.s32 4, %v4494
        %v4519 = vsel %vm4396, %v4518, %v4494
        %v4520 = vsel %vm4395, %v360, %v4517
        %v4521 = vsel %vm4395, 0, %v4519
        %v4522 = vmul.f32 %v4520, %v4520
        %v4523 = vmul.f32 %v4522, -0.001358992
        %v4524 = vadd.f32 %v4523, 0.041655596
        %v4525 = vmul.f32 %v4522, %v4524
        %v4526 = vadd.f32 %v4525, -0.4999988
        %v4527 = vmul.f32 %v4522, %v4526
        %v4528 = vadd.f32 1.0, %v4527
        %v4529 = vmul.f32 %v4520, %v4520
        %v4530 = vmul.f32 %v4529, -0.00019511016
        %v4531 = vadd.f32 %v4530, 0.008332121
        %v4532 = vmul.f32 %v4529, %v4531
        %v4533 = vadd.f32 %v4532, -0.16666654
        %v4534 = vmul.f32 %v4529, %v4533
        %v4535 = vadd.f32 %v4534, 1.0
        %v4536 = vmul.f32 %v4535, %v4520
        %vm4537 = vweird.f32 %v360
        %v4538 = vadd.s32 %v4521, 3
        %v4539 = vand.u32 %v4538, 3
        %vm4540 = vcmp.lt.s32.totalorder %v4539, 2
        %vm4541 = vcmp.eq.s32.totalorder %v4539, 0
        %v4542 = vxor.u32 %v4536, 2147483648
        %v4543 = vsel %vm4541, %v4528, %v4542
        %vm4544 = vcmp.eq.s32.totalorder %v4539, 2
        %v4545 = vxor.u32 %v4528, 2147483648
        %v4546 = vsel %vm4544, %v4545, %v4536
        %v4547 = vsel %vm4540, %v4543, %v4546
        %v4548 = vsel %vm4537, nan, %v4547
        %v4549 = vand.u32 2147483647, %v361
        %vm4550 = vcmp.le.f32.partialorder %v4549, 0.7853982
        %vm4551 = vcmp.lt.s32.totalorder %v361, 0
        %v4552 = vand.u32 %v361, 2139095040
        %v4553 = vshrl.u32 %v4552, 23
        %v4554 = vsub.s32 %v4553, 127
        %v4555 = vand.u32 2147483647, %v361
        %v4556 = vand.u32 %v4555, 8388607
        %v4557 = vor.u32 %v4556, 8388608
        %v4558 = vsub.s32 0, %v4557
        %v4559 = vadd.s32 %v4554, 1
        %vm4560 = vcmp.gt.s32.totalorder %v4559, 0
        %v4561 = vsel %vm4560, %v4559, 0
        %v4562 = vshrl.u32 %v4561, 5
        %v4563 = vand.u32 %v4561, 31
        %v4564 = vsub.s32 32, %v4563
        %v4565 = vshrl.u32 683565275, %v4564
        %v4566 = vshll.u32 683565275, %v4563
        %v4567 = vshrl.u32 2475754826, %v4564
        %v4568 = vor.u32 %v4566, %v4567
        %v4569 = vshll.u32 2475754826, %v4563
        %v4570 = vshrl.u32 2131351028, %v4564
        %v4571 = vor.u32 %v4569, %v4570
        %v4572 = vshll.u32 2131351028, %v4563
        %v4573 = vshrl.u32 2102212464, %v4564
        %v4574 = vor.u32 %v4572, %v4573
        %v4575 = vshll.u32 2102212464, %v4563
        %v4576 = vshrl.u32 920167782, %v4564
        %v4577 = vor.u32 %v4575, %v4576
        %v4578 = vshll.u32 920167782, %v4563
        %v4579 = vshrl.u32 1326507024, %v4564
        %v4580 = vor.u32 %v4578, %v4579
        %vm4581 = vcmp.lt.s32.totalorder %v4562, 1
        %vm4582 = vcmp.lt.s32.totalorder %v4562, 2
        %vm4583 = vcmp.lt.s32.totalorder %v4562, 3
        %vm4584 = vcmp.lt.s32.totalorder %v4562, 4
        %v4585 = vsel %vm4581, %v4565, %v4568
        %v4586 = vsel %vm4584, %v4574, 2102212464
        %v4587 = vsel %vm4583, %v4571, %v4586
        %v4588 = vsel %vm4582, %v4585, %v4587
        %v4589 = vsel %vm4581, %v4568, %v4571
        %v4590 = vsel %vm4584, %v4577, 920167782
        %v4591 = vsel %vm4583, %v4574, %v4590
        %v4592 = vsel %vm4582, %v4589, %v4591
        %v4593 = vsel %vm4581, %v4571, %v4574
        %v4594 = vsel %vm4584, %v4580, 1326507024
        %v4595 = vsel %vm4583, %v4577, %v4594
        %v4596 = vsel %vm4582, %v4593, %v4595
        %v4597 = vshll.u32 %v4557, 8
        %v4598 = vand.u32 %v4597, 65535
        %v4599 = vshrl.u32 %v4597, 16
        %v4600 = vand.u32 %v4596, 65535
        %v4601 = vshrl.u32 %v4596, 16
        %v4602 = vmul.u32 %v4598, %v4600
        %v4603 = vmul.u32 %v4598, %v4601
        %v4604 = vmul.u32 %v4599, %v4600
        %v4605 = vmul.u32 %v4599, %v4601
        %v4606 = vshll.u32 %v4603, 16
        %v4607 = vshrl.u32 %v4603, 16
        %v4608 = vshll.u32 %v4604, 16
        %v4609 = vshrl.u32 %v4604, 16
        %vm4610 = vc.u32 %v4602, %v4606
        %v4611 = vsel %vm4610, 1, 0
        %v4612 = vadd.s32 %v4602, %v4606
        %v4613 = vadd.s32 %v4605, %v4611
        %vm4614 = vc.u32 %v4612, %v4608
        %v4615 = vsel %vm4614, 1, 0
        %v4616 = vadd.s32 %v4612, %v4608
        %v4617 = vadd.s32 %v4613, %v4615
        %v4618 = vadd.s32 %v4617, %v4607
        %v4619 = vadd.s32 %v4618, %v4609
        %v4620 = vand.u32 %v4597, 65535
        %v4621 = vshrl.u32 %v4597, 16
        %v4622 = vand.u32 %v4592, 65535
        %v4623 = vshrl.u32 %v4592, 16
        %v4624 = vmul.u32 %v4620, %v4622
        %v4625 = vmul.u32 %v4620, %v4623
        %v4626 = vmul.u32 %v4621, %v4622
        %v4627 = vmul.u32 %v4621, %v4623
        %v4628 = vshll.u32 %v4625, 16
        %v4629 = vshrl.u32 %v4625, 16
        %v4630 = vshll.u32 %v4626, 16
        %v4631 = vshrl.u32 %v4626, 16
        %vm4632 = vc.u32 %v4624, %v4628
        %v4633 = vsel %vm4632, 1, 0
        %v4634 = vadd.s32 %v4624, %v4628
        %v4635 = vadd.s32 %v4627, %v4633
        %vm4636 = vc.u32 %v4634, %v4630
        %v4637 = vsel %vm4636, 1, 0
        %v4638 = vadd.s32 %v4634, %v4630
        %v4639 = vadd.s32 %v4635, %v4637
        %v4640 = vadd.s32 %v4639, %v4629
        %v4641 = vadd.s32 %v4640, %v4631
        %v4642 = vmul.u32 %v4597, %v4588
        %v4643 = vadd.s32 %v4619, %v4638
        %vm4644 = vc.u32 %v4619, %v4638
        %v4645 = vadd.s32 %v4641, 1
        %v4646 = vsel %vm4644, %v4645, %v4641
        %v4647 = vadd.s32 %v4642, %v4646
        %v4648 = vadd.s32 %v4647, 536870912
        %v4649 = vshrl.u32 %v4648, 30
        %v4650 = vshll.u32 %v4649, 30
        %v4651 = vsub.s32 %v4647, %v4650
        %vm4652 = vcmp.lt.s32.totalorder %v4651, 0
        %v4653 = vsub.s32 0, %v4651
        %v4654 = vsel %vm4652, %v4653, %v4651
        %v4655 = vclz %v4654
        %v4656 = vsub.s32 %v4655, 2
        %vm4657 = vcmp.gt.s32.totalorder 0, %v4656
        %v4658 = vsel %vm4657, 0, %v4656
        %v4659 = vsub.s32 32, %v4658
        %v4660 = vshll.u32 %v4651, %v4658
        %v4661 = vshrl.u32 %v4643, %v4659
        %v4662 = vor.u32 %v4660, %v4661
        %v4663 = vsub.s32 4294967266, %v4658
        %v4664 = vadd.s32 %v4663, 127
        %v4665 = vshll.u32 %v4664, 23
        %v4666 = vor.u32 4788187, %v4665
        %v4667 = vand.u32 2147483647, %v4666
        %v4669 = vcvt.s32.f32 %v4662
        %v4670 = vmul.f32 %v4669, %v4667
        %v4671 = vxor.u32 %v4670, 2147483648
        %v4672 = vsel %vm4551, %v4671, %v4670
        %v4673 = vsub.s32 4, %v4649
        %v4674 = vsel %vm4551, %v4673, %v4649
        %v4675 = vsel %vm4550, %v361, %v4672
        %v4676 = vsel %vm4550, 0, %v4674
        %v4677 = vmul.f32 %v4675, %v4675
        %v4678 = vmul.f32 %v4677, -0.001358992
        %v4679 = vadd.f32 %v4678, 0.041655596
        %v4680 = vmul.f32 %v4677, %v4679
        %v4681 = vadd.f32 %v4680, -0.4999988
        %v4682 = vmul.f32 %v4677, %v4681
        %v4683 = vadd.f32 1.0, %v4682
        %v4684 = vmul.f32 %v4675, %v4675
        %v4685 = vmul.f32 %v4684, -0.00019511016
        %v4686 = vadd.f32 %v4685, 0.008332121
        %v4687 = vmul.f32 %v4684, %v4686
        %v4688 = vadd.f32 %v4687, -0.16666654
        %v4689 = vmul.f32 %v4684, %v4688
        %v4690 = vadd.f32 %v4689, 1.0
        %v4691 = vmul.f32 %v4690, %v4675
        %vm4692 = vweird.f32 %v361
        %v4693 = vadd.s32 %v4676, 3
        %v4694 = vand.u32 %v4693, 3
        %vm4695 = vcmp.lt.s32.totalorder %v4694, 2
        %vm4696 = vcmp.eq.s32.totalorder %v4694, 0
        %v4697 = vxor.u32 %v4691, 2147483648
        %v4698 = vsel %vm4696, %v4683, %v4697
        %vm4699 = vcmp.eq.s32.totalorder %v4694, 2
        %v4700 = vxor.u32 %v4683, 2147483648
        %v4701 = vsel %vm4699, %v4700, %v4691
        %v4702 = vsel %vm4695, %v4698, %v4701
        %v4703 = vsel %vm4692, nan, %v4702
        %v4704 = vand.u32 2147483647, %v362
        %vm4705 = vcmp.le.f32.partialorder %v4704, 0.7853982
        %vm4706 = vcmp.lt.s32.totalorder %v362, 0
        %v4707 = vand.u32 %v362, 2139095040
        %v4708 = vshrl.u32 %v4707, 23
        %v4709 = vsub.s32 %v4708, 127
        %v4710 = vand.u32 2147483647, %v362
        %v4711 = vand.u32 %v4710, 8388607
        %v4712 = vor.u32 %v4711, 8388608
        %v4713 = vsub.s32 0, %v4712
        %v4714 = vadd.s32 %v4709, 1
        %vm4715 = vcmp.gt.s32.totalorder %v4714, 0
        %v4716 = vsel %vm4715, %v4714, 0
        %v4717 = vshrl.u32 %v4716, 5
        %v4718 = vand.u32 %v4716, 31
        %v4719 = vsub.s32 32, %v4718
        %v4720 = vshrl.u32 683565275, %v4719
        %v4721 = vshll.u32 683565275, %v4718
        %v4722 = vshrl.u32 2475754826, %v4719
        %v4723 = vor.u32 %v4721, %v4722
        %v4724 = vshll.u32 2475754826, %v4718
        %v4725 = vshrl.u32 2131351028, %v4719
        %v4726 = vor.u32 %v4724, %v4725
        %v4727 = vshll.u32 2131351028, %v4718
        %v4728 = vshrl.u32 2102212464, %v4719
        %v4729 = vor.u32 %v4727, %v4728
        %v4730 = vshll.u32 2102212464, %v4718
        %v4731 = vshrl.u32 920167782, %v4719
        %v4732 = vor.u32 %v4730, %v4731
        %v4733 = vshll.u32 920167782, %v4718
        %v4734 = vshrl.u32 1326507024, %v4719
        %v4735 = vor.u32 %v4733, %v4734
        %vm4736 = vcmp.lt.s32.totalorder %v4717, 1
        %vm4737 = vcmp.lt.s32.totalorder %v4717, 2
        %vm4738 = vcmp.lt.s32.totalorder %v4717, 3
        %vm4739 = vcmp.lt.s32.totalorder %v4717, 4
        %v4740 = vsel %vm4736, %v4720, %v4723
        %v4741 = vsel %vm4739, %v4729, 2102212464
        %v4742 = vsel %vm4738, %v4726, %v4741
        %v4743 = vsel %vm4737, %v4740, %v4742
        %v4744 = vsel %vm4736, %v4723, %v4726
        %v4745 = vsel %vm4739, %v4732, 920167782
        %v4746 = vsel %vm4738, %v4729, %v4745
        %v4747 = vsel %vm4737, %v4744, %v4746
        %v4748 = vsel %vm4736, %v4726, %v4729
        %v4749 = vsel %vm4739, %v4735, 1326507024
        %v4750 = vsel %vm4738, %v4732, %v4749
        %v4751 = vsel %vm4737, %v4748, %v4750
        %v4752 = vshll.u32 %v4712, 8
        %v4753 = vand.u32 %v4752, 65535
        %v4754 = vshrl.u32 %v4752, 16
        %v4755 = vand.u32 %v4751, 65535
        %v4756 = vshrl.u32 %v4751, 16
        %v4757 = vmul.u32 %v4753, %v4755
        %v4758 = vmul.u32 %v4753, %v4756
        %v4759 = vmul.u32 %v4754, %v4755
        %v4760 = vmul.u32 %v4754, %v4756
        %v4761 = vshll.u32 %v4758, 16
        %v4762 = vshrl.u32 %v4758, 16
        %v4763 = vshll.u32 %v4759, 16
        %v4764 = vshrl.u32 %v4759, 16
        %vm4765 = vc.u32 %v4757, %v4761
        %v4766 = vsel %vm4765, 1, 0
        %v4767 = vadd.s32 %v4757, %v4761
        %v4768 = vadd.s32 %v4760, %v4766
        %vm4769 = vc.u32 %v4767, %v4763
        %v4770 = vsel %vm4769, 1, 0
        %v4771 = vadd.s32 %v4767, %v4763
        %v4772 = vadd.s32 %v4768, %v4770
        %v4773 = vadd.s32 %v4772, %v4762
        %v4774 = vadd.s32 %v4773, %v4764
        %v4775 = vand.u32 %v4752, 65535
        %v4776 = vshrl.u32 %v4752, 16
        %v4777 = vand.u32 %v4747, 65535
        %v4778 = vshrl.u32 %v4747, 16
        %v4779 = vmul.u32 %v4775, %v4777
        %v4780 = vmul.u32 %v4775, %v4778
        %v4781 = vmul.u32 %v4776, %v4777
        %v4782 = vmul.u32 %v4776, %v4778
        %v4783 = vshll.u32 %v4780, 16
        %v4784 = vshrl.u32 %v4780, 16
        %v4785 = vshll.u32 %v4781, 16
        %v4786 = vshrl.u32 %v4781, 16
        %vm4787 = vc.u32 %v4779, %v4783
        %v4788 = vsel %vm4787, 1, 0
        %v4789 = vadd.s32 %v4779, %v4783
        %v4790 = vadd.s32 %v4782, %v4788
        %vm4791 = vc.u32 %v4789, %v4785
        %v4792 = vsel %vm4791, 1, 0
        %v4793 = vadd.s32 %v4789, %v4785
        %v4794 = vadd.s32 %v4790, %v4792
        %v4795 = vadd.s32 %v4794, %v4784
        %v4796 = vadd.s32 %v4795, %v4786
        %v4797 = vmul.u32 %v4752, %v4743
        %v4798 = vadd.s32 %v4774, %v4793
        %vm4799 = vc.u32 %v4774, %v4793
        %v4800 = vadd.s32 %v4796, 1
        %v4801 = vsel %vm4799, %v4800, %v4796
        %v4802 = vadd.s32 %v4797, %v4801
        %v4803 = vadd.s32 %v4802, 536870912
        %v4804 = vshrl.u32 %v4803, 30
        %v4805 = vshll.u32 %v4804, 30
        %v4806 = vsub.s32 %v4802, %v4805
        %vm4807 = vcmp.lt.s32.totalorder %v4806, 0
        %v4808 = vsub.s32 0, %v4806
        %v4809 = vsel %vm4807, %v4808, %v4806
        %v4810 = vclz %v4809
        %v4811 = vsub.s32 %v4810, 2
        %vm4812 = vcmp.gt.s32.totalorder 0, %v4811
        %v4813 = vsel %vm4812, 0, %v4811
        %v4814 = vsub.s32 32, %v4813
        %v4815 = vshll.u32 %v4806, %v4813
        %v4816 = vshrl.u32 %v4798, %v4814
        %v4817 = vor.u32 %v4815, %v4816
        %v4818 = vsub.s32 4294967266, %v4813
        %v4819 = vadd.s32 %v4818, 127
        %v4820 = vshll.u32 %v4819, 23
        %v4821 = vor.u32 4788187, %v4820
        %v4822 = vand.u32 2147483647, %v4821
        %v4824 = vcvt.s32.f32 %v4817
        %v4825 = vmul.f32 %v4824, %v4822
        %v4826 = vxor.u32 %v4825, 2147483648
        %v4827 = vsel %vm4706, %v4826, %v4825
        %v4828 = vsub.s32 4, %v4804
        %v4829 = vsel %vm4706, %v4828, %v4804
        %v4830 = vsel %vm4705, %v362, %v4827
        %v4831 = vsel %vm4705, 0, %v4829
        %v4832 = vmul.f32 %v4830, %v4830
        %v4833 = vmul.f32 %v4832, -0.001358992
        %v4834 = vadd.f32 %v4833, 0.041655596
        %v4835 = vmul.f32 %v4832, %v4834
        %v4836 = vadd.f32 %v4835, -0.4999988
        %v4837 = vmul.f32 %v4832, %v4836
        %v4838 = vadd.f32 1.0, %v4837
        %v4839 = vmul.f32 %v4830, %v4830
        %v4840 = vmul.f32 %v4839, -0.00019511016
        %v4841 = vadd.f32 %v4840, 0.008332121
        %v4842 = vmul.f32 %v4839, %v4841
        %v4843 = vadd.f32 %v4842, -0.16666654
        %v4844 = vmul.f32 %v4839, %v4843
        %v4845 = vadd.f32 %v4844, 1.0
        %v4846 = vmul.f32 %v4845, %v4830
        %vm4847 = vweird.f32 %v362
        %v4848 = vadd.s32 %v4831, 3
        %v4849 = vand.u32 %v4848, 3
        %vm4850 = vcmp.lt.s32.totalorder %v4849, 2
        %vm4851 = vcmp.eq.s32.totalorder %v4849, 0
        %v4852 = vxor.u32 %v4846, 2147483648
        %v4853 = vsel %vm4851, %v4838, %v4852
        %vm4854 = vcmp.eq.s32.totalorder %v4849, 2
        %v4855 = vxor.u32 %v4838, 2147483648
        %v4856 = vsel %vm4854, %v4855, %v4846
        %v4857 = vsel %vm4850, %v4853, %v4856
        %v4858 = vsel %vm4847, nan, %v4857
        %v4859 = vand.u32 2147483647, %v363
        %vm4860 = vcmp.le.f32.partialorder %v4859, 0.7853982
        %vm4861 = vcmp.lt.s32.totalorder %v363, 0
        %v4862 = vand.u32 %v363, 2139095040
        %v4863 = vshrl.u32 %v4862, 23
        %v4864 = vsub.s32 %v4863, 127
        %v4865 = vand.u32 2147483647, %v363
        %v4866 = vand.u32 %v4865, 8388607
        %v4867 = vor.u32 %v4866, 8388608
        %v4868 = vsub.s32 0, %v4867
        %v4869 = vadd.s32 %v4864, 1
        %vm4870 = vcmp.gt.s32.totalorder %v4869, 0
        %v4871 = vsel %vm4870, %v4869, 0
        %v4872 = vshrl.u32 %v4871, 5
        %v4873 = vand.u32 %v4871, 31
        %v4874 = vsub.s32 32, %v4873
        %v4875 = vshrl.u32 683565275, %v4874
        %v4876 = vshll.u32 683565275, %v4873
        %v4877 = vshrl.u32 2475754826, %v4874
        %v4878 = vor.u32 %v4876, %v4877
        %v4879 = vshll.u32 2475754826, %v4873
        %v4880 = vshrl.u32 2131351028, %v4874
        %v4881 = vor.u32 %v4879, %v4880
        %v4882 = vshll.u32 2131351028, %v4873
        %v4883 = vshrl.u32 2102212464, %v4874
        %v4884 = vor.u32 %v4882, %v4883
        %v4885 = vshll.u32 2102212464, %v4873
        %v4886 = vshrl.u32 920167782, %v4874
        %v4887 = vor.u32 %v4885, %v4886
        %v4888 = vshll.u32 920167782, %v4873
        %v4889 = vshrl.u32 1326507024, %v4874
        %v4890 = vor.u32 %v4888, %v4889
        %vm4891 = vcmp.lt.s32.totalorder %v4872, 1
        %vm4892 = vcmp.lt.s32.totalorder %v4872, 2
        %vm4893 = vcmp.lt.s32.totalorder %v4872, 3
        %vm4894 = vcmp.lt.s32.totalorder %v4872, 4
        %v4895 = vsel %vm4891, %v4875, %v4878
        %v4896 = vsel %vm4894, %v4884, 2102212464
        %v4897 = vsel %vm4893, %v4881, %v4896
        %v4898 = vsel %vm4892, %v4895, %v4897
        %v4899 = vsel %vm4891, %v4878, %v4881
        %v4900 = vsel %vm4894, %v4887, 920167782
        %v4901 = vsel %vm4893, %v4884, %v4900
        %v4902 = vsel %vm4892, %v4899, %v4901
        %v4903 = vsel %vm4891, %v4881, %v4884
        %v4904 = vsel %vm4894, %v4890, 1326507024
        %v4905 = vsel %vm4893, %v4887, %v4904
        %v4906 = vsel %vm4892, %v4903, %v4905
        %v4907 = vshll.u32 %v4867, 8
        %v4908 = vand.u32 %v4907, 65535
        %v4909 = vshrl.u32 %v4907, 16
        %v4910 = vand.u32 %v4906, 65535
        %v4911 = vshrl.u32 %v4906, 16
        %v4912 = vmul.u32 %v4908, %v4910
        %v4913 = vmul.u32 %v4908, %v4911
        %v4914 = vmul.u32 %v4909, %v4910
        %v4915 = vmul.u32 %v4909, %v4911
        %v4916 = vshll.u32 %v4913, 16
        %v4917 = vshrl.u32 %v4913, 16
        %v4918 = vshll.u32 %v4914, 16
        %v4919 = vshrl.u32 %v4914, 16
        %vm4920 = vc.u32 %v4912, %v4916
        %v4921 = vsel %vm4920, 1, 0
        %v4922 = vadd.s32 %v4912, %v4916
        %v4923 = vadd.s32 %v4915, %v4921
        %vm4924 = vc.u32 %v4922, %v4918
        %v4925 = vsel %vm4924, 1, 0
        %v4926 = vadd.s32 %v4922, %v4918
        %v4927 = vadd.s32 %v4923, %v4925
        %v4928 = vadd.s32 %v4927, %v4917
        %v4929 = vadd.s32 %v4928, %v4919
        %v4930 = vand.u32 %v4907, 65535
        %v4931 = vshrl.u32 %v4907, 16
        %v4932 = vand.u32 %v4902, 65535
        %v4933 = vshrl.u32 %v4902, 16
        %v4934 = vmul.u32 %v4930, %v4932
        %v4935 = vmul.u32 %v4930, %v4933
        %v4936 = vmul.u32 %v4931, %v4932
        %v4937 = vmul.u32 %v4931, %v4933
        %v4938 = vshll.u32 %v4935, 16
        %v4939 = vshrl.u32 %v4935, 16
        %v4940 = vshll.u32 %v4936, 16
        %v4941 = vshrl.u32 %v4936, 16
        %vm4942 = vc.u32 %v4934, %v4938
        %v4943 = vsel %vm4942, 1, 0
        %v4944 = vadd.s32 %v4934, %v4938
        %v4945 = vadd.s32 %v4937, %v4943
        %vm4946 = vc.u32 %v4944, %v4940
        %v4947 = vsel %vm4946, 1, 0
        %v4948 = vadd.s32 %v4944, %v4940
        %v4949 = vadd.s32 %v4945, %v4947
        %v4950 = vadd.s32 %v4949, %v4939
        %v4951 = vadd.s32 %v4950, %v4941
        %v4952 = vmul.u32 %v4907, %v4898
        %v4953 = vadd.s32 %v4929, %v4948
        %vm4954 = vc.u32 %v4929, %v4948
        %v4955 = vadd.s32 %v4951, 1
        %v4956 = vsel %vm4954, %v4955, %v4951
        %v4957 = vadd.s32 %v4952, %v4956
        %v4958 = vadd.s32 %v4957, 536870912
        %v4959 = vshrl.u32 %v4958, 30
        %v4960 = vshll.u32 %v4959, 30
        %v4961 = vsub.s32 %v4957, %v4960
        %vm4962 = vcmp.lt.s32.totalorder %v4961, 0
        %v4963 = vsub.s32 0, %v4961
        %v4964 = vsel %vm4962, %v4963, %v4961
        %v4965 = vclz %v4964
        %v4966 = vsub.s32 %v4965, 2
        %vm4967 = vcmp.gt.s32.totalorder 0, %v4966
        %v4968 = vsel %vm4967, 0, %v4966
        %v4969 = vsub.s32 32, %v4968
        %v4970 = vshll.u32 %v4961, %v4968
        %v4971 = vshrl.u32 %v4953, %v4969
        %v4972 = vor.u32 %v4970, %v4971
        %v4973 = vsub.s32 4294967266, %v4968
        %v4974 = vadd.s32 %v4973, 127
        %v4975 = vshll.u32 %v4974, 23
        %v4976 = vor.u32 4788187, %v4975
        %v4977 = vand.u32 2147483647, %v4976
        %v4979 = vcvt.s32.f32 %v4972
        %v4980 = vmul.f32 %v4979, %v4977
        %v4981 = vxor.u32 %v4980, 2147483648
        %v4982 = vsel %vm4861, %v4981, %v4980
        %v4983 = vsub.s32 4, %v4959
        %v4984 = vsel %vm4861, %v4983, %v4959
        %v4985 = vsel %vm4860, %v363, %v4982
        %v4986 = vsel %vm4860, 0, %v4984
        %v4987 = vmul.f32 %v4985, %v4985
        %v4988 = vmul.f32 %v4987, -0.001358992
        %v4989 = vadd.f32 %v4988, 0.041655596
        %v4990 = vmul.f32 %v4987, %v4989
        %v4991 = vadd.f32 %v4990, -0.4999988
        %v4992 = vmul.f32 %v4987, %v4991
        %v4993 = vadd.f32 1.0, %v4992
        %v4994 = vmul.f32 %v4985, %v4985
        %v4995 = vmul.f32 %v4994, -0.00019511016
        %v4996 = vadd.f32 %v4995, 0.008332121
        %v4997 = vmul.f32 %v4994, %v4996
        %v4998 = vadd.f32 %v4997, -0.16666654
        %v4999 = vmul.f32 %v4994, %v4998
        %v5000 = vadd.f32 %v4999, 1.0
        %v5001 = vmul.f32 %v5000, %v4985
        %vm5002 = vweird.f32 %v363
        %v5003 = vadd.s32 %v4986, 3
        %v5004 = vand.u32 %v5003, 3
        %vm5005 = vcmp.lt.s32.totalorder %v5004, 2
        %vm5006 = vcmp.eq.s32.totalorder %v5004, 0
        %v5007 = vxor.u32 %v5001, 2147483648
        %v5008 = vsel %vm5006, %v4993, %v5007
        %vm5009 = vcmp.eq.s32.totalorder %v5004, 2
        %v5010 = vxor.u32 %v4993, 2147483648
        %v5011 = vsel %vm5009, %v5010, %v5001
        %v5012 = vsel %vm5005, %v5008, %v5011
        %v5013 = vsel %vm5002, nan, %v5012
        %5014 = vst [vmem:[%s149] sm:$0xff] %v518
        %5015 = vst [vmem:[%s149 + $0x8] sm:$0xff] %v673
        %5016 = vst [vmem:[%s149 + $0x10] sm:$0xff] %v828
        %5017 = vst [vmem:[%s149 + $0x18] sm:$0xff] %v983
        %5018 = vst [vmem:[%s149 + $0x20] sm:$0xff] %v1138
        %5019 = vst [vmem:[%s149 + $0x28] sm:$0xff] %v1293
        %5020 = vst [vmem:[%s149 + $0x60] sm:$0xff] %v1448
        %5021 = vst [vmem:[%s149 + $0x68] sm:$0xff] %v1603
        %5022 = vst [vmem:[%s149 + $0x70] sm:$0xff] %v1758
        %5023 = vst [vmem:[%s149 + $0x78] sm:$0xff] %v1913
        %5024 = vst [vmem:[%s149 + $0x80] sm:$0xff] %v2068
        %5025 = vst [vmem:[%s149 + $0x88] sm:$0xff] %v2223
        %5026 = vst [vmem:[%s149 + $0xc0] sm:$0xff] %v2378
        %5027 = vst [vmem:[%s149 + $0xc8] sm:$0xff] %v2533
        %5028 = vst [vmem:[%s149 + $0xd0] sm:$0xff] %v2688
        %5029 = vst [vmem:[%s149 + $0xd8] sm:$0xff] %v2843
        %5030 = vst [vmem:[%s149 + $0xe0] sm:$0xff] %v2998
        %5031 = vst [vmem:[%s149 + $0xe8] sm:$0xff] %v3153
        %5032 = vst [vmem:[%s149 + $0x120] sm:$0xff] %v3308
        %5033 = vst [vmem:[%s149 + $0x128] sm:$0xff] %v3463
        %5034 = vst [vmem:[%s149 + $0x130] sm:$0xff] %v3618
        %5035 = vst [vmem:[%s149 + $0x138] sm:$0xff] %v3773
        %5036 = vst [vmem:[%s149 + $0x140] sm:$0xff] %v3928
        %5037 = vst [vmem:[%s149 + $0x148] sm:$0xff] %v4083
        %5038 = vst [vmem:[%s149 + $0x180] sm:$0xff] %v4238
        %5039 = vst [vmem:[%s149 + $0x188] sm:$0xff] %v4393
        %5040 = vst [vmem:[%s149 + $0x190] sm:$0xff] %v4548
        %5041 = vst [vmem:[%s149 + $0x198] sm:$0xff] %v4703
        %5042 = vst [vmem:[%s149 + $0x1a0] sm:$0xff] %v4858
        %5043 = vst [vmem:[%s149 + $0x1a8] sm:$0xff] %v5013
        %v5044 = vand.u32 2147483647, %v334
        %vm5045 = vcmp.le.f32.partialorder %v5044, 0.7853982
        %vm5046 = vcmp.lt.s32.totalorder %v334, 0
        %v5047 = vand.u32 %v334, 2139095040
        %v5048 = vshrl.u32 %v5047, 23
        %v5049 = vsub.s32 %v5048, 127
        %v5050 = vand.u32 2147483647, %v334
        %v5051 = vand.u32 %v5050, 8388607
        %v5052 = vor.u32 %v5051, 8388608
        %v5053 = vsub.s32 0, %v5052
        %v5054 = vadd.s32 %v5049, 1
        %vm5055 = vcmp.gt.s32.totalorder %v5054, 0
        %v5056 = vsel %vm5055, %v5054, 0
        %v5057 = vshrl.u32 %v5056, 5
        %v5058 = vand.u32 %v5056, 31
        %v5059 = vsub.s32 32, %v5058
        %v5060 = vshrl.u32 683565275, %v5059
        %v5061 = vshll.u32 683565275, %v5058
        %v5062 = vshrl.u32 2475754826, %v5059
        %v5063 = vor.u32 %v5061, %v5062
        %v5064 = vshll.u32 2475754826, %v5058
        %v5065 = vshrl.u32 2131351028, %v5059
        %v5066 = vor.u32 %v5064, %v5065
        %v5067 = vshll.u32 2131351028, %v5058
        %v5068 = vshrl.u32 2102212464, %v5059
        %v5069 = vor.u32 %v5067, %v5068
        %v5070 = vshll.u32 2102212464, %v5058
        %v5071 = vshrl.u32 920167782, %v5059
        %v5072 = vor.u32 %v5070, %v5071
        %v5073 = vshll.u32 920167782, %v5058
        %v5074 = vshrl.u32 1326507024, %v5059
        %v5075 = vor.u32 %v5073, %v5074
        %vm5076 = vcmp.lt.s32.totalorder %v5057, 1
        %vm5077 = vcmp.lt.s32.totalorder %v5057, 2
        %vm5078 = vcmp.lt.s32.totalorder %v5057, 3
        %vm5079 = vcmp.lt.s32.totalorder %v5057, 4
        %v5080 = vsel %vm5076, %v5060, %v5063
        %v5081 = vsel %vm5079, %v5069, 2102212464
        %v5082 = vsel %vm5078, %v5066, %v5081
        %v5083 = vsel %vm5077, %v5080, %v5082
        %v5084 = vsel %vm5076, %v5063, %v5066
        %v5085 = vsel %vm5079, %v5072, 920167782
        %v5086 = vsel %vm5078, %v5069, %v5085
        %v5087 = vsel %vm5077, %v5084, %v5086
        %v5088 = vsel %vm5076, %v5066, %v5069
        %v5089 = vsel %vm5079, %v5075, 1326507024
        %v5090 = vsel %vm5078, %v5072, %v5089
        %v5091 = vsel %vm5077, %v5088, %v5090
        %v5092 = vshll.u32 %v5052, 8
        %v5093 = vand.u32 %v5092, 65535
        %v5094 = vshrl.u32 %v5092, 16
        %v5095 = vand.u32 %v5091, 65535
        %v5096 = vshrl.u32 %v5091, 16
        %v5097 = vmul.u32 %v5093, %v5095
        %v5098 = vmul.u32 %v5093, %v5096
        %v5099 = vmul.u32 %v5094, %v5095
        %v5100 = vmul.u32 %v5094, %v5096
        %v5101 = vshll.u32 %v5098, 16
        %v5102 = vshrl.u32 %v5098, 16
        %v5103 = vshll.u32 %v5099, 16
        %v5104 = vshrl.u32 %v5099, 16
        %vm5105 = vc.u32 %v5097, %v5101
        %v5106 = vsel %vm5105, 1, 0
        %v5107 = vadd.s32 %v5097, %v5101
        %v5108 = vadd.s32 %v5100, %v5106
        %vm5109 = vc.u32 %v5107, %v5103
        %v5110 = vsel %vm5109, 1, 0
        %v5111 = vadd.s32 %v5107, %v5103
        %v5112 = vadd.s32 %v5108, %v5110
        %v5113 = vadd.s32 %v5112, %v5102
        %v5114 = vadd.s32 %v5113, %v5104
        %v5115 = vand.u32 %v5092, 65535
        %v5116 = vshrl.u32 %v5092, 16
        %v5117 = vand.u32 %v5087, 65535
        %v5118 = vshrl.u32 %v5087, 16
        %v5119 = vmul.u32 %v5115, %v5117
        %v5120 = vmul.u32 %v5115, %v5118
        %v5121 = vmul.u32 %v5116, %v5117
        %v5122 = vmul.u32 %v5116, %v5118
        %v5123 = vshll.u32 %v5120, 16
        %v5124 = vshrl.u32 %v5120, 16
        %v5125 = vshll.u32 %v5121, 16
        %v5126 = vshrl.u32 %v5121, 16
        %vm5127 = vc.u32 %v5119, %v5123
        %v5128 = vsel %vm5127, 1, 0
        %v5129 = vadd.s32 %v5119, %v5123
        %v5130 = vadd.s32 %v5122, %v5128
        %vm5131 = vc.u32 %v5129, %v5125
        %v5132 = vsel %vm5131, 1, 0
        %v5133 = vadd.s32 %v5129, %v5125
        %v5134 = vadd.s32 %v5130, %v5132
        %v5135 = vadd.s32 %v5134, %v5124
        %v5136 = vadd.s32 %v5135, %v5126
        %v5137 = vmul.u32 %v5092, %v5083
        %v5138 = vadd.s32 %v5114, %v5133
        %vm5139 = vc.u32 %v5114, %v5133
        %v5140 = vadd.s32 %v5136, 1
        %v5141 = vsel %vm5139, %v5140, %v5136
        %v5142 = vadd.s32 %v5137, %v5141
        %v5143 = vadd.s32 %v5142, 536870912
        %v5144 = vshrl.u32 %v5143, 30
        %v5145 = vshll.u32 %v5144, 30
        %v5146 = vsub.s32 %v5142, %v5145
        %vm5147 = vcmp.lt.s32.totalorder %v5146, 0
        %v5148 = vsub.s32 0, %v5146
        %v5149 = vsel %vm5147, %v5148, %v5146
        %v5150 = vclz %v5149
        %v5151 = vsub.s32 %v5150, 2
        %vm5152 = vcmp.gt.s32.totalorder 0, %v5151
        %v5153 = vsel %vm5152, 0, %v5151
        %v5154 = vsub.s32 32, %v5153
        %v5155 = vshll.u32 %v5146, %v5153
        %v5156 = vshrl.u32 %v5138, %v5154
        %v5157 = vor.u32 %v5155, %v5156
        %v5158 = vsub.s32 4294967266, %v5153
        %v5159 = vadd.s32 %v5158, 127
        %v5160 = vshll.u32 %v5159, 23
        %v5161 = vor.u32 4788187, %v5160
        %v5162 = vand.u32 2147483647, %v5161
        %v5164 = vcvt.s32.f32 %v5157
        %v5165 = vmul.f32 %v5164, %v5162
        %v5166 = vxor.u32 %v5165, 2147483648
        %v5167 = vsel %vm5046, %v5166, %v5165
        %v5168 = vsub.s32 4, %v5144
        %v5169 = vsel %vm5046, %v5168, %v5144
        %v5170 = vsel %vm5045, %v334, %v5167
        %v5171 = vsel %vm5045, 0, %v5169
        %v5172 = vmul.f32 %v5170, %v5170
        %v5173 = vmul.f32 %v5172, -0.001358992
        %v5174 = vadd.f32 %v5173, 0.041655596
        %v5175 = vmul.f32 %v5172, %v5174
        %v5176 = vadd.f32 %v5175, -0.4999988
        %v5177 = vmul.f32 %v5172, %v5176
        %v5178 = vadd.f32 1.0, %v5177
        %v5179 = vmul.f32 %v5170, %v5170
        %v5180 = vmul.f32 %v5179, -0.00019511016
        %v5181 = vadd.f32 %v5180, 0.008332121
        %v5182 = vmul.f32 %v5179, %v5181
        %v5183 = vadd.f32 %v5182, -0.16666654
        %v5184 = vmul.f32 %v5179, %v5183
        %v5185 = vadd.f32 %v5184, 1.0
        %v5186 = vmul.f32 %v5185, %v5170
        %vm5187 = vweird.f32 %v334
        %v5188 = vand.u32 %v5171, 3
        %vm5189 = vcmp.lt.s32.totalorder %v5188, 2
        %vm5190 = vcmp.eq.s32.totalorder %v5188, 0
        %v5191 = vxor.u32 %v5186, 2147483648
        %v5192 = vsel %vm5190, %v5178, %v5191
        %vm5193 = vcmp.eq.s32.totalorder %v5188, 2
        %v5194 = vxor.u32 %v5178, 2147483648
        %v5195 = vsel %vm5193, %v5194, %v5186
        %v5196 = vsel %vm5189, %v5192, %v5195
        %v5197 = vsel %vm5187, nan, %v5196
        %v5198 = vand.u32 2147483647, %v335
        %vm5199 = vcmp.le.f32.partialorder %v5198, 0.7853982
        %vm5200 = vcmp.lt.s32.totalorder %v335, 0
        %v5201 = vand.u32 %v335, 2139095040
        %v5202 = vshrl.u32 %v5201, 23
        %v5203 = vsub.s32 %v5202, 127
        %v5204 = vand.u32 2147483647, %v335
        %v5205 = vand.u32 %v5204, 8388607
        %v5206 = vor.u32 %v5205, 8388608
        %v5207 = vsub.s32 0, %v5206
        %v5208 = vadd.s32 %v5203, 1
        %vm5209 = vcmp.gt.s32.totalorder %v5208, 0
        %v5210 = vsel %vm5209, %v5208, 0
        %v5211 = vshrl.u32 %v5210, 5
        %v5212 = vand.u32 %v5210, 31
        %v5213 = vsub.s32 32, %v5212
        %v5214 = vshrl.u32 683565275, %v5213
        %v5215 = vshll.u32 683565275, %v5212
        %v5216 = vshrl.u32 2475754826, %v5213
        %v5217 = vor.u32 %v5215, %v5216
        %v5218 = vshll.u32 2475754826, %v5212
        %v5219 = vshrl.u32 2131351028, %v5213
        %v5220 = vor.u32 %v5218, %v5219
        %v5221 = vshll.u32 2131351028, %v5212
        %v5222 = vshrl.u32 2102212464, %v5213
        %v5223 = vor.u32 %v5221, %v5222
        %v5224 = vshll.u32 2102212464, %v5212
        %v5225 = vshrl.u32 920167782, %v5213
        %v5226 = vor.u32 %v5224, %v5225
        %v5227 = vshll.u32 920167782, %v5212
        %v5228 = vshrl.u32 1326507024, %v5213
        %v5229 = vor.u32 %v5227, %v5228
        %vm5230 = vcmp.lt.s32.totalorder %v5211, 1
        %vm5231 = vcmp.lt.s32.totalorder %v5211, 2
        %vm5232 = vcmp.lt.s32.totalorder %v5211, 3
        %vm5233 = vcmp.lt.s32.totalorder %v5211, 4
        %v5234 = vsel %vm5230, %v5214, %v5217
        %v5235 = vsel %vm5233, %v5223, 2102212464
        %v5236 = vsel %vm5232, %v5220, %v5235
        %v5237 = vsel %vm5231, %v5234, %v5236
        %v5238 = vsel %vm5230, %v5217, %v5220
        %v5239 = vsel %vm5233, %v5226, 920167782
        %v5240 = vsel %vm5232, %v5223, %v5239
        %v5241 = vsel %vm5231, %v5238, %v5240
        %v5242 = vsel %vm5230, %v5220, %v5223
        %v5243 = vsel %vm5233, %v5229, 1326507024
        %v5244 = vsel %vm5232, %v5226, %v5243
        %v5245 = vsel %vm5231, %v5242, %v5244
        %v5246 = vshll.u32 %v5206, 8
        %v5247 = vand.u32 %v5246, 65535
        %v5248 = vshrl.u32 %v5246, 16
        %v5249 = vand.u32 %v5245, 65535
        %v5250 = vshrl.u32 %v5245, 16
        %v5251 = vmul.u32 %v5247, %v5249
        %v5252 = vmul.u32 %v5247, %v5250
        %v5253 = vmul.u32 %v5248, %v5249
        %v5254 = vmul.u32 %v5248, %v5250
        %v5255 = vshll.u32 %v5252, 16
        %v5256 = vshrl.u32 %v5252, 16
        %v5257 = vshll.u32 %v5253, 16
        %v5258 = vshrl.u32 %v5253, 16
        %vm5259 = vc.u32 %v5251, %v5255
        %v5260 = vsel %vm5259, 1, 0
        %v5261 = vadd.s32 %v5251, %v5255
        %v5262 = vadd.s32 %v5254, %v5260
        %vm5263 = vc.u32 %v5261, %v5257
        %v5264 = vsel %vm5263, 1, 0
        %v5265 = vadd.s32 %v5261, %v5257
        %v5266 = vadd.s32 %v5262, %v5264
        %v5267 = vadd.s32 %v5266, %v5256
        %v5268 = vadd.s32 %v5267, %v5258
        %v5269 = vand.u32 %v5246, 65535
        %v5270 = vshrl.u32 %v5246, 16
        %v5271 = vand.u32 %v5241, 65535
        %v5272 = vshrl.u32 %v5241, 16
        %v5273 = vmul.u32 %v5269, %v5271
        %v5274 = vmul.u32 %v5269, %v5272
        %v5275 = vmul.u32 %v5270, %v5271
        %v5276 = vmul.u32 %v5270, %v5272
        %v5277 = vshll.u32 %v5274, 16
        %v5278 = vshrl.u32 %v5274, 16
        %v5279 = vshll.u32 %v5275, 16
        %v5280 = vshrl.u32 %v5275, 16
        %vm5281 = vc.u32 %v5273, %v5277
        %v5282 = vsel %vm5281, 1, 0
        %v5283 = vadd.s32 %v5273, %v5277
        %v5284 = vadd.s32 %v5276, %v5282
        %vm5285 = vc.u32 %v5283, %v5279
        %v5286 = vsel %vm5285, 1, 0
        %v5287 = vadd.s32 %v5283, %v5279
        %v5288 = vadd.s32 %v5284, %v5286
        %v5289 = vadd.s32 %v5288, %v5278
        %v5290 = vadd.s32 %v5289, %v5280
        %v5291 = vmul.u32 %v5246, %v5237
        %v5292 = vadd.s32 %v5268, %v5287
        %vm5293 = vc.u32 %v5268, %v5287
        %v5294 = vadd.s32 %v5290, 1
        %v5295 = vsel %vm5293, %v5294, %v5290
        %v5296 = vadd.s32 %v5291, %v5295
        %v5297 = vadd.s32 %v5296, 536870912
        %v5298 = vshrl.u32 %v5297, 30
        %v5299 = vshll.u32 %v5298, 30
        %v5300 = vsub.s32 %v5296, %v5299
        %vm5301 = vcmp.lt.s32.totalorder %v5300, 0
        %v5302 = vsub.s32 0, %v5300
        %v5303 = vsel %vm5301, %v5302, %v5300
        %v5304 = vclz %v5303
        %v5305 = vsub.s32 %v5304, 2
        %vm5306 = vcmp.gt.s32.totalorder 0, %v5305
        %v5307 = vsel %vm5306, 0, %v5305
        %v5308 = vsub.s32 32, %v5307
        %v5309 = vshll.u32 %v5300, %v5307
        %v5310 = vshrl.u32 %v5292, %v5308
        %v5311 = vor.u32 %v5309, %v5310
        %v5312 = vsub.s32 4294967266, %v5307
        %v5313 = vadd.s32 %v5312, 127
        %v5314 = vshll.u32 %v5313, 23
        %v5315 = vor.u32 4788187, %v5314
        %v5316 = vand.u32 2147483647, %v5315
        %v5318 = vcvt.s32.f32 %v5311
        %v5319 = vmul.f32 %v5318, %v5316
        %v5320 = vxor.u32 %v5319, 2147483648
        %v5321 = vsel %vm5200, %v5320, %v5319
        %v5322 = vsub.s32 4, %v5298
        %v5323 = vsel %vm5200, %v5322, %v5298
        %v5324 = vsel %vm5199, %v335, %v5321
        %v5325 = vsel %vm5199, 0, %v5323
        %v5326 = vmul.f32 %v5324, %v5324
        %v5327 = vmul.f32 %v5326, -0.001358992
        %v5328 = vadd.f32 %v5327, 0.041655596
        %v5329 = vmul.f32 %v5326, %v5328
        %v5330 = vadd.f32 %v5329, -0.4999988
        %v5331 = vmul.f32 %v5326, %v5330
        %v5332 = vadd.f32 1.0, %v5331
        %v5333 = vmul.f32 %v5324, %v5324
        %v5334 = vmul.f32 %v5333, -0.00019511016
        %v5335 = vadd.f32 %v5334, 0.008332121
        %v5336 = vmul.f32 %v5333, %v5335
        %v5337 = vadd.f32 %v5336, -0.16666654
        %v5338 = vmul.f32 %v5333, %v5337
        %v5339 = vadd.f32 %v5338, 1.0
        %v5340 = vmul.f32 %v5339, %v5324
        %vm5341 = vweird.f32 %v335
        %v5342 = vand.u32 %v5325, 3
        %vm5343 = vcmp.lt.s32.totalorder %v5342, 2
        %vm5344 = vcmp.eq.s32.totalorder %v5342, 0
        %v5345 = vxor.u32 %v5340, 2147483648
        %v5346 = vsel %vm5344, %v5332, %v5345
        %vm5347 = vcmp.eq.s32.totalorder %v5342, 2
        %v5348 = vxor.u32 %v5332, 2147483648
        %v5349 = vsel %vm5347, %v5348, %v5340
        %v5350 = vsel %vm5343, %v5346, %v5349
        %v5351 = vsel %vm5341, nan, %v5350
        %v5352 = vand.u32 2147483647, %v336
        %vm5353 = vcmp.le.f32.partialorder %v5352, 0.7853982
        %vm5354 = vcmp.lt.s32.totalorder %v336, 0
        %v5355 = vand.u32 %v336, 2139095040
        %v5356 = vshrl.u32 %v5355, 23
        %v5357 = vsub.s32 %v5356, 127
        %v5358 = vand.u32 2147483647, %v336
        %v5359 = vand.u32 %v5358, 8388607
        %v5360 = vor.u32 %v5359, 8388608
        %v5361 = vsub.s32 0, %v5360
        %v5362 = vadd.s32 %v5357, 1
        %vm5363 = vcmp.gt.s32.totalorder %v5362, 0
        %v5364 = vsel %vm5363, %v5362, 0
        %v5365 = vshrl.u32 %v5364, 5
        %v5366 = vand.u32 %v5364, 31
        %v5367 = vsub.s32 32, %v5366
        %v5368 = vshrl.u32 683565275, %v5367
        %v5369 = vshll.u32 683565275, %v5366
        %v5370 = vshrl.u32 2475754826, %v5367
        %v5371 = vor.u32 %v5369, %v5370
        %v5372 = vshll.u32 2475754826, %v5366
        %v5373 = vshrl.u32 2131351028, %v5367
        %v5374 = vor.u32 %v5372, %v5373
        %v5375 = vshll.u32 2131351028, %v5366
        %v5376 = vshrl.u32 2102212464, %v5367
        %v5377 = vor.u32 %v5375, %v5376
        %v5378 = vshll.u32 2102212464, %v5366
        %v5379 = vshrl.u32 920167782, %v5367
        %v5380 = vor.u32 %v5378, %v5379
        %v5381 = vshll.u32 920167782, %v5366
        %v5382 = vshrl.u32 1326507024, %v5367
        %v5383 = vor.u32 %v5381, %v5382
        %vm5384 = vcmp.lt.s32.totalorder %v5365, 1
        %vm5385 = vcmp.lt.s32.totalorder %v5365, 2
        %vm5386 = vcmp.lt.s32.totalorder %v5365, 3
        %vm5387 = vcmp.lt.s32.totalorder %v5365, 4
        %v5388 = vsel %vm5384, %v5368, %v5371
        %v5389 = vsel %vm5387, %v5377, 2102212464
        %v5390 = vsel %vm5386, %v5374, %v5389
        %v5391 = vsel %vm5385, %v5388, %v5390
        %v5392 = vsel %vm5384, %v5371, %v5374
        %v5393 = vsel %vm5387, %v5380, 920167782
        %v5394 = vsel %vm5386, %v5377, %v5393
        %v5395 = vsel %vm5385, %v5392, %v5394
        %v5396 = vsel %vm5384, %v5374, %v5377
        %v5397 = vsel %vm5387, %v5383, 1326507024
        %v5398 = vsel %vm5386, %v5380, %v5397
        %v5399 = vsel %vm5385, %v5396, %v5398
        %v5400 = vshll.u32 %v5360, 8
        %v5401 = vand.u32 %v5400, 65535
        %v5402 = vshrl.u32 %v5400, 16
        %v5403 = vand.u32 %v5399, 65535
        %v5404 = vshrl.u32 %v5399, 16
        %v5405 = vmul.u32 %v5401, %v5403
        %v5406 = vmul.u32 %v5401, %v5404
        %v5407 = vmul.u32 %v5402, %v5403
        %v5408 = vmul.u32 %v5402, %v5404
        %v5409 = vshll.u32 %v5406, 16
        %v5410 = vshrl.u32 %v5406, 16
        %v5411 = vshll.u32 %v5407, 16
        %v5412 = vshrl.u32 %v5407, 16
        %vm5413 = vc.u32 %v5405, %v5409
        %v5414 = vsel %vm5413, 1, 0
        %v5415 = vadd.s32 %v5405, %v5409
        %v5416 = vadd.s32 %v5408, %v5414
        %vm5417 = vc.u32 %v5415, %v5411
        %v5418 = vsel %vm5417, 1, 0
        %v5419 = vadd.s32 %v5415, %v5411
        %v5420 = vadd.s32 %v5416, %v5418
        %v5421 = vadd.s32 %v5420, %v5410
        %v5422 = vadd.s32 %v5421, %v5412
        %v5423 = vand.u32 %v5400, 65535
        %v5424 = vshrl.u32 %v5400, 16
        %v5425 = vand.u32 %v5395, 65535
        %v5426 = vshrl.u32 %v5395, 16
        %v5427 = vmul.u32 %v5423, %v5425
        %v5428 = vmul.u32 %v5423, %v5426
        %v5429 = vmul.u32 %v5424, %v5425
        %v5430 = vmul.u32 %v5424, %v5426
        %v5431 = vshll.u32 %v5428, 16
        %v5432 = vshrl.u32 %v5428, 16
        %v5433 = vshll.u32 %v5429, 16
        %v5434 = vshrl.u32 %v5429, 16
        %vm5435 = vc.u32 %v5427, %v5431
        %v5436 = vsel %vm5435, 1, 0
        %v5437 = vadd.s32 %v5427, %v5431
        %v5438 = vadd.s32 %v5430, %v5436
        %vm5439 = vc.u32 %v5437, %v5433
        %v5440 = vsel %vm5439, 1, 0
        %v5441 = vadd.s32 %v5437, %v5433
        %v5442 = vadd.s32 %v5438, %v5440
        %v5443 = vadd.s32 %v5442, %v5432
        %v5444 = vadd.s32 %v5443, %v5434
        %v5445 = vmul.u32 %v5400, %v5391
        %v5446 = vadd.s32 %v5422, %v5441
        %vm5447 = vc.u32 %v5422, %v5441
        %v5448 = vadd.s32 %v5444, 1
        %v5449 = vsel %vm5447, %v5448, %v5444
        %v5450 = vadd.s32 %v5445, %v5449
        %v5451 = vadd.s32 %v5450, 536870912
        %v5452 = vshrl.u32 %v5451, 30
        %v5453 = vshll.u32 %v5452, 30
        %v5454 = vsub.s32 %v5450, %v5453
        %vm5455 = vcmp.lt.s32.totalorder %v5454, 0
        %v5456 = vsub.s32 0, %v5454
        %v5457 = vsel %vm5455, %v5456, %v5454
        %v5458 = vclz %v5457
        %v5459 = vsub.s32 %v5458, 2
        %vm5460 = vcmp.gt.s32.totalorder 0, %v5459
        %v5461 = vsel %vm5460, 0, %v5459
        %v5462 = vsub.s32 32, %v5461
        %v5463 = vshll.u32 %v5454, %v5461
        %v5464 = vshrl.u32 %v5446, %v5462
        %v5465 = vor.u32 %v5463, %v5464
        %v5466 = vsub.s32 4294967266, %v5461
        %v5467 = vadd.s32 %v5466, 127
        %v5468 = vshll.u32 %v5467, 23
        %v5469 = vor.u32 4788187, %v5468
        %v5470 = vand.u32 2147483647, %v5469
        %v5472 = vcvt.s32.f32 %v5465
        %v5473 = vmul.f32 %v5472, %v5470
        %v5474 = vxor.u32 %v5473, 2147483648
        %v5475 = vsel %vm5354, %v5474, %v5473
        %v5476 = vsub.s32 4, %v5452
        %v5477 = vsel %vm5354, %v5476, %v5452
        %v5478 = vsel %vm5353, %v336, %v5475
        %v5479 = vsel %vm5353, 0, %v5477
        %v5480 = vmul.f32 %v5478, %v5478
        %v5481 = vmul.f32 %v5480, -0.001358992
        %v5482 = vadd.f32 %v5481, 0.041655596
        %v5483 = vmul.f32 %v5480, %v5482
        %v5484 = vadd.f32 %v5483, -0.4999988
        %v5485 = vmul.f32 %v5480, %v5484
        %v5486 = vadd.f32 1.0, %v5485
        %v5487 = vmul.f32 %v5478, %v5478
        %v5488 = vmul.f32 %v5487, -0.00019511016
        %v5489 = vadd.f32 %v5488, 0.008332121
        %v5490 = vmul.f32 %v5487, %v5489
        %v5491 = vadd.f32 %v5490, -0.16666654
        %v5492 = vmul.f32 %v5487, %v5491
        %v5493 = vadd.f32 %v5492, 1.0
        %v5494 = vmul.f32 %v5493, %v5478
        %vm5495 = vweird.f32 %v336
        %v5496 = vand.u32 %v5479, 3
        %vm5497 = vcmp.lt.s32.totalorder %v5496, 2
        %vm5498 = vcmp.eq.s32.totalorder %v5496, 0
        %v5499 = vxor.u32 %v5494, 2147483648
        %v5500 = vsel %vm5498, %v5486, %v5499
        %vm5501 = vcmp.eq.s32.totalorder %v5496, 2
        %v5502 = vxor.u32 %v5486, 2147483648
        %v5503 = vsel %vm5501, %v5502, %v5494
        %v5504 = vsel %vm5497, %v5500, %v5503
        %v5505 = vsel %vm5495, nan, %v5504
        %v5506 = vand.u32 2147483647, %v337
        %vm5507 = vcmp.le.f32.partialorder %v5506, 0.7853982
        %vm5508 = vcmp.lt.s32.totalorder %v337, 0
        %v5509 = vand.u32 %v337, 2139095040
        %v5510 = vshrl.u32 %v5509, 23
        %v5511 = vsub.s32 %v5510, 127
        %v5512 = vand.u32 2147483647, %v337
        %v5513 = vand.u32 %v5512, 8388607
        %v5514 = vor.u32 %v5513, 8388608
        %v5515 = vsub.s32 0, %v5514
        %v5516 = vadd.s32 %v5511, 1
        %vm5517 = vcmp.gt.s32.totalorder %v5516, 0
        %v5518 = vsel %vm5517, %v5516, 0
        %v5519 = vshrl.u32 %v5518, 5
        %v5520 = vand.u32 %v5518, 31
        %v5521 = vsub.s32 32, %v5520
        %v5522 = vshrl.u32 683565275, %v5521
        %v5523 = vshll.u32 683565275, %v5520
        %v5524 = vshrl.u32 2475754826, %v5521
        %v5525 = vor.u32 %v5523, %v5524
        %v5526 = vshll.u32 2475754826, %v5520
        %v5527 = vshrl.u32 2131351028, %v5521
        %v5528 = vor.u32 %v5526, %v5527
        %v5529 = vshll.u32 2131351028, %v5520
        %v5530 = vshrl.u32 2102212464, %v5521
        %v5531 = vor.u32 %v5529, %v5530
        %v5532 = vshll.u32 2102212464, %v5520
        %v5533 = vshrl.u32 920167782, %v5521
        %v5534 = vor.u32 %v5532, %v5533
        %v5535 = vshll.u32 920167782, %v5520
        %v5536 = vshrl.u32 1326507024, %v5521
        %v5537 = vor.u32 %v5535, %v5536
        %vm5538 = vcmp.lt.s32.totalorder %v5519, 1
        %vm5539 = vcmp.lt.s32.totalorder %v5519, 2
        %vm5540 = vcmp.lt.s32.totalorder %v5519, 3
        %vm5541 = vcmp.lt.s32.totalorder %v5519, 4
        %v5542 = vsel %vm5538, %v5522, %v5525
        %v5543 = vsel %vm5541, %v5531, 2102212464
        %v5544 = vsel %vm5540, %v5528, %v5543
        %v5545 = vsel %vm5539, %v5542, %v5544
        %v5546 = vsel %vm5538, %v5525, %v5528
        %v5547 = vsel %vm5541, %v5534, 920167782
        %v5548 = vsel %vm5540, %v5531, %v5547
        %v5549 = vsel %vm5539, %v5546, %v5548
        %v5550 = vsel %vm5538, %v5528, %v5531
        %v5551 = vsel %vm5541, %v5537, 1326507024
        %v5552 = vsel %vm5540, %v5534, %v5551
        %v5553 = vsel %vm5539, %v5550, %v5552
        %v5554 = vshll.u32 %v5514, 8
        %v5555 = vand.u32 %v5554, 65535
        %v5556 = vshrl.u32 %v5554, 16
        %v5557 = vand.u32 %v5553, 65535
        %v5558 = vshrl.u32 %v5553, 16
        %v5559 = vmul.u32 %v5555, %v5557
        %v5560 = vmul.u32 %v5555, %v5558
        %v5561 = vmul.u32 %v5556, %v5557
        %v5562 = vmul.u32 %v5556, %v5558
        %v5563 = vshll.u32 %v5560, 16
        %v5564 = vshrl.u32 %v5560, 16
        %v5565 = vshll.u32 %v5561, 16
        %v5566 = vshrl.u32 %v5561, 16
        %vm5567 = vc.u32 %v5559, %v5563
        %v5568 = vsel %vm5567, 1, 0
        %v5569 = vadd.s32 %v5559, %v5563
        %v5570 = vadd.s32 %v5562, %v5568
        %vm5571 = vc.u32 %v5569, %v5565
        %v5572 = vsel %vm5571, 1, 0
        %v5573 = vadd.s32 %v5569, %v5565
        %v5574 = vadd.s32 %v5570, %v5572
        %v5575 = vadd.s32 %v5574, %v5564
        %v5576 = vadd.s32 %v5575, %v5566
        %v5577 = vand.u32 %v5554, 65535
        %v5578 = vshrl.u32 %v5554, 16
        %v5579 = vand.u32 %v5549, 65535
        %v5580 = vshrl.u32 %v5549, 16
        %v5581 = vmul.u32 %v5577, %v5579
        %v5582 = vmul.u32 %v5577, %v5580
        %v5583 = vmul.u32 %v5578, %v5579
        %v5584 = vmul.u32 %v5578, %v5580
        %v5585 = vshll.u32 %v5582, 16
        %v5586 = vshrl.u32 %v5582, 16
        %v5587 = vshll.u32 %v5583, 16
        %v5588 = vshrl.u32 %v5583, 16
        %vm5589 = vc.u32 %v5581, %v5585
        %v5590 = vsel %vm5589, 1, 0
        %v5591 = vadd.s32 %v5581, %v5585
        %v5592 = vadd.s32 %v5584, %v5590
        %vm5593 = vc.u32 %v5591, %v5587
        %v5594 = vsel %vm5593, 1, 0
        %v5595 = vadd.s32 %v5591, %v5587
        %v5596 = vadd.s32 %v5592, %v5594
        %v5597 = vadd.s32 %v5596, %v5586
        %v5598 = vadd.s32 %v5597, %v5588
        %v5599 = vmul.u32 %v5554, %v5545
        %v5600 = vadd.s32 %v5576, %v5595
        %vm5601 = vc.u32 %v5576, %v5595
        %v5602 = vadd.s32 %v5598, 1
        %v5603 = vsel %vm5601, %v5602, %v5598
        %v5604 = vadd.s32 %v5599, %v5603
        %v5605 = vadd.s32 %v5604, 536870912
        %v5606 = vshrl.u32 %v5605, 30
        %v5607 = vshll.u32 %v5606, 30
        %v5608 = vsub.s32 %v5604, %v5607
        %vm5609 = vcmp.lt.s32.totalorder %v5608, 0
        %v5610 = vsub.s32 0, %v5608
        %v5611 = vsel %vm5609, %v5610, %v5608
        %v5612 = vclz %v5611
        %v5613 = vsub.s32 %v5612, 2
        %vm5614 = vcmp.gt.s32.totalorder 0, %v5613
        %v5615 = vsel %vm5614, 0, %v5613
        %v5616 = vsub.s32 32, %v5615
        %v5617 = vshll.u32 %v5608, %v5615
        %v5618 = vshrl.u32 %v5600, %v5616
        %v5619 = vor.u32 %v5617, %v5618
        %v5620 = vsub.s32 4294967266, %v5615
        %v5621 = vadd.s32 %v5620, 127
        %v5622 = vshll.u32 %v5621, 23
        %v5623 = vor.u32 4788187, %v5622
        %v5624 = vand.u32 2147483647, %v5623
        %v5626 = vcvt.s32.f32 %v5619
        %v5627 = vmul.f32 %v5626, %v5624
        %v5628 = vxor.u32 %v5627, 2147483648
        %v5629 = vsel %vm5508, %v5628, %v5627
        %v5630 = vsub.s32 4, %v5606
        %v5631 = vsel %vm5508, %v5630, %v5606
        %v5632 = vsel %vm5507, %v337, %v5629
        %v5633 = vsel %vm5507, 0, %v5631
        %v5634 = vmul.f32 %v5632, %v5632
        %v5635 = vmul.f32 %v5634, -0.001358992
        %v5636 = vadd.f32 %v5635, 0.041655596
        %v5637 = vmul.f32 %v5634, %v5636
        %v5638 = vadd.f32 %v5637, -0.4999988
        %v5639 = vmul.f32 %v5634, %v5638
        %v5640 = vadd.f32 1.0, %v5639
        %v5641 = vmul.f32 %v5632, %v5632
        %v5642 = vmul.f32 %v5641, -0.00019511016
        %v5643 = vadd.f32 %v5642, 0.008332121
        %v5644 = vmul.f32 %v5641, %v5643
        %v5645 = vadd.f32 %v5644, -0.16666654
        %v5646 = vmul.f32 %v5641, %v5645
        %v5647 = vadd.f32 %v5646, 1.0
        %v5648 = vmul.f32 %v5647, %v5632
        %vm5649 = vweird.f32 %v337
        %v5650 = vand.u32 %v5633, 3
        %vm5651 = vcmp.lt.s32.totalorder %v5650, 2
        %vm5652 = vcmp.eq.s32.totalorder %v5650, 0
        %v5653 = vxor.u32 %v5648, 2147483648
        %v5654 = vsel %vm5652, %v5640, %v5653
        %vm5655 = vcmp.eq.s32.totalorder %v5650, 2
        %v5656 = vxor.u32 %v5640, 2147483648
        %v5657 = vsel %vm5655, %v5656, %v5648
        %v5658 = vsel %vm5651, %v5654, %v5657
        %v5659 = vsel %vm5649, nan, %v5658
        %v5660 = vand.u32 2147483647, %v338
        %vm5661 = vcmp.le.f32.partialorder %v5660, 0.7853982
        %vm5662 = vcmp.lt.s32.totalorder %v338, 0
        %v5663 = vand.u32 %v338, 2139095040
        %v5664 = vshrl.u32 %v5663, 23
        %v5665 = vsub.s32 %v5664, 127
        %v5666 = vand.u32 2147483647, %v338
        %v5667 = vand.u32 %v5666, 8388607
        %v5668 = vor.u32 %v5667, 8388608
        %v5669 = vsub.s32 0, %v5668
        %v5670 = vadd.s32 %v5665, 1
        %vm5671 = vcmp.gt.s32.totalorder %v5670, 0
        %v5672 = vsel %vm5671, %v5670, 0
        %v5673 = vshrl.u32 %v5672, 5
        %v5674 = vand.u32 %v5672, 31
        %v5675 = vsub.s32 32, %v5674
        %v5676 = vshrl.u32 683565275, %v5675
        %v5677 = vshll.u32 683565275, %v5674
        %v5678 = vshrl.u32 2475754826, %v5675
        %v5679 = vor.u32 %v5677, %v5678
        %v5680 = vshll.u32 2475754826, %v5674
        %v5681 = vshrl.u32 2131351028, %v5675
        %v5682 = vor.u32 %v5680, %v5681
        %v5683 = vshll.u32 2131351028, %v5674
        %v5684 = vshrl.u32 2102212464, %v5675
        %v5685 = vor.u32 %v5683, %v5684
        %v5686 = vshll.u32 2102212464, %v5674
        %v5687 = vshrl.u32 920167782, %v5675
        %v5688 = vor.u32 %v5686, %v5687
        %v5689 = vshll.u32 920167782, %v5674
        %v5690 = vshrl.u32 1326507024, %v5675
        %v5691 = vor.u32 %v5689, %v5690
        %vm5692 = vcmp.lt.s32.totalorder %v5673, 1
        %vm5693 = vcmp.lt.s32.totalorder %v5673, 2
        %vm5694 = vcmp.lt.s32.totalorder %v5673, 3
        %vm5695 = vcmp.lt.s32.totalorder %v5673, 4
        %v5696 = vsel %vm5692, %v5676, %v5679
        %v5697 = vsel %vm5695, %v5685, 2102212464
        %v5698 = vsel %vm5694, %v5682, %v5697
        %v5699 = vsel %vm5693, %v5696, %v5698
        %v5700 = vsel %vm5692, %v5679, %v5682
        %v5701 = vsel %vm5695, %v5688, 920167782
        %v5702 = vsel %vm5694, %v5685, %v5701
        %v5703 = vsel %vm5693, %v5700, %v5702
        %v5704 = vsel %vm5692, %v5682, %v5685
        %v5705 = vsel %vm5695, %v5691, 1326507024
        %v5706 = vsel %vm5694, %v5688, %v5705
        %v5707 = vsel %vm5693, %v5704, %v5706
        %v5708 = vshll.u32 %v5668, 8
        %v5709 = vand.u32 %v5708, 65535
        %v5710 = vshrl.u32 %v5708, 16
        %v5711 = vand.u32 %v5707, 65535
        %v5712 = vshrl.u32 %v5707, 16
        %v5713 = vmul.u32 %v5709, %v5711
        %v5714 = vmul.u32 %v5709, %v5712
        %v5715 = vmul.u32 %v5710, %v5711
        %v5716 = vmul.u32 %v5710, %v5712
        %v5717 = vshll.u32 %v5714, 16
        %v5718 = vshrl.u32 %v5714, 16
        %v5719 = vshll.u32 %v5715, 16
        %v5720 = vshrl.u32 %v5715, 16
        %vm5721 = vc.u32 %v5713, %v5717
        %v5722 = vsel %vm5721, 1, 0
        %v5723 = vadd.s32 %v5713, %v5717
        %v5724 = vadd.s32 %v5716, %v5722
        %vm5725 = vc.u32 %v5723, %v5719
        %v5726 = vsel %vm5725, 1, 0
        %v5727 = vadd.s32 %v5723, %v5719
        %v5728 = vadd.s32 %v5724, %v5726
        %v5729 = vadd.s32 %v5728, %v5718
        %v5730 = vadd.s32 %v5729, %v5720
        %v5731 = vand.u32 %v5708, 65535
        %v5732 = vshrl.u32 %v5708, 16
        %v5733 = vand.u32 %v5703, 65535
        %v5734 = vshrl.u32 %v5703, 16
        %v5735 = vmul.u32 %v5731, %v5733
        %v5736 = vmul.u32 %v5731, %v5734
        %v5737 = vmul.u32 %v5732, %v5733
        %v5738 = vmul.u32 %v5732, %v5734
        %v5739 = vshll.u32 %v5736, 16
        %v5740 = vshrl.u32 %v5736, 16
        %v5741 = vshll.u32 %v5737, 16
        %v5742 = vshrl.u32 %v5737, 16
        %vm5743 = vc.u32 %v5735, %v5739
        %v5744 = vsel %vm5743, 1, 0
        %v5745 = vadd.s32 %v5735, %v5739
        %v5746 = vadd.s32 %v5738, %v5744
        %vm5747 = vc.u32 %v5745, %v5741
        %v5748 = vsel %vm5747, 1, 0
        %v5749 = vadd.s32 %v5745, %v5741
        %v5750 = vadd.s32 %v5746, %v5748
        %v5751 = vadd.s32 %v5750, %v5740
        %v5752 = vadd.s32 %v5751, %v5742
        %v5753 = vmul.u32 %v5708, %v5699
        %v5754 = vadd.s32 %v5730, %v5749
        %vm5755 = vc.u32 %v5730, %v5749
        %v5756 = vadd.s32 %v5752, 1
        %v5757 = vsel %vm5755, %v5756, %v5752
        %v5758 = vadd.s32 %v5753, %v5757
        %v5759 = vadd.s32 %v5758, 536870912
        %v5760 = vshrl.u32 %v5759, 30
        %v5761 = vshll.u32 %v5760, 30
        %v5762 = vsub.s32 %v5758, %v5761
        %vm5763 = vcmp.lt.s32.totalorder %v5762, 0
        %v5764 = vsub.s32 0, %v5762
        %v5765 = vsel %vm5763, %v5764, %v5762
        %v5766 = vclz %v5765
        %v5767 = vsub.s32 %v5766, 2
        %vm5768 = vcmp.gt.s32.totalorder 0, %v5767
        %v5769 = vsel %vm5768, 0, %v5767
        %v5770 = vsub.s32 32, %v5769
        %v5771 = vshll.u32 %v5762, %v5769
        %v5772 = vshrl.u32 %v5754, %v5770
        %v5773 = vor.u32 %v5771, %v5772
        %v5774 = vsub.s32 4294967266, %v5769
        %v5775 = vadd.s32 %v5774, 127
        %v5776 = vshll.u32 %v5775, 23
        %v5777 = vor.u32 4788187, %v5776
        %v5778 = vand.u32 2147483647, %v5777
        %v5780 = vcvt.s32.f32 %v5773
        %v5781 = vmul.f32 %v5780, %v5778
        %v5782 = vxor.u32 %v5781, 2147483648
        %v5783 = vsel %vm5662, %v5782, %v5781
        %v5784 = vsub.s32 4, %v5760
        %v5785 = vsel %vm5662, %v5784, %v5760
        %v5786 = vsel %vm5661, %v338, %v5783
        %v5787 = vsel %vm5661, 0, %v5785
        %v5788 = vmul.f32 %v5786, %v5786
        %v5789 = vmul.f32 %v5788, -0.001358992
        %v5790 = vadd.f32 %v5789, 0.041655596
        %v5791 = vmul.f32 %v5788, %v5790
        %v5792 = vadd.f32 %v5791, -0.4999988
        %v5793 = vmul.f32 %v5788, %v5792
        %v5794 = vadd.f32 1.0, %v5793
        %v5795 = vmul.f32 %v5786, %v5786
        %v5796 = vmul.f32 %v5795, -0.00019511016
        %v5797 = vadd.f32 %v5796, 0.008332121
        %v5798 = vmul.f32 %v5795, %v5797
        %v5799 = vadd.f32 %v5798, -0.16666654
        %v5800 = vmul.f32 %v5795, %v5799
        %v5801 = vadd.f32 %v5800, 1.0
        %v5802 = vmul.f32 %v5801, %v5786
        %vm5803 = vweird.f32 %v338
        %v5804 = vand.u32 %v5787, 3
        %vm5805 = vcmp.lt.s32.totalorder %v5804, 2
        %vm5806 = vcmp.eq.s32.totalorder %v5804, 0
        %v5807 = vxor.u32 %v5802, 2147483648
        %v5808 = vsel %vm5806, %v5794, %v5807
        %vm5809 = vcmp.eq.s32.totalorder %v5804, 2
        %v5810 = vxor.u32 %v5794, 2147483648
        %v5811 = vsel %vm5809, %v5810, %v5802
        %v5812 = vsel %vm5805, %v5808, %v5811
        %v5813 = vsel %vm5803, nan, %v5812
        %v5814 = vand.u32 2147483647, %v339
        %vm5815 = vcmp.le.f32.partialorder %v5814, 0.7853982
        %vm5816 = vcmp.lt.s32.totalorder %v339, 0
        %v5817 = vand.u32 %v339, 2139095040
        %v5818 = vshrl.u32 %v5817, 23
        %v5819 = vsub.s32 %v5818, 127
        %v5820 = vand.u32 2147483647, %v339
        %v5821 = vand.u32 %v5820, 8388607
        %v5822 = vor.u32 %v5821, 8388608
        %v5823 = vsub.s32 0, %v5822
        %v5824 = vadd.s32 %v5819, 1
        %vm5825 = vcmp.gt.s32.totalorder %v5824, 0
        %v5826 = vsel %vm5825, %v5824, 0
        %v5827 = vshrl.u32 %v5826, 5
        %v5828 = vand.u32 %v5826, 31
        %v5829 = vsub.s32 32, %v5828
        %v5830 = vshrl.u32 683565275, %v5829
        %v5831 = vshll.u32 683565275, %v5828
        %v5832 = vshrl.u32 2475754826, %v5829
        %v5833 = vor.u32 %v5831, %v5832
        %v5834 = vshll.u32 2475754826, %v5828
        %v5835 = vshrl.u32 2131351028, %v5829
        %v5836 = vor.u32 %v5834, %v5835
        %v5837 = vshll.u32 2131351028, %v5828
        %v5838 = vshrl.u32 2102212464, %v5829
        %v5839 = vor.u32 %v5837, %v5838
        %v5840 = vshll.u32 2102212464, %v5828
        %v5841 = vshrl.u32 920167782, %v5829
        %v5842 = vor.u32 %v5840, %v5841
        %v5843 = vshll.u32 920167782, %v5828
        %v5844 = vshrl.u32 1326507024, %v5829
        %v5845 = vor.u32 %v5843, %v5844
        %vm5846 = vcmp.lt.s32.totalorder %v5827, 1
        %vm5847 = vcmp.lt.s32.totalorder %v5827, 2
        %vm5848 = vcmp.lt.s32.totalorder %v5827, 3
        %vm5849 = vcmp.lt.s32.totalorder %v5827, 4
        %v5850 = vsel %vm5846, %v5830, %v5833
        %v5851 = vsel %vm5849, %v5839, 2102212464
        %v5852 = vsel %vm5848, %v5836, %v5851
        %v5853 = vsel %vm5847, %v5850, %v5852
        %v5854 = vsel %vm5846, %v5833, %v5836
        %v5855 = vsel %vm5849, %v5842, 920167782
        %v5856 = vsel %vm5848, %v5839, %v5855
        %v5857 = vsel %vm5847, %v5854, %v5856
        %v5858 = vsel %vm5846, %v5836, %v5839
        %v5859 = vsel %vm5849, %v5845, 1326507024
        %v5860 = vsel %vm5848, %v5842, %v5859
        %v5861 = vsel %vm5847, %v5858, %v5860
        %v5862 = vshll.u32 %v5822, 8
        %v5863 = vand.u32 %v5862, 65535
        %v5864 = vshrl.u32 %v5862, 16
        %v5865 = vand.u32 %v5861, 65535
        %v5866 = vshrl.u32 %v5861, 16
        %v5867 = vmul.u32 %v5863, %v5865
        %v5868 = vmul.u32 %v5863, %v5866
        %v5869 = vmul.u32 %v5864, %v5865
        %v5870 = vmul.u32 %v5864, %v5866
        %v5871 = vshll.u32 %v5868, 16
        %v5872 = vshrl.u32 %v5868, 16
        %v5873 = vshll.u32 %v5869, 16
        %v5874 = vshrl.u32 %v5869, 16
        %vm5875 = vc.u32 %v5867, %v5871
        %v5876 = vsel %vm5875, 1, 0
        %v5877 = vadd.s32 %v5867, %v5871
        %v5878 = vadd.s32 %v5870, %v5876
        %vm5879 = vc.u32 %v5877, %v5873
        %v5880 = vsel %vm5879, 1, 0
        %v5881 = vadd.s32 %v5877, %v5873
        %v5882 = vadd.s32 %v5878, %v5880
        %v5883 = vadd.s32 %v5882, %v5872
        %v5884 = vadd.s32 %v5883, %v5874
        %v5885 = vand.u32 %v5862, 65535
        %v5886 = vshrl.u32 %v5862, 16
        %v5887 = vand.u32 %v5857, 65535
        %v5888 = vshrl.u32 %v5857, 16
        %v5889 = vmul.u32 %v5885, %v5887
        %v5890 = vmul.u32 %v5885, %v5888
        %v5891 = vmul.u32 %v5886, %v5887
        %v5892 = vmul.u32 %v5886, %v5888
        %v5893 = vshll.u32 %v5890, 16
        %v5894 = vshrl.u32 %v5890, 16
        %v5895 = vshll.u32 %v5891, 16
        %v5896 = vshrl.u32 %v5891, 16
        %vm5897 = vc.u32 %v5889, %v5893
        %v5898 = vsel %vm5897, 1, 0
        %v5899 = vadd.s32 %v5889, %v5893
        %v5900 = vadd.s32 %v5892, %v5898
        %vm5901 = vc.u32 %v5899, %v5895
        %v5902 = vsel %vm5901, 1, 0
        %v5903 = vadd.s32 %v5899, %v5895
        %v5904 = vadd.s32 %v5900, %v5902
        %v5905 = vadd.s32 %v5904, %v5894
        %v5906 = vadd.s32 %v5905, %v5896
        %v5907 = vmul.u32 %v5862, %v5853
        %v5908 = vadd.s32 %v5884, %v5903
        %vm5909 = vc.u32 %v5884, %v5903
        %v5910 = vadd.s32 %v5906, 1
        %v5911 = vsel %vm5909, %v5910, %v5906
        %v5912 = vadd.s32 %v5907, %v5911
        %v5913 = vadd.s32 %v5912, 536870912
        %v5914 = vshrl.u32 %v5913, 30
        %v5915 = vshll.u32 %v5914, 30
        %v5916 = vsub.s32 %v5912, %v5915
        %vm5917 = vcmp.lt.s32.totalorder %v5916, 0
        %v5918 = vsub.s32 0, %v5916
        %v5919 = vsel %vm5917, %v5918, %v5916
        %v5920 = vclz %v5919
        %v5921 = vsub.s32 %v5920, 2
        %vm5922 = vcmp.gt.s32.totalorder 0, %v5921
        %v5923 = vsel %vm5922, 0, %v5921
        %v5924 = vsub.s32 32, %v5923
        %v5925 = vshll.u32 %v5916, %v5923
        %v5926 = vshrl.u32 %v5908, %v5924
        %v5927 = vor.u32 %v5925, %v5926
        %v5928 = vsub.s32 4294967266, %v5923
        %v5929 = vadd.s32 %v5928, 127
        %v5930 = vshll.u32 %v5929, 23
        %v5931 = vor.u32 4788187, %v5930
        %v5932 = vand.u32 2147483647, %v5931
        %v5934 = vcvt.s32.f32 %v5927
        %v5935 = vmul.f32 %v5934, %v5932
        %v5936 = vxor.u32 %v5935, 2147483648
        %v5937 = vsel %vm5816, %v5936, %v5935
        %v5938 = vsub.s32 4, %v5914
        %v5939 = vsel %vm5816, %v5938, %v5914
        %v5940 = vsel %vm5815, %v339, %v5937
        %v5941 = vsel %vm5815, 0, %v5939
        %v5942 = vmul.f32 %v5940, %v5940
        %v5943 = vmul.f32 %v5942, -0.001358992
        %v5944 = vadd.f32 %v5943, 0.041655596
        %v5945 = vmul.f32 %v5942, %v5944
        %v5946 = vadd.f32 %v5945, -0.4999988
        %v5947 = vmul.f32 %v5942, %v5946
        %v5948 = vadd.f32 1.0, %v5947
        %v5949 = vmul.f32 %v5940, %v5940
        %v5950 = vmul.f32 %v5949, -0.00019511016
        %v5951 = vadd.f32 %v5950, 0.008332121
        %v5952 = vmul.f32 %v5949, %v5951
        %v5953 = vadd.f32 %v5952, -0.16666654
        %v5954 = vmul.f32 %v5949, %v5953
        %v5955 = vadd.f32 %v5954, 1.0
        %v5956 = vmul.f32 %v5955, %v5940
        %vm5957 = vweird.f32 %v339
        %v5958 = vand.u32 %v5941, 3
        %vm5959 = vcmp.lt.s32.totalorder %v5958, 2
        %vm5960 = vcmp.eq.s32.totalorder %v5958, 0
        %v5961 = vxor.u32 %v5956, 2147483648
        %v5962 = vsel %vm5960, %v5948, %v5961
        %vm5963 = vcmp.eq.s32.totalorder %v5958, 2
        %v5964 = vxor.u32 %v5948, 2147483648
        %v5965 = vsel %vm5963, %v5964, %v5956
        %v5966 = vsel %vm5959, %v5962, %v5965
        %v5967 = vsel %vm5957, nan, %v5966
        %v5968 = vand.u32 2147483647, %v340
        %vm5969 = vcmp.le.f32.partialorder %v5968, 0.7853982
        %vm5970 = vcmp.lt.s32.totalorder %v340, 0
        %v5971 = vand.u32 %v340, 2139095040
        %v5972 = vshrl.u32 %v5971, 23
        %v5973 = vsub.s32 %v5972, 127
        %v5974 = vand.u32 2147483647, %v340
        %v5975 = vand.u32 %v5974, 8388607
        %v5976 = vor.u32 %v5975, 8388608
        %v5977 = vsub.s32 0, %v5976
        %v5978 = vadd.s32 %v5973, 1
        %vm5979 = vcmp.gt.s32.totalorder %v5978, 0
        %v5980 = vsel %vm5979, %v5978, 0
        %v5981 = vshrl.u32 %v5980, 5
        %v5982 = vand.u32 %v5980, 31
        %v5983 = vsub.s32 32, %v5982
        %v5984 = vshrl.u32 683565275, %v5983
        %v5985 = vshll.u32 683565275, %v5982
        %v5986 = vshrl.u32 2475754826, %v5983
        %v5987 = vor.u32 %v5985, %v5986
        %v5988 = vshll.u32 2475754826, %v5982
        %v5989 = vshrl.u32 2131351028, %v5983
        %v5990 = vor.u32 %v5988, %v5989
        %v5991 = vshll.u32 2131351028, %v5982
        %v5992 = vshrl.u32 2102212464, %v5983
        %v5993 = vor.u32 %v5991, %v5992
        %v5994 = vshll.u32 2102212464, %v5982
        %v5995 = vshrl.u32 920167782, %v5983
        %v5996 = vor.u32 %v5994, %v5995
        %v5997 = vshll.u32 920167782, %v5982
        %v5998 = vshrl.u32 1326507024, %v5983
        %v5999 = vor.u32 %v5997, %v5998
        %vm6000 = vcmp.lt.s32.totalorder %v5981, 1
        %vm6001 = vcmp.lt.s32.totalorder %v5981, 2
        %vm6002 = vcmp.lt.s32.totalorder %v5981, 3
        %vm6003 = vcmp.lt.s32.totalorder %v5981, 4
        %v6004 = vsel %vm6000, %v5984, %v5987
        %v6005 = vsel %vm6003, %v5993, 2102212464
        %v6006 = vsel %vm6002, %v5990, %v6005
        %v6007 = vsel %vm6001, %v6004, %v6006
        %v6008 = vsel %vm6000, %v5987, %v5990
        %v6009 = vsel %vm6003, %v5996, 920167782
        %v6010 = vsel %vm6002, %v5993, %v6009
        %v6011 = vsel %vm6001, %v6008, %v6010
        %v6012 = vsel %vm6000, %v5990, %v5993
        %v6013 = vsel %vm6003, %v5999, 1326507024
        %v6014 = vsel %vm6002, %v5996, %v6013
        %v6015 = vsel %vm6001, %v6012, %v6014
        %v6016 = vshll.u32 %v5976, 8
        %v6017 = vand.u32 %v6016, 65535
        %v6018 = vshrl.u32 %v6016, 16
        %v6019 = vand.u32 %v6015, 65535
        %v6020 = vshrl.u32 %v6015, 16
        %v6021 = vmul.u32 %v6017, %v6019
        %v6022 = vmul.u32 %v6017, %v6020
        %v6023 = vmul.u32 %v6018, %v6019
        %v6024 = vmul.u32 %v6018, %v6020
        %v6025 = vshll.u32 %v6022, 16
        %v6026 = vshrl.u32 %v6022, 16
        %v6027 = vshll.u32 %v6023, 16
        %v6028 = vshrl.u32 %v6023, 16
        %vm6029 = vc.u32 %v6021, %v6025
        %v6030 = vsel %vm6029, 1, 0
        %v6031 = vadd.s32 %v6021, %v6025
        %v6032 = vadd.s32 %v6024, %v6030
        %vm6033 = vc.u32 %v6031, %v6027
        %v6034 = vsel %vm6033, 1, 0
        %v6035 = vadd.s32 %v6031, %v6027
        %v6036 = vadd.s32 %v6032, %v6034
        %v6037 = vadd.s32 %v6036, %v6026
        %v6038 = vadd.s32 %v6037, %v6028
        %v6039 = vand.u32 %v6016, 65535
        %v6040 = vshrl.u32 %v6016, 16
        %v6041 = vand.u32 %v6011, 65535
        %v6042 = vshrl.u32 %v6011, 16
        %v6043 = vmul.u32 %v6039, %v6041
        %v6044 = vmul.u32 %v6039, %v6042
        %v6045 = vmul.u32 %v6040, %v6041
        %v6046 = vmul.u32 %v6040, %v6042
        %v6047 = vshll.u32 %v6044, 16
        %v6048 = vshrl.u32 %v6044, 16
        %v6049 = vshll.u32 %v6045, 16
        %v6050 = vshrl.u32 %v6045, 16
        %vm6051 = vc.u32 %v6043, %v6047
        %v6052 = vsel %vm6051, 1, 0
        %v6053 = vadd.s32 %v6043, %v6047
        %v6054 = vadd.s32 %v6046, %v6052
        %vm6055 = vc.u32 %v6053, %v6049
        %v6056 = vsel %vm6055, 1, 0
        %v6057 = vadd.s32 %v6053, %v6049
        %v6058 = vadd.s32 %v6054, %v6056
        %v6059 = vadd.s32 %v6058, %v6048
        %v6060 = vadd.s32 %v6059, %v6050
        %v6061 = vmul.u32 %v6016, %v6007
        %v6062 = vadd.s32 %v6038, %v6057
        %vm6063 = vc.u32 %v6038, %v6057
        %v6064 = vadd.s32 %v6060, 1
        %v6065 = vsel %vm6063, %v6064, %v6060
        %v6066 = vadd.s32 %v6061, %v6065
        %v6067 = vadd.s32 %v6066, 536870912
        %v6068 = vshrl.u32 %v6067, 30
        %v6069 = vshll.u32 %v6068, 30
        %v6070 = vsub.s32 %v6066, %v6069
        %vm6071 = vcmp.lt.s32.totalorder %v6070, 0
        %v6072 = vsub.s32 0, %v6070
        %v6073 = vsel %vm6071, %v6072, %v6070
        %v6074 = vclz %v6073
        %v6075 = vsub.s32 %v6074, 2
        %vm6076 = vcmp.gt.s32.totalorder 0, %v6075
        %v6077 = vsel %vm6076, 0, %v6075
        %v6078 = vsub.s32 32, %v6077
        %v6079 = vshll.u32 %v6070, %v6077
        %v6080 = vshrl.u32 %v6062, %v6078
        %v6081 = vor.u32 %v6079, %v6080
        %v6082 = vsub.s32 4294967266, %v6077
        %v6083 = vadd.s32 %v6082, 127
        %v6084 = vshll.u32 %v6083, 23
        %v6085 = vor.u32 4788187, %v6084
        %v6086 = vand.u32 2147483647, %v6085
        %v6088 = vcvt.s32.f32 %v6081
        %v6089 = vmul.f32 %v6088, %v6086
        %v6090 = vxor.u32 %v6089, 2147483648
        %v6091 = vsel %vm5970, %v6090, %v6089
        %v6092 = vsub.s32 4, %v6068
        %v6093 = vsel %vm5970, %v6092, %v6068
        %v6094 = vsel %vm5969, %v340, %v6091
        %v6095 = vsel %vm5969, 0, %v6093
        %v6096 = vmul.f32 %v6094, %v6094
        %v6097 = vmul.f32 %v6096, -0.001358992
        %v6098 = vadd.f32 %v6097, 0.041655596
        %v6099 = vmul.f32 %v6096, %v6098
        %v6100 = vadd.f32 %v6099, -0.4999988
        %v6101 = vmul.f32 %v6096, %v6100
        %v6102 = vadd.f32 1.0, %v6101
        %v6103 = vmul.f32 %v6094, %v6094
        %v6104 = vmul.f32 %v6103, -0.00019511016
        %v6105 = vadd.f32 %v6104, 0.008332121
        %v6106 = vmul.f32 %v6103, %v6105
        %v6107 = vadd.f32 %v6106, -0.16666654
        %v6108 = vmul.f32 %v6103, %v6107
        %v6109 = vadd.f32 %v6108, 1.0
        %v6110 = vmul.f32 %v6109, %v6094
        %vm6111 = vweird.f32 %v340
        %v6112 = vand.u32 %v6095, 3
        %vm6113 = vcmp.lt.s32.totalorder %v6112, 2
        %vm6114 = vcmp.eq.s32.totalorder %v6112, 0
        %v6115 = vxor.u32 %v6110, 2147483648
        %v6116 = vsel %vm6114, %v6102, %v6115
        %vm6117 = vcmp.eq.s32.totalorder %v6112, 2
        %v6118 = vxor.u32 %v6102, 2147483648
        %v6119 = vsel %vm6117, %v6118, %v6110
        %v6120 = vsel %vm6113, %v6116, %v6119
        %v6121 = vsel %vm6111, nan, %v6120
        %v6122 = vand.u32 2147483647, %v341
        %vm6123 = vcmp.le.f32.partialorder %v6122, 0.7853982
        %vm6124 = vcmp.lt.s32.totalorder %v341, 0
        %v6125 = vand.u32 %v341, 2139095040
        %v6126 = vshrl.u32 %v6125, 23
        %v6127 = vsub.s32 %v6126, 127
        %v6128 = vand.u32 2147483647, %v341
        %v6129 = vand.u32 %v6128, 8388607
        %v6130 = vor.u32 %v6129, 8388608
        %v6131 = vsub.s32 0, %v6130
        %v6132 = vadd.s32 %v6127, 1
        %vm6133 = vcmp.gt.s32.totalorder %v6132, 0
        %v6134 = vsel %vm6133, %v6132, 0
        %v6135 = vshrl.u32 %v6134, 5
        %v6136 = vand.u32 %v6134, 31
        %v6137 = vsub.s32 32, %v6136
        %v6138 = vshrl.u32 683565275, %v6137
        %v6139 = vshll.u32 683565275, %v6136
        %v6140 = vshrl.u32 2475754826, %v6137
        %v6141 = vor.u32 %v6139, %v6140
        %v6142 = vshll.u32 2475754826, %v6136
        %v6143 = vshrl.u32 2131351028, %v6137
        %v6144 = vor.u32 %v6142, %v6143
        %v6145 = vshll.u32 2131351028, %v6136
        %v6146 = vshrl.u32 2102212464, %v6137
        %v6147 = vor.u32 %v6145, %v6146
        %v6148 = vshll.u32 2102212464, %v6136
        %v6149 = vshrl.u32 920167782, %v6137
        %v6150 = vor.u32 %v6148, %v6149
        %v6151 = vshll.u32 920167782, %v6136
        %v6152 = vshrl.u32 1326507024, %v6137
        %v6153 = vor.u32 %v6151, %v6152
        %vm6154 = vcmp.lt.s32.totalorder %v6135, 1
        %vm6155 = vcmp.lt.s32.totalorder %v6135, 2
        %vm6156 = vcmp.lt.s32.totalorder %v6135, 3
        %vm6157 = vcmp.lt.s32.totalorder %v6135, 4
        %v6158 = vsel %vm6154, %v6138, %v6141
        %v6159 = vsel %vm6157, %v6147, 2102212464
        %v6160 = vsel %vm6156, %v6144, %v6159
        %v6161 = vsel %vm6155, %v6158, %v6160
        %v6162 = vsel %vm6154, %v6141, %v6144
        %v6163 = vsel %vm6157, %v6150, 920167782
        %v6164 = vsel %vm6156, %v6147, %v6163
        %v6165 = vsel %vm6155, %v6162, %v6164
        %v6166 = vsel %vm6154, %v6144, %v6147
        %v6167 = vsel %vm6157, %v6153, 1326507024
        %v6168 = vsel %vm6156, %v6150, %v6167
        %v6169 = vsel %vm6155, %v6166, %v6168
        %v6170 = vshll.u32 %v6130, 8
        %v6171 = vand.u32 %v6170, 65535
        %v6172 = vshrl.u32 %v6170, 16
        %v6173 = vand.u32 %v6169, 65535
        %v6174 = vshrl.u32 %v6169, 16
        %v6175 = vmul.u32 %v6171, %v6173
        %v6176 = vmul.u32 %v6171, %v6174
        %v6177 = vmul.u32 %v6172, %v6173
        %v6178 = vmul.u32 %v6172, %v6174
        %v6179 = vshll.u32 %v6176, 16
        %v6180 = vshrl.u32 %v6176, 16
        %v6181 = vshll.u32 %v6177, 16
        %v6182 = vshrl.u32 %v6177, 16
        %vm6183 = vc.u32 %v6175, %v6179
        %v6184 = vsel %vm6183, 1, 0
        %v6185 = vadd.s32 %v6175, %v6179
        %v6186 = vadd.s32 %v6178, %v6184
        %vm6187 = vc.u32 %v6185, %v6181
        %v6188 = vsel %vm6187, 1, 0
        %v6189 = vadd.s32 %v6185, %v6181
        %v6190 = vadd.s32 %v6186, %v6188
        %v6191 = vadd.s32 %v6190, %v6180
        %v6192 = vadd.s32 %v6191, %v6182
        %v6193 = vand.u32 %v6170, 65535
        %v6194 = vshrl.u32 %v6170, 16
        %v6195 = vand.u32 %v6165, 65535
        %v6196 = vshrl.u32 %v6165, 16
        %v6197 = vmul.u32 %v6193, %v6195
        %v6198 = vmul.u32 %v6193, %v6196
        %v6199 = vmul.u32 %v6194, %v6195
        %v6200 = vmul.u32 %v6194, %v6196
        %v6201 = vshll.u32 %v6198, 16
        %v6202 = vshrl.u32 %v6198, 16
        %v6203 = vshll.u32 %v6199, 16
        %v6204 = vshrl.u32 %v6199, 16
        %vm6205 = vc.u32 %v6197, %v6201
        %v6206 = vsel %vm6205, 1, 0
        %v6207 = vadd.s32 %v6197, %v6201
        %v6208 = vadd.s32 %v6200, %v6206
        %vm6209 = vc.u32 %v6207, %v6203
        %v6210 = vsel %vm6209, 1, 0
        %v6211 = vadd.s32 %v6207, %v6203
        %v6212 = vadd.s32 %v6208, %v6210
        %v6213 = vadd.s32 %v6212, %v6202
        %v6214 = vadd.s32 %v6213, %v6204
        %v6215 = vmul.u32 %v6170, %v6161
        %v6216 = vadd.s32 %v6192, %v6211
        %vm6217 = vc.u32 %v6192, %v6211
        %v6218 = vadd.s32 %v6214, 1
        %v6219 = vsel %vm6217, %v6218, %v6214
        %v6220 = vadd.s32 %v6215, %v6219
        %v6221 = vadd.s32 %v6220, 536870912
        %v6222 = vshrl.u32 %v6221, 30
        %v6223 = vshll.u32 %v6222, 30
        %v6224 = vsub.s32 %v6220, %v6223
        %vm6225 = vcmp.lt.s32.totalorder %v6224, 0
        %v6226 = vsub.s32 0, %v6224
        %v6227 = vsel %vm6225, %v6226, %v6224
        %v6228 = vclz %v6227
        %v6229 = vsub.s32 %v6228, 2
        %vm6230 = vcmp.gt.s32.totalorder 0, %v6229
        %v6231 = vsel %vm6230, 0, %v6229
        %v6232 = vsub.s32 32, %v6231
        %v6233 = vshll.u32 %v6224, %v6231
        %v6234 = vshrl.u32 %v6216, %v6232
        %v6235 = vor.u32 %v6233, %v6234
        %v6236 = vsub.s32 4294967266, %v6231
        %v6237 = vadd.s32 %v6236, 127
        %v6238 = vshll.u32 %v6237, 23
        %v6239 = vor.u32 4788187, %v6238
        %v6240 = vand.u32 2147483647, %v6239
        %v6242 = vcvt.s32.f32 %v6235
        %v6243 = vmul.f32 %v6242, %v6240
        %v6244 = vxor.u32 %v6243, 2147483648
        %v6245 = vsel %vm6124, %v6244, %v6243
        %v6246 = vsub.s32 4, %v6222
        %v6247 = vsel %vm6124, %v6246, %v6222
        %v6248 = vsel %vm6123, %v341, %v6245
        %v6249 = vsel %vm6123, 0, %v6247
        %v6250 = vmul.f32 %v6248, %v6248
        %v6251 = vmul.f32 %v6250, -0.001358992
        %v6252 = vadd.f32 %v6251, 0.041655596
        %v6253 = vmul.f32 %v6250, %v6252
        %v6254 = vadd.f32 %v6253, -0.4999988
        %v6255 = vmul.f32 %v6250, %v6254
        %v6256 = vadd.f32 1.0, %v6255
        %v6257 = vmul.f32 %v6248, %v6248
        %v6258 = vmul.f32 %v6257, -0.00019511016
        %v6259 = vadd.f32 %v6258, 0.008332121
        %v6260 = vmul.f32 %v6257, %v6259
        %v6261 = vadd.f32 %v6260, -0.16666654
        %v6262 = vmul.f32 %v6257, %v6261
        %v6263 = vadd.f32 %v6262, 1.0
        %v6264 = vmul.f32 %v6263, %v6248
        %vm6265 = vweird.f32 %v341
        %v6266 = vand.u32 %v6249, 3
        %vm6267 = vcmp.lt.s32.totalorder %v6266, 2
        %vm6268 = vcmp.eq.s32.totalorder %v6266, 0
        %v6269 = vxor.u32 %v6264, 2147483648
        %v6270 = vsel %vm6268, %v6256, %v6269
        %vm6271 = vcmp.eq.s32.totalorder %v6266, 2
        %v6272 = vxor.u32 %v6256, 2147483648
        %v6273 = vsel %vm6271, %v6272, %v6264
        %v6274 = vsel %vm6267, %v6270, %v6273
        %v6275 = vsel %vm6265, nan, %v6274
        %v6276 = vand.u32 2147483647, %v342
        %vm6277 = vcmp.le.f32.partialorder %v6276, 0.7853982
        %vm6278 = vcmp.lt.s32.totalorder %v342, 0
        %v6279 = vand.u32 %v342, 2139095040
        %v6280 = vshrl.u32 %v6279, 23
        %v6281 = vsub.s32 %v6280, 127
        %v6282 = vand.u32 2147483647, %v342
        %v6283 = vand.u32 %v6282, 8388607
        %v6284 = vor.u32 %v6283, 8388608
        %v6285 = vsub.s32 0, %v6284
        %v6286 = vadd.s32 %v6281, 1
        %vm6287 = vcmp.gt.s32.totalorder %v6286, 0
        %v6288 = vsel %vm6287, %v6286, 0
        %v6289 = vshrl.u32 %v6288, 5
        %v6290 = vand.u32 %v6288, 31
        %v6291 = vsub.s32 32, %v6290
        %v6292 = vshrl.u32 683565275, %v6291
        %v6293 = vshll.u32 683565275, %v6290
        %v6294 = vshrl.u32 2475754826, %v6291
        %v6295 = vor.u32 %v6293, %v6294
        %v6296 = vshll.u32 2475754826, %v6290
        %v6297 = vshrl.u32 2131351028, %v6291
        %v6298 = vor.u32 %v6296, %v6297
        %v6299 = vshll.u32 2131351028, %v6290
        %v6300 = vshrl.u32 2102212464, %v6291
        %v6301 = vor.u32 %v6299, %v6300
        %v6302 = vshll.u32 2102212464, %v6290
        %v6303 = vshrl.u32 920167782, %v6291
        %v6304 = vor.u32 %v6302, %v6303
        %v6305 = vshll.u32 920167782, %v6290
        %v6306 = vshrl.u32 1326507024, %v6291
        %v6307 = vor.u32 %v6305, %v6306
        %vm6308 = vcmp.lt.s32.totalorder %v6289, 1
        %vm6309 = vcmp.lt.s32.totalorder %v6289, 2
        %vm6310 = vcmp.lt.s32.totalorder %v6289, 3
        %vm6311 = vcmp.lt.s32.totalorder %v6289, 4
        %v6312 = vsel %vm6308, %v6292, %v6295
        %v6313 = vsel %vm6311, %v6301, 2102212464
        %v6314 = vsel %vm6310, %v6298, %v6313
        %v6315 = vsel %vm6309, %v6312, %v6314
        %v6316 = vsel %vm6308, %v6295, %v6298
        %v6317 = vsel %vm6311, %v6304, 920167782
        %v6318 = vsel %vm6310, %v6301, %v6317
        %v6319 = vsel %vm6309, %v6316, %v6318
        %v6320 = vsel %vm6308, %v6298, %v6301
        %v6321 = vsel %vm6311, %v6307, 1326507024
        %v6322 = vsel %vm6310, %v6304, %v6321
        %v6323 = vsel %vm6309, %v6320, %v6322
        %v6324 = vshll.u32 %v6284, 8
        %v6325 = vand.u32 %v6324, 65535
        %v6326 = vshrl.u32 %v6324, 16
        %v6327 = vand.u32 %v6323, 65535
        %v6328 = vshrl.u32 %v6323, 16
        %v6329 = vmul.u32 %v6325, %v6327
        %v6330 = vmul.u32 %v6325, %v6328
        %v6331 = vmul.u32 %v6326, %v6327
        %v6332 = vmul.u32 %v6326, %v6328
        %v6333 = vshll.u32 %v6330, 16
        %v6334 = vshrl.u32 %v6330, 16
        %v6335 = vshll.u32 %v6331, 16
        %v6336 = vshrl.u32 %v6331, 16
        %vm6337 = vc.u32 %v6329, %v6333
        %v6338 = vsel %vm6337, 1, 0
        %v6339 = vadd.s32 %v6329, %v6333
        %v6340 = vadd.s32 %v6332, %v6338
        %vm6341 = vc.u32 %v6339, %v6335
        %v6342 = vsel %vm6341, 1, 0
        %v6343 = vadd.s32 %v6339, %v6335
        %v6344 = vadd.s32 %v6340, %v6342
        %v6345 = vadd.s32 %v6344, %v6334
        %v6346 = vadd.s32 %v6345, %v6336
        %v6347 = vand.u32 %v6324, 65535
        %v6348 = vshrl.u32 %v6324, 16
        %v6349 = vand.u32 %v6319, 65535
        %v6350 = vshrl.u32 %v6319, 16
        %v6351 = vmul.u32 %v6347, %v6349
        %v6352 = vmul.u32 %v6347, %v6350
        %v6353 = vmul.u32 %v6348, %v6349
        %v6354 = vmul.u32 %v6348, %v6350
        %v6355 = vshll.u32 %v6352, 16
        %v6356 = vshrl.u32 %v6352, 16
        %v6357 = vshll.u32 %v6353, 16
        %v6358 = vshrl.u32 %v6353, 16
        %vm6359 = vc.u32 %v6351, %v6355
        %v6360 = vsel %vm6359, 1, 0
        %v6361 = vadd.s32 %v6351, %v6355
        %v6362 = vadd.s32 %v6354, %v6360
        %vm6363 = vc.u32 %v6361, %v6357
        %v6364 = vsel %vm6363, 1, 0
        %v6365 = vadd.s32 %v6361, %v6357
        %v6366 = vadd.s32 %v6362, %v6364
        %v6367 = vadd.s32 %v6366, %v6356
        %v6368 = vadd.s32 %v6367, %v6358
        %v6369 = vmul.u32 %v6324, %v6315
        %v6370 = vadd.s32 %v6346, %v6365
        %vm6371 = vc.u32 %v6346, %v6365
        %v6372 = vadd.s32 %v6368, 1
        %v6373 = vsel %vm6371, %v6372, %v6368
        %v6374 = vadd.s32 %v6369, %v6373
        %v6375 = vadd.s32 %v6374, 536870912
        %v6376 = vshrl.u32 %v6375, 30
        %v6377 = vshll.u32 %v6376, 30
        %v6378 = vsub.s32 %v6374, %v6377
        %vm6379 = vcmp.lt.s32.totalorder %v6378, 0
        %v6380 = vsub.s32 0, %v6378
        %v6381 = vsel %vm6379, %v6380, %v6378
        %v6382 = vclz %v6381
        %v6383 = vsub.s32 %v6382, 2
        %vm6384 = vcmp.gt.s32.totalorder 0, %v6383
        %v6385 = vsel %vm6384, 0, %v6383
        %v6386 = vsub.s32 32, %v6385
        %v6387 = vshll.u32 %v6378, %v6385
        %v6388 = vshrl.u32 %v6370, %v6386
        %v6389 = vor.u32 %v6387, %v6388
        %v6390 = vsub.s32 4294967266, %v6385
        %v6391 = vadd.s32 %v6390, 127
        %v6392 = vshll.u32 %v6391, 23
        %v6393 = vor.u32 4788187, %v6392
        %v6394 = vand.u32 2147483647, %v6393
        %v6396 = vcvt.s32.f32 %v6389
        %v6397 = vmul.f32 %v6396, %v6394
        %v6398 = vxor.u32 %v6397, 2147483648
        %v6399 = vsel %vm6278, %v6398, %v6397
        %v6400 = vsub.s32 4, %v6376
        %v6401 = vsel %vm6278, %v6400, %v6376
        %v6402 = vsel %vm6277, %v342, %v6399
        %v6403 = vsel %vm6277, 0, %v6401
        %v6404 = vmul.f32 %v6402, %v6402
        %v6405 = vmul.f32 %v6404, -0.001358992
        %v6406 = vadd.f32 %v6405, 0.041655596
        %v6407 = vmul.f32 %v6404, %v6406
        %v6408 = vadd.f32 %v6407, -0.4999988
        %v6409 = vmul.f32 %v6404, %v6408
        %v6410 = vadd.f32 1.0, %v6409
        %v6411 = vmul.f32 %v6402, %v6402
        %v6412 = vmul.f32 %v6411, -0.00019511016
        %v6413 = vadd.f32 %v6412, 0.008332121
        %v6414 = vmul.f32 %v6411, %v6413
        %v6415 = vadd.f32 %v6414, -0.16666654
        %v6416 = vmul.f32 %v6411, %v6415
        %v6417 = vadd.f32 %v6416, 1.0
        %v6418 = vmul.f32 %v6417, %v6402
        %vm6419 = vweird.f32 %v342
        %v6420 = vand.u32 %v6403, 3
        %vm6421 = vcmp.lt.s32.totalorder %v6420, 2
        %vm6422 = vcmp.eq.s32.totalorder %v6420, 0
        %v6423 = vxor.u32 %v6418, 2147483648
        %v6424 = vsel %vm6422, %v6410, %v6423
        %vm6425 = vcmp.eq.s32.totalorder %v6420, 2
        %v6426 = vxor.u32 %v6410, 2147483648
        %v6427 = vsel %vm6425, %v6426, %v6418
        %v6428 = vsel %vm6421, %v6424, %v6427
        %v6429 = vsel %vm6419, nan, %v6428
        %v6430 = vand.u32 2147483647, %v343
        %vm6431 = vcmp.le.f32.partialorder %v6430, 0.7853982
        %vm6432 = vcmp.lt.s32.totalorder %v343, 0
        %v6433 = vand.u32 %v343, 2139095040
        %v6434 = vshrl.u32 %v6433, 23
        %v6435 = vsub.s32 %v6434, 127
        %v6436 = vand.u32 2147483647, %v343
        %v6437 = vand.u32 %v6436, 8388607
        %v6438 = vor.u32 %v6437, 8388608
        %v6439 = vsub.s32 0, %v6438
        %v6440 = vadd.s32 %v6435, 1
        %vm6441 = vcmp.gt.s32.totalorder %v6440, 0
        %v6442 = vsel %vm6441, %v6440, 0
        %v6443 = vshrl.u32 %v6442, 5
        %v6444 = vand.u32 %v6442, 31
        %v6445 = vsub.s32 32, %v6444
        %v6446 = vshrl.u32 683565275, %v6445
        %v6447 = vshll.u32 683565275, %v6444
        %v6448 = vshrl.u32 2475754826, %v6445
        %v6449 = vor.u32 %v6447, %v6448
        %v6450 = vshll.u32 2475754826, %v6444
        %v6451 = vshrl.u32 2131351028, %v6445
        %v6452 = vor.u32 %v6450, %v6451
        %v6453 = vshll.u32 2131351028, %v6444
        %v6454 = vshrl.u32 2102212464, %v6445
        %v6455 = vor.u32 %v6453, %v6454
        %v6456 = vshll.u32 2102212464, %v6444
        %v6457 = vshrl.u32 920167782, %v6445
        %v6458 = vor.u32 %v6456, %v6457
        %v6459 = vshll.u32 920167782, %v6444
        %v6460 = vshrl.u32 1326507024, %v6445
        %v6461 = vor.u32 %v6459, %v6460
        %vm6462 = vcmp.lt.s32.totalorder %v6443, 1
        %vm6463 = vcmp.lt.s32.totalorder %v6443, 2
        %vm6464 = vcmp.lt.s32.totalorder %v6443, 3
        %vm6465 = vcmp.lt.s32.totalorder %v6443, 4
        %v6466 = vsel %vm6462, %v6446, %v6449
        %v6467 = vsel %vm6465, %v6455, 2102212464
        %v6468 = vsel %vm6464, %v6452, %v6467
        %v6469 = vsel %vm6463, %v6466, %v6468
        %v6470 = vsel %vm6462, %v6449, %v6452
        %v6471 = vsel %vm6465, %v6458, 920167782
        %v6472 = vsel %vm6464, %v6455, %v6471
        %v6473 = vsel %vm6463, %v6470, %v6472
        %v6474 = vsel %vm6462, %v6452, %v6455
        %v6475 = vsel %vm6465, %v6461, 1326507024
        %v6476 = vsel %vm6464, %v6458, %v6475
        %v6477 = vsel %vm6463, %v6474, %v6476
        %v6478 = vshll.u32 %v6438, 8
        %v6479 = vand.u32 %v6478, 65535
        %v6480 = vshrl.u32 %v6478, 16
        %v6481 = vand.u32 %v6477, 65535
        %v6482 = vshrl.u32 %v6477, 16
        %v6483 = vmul.u32 %v6479, %v6481
        %v6484 = vmul.u32 %v6479, %v6482
        %v6485 = vmul.u32 %v6480, %v6481
        %v6486 = vmul.u32 %v6480, %v6482
        %v6487 = vshll.u32 %v6484, 16
        %v6488 = vshrl.u32 %v6484, 16
        %v6489 = vshll.u32 %v6485, 16
        %v6490 = vshrl.u32 %v6485, 16
        %vm6491 = vc.u32 %v6483, %v6487
        %v6492 = vsel %vm6491, 1, 0
        %v6493 = vadd.s32 %v6483, %v6487
        %v6494 = vadd.s32 %v6486, %v6492
        %vm6495 = vc.u32 %v6493, %v6489
        %v6496 = vsel %vm6495, 1, 0
        %v6497 = vadd.s32 %v6493, %v6489
        %v6498 = vadd.s32 %v6494, %v6496
        %v6499 = vadd.s32 %v6498, %v6488
        %v6500 = vadd.s32 %v6499, %v6490
        %v6501 = vand.u32 %v6478, 65535
        %v6502 = vshrl.u32 %v6478, 16
        %v6503 = vand.u32 %v6473, 65535
        %v6504 = vshrl.u32 %v6473, 16
        %v6505 = vmul.u32 %v6501, %v6503
        %v6506 = vmul.u32 %v6501, %v6504
        %v6507 = vmul.u32 %v6502, %v6503
        %v6508 = vmul.u32 %v6502, %v6504
        %v6509 = vshll.u32 %v6506, 16
        %v6510 = vshrl.u32 %v6506, 16
        %v6511 = vshll.u32 %v6507, 16
        %v6512 = vshrl.u32 %v6507, 16
        %vm6513 = vc.u32 %v6505, %v6509
        %v6514 = vsel %vm6513, 1, 0
        %v6515 = vadd.s32 %v6505, %v6509
        %v6516 = vadd.s32 %v6508, %v6514
        %vm6517 = vc.u32 %v6515, %v6511
        %v6518 = vsel %vm6517, 1, 0
        %v6519 = vadd.s32 %v6515, %v6511
        %v6520 = vadd.s32 %v6516, %v6518
        %v6521 = vadd.s32 %v6520, %v6510
        %v6522 = vadd.s32 %v6521, %v6512
        %v6523 = vmul.u32 %v6478, %v6469
        %v6524 = vadd.s32 %v6500, %v6519
        %vm6525 = vc.u32 %v6500, %v6519
        %v6526 = vadd.s32 %v6522, 1
        %v6527 = vsel %vm6525, %v6526, %v6522
        %v6528 = vadd.s32 %v6523, %v6527
        %v6529 = vadd.s32 %v6528, 536870912
        %v6530 = vshrl.u32 %v6529, 30
        %v6531 = vshll.u32 %v6530, 30
        %v6532 = vsub.s32 %v6528, %v6531
        %vm6533 = vcmp.lt.s32.totalorder %v6532, 0
        %v6534 = vsub.s32 0, %v6532
        %v6535 = vsel %vm6533, %v6534, %v6532
        %v6536 = vclz %v6535
        %v6537 = vsub.s32 %v6536, 2
        %vm6538 = vcmp.gt.s32.totalorder 0, %v6537
        %v6539 = vsel %vm6538, 0, %v6537
        %v6540 = vsub.s32 32, %v6539
        %v6541 = vshll.u32 %v6532, %v6539
        %v6542 = vshrl.u32 %v6524, %v6540
        %v6543 = vor.u32 %v6541, %v6542
        %v6544 = vsub.s32 4294967266, %v6539
        %v6545 = vadd.s32 %v6544, 127
        %v6546 = vshll.u32 %v6545, 23
        %v6547 = vor.u32 4788187, %v6546
        %v6548 = vand.u32 2147483647, %v6547
        %v6550 = vcvt.s32.f32 %v6543
        %v6551 = vmul.f32 %v6550, %v6548
        %v6552 = vxor.u32 %v6551, 2147483648
        %v6553 = vsel %vm6432, %v6552, %v6551
        %v6554 = vsub.s32 4, %v6530
        %v6555 = vsel %vm6432, %v6554, %v6530
        %v6556 = vsel %vm6431, %v343, %v6553
        %v6557 = vsel %vm6431, 0, %v6555
        %v6558 = vmul.f32 %v6556, %v6556
        %v6559 = vmul.f32 %v6558, -0.001358992
        %v6560 = vadd.f32 %v6559, 0.041655596
        %v6561 = vmul.f32 %v6558, %v6560
        %v6562 = vadd.f32 %v6561, -0.4999988
        %v6563 = vmul.f32 %v6558, %v6562
        %v6564 = vadd.f32 1.0, %v6563
        %v6565 = vmul.f32 %v6556, %v6556
        %v6566 = vmul.f32 %v6565, -0.00019511016
        %v6567 = vadd.f32 %v6566, 0.008332121
        %v6568 = vmul.f32 %v6565, %v6567
        %v6569 = vadd.f32 %v6568, -0.16666654
        %v6570 = vmul.f32 %v6565, %v6569
        %v6571 = vadd.f32 %v6570, 1.0
        %v6572 = vmul.f32 %v6571, %v6556
        %vm6573 = vweird.f32 %v343
        %v6574 = vand.u32 %v6557, 3
        %vm6575 = vcmp.lt.s32.totalorder %v6574, 2
        %vm6576 = vcmp.eq.s32.totalorder %v6574, 0
        %v6577 = vxor.u32 %v6572, 2147483648
        %v6578 = vsel %vm6576, %v6564, %v6577
        %vm6579 = vcmp.eq.s32.totalorder %v6574, 2
        %v6580 = vxor.u32 %v6564, 2147483648
        %v6581 = vsel %vm6579, %v6580, %v6572
        %v6582 = vsel %vm6575, %v6578, %v6581
        %v6583 = vsel %vm6573, nan, %v6582
        %v6584 = vand.u32 2147483647, %v344
        %vm6585 = vcmp.le.f32.partialorder %v6584, 0.7853982
        %vm6586 = vcmp.lt.s32.totalorder %v344, 0
        %v6587 = vand.u32 %v344, 2139095040
        %v6588 = vshrl.u32 %v6587, 23
        %v6589 = vsub.s32 %v6588, 127
        %v6590 = vand.u32 2147483647, %v344
        %v6591 = vand.u32 %v6590, 8388607
        %v6592 = vor.u32 %v6591, 8388608
        %v6593 = vsub.s32 0, %v6592
        %v6594 = vadd.s32 %v6589, 1
        %vm6595 = vcmp.gt.s32.totalorder %v6594, 0
        %v6596 = vsel %vm6595, %v6594, 0
        %v6597 = vshrl.u32 %v6596, 5
        %v6598 = vand.u32 %v6596, 31
        %v6599 = vsub.s32 32, %v6598
        %v6600 = vshrl.u32 683565275, %v6599
        %v6601 = vshll.u32 683565275, %v6598
        %v6602 = vshrl.u32 2475754826, %v6599
        %v6603 = vor.u32 %v6601, %v6602
        %v6604 = vshll.u32 2475754826, %v6598
        %v6605 = vshrl.u32 2131351028, %v6599
        %v6606 = vor.u32 %v6604, %v6605
        %v6607 = vshll.u32 2131351028, %v6598
        %v6608 = vshrl.u32 2102212464, %v6599
        %v6609 = vor.u32 %v6607, %v6608
        %v6610 = vshll.u32 2102212464, %v6598
        %v6611 = vshrl.u32 920167782, %v6599
        %v6612 = vor.u32 %v6610, %v6611
        %v6613 = vshll.u32 920167782, %v6598
        %v6614 = vshrl.u32 1326507024, %v6599
        %v6615 = vor.u32 %v6613, %v6614
        %vm6616 = vcmp.lt.s32.totalorder %v6597, 1
        %vm6617 = vcmp.lt.s32.totalorder %v6597, 2
        %vm6618 = vcmp.lt.s32.totalorder %v6597, 3
        %vm6619 = vcmp.lt.s32.totalorder %v6597, 4
        %v6620 = vsel %vm6616, %v6600, %v6603
        %v6621 = vsel %vm6619, %v6609, 2102212464
        %v6622 = vsel %vm6618, %v6606, %v6621
        %v6623 = vsel %vm6617, %v6620, %v6622
        %v6624 = vsel %vm6616, %v6603, %v6606
        %v6625 = vsel %vm6619, %v6612, 920167782
        %v6626 = vsel %vm6618, %v6609, %v6625
        %v6627 = vsel %vm6617, %v6624, %v6626
        %v6628 = vsel %vm6616, %v6606, %v6609
        %v6629 = vsel %vm6619, %v6615, 1326507024
        %v6630 = vsel %vm6618, %v6612, %v6629
        %v6631 = vsel %vm6617, %v6628, %v6630
        %v6632 = vshll.u32 %v6592, 8
        %v6633 = vand.u32 %v6632, 65535
        %v6634 = vshrl.u32 %v6632, 16
        %v6635 = vand.u32 %v6631, 65535
        %v6636 = vshrl.u32 %v6631, 16
        %v6637 = vmul.u32 %v6633, %v6635
        %v6638 = vmul.u32 %v6633, %v6636
        %v6639 = vmul.u32 %v6634, %v6635
        %v6640 = vmul.u32 %v6634, %v6636
        %v6641 = vshll.u32 %v6638, 16
        %v6642 = vshrl.u32 %v6638, 16
        %v6643 = vshll.u32 %v6639, 16
        %v6644 = vshrl.u32 %v6639, 16
        %vm6645 = vc.u32 %v6637, %v6641
        %v6646 = vsel %vm6645, 1, 0
        %v6647 = vadd.s32 %v6637, %v6641
        %v6648 = vadd.s32 %v6640, %v6646
        %vm6649 = vc.u32 %v6647, %v6643
        %v6650 = vsel %vm6649, 1, 0
        %v6651 = vadd.s32 %v6647, %v6643
        %v6652 = vadd.s32 %v6648, %v6650
        %v6653 = vadd.s32 %v6652, %v6642
        %v6654 = vadd.s32 %v6653, %v6644
        %v6655 = vand.u32 %v6632, 65535
        %v6656 = vshrl.u32 %v6632, 16
        %v6657 = vand.u32 %v6627, 65535
        %v6658 = vshrl.u32 %v6627, 16
        %v6659 = vmul.u32 %v6655, %v6657
        %v6660 = vmul.u32 %v6655, %v6658
        %v6661 = vmul.u32 %v6656, %v6657
        %v6662 = vmul.u32 %v6656, %v6658
        %v6663 = vshll.u32 %v6660, 16
        %v6664 = vshrl.u32 %v6660, 16
        %v6665 = vshll.u32 %v6661, 16
        %v6666 = vshrl.u32 %v6661, 16
        %vm6667 = vc.u32 %v6659, %v6663
        %v6668 = vsel %vm6667, 1, 0
        %v6669 = vadd.s32 %v6659, %v6663
        %v6670 = vadd.s32 %v6662, %v6668
        %vm6671 = vc.u32 %v6669, %v6665
        %v6672 = vsel %vm6671, 1, 0
        %v6673 = vadd.s32 %v6669, %v6665
        %v6674 = vadd.s32 %v6670, %v6672
        %v6675 = vadd.s32 %v6674, %v6664
        %v6676 = vadd.s32 %v6675, %v6666
        %v6677 = vmul.u32 %v6632, %v6623
        %v6678 = vadd.s32 %v6654, %v6673
        %vm6679 = vc.u32 %v6654, %v6673
        %v6680 = vadd.s32 %v6676, 1
        %v6681 = vsel %vm6679, %v6680, %v6676
        %v6682 = vadd.s32 %v6677, %v6681
        %v6683 = vadd.s32 %v6682, 536870912
        %v6684 = vshrl.u32 %v6683, 30
        %v6685 = vshll.u32 %v6684, 30
        %v6686 = vsub.s32 %v6682, %v6685
        %vm6687 = vcmp.lt.s32.totalorder %v6686, 0
        %v6688 = vsub.s32 0, %v6686
        %v6689 = vsel %vm6687, %v6688, %v6686
        %v6690 = vclz %v6689
        %v6691 = vsub.s32 %v6690, 2
        %vm6692 = vcmp.gt.s32.totalorder 0, %v6691
        %v6693 = vsel %vm6692, 0, %v6691
        %v6694 = vsub.s32 32, %v6693
        %v6695 = vshll.u32 %v6686, %v6693
        %v6696 = vshrl.u32 %v6678, %v6694
        %v6697 = vor.u32 %v6695, %v6696
        %v6698 = vsub.s32 4294967266, %v6693
        %v6699 = vadd.s32 %v6698, 127
        %v6700 = vshll.u32 %v6699, 23
        %v6701 = vor.u32 4788187, %v6700
        %v6702 = vand.u32 2147483647, %v6701
        %v6704 = vcvt.s32.f32 %v6697
        %v6705 = vmul.f32 %v6704, %v6702
        %v6706 = vxor.u32 %v6705, 2147483648
        %v6707 = vsel %vm6586, %v6706, %v6705
        %v6708 = vsub.s32 4, %v6684
        %v6709 = vsel %vm6586, %v6708, %v6684
        %v6710 = vsel %vm6585, %v344, %v6707
        %v6711 = vsel %vm6585, 0, %v6709
        %v6712 = vmul.f32 %v6710, %v6710
        %v6713 = vmul.f32 %v6712, -0.001358992
        %v6714 = vadd.f32 %v6713, 0.041655596
        %v6715 = vmul.f32 %v6712, %v6714
        %v6716 = vadd.f32 %v6715, -0.4999988
        %v6717 = vmul.f32 %v6712, %v6716
        %v6718 = vadd.f32 1.0, %v6717
        %v6719 = vmul.f32 %v6710, %v6710
        %v6720 = vmul.f32 %v6719, -0.00019511016
        %v6721 = vadd.f32 %v6720, 0.008332121
        %v6722 = vmul.f32 %v6719, %v6721
        %v6723 = vadd.f32 %v6722, -0.16666654
        %v6724 = vmul.f32 %v6719, %v6723
        %v6725 = vadd.f32 %v6724, 1.0
        %v6726 = vmul.f32 %v6725, %v6710
        %vm6727 = vweird.f32 %v344
        %v6728 = vand.u32 %v6711, 3
        %vm6729 = vcmp.lt.s32.totalorder %v6728, 2
        %vm6730 = vcmp.eq.s32.totalorder %v6728, 0
        %v6731 = vxor.u32 %v6726, 2147483648
        %v6732 = vsel %vm6730, %v6718, %v6731
        %vm6733 = vcmp.eq.s32.totalorder %v6728, 2
        %v6734 = vxor.u32 %v6718, 2147483648
        %v6735 = vsel %vm6733, %v6734, %v6726
        %v6736 = vsel %vm6729, %v6732, %v6735
        %v6737 = vsel %vm6727, nan, %v6736
        %v6738 = vand.u32 2147483647, %v345
        %vm6739 = vcmp.le.f32.partialorder %v6738, 0.7853982
        %vm6740 = vcmp.lt.s32.totalorder %v345, 0
        %v6741 = vand.u32 %v345, 2139095040
        %v6742 = vshrl.u32 %v6741, 23
        %v6743 = vsub.s32 %v6742, 127
        %v6744 = vand.u32 2147483647, %v345
        %v6745 = vand.u32 %v6744, 8388607
        %v6746 = vor.u32 %v6745, 8388608
        %v6747 = vsub.s32 0, %v6746
        %v6748 = vadd.s32 %v6743, 1
        %vm6749 = vcmp.gt.s32.totalorder %v6748, 0
        %v6750 = vsel %vm6749, %v6748, 0
        %v6751 = vshrl.u32 %v6750, 5
        %v6752 = vand.u32 %v6750, 31
        %v6753 = vsub.s32 32, %v6752
        %v6754 = vshrl.u32 683565275, %v6753
        %v6755 = vshll.u32 683565275, %v6752
        %v6756 = vshrl.u32 2475754826, %v6753
        %v6757 = vor.u32 %v6755, %v6756
        %v6758 = vshll.u32 2475754826, %v6752
        %v6759 = vshrl.u32 2131351028, %v6753
        %v6760 = vor.u32 %v6758, %v6759
        %v6761 = vshll.u32 2131351028, %v6752
        %v6762 = vshrl.u32 2102212464, %v6753
        %v6763 = vor.u32 %v6761, %v6762
        %v6764 = vshll.u32 2102212464, %v6752
        %v6765 = vshrl.u32 920167782, %v6753
        %v6766 = vor.u32 %v6764, %v6765
        %v6767 = vshll.u32 920167782, %v6752
        %v6768 = vshrl.u32 1326507024, %v6753
        %v6769 = vor.u32 %v6767, %v6768
        %vm6770 = vcmp.lt.s32.totalorder %v6751, 1
        %vm6771 = vcmp.lt.s32.totalorder %v6751, 2
        %vm6772 = vcmp.lt.s32.totalorder %v6751, 3
        %vm6773 = vcmp.lt.s32.totalorder %v6751, 4
        %v6774 = vsel %vm6770, %v6754, %v6757
        %v6775 = vsel %vm6773, %v6763, 2102212464
        %v6776 = vsel %vm6772, %v6760, %v6775
        %v6777 = vsel %vm6771, %v6774, %v6776
        %v6778 = vsel %vm6770, %v6757, %v6760
        %v6779 = vsel %vm6773, %v6766, 920167782
        %v6780 = vsel %vm6772, %v6763, %v6779
        %v6781 = vsel %vm6771, %v6778, %v6780
        %v6782 = vsel %vm6770, %v6760, %v6763
        %v6783 = vsel %vm6773, %v6769, 1326507024
        %v6784 = vsel %vm6772, %v6766, %v6783
        %v6785 = vsel %vm6771, %v6782, %v6784
        %v6786 = vshll.u32 %v6746, 8
        %v6787 = vand.u32 %v6786, 65535
        %v6788 = vshrl.u32 %v6786, 16
        %v6789 = vand.u32 %v6785, 65535
        %v6790 = vshrl.u32 %v6785, 16
        %v6791 = vmul.u32 %v6787, %v6789
        %v6792 = vmul.u32 %v6787, %v6790
        %v6793 = vmul.u32 %v6788, %v6789
        %v6794 = vmul.u32 %v6788, %v6790
        %v6795 = vshll.u32 %v6792, 16
        %v6796 = vshrl.u32 %v6792, 16
        %v6797 = vshll.u32 %v6793, 16
        %v6798 = vshrl.u32 %v6793, 16
        %vm6799 = vc.u32 %v6791, %v6795
        %v6800 = vsel %vm6799, 1, 0
        %v6801 = vadd.s32 %v6791, %v6795
        %v6802 = vadd.s32 %v6794, %v6800
        %vm6803 = vc.u32 %v6801, %v6797
        %v6804 = vsel %vm6803, 1, 0
        %v6805 = vadd.s32 %v6801, %v6797
        %v6806 = vadd.s32 %v6802, %v6804
        %v6807 = vadd.s32 %v6806, %v6796
        %v6808 = vadd.s32 %v6807, %v6798
        %v6809 = vand.u32 %v6786, 65535
        %v6810 = vshrl.u32 %v6786, 16
        %v6811 = vand.u32 %v6781, 65535
        %v6812 = vshrl.u32 %v6781, 16
        %v6813 = vmul.u32 %v6809, %v6811
        %v6814 = vmul.u32 %v6809, %v6812
        %v6815 = vmul.u32 %v6810, %v6811
        %v6816 = vmul.u32 %v6810, %v6812
        %v6817 = vshll.u32 %v6814, 16
        %v6818 = vshrl.u32 %v6814, 16
        %v6819 = vshll.u32 %v6815, 16
        %v6820 = vshrl.u32 %v6815, 16
        %vm6821 = vc.u32 %v6813, %v6817
        %v6822 = vsel %vm6821, 1, 0
        %v6823 = vadd.s32 %v6813, %v6817
        %v6824 = vadd.s32 %v6816, %v6822
        %vm6825 = vc.u32 %v6823, %v6819
        %v6826 = vsel %vm6825, 1, 0
        %v6827 = vadd.s32 %v6823, %v6819
        %v6828 = vadd.s32 %v6824, %v6826
        %v6829 = vadd.s32 %v6828, %v6818
        %v6830 = vadd.s32 %v6829, %v6820
        %v6831 = vmul.u32 %v6786, %v6777
        %v6832 = vadd.s32 %v6808, %v6827
        %vm6833 = vc.u32 %v6808, %v6827
        %v6834 = vadd.s32 %v6830, 1
        %v6835 = vsel %vm6833, %v6834, %v6830
        %v6836 = vadd.s32 %v6831, %v6835
        %v6837 = vadd.s32 %v6836, 536870912
        %v6838 = vshrl.u32 %v6837, 30
        %v6839 = vshll.u32 %v6838, 30
        %v6840 = vsub.s32 %v6836, %v6839
        %vm6841 = vcmp.lt.s32.totalorder %v6840, 0
        %v6842 = vsub.s32 0, %v6840
        %v6843 = vsel %vm6841, %v6842, %v6840
        %v6844 = vclz %v6843
        %v6845 = vsub.s32 %v6844, 2
        %vm6846 = vcmp.gt.s32.totalorder 0, %v6845
        %v6847 = vsel %vm6846, 0, %v6845
        %v6848 = vsub.s32 32, %v6847
        %v6849 = vshll.u32 %v6840, %v6847
        %v6850 = vshrl.u32 %v6832, %v6848
        %v6851 = vor.u32 %v6849, %v6850
        %v6852 = vsub.s32 4294967266, %v6847
        %v6853 = vadd.s32 %v6852, 127
        %v6854 = vshll.u32 %v6853, 23
        %v6855 = vor.u32 4788187, %v6854
        %v6856 = vand.u32 2147483647, %v6855
        %v6858 = vcvt.s32.f32 %v6851
        %v6859 = vmul.f32 %v6858, %v6856
        %v6860 = vxor.u32 %v6859, 2147483648
        %v6861 = vsel %vm6740, %v6860, %v6859
        %v6862 = vsub.s32 4, %v6838
        %v6863 = vsel %vm6740, %v6862, %v6838
        %v6864 = vsel %vm6739, %v345, %v6861
        %v6865 = vsel %vm6739, 0, %v6863
        %v6866 = vmul.f32 %v6864, %v6864
        %v6867 = vmul.f32 %v6866, -0.001358992
        %v6868 = vadd.f32 %v6867, 0.041655596
        %v6869 = vmul.f32 %v6866, %v6868
        %v6870 = vadd.f32 %v6869, -0.4999988
        %v6871 = vmul.f32 %v6866, %v6870
        %v6872 = vadd.f32 1.0, %v6871
        %v6873 = vmul.f32 %v6864, %v6864
        %v6874 = vmul.f32 %v6873, -0.00019511016
        %v6875 = vadd.f32 %v6874, 0.008332121
        %v6876 = vmul.f32 %v6873, %v6875
        %v6877 = vadd.f32 %v6876, -0.16666654
        %v6878 = vmul.f32 %v6873, %v6877
        %v6879 = vadd.f32 %v6878, 1.0
        %v6880 = vmul.f32 %v6879, %v6864
        %vm6881 = vweird.f32 %v345
        %v6882 = vand.u32 %v6865, 3
        %vm6883 = vcmp.lt.s32.totalorder %v6882, 2
        %vm6884 = vcmp.eq.s32.totalorder %v6882, 0
        %v6885 = vxor.u32 %v6880, 2147483648
        %v6886 = vsel %vm6884, %v6872, %v6885
        %vm6887 = vcmp.eq.s32.totalorder %v6882, 2
        %v6888 = vxor.u32 %v6872, 2147483648
        %v6889 = vsel %vm6887, %v6888, %v6880
        %v6890 = vsel %vm6883, %v6886, %v6889
        %v6891 = vsel %vm6881, nan, %v6890
        %v6892 = vand.u32 2147483647, %v346
        %vm6893 = vcmp.le.f32.partialorder %v6892, 0.7853982
        %vm6894 = vcmp.lt.s32.totalorder %v346, 0
        %v6895 = vand.u32 %v346, 2139095040
        %v6896 = vshrl.u32 %v6895, 23
        %v6897 = vsub.s32 %v6896, 127
        %v6898 = vand.u32 2147483647, %v346
        %v6899 = vand.u32 %v6898, 8388607
        %v6900 = vor.u32 %v6899, 8388608
        %v6901 = vsub.s32 0, %v6900
        %v6902 = vadd.s32 %v6897, 1
        %vm6903 = vcmp.gt.s32.totalorder %v6902, 0
        %v6904 = vsel %vm6903, %v6902, 0
        %v6905 = vshrl.u32 %v6904, 5
        %v6906 = vand.u32 %v6904, 31
        %v6907 = vsub.s32 32, %v6906
        %v6908 = vshrl.u32 683565275, %v6907
        %v6909 = vshll.u32 683565275, %v6906
        %v6910 = vshrl.u32 2475754826, %v6907
        %v6911 = vor.u32 %v6909, %v6910
        %v6912 = vshll.u32 2475754826, %v6906
        %v6913 = vshrl.u32 2131351028, %v6907
        %v6914 = vor.u32 %v6912, %v6913
        %v6915 = vshll.u32 2131351028, %v6906
        %v6916 = vshrl.u32 2102212464, %v6907
        %v6917 = vor.u32 %v6915, %v6916
        %v6918 = vshll.u32 2102212464, %v6906
        %v6919 = vshrl.u32 920167782, %v6907
        %v6920 = vor.u32 %v6918, %v6919
        %v6921 = vshll.u32 920167782, %v6906
        %v6922 = vshrl.u32 1326507024, %v6907
        %v6923 = vor.u32 %v6921, %v6922
        %vm6924 = vcmp.lt.s32.totalorder %v6905, 1
        %vm6925 = vcmp.lt.s32.totalorder %v6905, 2
        %vm6926 = vcmp.lt.s32.totalorder %v6905, 3
        %vm6927 = vcmp.lt.s32.totalorder %v6905, 4
        %v6928 = vsel %vm6924, %v6908, %v6911
        %v6929 = vsel %vm6927, %v6917, 2102212464
        %v6930 = vsel %vm6926, %v6914, %v6929
        %v6931 = vsel %vm6925, %v6928, %v6930
        %v6932 = vsel %vm6924, %v6911, %v6914
        %v6933 = vsel %vm6927, %v6920, 920167782
        %v6934 = vsel %vm6926, %v6917, %v6933
        %v6935 = vsel %vm6925, %v6932, %v6934
        %v6936 = vsel %vm6924, %v6914, %v6917
        %v6937 = vsel %vm6927, %v6923, 1326507024
        %v6938 = vsel %vm6926, %v6920, %v6937
        %v6939 = vsel %vm6925, %v6936, %v6938
        %v6940 = vshll.u32 %v6900, 8
        %v6941 = vand.u32 %v6940, 65535
        %v6942 = vshrl.u32 %v6940, 16
        %v6943 = vand.u32 %v6939, 65535
        %v6944 = vshrl.u32 %v6939, 16
        %v6945 = vmul.u32 %v6941, %v6943
        %v6946 = vmul.u32 %v6941, %v6944
        %v6947 = vmul.u32 %v6942, %v6943
        %v6948 = vmul.u32 %v6942, %v6944
        %v6949 = vshll.u32 %v6946, 16
        %v6950 = vshrl.u32 %v6946, 16
        %v6951 = vshll.u32 %v6947, 16
        %v6952 = vshrl.u32 %v6947, 16
        %vm6953 = vc.u32 %v6945, %v6949
        %v6954 = vsel %vm6953, 1, 0
        %v6955 = vadd.s32 %v6945, %v6949
        %v6956 = vadd.s32 %v6948, %v6954
        %vm6957 = vc.u32 %v6955, %v6951
        %v6958 = vsel %vm6957, 1, 0
        %v6959 = vadd.s32 %v6955, %v6951
        %v6960 = vadd.s32 %v6956, %v6958
        %v6961 = vadd.s32 %v6960, %v6950
        %v6962 = vadd.s32 %v6961, %v6952
        %v6963 = vand.u32 %v6940, 65535
        %v6964 = vshrl.u32 %v6940, 16
        %v6965 = vand.u32 %v6935, 65535
        %v6966 = vshrl.u32 %v6935, 16
        %v6967 = vmul.u32 %v6963, %v6965
        %v6968 = vmul.u32 %v6963, %v6966
        %v6969 = vmul.u32 %v6964, %v6965
        %v6970 = vmul.u32 %v6964, %v6966
        %v6971 = vshll.u32 %v6968, 16
        %v6972 = vshrl.u32 %v6968, 16
        %v6973 = vshll.u32 %v6969, 16
        %v6974 = vshrl.u32 %v6969, 16
        %vm6975 = vc.u32 %v6967, %v6971
        %v6976 = vsel %vm6975, 1, 0
        %v6977 = vadd.s32 %v6967, %v6971
        %v6978 = vadd.s32 %v6970, %v6976
        %vm6979 = vc.u32 %v6977, %v6973
        %v6980 = vsel %vm6979, 1, 0
        %v6981 = vadd.s32 %v6977, %v6973
        %v6982 = vadd.s32 %v6978, %v6980
        %v6983 = vadd.s32 %v6982, %v6972
        %v6984 = vadd.s32 %v6983, %v6974
        %v6985 = vmul.u32 %v6940, %v6931
        %v6986 = vadd.s32 %v6962, %v6981
        %vm6987 = vc.u32 %v6962, %v6981
        %v6988 = vadd.s32 %v6984, 1
        %v6989 = vsel %vm6987, %v6988, %v6984
        %v6990 = vadd.s32 %v6985, %v6989
        %v6991 = vadd.s32 %v6990, 536870912
        %v6992 = vshrl.u32 %v6991, 30
        %v6993 = vshll.u32 %v6992, 30
        %v6994 = vsub.s32 %v6990, %v6993
        %vm6995 = vcmp.lt.s32.totalorder %v6994, 0
        %v6996 = vsub.s32 0, %v6994
        %v6997 = vsel %vm6995, %v6996, %v6994
        %v6998 = vclz %v6997
        %v6999 = vsub.s32 %v6998, 2
        %vm7000 = vcmp.gt.s32.totalorder 0, %v6999
        %v7001 = vsel %vm7000, 0, %v6999
        %v7002 = vsub.s32 32, %v7001
        %v7003 = vshll.u32 %v6994, %v7001
        %v7004 = vshrl.u32 %v6986, %v7002
        %v7005 = vor.u32 %v7003, %v7004
        %v7006 = vsub.s32 4294967266, %v7001
        %v7007 = vadd.s32 %v7006, 127
        %v7008 = vshll.u32 %v7007, 23
        %v7009 = vor.u32 4788187, %v7008
        %v7010 = vand.u32 2147483647, %v7009
        %v7012 = vcvt.s32.f32 %v7005
        %v7013 = vmul.f32 %v7012, %v7010
        %v7014 = vxor.u32 %v7013, 2147483648
        %v7015 = vsel %vm6894, %v7014, %v7013
        %v7016 = vsub.s32 4, %v6992
        %v7017 = vsel %vm6894, %v7016, %v6992
        %v7018 = vsel %vm6893, %v346, %v7015
        %v7019 = vsel %vm6893, 0, %v7017
        %v7020 = vmul.f32 %v7018, %v7018
        %v7021 = vmul.f32 %v7020, -0.001358992
        %v7022 = vadd.f32 %v7021, 0.041655596
        %v7023 = vmul.f32 %v7020, %v7022
        %v7024 = vadd.f32 %v7023, -0.4999988
        %v7025 = vmul.f32 %v7020, %v7024
        %v7026 = vadd.f32 1.0, %v7025
        %v7027 = vmul.f32 %v7018, %v7018
        %v7028 = vmul.f32 %v7027, -0.00019511016
        %v7029 = vadd.f32 %v7028, 0.008332121
        %v7030 = vmul.f32 %v7027, %v7029
        %v7031 = vadd.f32 %v7030, -0.16666654
        %v7032 = vmul.f32 %v7027, %v7031
        %v7033 = vadd.f32 %v7032, 1.0
        %v7034 = vmul.f32 %v7033, %v7018
        %vm7035 = vweird.f32 %v346
        %v7036 = vand.u32 %v7019, 3
        %vm7037 = vcmp.lt.s32.totalorder %v7036, 2
        %vm7038 = vcmp.eq.s32.totalorder %v7036, 0
        %v7039 = vxor.u32 %v7034, 2147483648
        %v7040 = vsel %vm7038, %v7026, %v7039
        %vm7041 = vcmp.eq.s32.totalorder %v7036, 2
        %v7042 = vxor.u32 %v7026, 2147483648
        %v7043 = vsel %vm7041, %v7042, %v7034
        %v7044 = vsel %vm7037, %v7040, %v7043
        %v7045 = vsel %vm7035, nan, %v7044
        %v7046 = vand.u32 2147483647, %v347
        %vm7047 = vcmp.le.f32.partialorder %v7046, 0.7853982
        %vm7048 = vcmp.lt.s32.totalorder %v347, 0
        %v7049 = vand.u32 %v347, 2139095040
        %v7050 = vshrl.u32 %v7049, 23
        %v7051 = vsub.s32 %v7050, 127
        %v7052 = vand.u32 2147483647, %v347
        %v7053 = vand.u32 %v7052, 8388607
        %v7054 = vor.u32 %v7053, 8388608
        %v7055 = vsub.s32 0, %v7054
        %v7056 = vadd.s32 %v7051, 1
        %vm7057 = vcmp.gt.s32.totalorder %v7056, 0
        %v7058 = vsel %vm7057, %v7056, 0
        %v7059 = vshrl.u32 %v7058, 5
        %v7060 = vand.u32 %v7058, 31
        %v7061 = vsub.s32 32, %v7060
        %v7062 = vshrl.u32 683565275, %v7061
        %v7063 = vshll.u32 683565275, %v7060
        %v7064 = vshrl.u32 2475754826, %v7061
        %v7065 = vor.u32 %v7063, %v7064
        %v7066 = vshll.u32 2475754826, %v7060
        %v7067 = vshrl.u32 2131351028, %v7061
        %v7068 = vor.u32 %v7066, %v7067
        %v7069 = vshll.u32 2131351028, %v7060
        %v7070 = vshrl.u32 2102212464, %v7061
        %v7071 = vor.u32 %v7069, %v7070
        %v7072 = vshll.u32 2102212464, %v7060
        %v7073 = vshrl.u32 920167782, %v7061
        %v7074 = vor.u32 %v7072, %v7073
        %v7075 = vshll.u32 920167782, %v7060
        %v7076 = vshrl.u32 1326507024, %v7061
        %v7077 = vor.u32 %v7075, %v7076
        %vm7078 = vcmp.lt.s32.totalorder %v7059, 1
        %vm7079 = vcmp.lt.s32.totalorder %v7059, 2
        %vm7080 = vcmp.lt.s32.totalorder %v7059, 3
        %vm7081 = vcmp.lt.s32.totalorder %v7059, 4
        %v7082 = vsel %vm7078, %v7062, %v7065
        %v7083 = vsel %vm7081, %v7071, 2102212464
        %v7084 = vsel %vm7080, %v7068, %v7083
        %v7085 = vsel %vm7079, %v7082, %v7084
        %v7086 = vsel %vm7078, %v7065, %v7068
        %v7087 = vsel %vm7081, %v7074, 920167782
        %v7088 = vsel %vm7080, %v7071, %v7087
        %v7089 = vsel %vm7079, %v7086, %v7088
        %v7090 = vsel %vm7078, %v7068, %v7071
        %v7091 = vsel %vm7081, %v7077, 1326507024
        %v7092 = vsel %vm7080, %v7074, %v7091
        %v7093 = vsel %vm7079, %v7090, %v7092
        %v7094 = vshll.u32 %v7054, 8
        %v7095 = vand.u32 %v7094, 65535
        %v7096 = vshrl.u32 %v7094, 16
        %v7097 = vand.u32 %v7093, 65535
        %v7098 = vshrl.u32 %v7093, 16
        %v7099 = vmul.u32 %v7095, %v7097
        %v7100 = vmul.u32 %v7095, %v7098
        %v7101 = vmul.u32 %v7096, %v7097
        %v7102 = vmul.u32 %v7096, %v7098
        %v7103 = vshll.u32 %v7100, 16
        %v7104 = vshrl.u32 %v7100, 16
        %v7105 = vshll.u32 %v7101, 16
        %v7106 = vshrl.u32 %v7101, 16
        %vm7107 = vc.u32 %v7099, %v7103
        %v7108 = vsel %vm7107, 1, 0
        %v7109 = vadd.s32 %v7099, %v7103
        %v7110 = vadd.s32 %v7102, %v7108
        %vm7111 = vc.u32 %v7109, %v7105
        %v7112 = vsel %vm7111, 1, 0
        %v7113 = vadd.s32 %v7109, %v7105
        %v7114 = vadd.s32 %v7110, %v7112
        %v7115 = vadd.s32 %v7114, %v7104
        %v7116 = vadd.s32 %v7115, %v7106
        %v7117 = vand.u32 %v7094, 65535
        %v7118 = vshrl.u32 %v7094, 16
        %v7119 = vand.u32 %v7089, 65535
        %v7120 = vshrl.u32 %v7089, 16
        %v7121 = vmul.u32 %v7117, %v7119
        %v7122 = vmul.u32 %v7117, %v7120
        %v7123 = vmul.u32 %v7118, %v7119
        %v7124 = vmul.u32 %v7118, %v7120
        %v7125 = vshll.u32 %v7122, 16
        %v7126 = vshrl.u32 %v7122, 16
        %v7127 = vshll.u32 %v7123, 16
        %v7128 = vshrl.u32 %v7123, 16
        %vm7129 = vc.u32 %v7121, %v7125
        %v7130 = vsel %vm7129, 1, 0
        %v7131 = vadd.s32 %v7121, %v7125
        %v7132 = vadd.s32 %v7124, %v7130
        %vm7133 = vc.u32 %v7131, %v7127
        %v7134 = vsel %vm7133, 1, 0
        %v7135 = vadd.s32 %v7131, %v7127
        %v7136 = vadd.s32 %v7132, %v7134
        %v7137 = vadd.s32 %v7136, %v7126
        %v7138 = vadd.s32 %v7137, %v7128
        %v7139 = vmul.u32 %v7094, %v7085
        %v7140 = vadd.s32 %v7116, %v7135
        %vm7141 = vc.u32 %v7116, %v7135
        %v7142 = vadd.s32 %v7138, 1
        %v7143 = vsel %vm7141, %v7142, %v7138
        %v7144 = vadd.s32 %v7139, %v7143
        %v7145 = vadd.s32 %v7144, 536870912
        %v7146 = vshrl.u32 %v7145, 30
        %v7147 = vshll.u32 %v7146, 30
        %v7148 = vsub.s32 %v7144, %v7147
        %vm7149 = vcmp.lt.s32.totalorder %v7148, 0
        %v7150 = vsub.s32 0, %v7148
        %v7151 = vsel %vm7149, %v7150, %v7148
        %v7152 = vclz %v7151
        %v7153 = vsub.s32 %v7152, 2
        %vm7154 = vcmp.gt.s32.totalorder 0, %v7153
        %v7155 = vsel %vm7154, 0, %v7153
        %v7156 = vsub.s32 32, %v7155
        %v7157 = vshll.u32 %v7148, %v7155
        %v7158 = vshrl.u32 %v7140, %v7156
        %v7159 = vor.u32 %v7157, %v7158
        %v7160 = vsub.s32 4294967266, %v7155
        %v7161 = vadd.s32 %v7160, 127
        %v7162 = vshll.u32 %v7161, 23
        %v7163 = vor.u32 4788187, %v7162
        %v7164 = vand.u32 2147483647, %v7163
        %v7166 = vcvt.s32.f32 %v7159
        %v7167 = vmul.f32 %v7166, %v7164
        %v7168 = vxor.u32 %v7167, 2147483648
        %v7169 = vsel %vm7048, %v7168, %v7167
        %v7170 = vsub.s32 4, %v7146
        %v7171 = vsel %vm7048, %v7170, %v7146
        %v7172 = vsel %vm7047, %v347, %v7169
        %v7173 = vsel %vm7047, 0, %v7171
        %v7174 = vmul.f32 %v7172, %v7172
        %v7175 = vmul.f32 %v7174, -0.001358992
        %v7176 = vadd.f32 %v7175, 0.041655596
        %v7177 = vmul.f32 %v7174, %v7176
        %v7178 = vadd.f32 %v7177, -0.4999988
        %v7179 = vmul.f32 %v7174, %v7178
        %v7180 = vadd.f32 1.0, %v7179
        %v7181 = vmul.f32 %v7172, %v7172
        %v7182 = vmul.f32 %v7181, -0.00019511016
        %v7183 = vadd.f32 %v7182, 0.008332121
        %v7184 = vmul.f32 %v7181, %v7183
        %v7185 = vadd.f32 %v7184, -0.16666654
        %v7186 = vmul.f32 %v7181, %v7185
        %v7187 = vadd.f32 %v7186, 1.0
        %v7188 = vmul.f32 %v7187, %v7172
        %vm7189 = vweird.f32 %v347
        %v7190 = vand.u32 %v7173, 3
        %vm7191 = vcmp.lt.s32.totalorder %v7190, 2
        %vm7192 = vcmp.eq.s32.totalorder %v7190, 0
        %v7193 = vxor.u32 %v7188, 2147483648
        %v7194 = vsel %vm7192, %v7180, %v7193
        %vm7195 = vcmp.eq.s32.totalorder %v7190, 2
        %v7196 = vxor.u32 %v7180, 2147483648
        %v7197 = vsel %vm7195, %v7196, %v7188
        %v7198 = vsel %vm7191, %v7194, %v7197
        %v7199 = vsel %vm7189, nan, %v7198
        %v7200 = vand.u32 2147483647, %v348
        %vm7201 = vcmp.le.f32.partialorder %v7200, 0.7853982
        %vm7202 = vcmp.lt.s32.totalorder %v348, 0
        %v7203 = vand.u32 %v348, 2139095040
        %v7204 = vshrl.u32 %v7203, 23
        %v7205 = vsub.s32 %v7204, 127
        %v7206 = vand.u32 2147483647, %v348
        %v7207 = vand.u32 %v7206, 8388607
        %v7208 = vor.u32 %v7207, 8388608
        %v7209 = vsub.s32 0, %v7208
        %v7210 = vadd.s32 %v7205, 1
        %vm7211 = vcmp.gt.s32.totalorder %v7210, 0
        %v7212 = vsel %vm7211, %v7210, 0
        %v7213 = vshrl.u32 %v7212, 5
        %v7214 = vand.u32 %v7212, 31
        %v7215 = vsub.s32 32, %v7214
        %v7216 = vshrl.u32 683565275, %v7215
        %v7217 = vshll.u32 683565275, %v7214
        %v7218 = vshrl.u32 2475754826, %v7215
        %v7219 = vor.u32 %v7217, %v7218
        %v7220 = vshll.u32 2475754826, %v7214
        %v7221 = vshrl.u32 2131351028, %v7215
        %v7222 = vor.u32 %v7220, %v7221
        %v7223 = vshll.u32 2131351028, %v7214
        %v7224 = vshrl.u32 2102212464, %v7215
        %v7225 = vor.u32 %v7223, %v7224
        %v7226 = vshll.u32 2102212464, %v7214
        %v7227 = vshrl.u32 920167782, %v7215
        %v7228 = vor.u32 %v7226, %v7227
        %v7229 = vshll.u32 920167782, %v7214
        %v7230 = vshrl.u32 1326507024, %v7215
        %v7231 = vor.u32 %v7229, %v7230
        %vm7232 = vcmp.lt.s32.totalorder %v7213, 1
        %vm7233 = vcmp.lt.s32.totalorder %v7213, 2
        %vm7234 = vcmp.lt.s32.totalorder %v7213, 3
        %vm7235 = vcmp.lt.s32.totalorder %v7213, 4
        %v7236 = vsel %vm7232, %v7216, %v7219
        %v7237 = vsel %vm7235, %v7225, 2102212464
        %v7238 = vsel %vm7234, %v7222, %v7237
        %v7239 = vsel %vm7233, %v7236, %v7238
        %v7240 = vsel %vm7232, %v7219, %v7222
        %v7241 = vsel %vm7235, %v7228, 920167782
        %v7242 = vsel %vm7234, %v7225, %v7241
        %v7243 = vsel %vm7233, %v7240, %v7242
        %v7244 = vsel %vm7232, %v7222, %v7225
        %v7245 = vsel %vm7235, %v7231, 1326507024
        %v7246 = vsel %vm7234, %v7228, %v7245
        %v7247 = vsel %vm7233, %v7244, %v7246
        %v7248 = vshll.u32 %v7208, 8
        %v7249 = vand.u32 %v7248, 65535
        %v7250 = vshrl.u32 %v7248, 16
        %v7251 = vand.u32 %v7247, 65535
        %v7252 = vshrl.u32 %v7247, 16
        %v7253 = vmul.u32 %v7249, %v7251
        %v7254 = vmul.u32 %v7249, %v7252
        %v7255 = vmul.u32 %v7250, %v7251
        %v7256 = vmul.u32 %v7250, %v7252
        %v7257 = vshll.u32 %v7254, 16
        %v7258 = vshrl.u32 %v7254, 16
        %v7259 = vshll.u32 %v7255, 16
        %v7260 = vshrl.u32 %v7255, 16
        %vm7261 = vc.u32 %v7253, %v7257
        %v7262 = vsel %vm7261, 1, 0
        %v7263 = vadd.s32 %v7253, %v7257
        %v7264 = vadd.s32 %v7256, %v7262
        %vm7265 = vc.u32 %v7263, %v7259
        %v7266 = vsel %vm7265, 1, 0
        %v7267 = vadd.s32 %v7263, %v7259
        %v7268 = vadd.s32 %v7264, %v7266
        %v7269 = vadd.s32 %v7268, %v7258
        %v7270 = vadd.s32 %v7269, %v7260
        %v7271 = vand.u32 %v7248, 65535
        %v7272 = vshrl.u32 %v7248, 16
        %v7273 = vand.u32 %v7243, 65535
        %v7274 = vshrl.u32 %v7243, 16
        %v7275 = vmul.u32 %v7271, %v7273
        %v7276 = vmul.u32 %v7271, %v7274
        %v7277 = vmul.u32 %v7272, %v7273
        %v7278 = vmul.u32 %v7272, %v7274
        %v7279 = vshll.u32 %v7276, 16
        %v7280 = vshrl.u32 %v7276, 16
        %v7281 = vshll.u32 %v7277, 16
        %v7282 = vshrl.u32 %v7277, 16
        %vm7283 = vc.u32 %v7275, %v7279
        %v7284 = vsel %vm7283, 1, 0
        %v7285 = vadd.s32 %v7275, %v7279
        %v7286 = vadd.s32 %v7278, %v7284
        %vm7287 = vc.u32 %v7285, %v7281
        %v7288 = vsel %vm7287, 1, 0
        %v7289 = vadd.s32 %v7285, %v7281
        %v7290 = vadd.s32 %v7286, %v7288
        %v7291 = vadd.s32 %v7290, %v7280
        %v7292 = vadd.s32 %v7291, %v7282
        %v7293 = vmul.u32 %v7248, %v7239
        %v7294 = vadd.s32 %v7270, %v7289
        %vm7295 = vc.u32 %v7270, %v7289
        %v7296 = vadd.s32 %v7292, 1
        %v7297 = vsel %vm7295, %v7296, %v7292
        %v7298 = vadd.s32 %v7293, %v7297
        %v7299 = vadd.s32 %v7298, 536870912
        %v7300 = vshrl.u32 %v7299, 30
        %v7301 = vshll.u32 %v7300, 30
        %v7302 = vsub.s32 %v7298, %v7301
        %vm7303 = vcmp.lt.s32.totalorder %v7302, 0
        %v7304 = vsub.s32 0, %v7302
        %v7305 = vsel %vm7303, %v7304, %v7302
        %v7306 = vclz %v7305
        %v7307 = vsub.s32 %v7306, 2
        %vm7308 = vcmp.gt.s32.totalorder 0, %v7307
        %v7309 = vsel %vm7308, 0, %v7307
        %v7310 = vsub.s32 32, %v7309
        %v7311 = vshll.u32 %v7302, %v7309
        %v7312 = vshrl.u32 %v7294, %v7310
        %v7313 = vor.u32 %v7311, %v7312
        %v7314 = vsub.s32 4294967266, %v7309
        %v7315 = vadd.s32 %v7314, 127
        %v7316 = vshll.u32 %v7315, 23
        %v7317 = vor.u32 4788187, %v7316
        %v7318 = vand.u32 2147483647, %v7317
        %v7320 = vcvt.s32.f32 %v7313
        %v7321 = vmul.f32 %v7320, %v7318
        %v7322 = vxor.u32 %v7321, 2147483648
        %v7323 = vsel %vm7202, %v7322, %v7321
        %v7324 = vsub.s32 4, %v7300
        %v7325 = vsel %vm7202, %v7324, %v7300
        %v7326 = vsel %vm7201, %v348, %v7323
        %v7327 = vsel %vm7201, 0, %v7325
        %v7328 = vmul.f32 %v7326, %v7326
        %v7329 = vmul.f32 %v7328, -0.001358992
        %v7330 = vadd.f32 %v7329, 0.041655596
        %v7331 = vmul.f32 %v7328, %v7330
        %v7332 = vadd.f32 %v7331, -0.4999988
        %v7333 = vmul.f32 %v7328, %v7332
        %v7334 = vadd.f32 1.0, %v7333
        %v7335 = vmul.f32 %v7326, %v7326
        %v7336 = vmul.f32 %v7335, -0.00019511016
        %v7337 = vadd.f32 %v7336, 0.008332121
        %v7338 = vmul.f32 %v7335, %v7337
        %v7339 = vadd.f32 %v7338, -0.16666654
        %v7340 = vmul.f32 %v7335, %v7339
        %v7341 = vadd.f32 %v7340, 1.0
        %v7342 = vmul.f32 %v7341, %v7326
        %vm7343 = vweird.f32 %v348
        %v7344 = vand.u32 %v7327, 3
        %vm7345 = vcmp.lt.s32.totalorder %v7344, 2
        %vm7346 = vcmp.eq.s32.totalorder %v7344, 0
        %v7347 = vxor.u32 %v7342, 2147483648
        %v7348 = vsel %vm7346, %v7334, %v7347
        %vm7349 = vcmp.eq.s32.totalorder %v7344, 2
        %v7350 = vxor.u32 %v7334, 2147483648
        %v7351 = vsel %vm7349, %v7350, %v7342
        %v7352 = vsel %vm7345, %v7348, %v7351
        %v7353 = vsel %vm7343, nan, %v7352
        %v7354 = vand.u32 2147483647, %v349
        %vm7355 = vcmp.le.f32.partialorder %v7354, 0.7853982
        %vm7356 = vcmp.lt.s32.totalorder %v349, 0
        %v7357 = vand.u32 %v349, 2139095040
        %v7358 = vshrl.u32 %v7357, 23
        %v7359 = vsub.s32 %v7358, 127
        %v7360 = vand.u32 2147483647, %v349
        %v7361 = vand.u32 %v7360, 8388607
        %v7362 = vor.u32 %v7361, 8388608
        %v7363 = vsub.s32 0, %v7362
        %v7364 = vadd.s32 %v7359, 1
        %vm7365 = vcmp.gt.s32.totalorder %v7364, 0
        %v7366 = vsel %vm7365, %v7364, 0
        %v7367 = vshrl.u32 %v7366, 5
        %v7368 = vand.u32 %v7366, 31
        %v7369 = vsub.s32 32, %v7368
        %v7370 = vshrl.u32 683565275, %v7369
        %v7371 = vshll.u32 683565275, %v7368
        %v7372 = vshrl.u32 2475754826, %v7369
        %v7373 = vor.u32 %v7371, %v7372
        %v7374 = vshll.u32 2475754826, %v7368
        %v7375 = vshrl.u32 2131351028, %v7369
        %v7376 = vor.u32 %v7374, %v7375
        %v7377 = vshll.u32 2131351028, %v7368
        %v7378 = vshrl.u32 2102212464, %v7369
        %v7379 = vor.u32 %v7377, %v7378
        %v7380 = vshll.u32 2102212464, %v7368
        %v7381 = vshrl.u32 920167782, %v7369
        %v7382 = vor.u32 %v7380, %v7381
        %v7383 = vshll.u32 920167782, %v7368
        %v7384 = vshrl.u32 1326507024, %v7369
        %v7385 = vor.u32 %v7383, %v7384
        %vm7386 = vcmp.lt.s32.totalorder %v7367, 1
        %vm7387 = vcmp.lt.s32.totalorder %v7367, 2
        %vm7388 = vcmp.lt.s32.totalorder %v7367, 3
        %vm7389 = vcmp.lt.s32.totalorder %v7367, 4
        %v7390 = vsel %vm7386, %v7370, %v7373
        %v7391 = vsel %vm7389, %v7379, 2102212464
        %v7392 = vsel %vm7388, %v7376, %v7391
        %v7393 = vsel %vm7387, %v7390, %v7392
        %v7394 = vsel %vm7386, %v7373, %v7376
        %v7395 = vsel %vm7389, %v7382, 920167782
        %v7396 = vsel %vm7388, %v7379, %v7395
        %v7397 = vsel %vm7387, %v7394, %v7396
        %v7398 = vsel %vm7386, %v7376, %v7379
        %v7399 = vsel %vm7389, %v7385, 1326507024
        %v7400 = vsel %vm7388, %v7382, %v7399
        %v7401 = vsel %vm7387, %v7398, %v7400
        %v7402 = vshll.u32 %v7362, 8
        %v7403 = vand.u32 %v7402, 65535
        %v7404 = vshrl.u32 %v7402, 16
        %v7405 = vand.u32 %v7401, 65535
        %v7406 = vshrl.u32 %v7401, 16
        %v7407 = vmul.u32 %v7403, %v7405
        %v7408 = vmul.u32 %v7403, %v7406
        %v7409 = vmul.u32 %v7404, %v7405
        %v7410 = vmul.u32 %v7404, %v7406
        %v7411 = vshll.u32 %v7408, 16
        %v7412 = vshrl.u32 %v7408, 16
        %v7413 = vshll.u32 %v7409, 16
        %v7414 = vshrl.u32 %v7409, 16
        %vm7415 = vc.u32 %v7407, %v7411
        %v7416 = vsel %vm7415, 1, 0
        %v7417 = vadd.s32 %v7407, %v7411
        %v7418 = vadd.s32 %v7410, %v7416
        %vm7419 = vc.u32 %v7417, %v7413
        %v7420 = vsel %vm7419, 1, 0
        %v7421 = vadd.s32 %v7417, %v7413
        %v7422 = vadd.s32 %v7418, %v7420
        %v7423 = vadd.s32 %v7422, %v7412
        %v7424 = vadd.s32 %v7423, %v7414
        %v7425 = vand.u32 %v7402, 65535
        %v7426 = vshrl.u32 %v7402, 16
        %v7427 = vand.u32 %v7397, 65535
        %v7428 = vshrl.u32 %v7397, 16
        %v7429 = vmul.u32 %v7425, %v7427
        %v7430 = vmul.u32 %v7425, %v7428
        %v7431 = vmul.u32 %v7426, %v7427
        %v7432 = vmul.u32 %v7426, %v7428
        %v7433 = vshll.u32 %v7430, 16
        %v7434 = vshrl.u32 %v7430, 16
        %v7435 = vshll.u32 %v7431, 16
        %v7436 = vshrl.u32 %v7431, 16
        %vm7437 = vc.u32 %v7429, %v7433
        %v7438 = vsel %vm7437, 1, 0
        %v7439 = vadd.s32 %v7429, %v7433
        %v7440 = vadd.s32 %v7432, %v7438
        %vm7441 = vc.u32 %v7439, %v7435
        %v7442 = vsel %vm7441, 1, 0
        %v7443 = vadd.s32 %v7439, %v7435
        %v7444 = vadd.s32 %v7440, %v7442
        %v7445 = vadd.s32 %v7444, %v7434
        %v7446 = vadd.s32 %v7445, %v7436
        %v7447 = vmul.u32 %v7402, %v7393
        %v7448 = vadd.s32 %v7424, %v7443
        %vm7449 = vc.u32 %v7424, %v7443
        %v7450 = vadd.s32 %v7446, 1
        %v7451 = vsel %vm7449, %v7450, %v7446
        %v7452 = vadd.s32 %v7447, %v7451
        %v7453 = vadd.s32 %v7452, 536870912
        %v7454 = vshrl.u32 %v7453, 30
        %v7455 = vshll.u32 %v7454, 30
        %v7456 = vsub.s32 %v7452, %v7455
        %vm7457 = vcmp.lt.s32.totalorder %v7456, 0
        %v7458 = vsub.s32 0, %v7456
        %v7459 = vsel %vm7457, %v7458, %v7456
        %v7460 = vclz %v7459
        %v7461 = vsub.s32 %v7460, 2
        %vm7462 = vcmp.gt.s32.totalorder 0, %v7461
        %v7463 = vsel %vm7462, 0, %v7461
        %v7464 = vsub.s32 32, %v7463
        %v7465 = vshll.u32 %v7456, %v7463
        %v7466 = vshrl.u32 %v7448, %v7464
        %v7467 = vor.u32 %v7465, %v7466
        %v7468 = vsub.s32 4294967266, %v7463
        %v7469 = vadd.s32 %v7468, 127
        %v7470 = vshll.u32 %v7469, 23
        %v7471 = vor.u32 4788187, %v7470
        %v7472 = vand.u32 2147483647, %v7471
        %v7474 = vcvt.s32.f32 %v7467
        %v7475 = vmul.f32 %v7474, %v7472
        %v7476 = vxor.u32 %v7475, 2147483648
        %v7477 = vsel %vm7356, %v7476, %v7475
        %v7478 = vsub.s32 4, %v7454
        %v7479 = vsel %vm7356, %v7478, %v7454
        %v7480 = vsel %vm7355, %v349, %v7477
        %v7481 = vsel %vm7355, 0, %v7479
        %v7482 = vmul.f32 %v7480, %v7480
        %v7483 = vmul.f32 %v7482, -0.001358992
        %v7484 = vadd.f32 %v7483, 0.041655596
        %v7485 = vmul.f32 %v7482, %v7484
        %v7486 = vadd.f32 %v7485, -0.4999988
        %v7487 = vmul.f32 %v7482, %v7486
        %v7488 = vadd.f32 1.0, %v7487
        %v7489 = vmul.f32 %v7480, %v7480
        %v7490 = vmul.f32 %v7489, -0.00019511016
        %v7491 = vadd.f32 %v7490, 0.008332121
        %v7492 = vmul.f32 %v7489, %v7491
        %v7493 = vadd.f32 %v7492, -0.16666654
        %v7494 = vmul.f32 %v7489, %v7493
        %v7495 = vadd.f32 %v7494, 1.0
        %v7496 = vmul.f32 %v7495, %v7480
        %vm7497 = vweird.f32 %v349
        %v7498 = vand.u32 %v7481, 3
        %vm7499 = vcmp.lt.s32.totalorder %v7498, 2
        %vm7500 = vcmp.eq.s32.totalorder %v7498, 0
        %v7501 = vxor.u32 %v7496, 2147483648
        %v7502 = vsel %vm7500, %v7488, %v7501
        %vm7503 = vcmp.eq.s32.totalorder %v7498, 2
        %v7504 = vxor.u32 %v7488, 2147483648
        %v7505 = vsel %vm7503, %v7504, %v7496
        %v7506 = vsel %vm7499, %v7502, %v7505
        %v7507 = vsel %vm7497, nan, %v7506
        %v7508 = vand.u32 2147483647, %v350
        %vm7509 = vcmp.le.f32.partialorder %v7508, 0.7853982
        %vm7510 = vcmp.lt.s32.totalorder %v350, 0
        %v7511 = vand.u32 %v350, 2139095040
        %v7512 = vshrl.u32 %v7511, 23
        %v7513 = vsub.s32 %v7512, 127
        %v7514 = vand.u32 2147483647, %v350
        %v7515 = vand.u32 %v7514, 8388607
        %v7516 = vor.u32 %v7515, 8388608
        %v7517 = vsub.s32 0, %v7516
        %v7518 = vadd.s32 %v7513, 1
        %vm7519 = vcmp.gt.s32.totalorder %v7518, 0
        %v7520 = vsel %vm7519, %v7518, 0
        %v7521 = vshrl.u32 %v7520, 5
        %v7522 = vand.u32 %v7520, 31
        %v7523 = vsub.s32 32, %v7522
        %v7524 = vshrl.u32 683565275, %v7523
        %v7525 = vshll.u32 683565275, %v7522
        %v7526 = vshrl.u32 2475754826, %v7523
        %v7527 = vor.u32 %v7525, %v7526
        %v7528 = vshll.u32 2475754826, %v7522
        %v7529 = vshrl.u32 2131351028, %v7523
        %v7530 = vor.u32 %v7528, %v7529
        %v7531 = vshll.u32 2131351028, %v7522
        %v7532 = vshrl.u32 2102212464, %v7523
        %v7533 = vor.u32 %v7531, %v7532
        %v7534 = vshll.u32 2102212464, %v7522
        %v7535 = vshrl.u32 920167782, %v7523
        %v7536 = vor.u32 %v7534, %v7535
        %v7537 = vshll.u32 920167782, %v7522
        %v7538 = vshrl.u32 1326507024, %v7523
        %v7539 = vor.u32 %v7537, %v7538
        %vm7540 = vcmp.lt.s32.totalorder %v7521, 1
        %vm7541 = vcmp.lt.s32.totalorder %v7521, 2
        %vm7542 = vcmp.lt.s32.totalorder %v7521, 3
        %vm7543 = vcmp.lt.s32.totalorder %v7521, 4
        %v7544 = vsel %vm7540, %v7524, %v7527
        %v7545 = vsel %vm7543, %v7533, 2102212464
        %v7546 = vsel %vm7542, %v7530, %v7545
        %v7547 = vsel %vm7541, %v7544, %v7546
        %v7548 = vsel %vm7540, %v7527, %v7530
        %v7549 = vsel %vm7543, %v7536, 920167782
        %v7550 = vsel %vm7542, %v7533, %v7549
        %v7551 = vsel %vm7541, %v7548, %v7550
        %v7552 = vsel %vm7540, %v7530, %v7533
        %v7553 = vsel %vm7543, %v7539, 1326507024
        %v7554 = vsel %vm7542, %v7536, %v7553
        %v7555 = vsel %vm7541, %v7552, %v7554
        %v7556 = vshll.u32 %v7516, 8
        %v7557 = vand.u32 %v7556, 65535
        %v7558 = vshrl.u32 %v7556, 16
        %v7559 = vand.u32 %v7555, 65535
        %v7560 = vshrl.u32 %v7555, 16
        %v7561 = vmul.u32 %v7557, %v7559
        %v7562 = vmul.u32 %v7557, %v7560
        %v7563 = vmul.u32 %v7558, %v7559
        %v7564 = vmul.u32 %v7558, %v7560
        %v7565 = vshll.u32 %v7562, 16
        %v7566 = vshrl.u32 %v7562, 16
        %v7567 = vshll.u32 %v7563, 16
        %v7568 = vshrl.u32 %v7563, 16
        %vm7569 = vc.u32 %v7561, %v7565
        %v7570 = vsel %vm7569, 1, 0
        %v7571 = vadd.s32 %v7561, %v7565
        %v7572 = vadd.s32 %v7564, %v7570
        %vm7573 = vc.u32 %v7571, %v7567
        %v7574 = vsel %vm7573, 1, 0
        %v7575 = vadd.s32 %v7571, %v7567
        %v7576 = vadd.s32 %v7572, %v7574
        %v7577 = vadd.s32 %v7576, %v7566
        %v7578 = vadd.s32 %v7577, %v7568
        %v7579 = vand.u32 %v7556, 65535
        %v7580 = vshrl.u32 %v7556, 16
        %v7581 = vand.u32 %v7551, 65535
        %v7582 = vshrl.u32 %v7551, 16
        %v7583 = vmul.u32 %v7579, %v7581
        %v7584 = vmul.u32 %v7579, %v7582
        %v7585 = vmul.u32 %v7580, %v7581
        %v7586 = vmul.u32 %v7580, %v7582
        %v7587 = vshll.u32 %v7584, 16
        %v7588 = vshrl.u32 %v7584, 16
        %v7589 = vshll.u32 %v7585, 16
        %v7590 = vshrl.u32 %v7585, 16
        %vm7591 = vc.u32 %v7583, %v7587
        %v7592 = vsel %vm7591, 1, 0
        %v7593 = vadd.s32 %v7583, %v7587
        %v7594 = vadd.s32 %v7586, %v7592
        %vm7595 = vc.u32 %v7593, %v7589
        %v7596 = vsel %vm7595, 1, 0
        %v7597 = vadd.s32 %v7593, %v7589
        %v7598 = vadd.s32 %v7594, %v7596
        %v7599 = vadd.s32 %v7598, %v7588
        %v7600 = vadd.s32 %v7599, %v7590
        %v7601 = vmul.u32 %v7556, %v7547
        %v7602 = vadd.s32 %v7578, %v7597
        %vm7603 = vc.u32 %v7578, %v7597
        %v7604 = vadd.s32 %v7600, 1
        %v7605 = vsel %vm7603, %v7604, %v7600
        %v7606 = vadd.s32 %v7601, %v7605
        %v7607 = vadd.s32 %v7606, 536870912
        %v7608 = vshrl.u32 %v7607, 30
        %v7609 = vshll.u32 %v7608, 30
        %v7610 = vsub.s32 %v7606, %v7609
        %vm7611 = vcmp.lt.s32.totalorder %v7610, 0
        %v7612 = vsub.s32 0, %v7610
        %v7613 = vsel %vm7611, %v7612, %v7610
        %v7614 = vclz %v7613
        %v7615 = vsub.s32 %v7614, 2
        %vm7616 = vcmp.gt.s32.totalorder 0, %v7615
        %v7617 = vsel %vm7616, 0, %v7615
        %v7618 = vsub.s32 32, %v7617
        %v7619 = vshll.u32 %v7610, %v7617
        %v7620 = vshrl.u32 %v7602, %v7618
        %v7621 = vor.u32 %v7619, %v7620
        %v7622 = vsub.s32 4294967266, %v7617
        %v7623 = vadd.s32 %v7622, 127
        %v7624 = vshll.u32 %v7623, 23
        %v7625 = vor.u32 4788187, %v7624
        %v7626 = vand.u32 2147483647, %v7625
        %v7628 = vcvt.s32.f32 %v7621
        %v7629 = vmul.f32 %v7628, %v7626
        %v7630 = vxor.u32 %v7629, 2147483648
        %v7631 = vsel %vm7510, %v7630, %v7629
        %v7632 = vsub.s32 4, %v7608
        %v7633 = vsel %vm7510, %v7632, %v7608
        %v7634 = vsel %vm7509, %v350, %v7631
        %v7635 = vsel %vm7509, 0, %v7633
        %v7636 = vmul.f32 %v7634, %v7634
        %v7637 = vmul.f32 %v7636, -0.001358992
        %v7638 = vadd.f32 %v7637, 0.041655596
        %v7639 = vmul.f32 %v7636, %v7638
        %v7640 = vadd.f32 %v7639, -0.4999988
        %v7641 = vmul.f32 %v7636, %v7640
        %v7642 = vadd.f32 1.0, %v7641
        %v7643 = vmul.f32 %v7634, %v7634
        %v7644 = vmul.f32 %v7643, -0.00019511016
        %v7645 = vadd.f32 %v7644, 0.008332121
        %v7646 = vmul.f32 %v7643, %v7645
        %v7647 = vadd.f32 %v7646, -0.16666654
        %v7648 = vmul.f32 %v7643, %v7647
        %v7649 = vadd.f32 %v7648, 1.0
        %v7650 = vmul.f32 %v7649, %v7634
        %vm7651 = vweird.f32 %v350
        %v7652 = vand.u32 %v7635, 3
        %vm7653 = vcmp.lt.s32.totalorder %v7652, 2
        %vm7654 = vcmp.eq.s32.totalorder %v7652, 0
        %v7655 = vxor.u32 %v7650, 2147483648
        %v7656 = vsel %vm7654, %v7642, %v7655
        %vm7657 = vcmp.eq.s32.totalorder %v7652, 2
        %v7658 = vxor.u32 %v7642, 2147483648
        %v7659 = vsel %vm7657, %v7658, %v7650
        %v7660 = vsel %vm7653, %v7656, %v7659
        %v7661 = vsel %vm7651, nan, %v7660
        %v7662 = vand.u32 2147483647, %v351
        %vm7663 = vcmp.le.f32.partialorder %v7662, 0.7853982
        %vm7664 = vcmp.lt.s32.totalorder %v351, 0
        %v7665 = vand.u32 %v351, 2139095040
        %v7666 = vshrl.u32 %v7665, 23
        %v7667 = vsub.s32 %v7666, 127
        %v7668 = vand.u32 2147483647, %v351
        %v7669 = vand.u32 %v7668, 8388607
        %v7670 = vor.u32 %v7669, 8388608
        %v7671 = vsub.s32 0, %v7670
        %v7672 = vadd.s32 %v7667, 1
        %vm7673 = vcmp.gt.s32.totalorder %v7672, 0
        %v7674 = vsel %vm7673, %v7672, 0
        %v7675 = vshrl.u32 %v7674, 5
        %v7676 = vand.u32 %v7674, 31
        %v7677 = vsub.s32 32, %v7676
        %v7678 = vshrl.u32 683565275, %v7677
        %v7679 = vshll.u32 683565275, %v7676
        %v7680 = vshrl.u32 2475754826, %v7677
        %v7681 = vor.u32 %v7679, %v7680
        %v7682 = vshll.u32 2475754826, %v7676
        %v7683 = vshrl.u32 2131351028, %v7677
        %v7684 = vor.u32 %v7682, %v7683
        %v7685 = vshll.u32 2131351028, %v7676
        %v7686 = vshrl.u32 2102212464, %v7677
        %v7687 = vor.u32 %v7685, %v7686
        %v7688 = vshll.u32 2102212464, %v7676
        %v7689 = vshrl.u32 920167782, %v7677
        %v7690 = vor.u32 %v7688, %v7689
        %v7691 = vshll.u32 920167782, %v7676
        %v7692 = vshrl.u32 1326507024, %v7677
        %v7693 = vor.u32 %v7691, %v7692
        %vm7694 = vcmp.lt.s32.totalorder %v7675, 1
        %vm7695 = vcmp.lt.s32.totalorder %v7675, 2
        %vm7696 = vcmp.lt.s32.totalorder %v7675, 3
        %vm7697 = vcmp.lt.s32.totalorder %v7675, 4
        %v7698 = vsel %vm7694, %v7678, %v7681
        %v7699 = vsel %vm7697, %v7687, 2102212464
        %v7700 = vsel %vm7696, %v7684, %v7699
        %v7701 = vsel %vm7695, %v7698, %v7700
        %v7702 = vsel %vm7694, %v7681, %v7684
        %v7703 = vsel %vm7697, %v7690, 920167782
        %v7704 = vsel %vm7696, %v7687, %v7703
        %v7705 = vsel %vm7695, %v7702, %v7704
        %v7706 = vsel %vm7694, %v7684, %v7687
        %v7707 = vsel %vm7697, %v7693, 1326507024
        %v7708 = vsel %vm7696, %v7690, %v7707
        %v7709 = vsel %vm7695, %v7706, %v7708
        %v7710 = vshll.u32 %v7670, 8
        %v7711 = vand.u32 %v7710, 65535
        %v7712 = vshrl.u32 %v7710, 16
        %v7713 = vand.u32 %v7709, 65535
        %v7714 = vshrl.u32 %v7709, 16
        %v7715 = vmul.u32 %v7711, %v7713
        %v7716 = vmul.u32 %v7711, %v7714
        %v7717 = vmul.u32 %v7712, %v7713
        %v7718 = vmul.u32 %v7712, %v7714
        %v7719 = vshll.u32 %v7716, 16
        %v7720 = vshrl.u32 %v7716, 16
        %v7721 = vshll.u32 %v7717, 16
        %v7722 = vshrl.u32 %v7717, 16
        %vm7723 = vc.u32 %v7715, %v7719
        %v7724 = vsel %vm7723, 1, 0
        %v7725 = vadd.s32 %v7715, %v7719
        %v7726 = vadd.s32 %v7718, %v7724
        %vm7727 = vc.u32 %v7725, %v7721
        %v7728 = vsel %vm7727, 1, 0
        %v7729 = vadd.s32 %v7725, %v7721
        %v7730 = vadd.s32 %v7726, %v7728
        %v7731 = vadd.s32 %v7730, %v7720
        %v7732 = vadd.s32 %v7731, %v7722
        %v7733 = vand.u32 %v7710, 65535
        %v7734 = vshrl.u32 %v7710, 16
        %v7735 = vand.u32 %v7705, 65535
        %v7736 = vshrl.u32 %v7705, 16
        %v7737 = vmul.u32 %v7733, %v7735
        %v7738 = vmul.u32 %v7733, %v7736
        %v7739 = vmul.u32 %v7734, %v7735
        %v7740 = vmul.u32 %v7734, %v7736
        %v7741 = vshll.u32 %v7738, 16
        %v7742 = vshrl.u32 %v7738, 16
        %v7743 = vshll.u32 %v7739, 16
        %v7744 = vshrl.u32 %v7739, 16
        %vm7745 = vc.u32 %v7737, %v7741
        %v7746 = vsel %vm7745, 1, 0
        %v7747 = vadd.s32 %v7737, %v7741
        %v7748 = vadd.s32 %v7740, %v7746
        %vm7749 = vc.u32 %v7747, %v7743
        %v7750 = vsel %vm7749, 1, 0
        %v7751 = vadd.s32 %v7747, %v7743
        %v7752 = vadd.s32 %v7748, %v7750
        %v7753 = vadd.s32 %v7752, %v7742
        %v7754 = vadd.s32 %v7753, %v7744
        %v7755 = vmul.u32 %v7710, %v7701
        %v7756 = vadd.s32 %v7732, %v7751
        %vm7757 = vc.u32 %v7732, %v7751
        %v7758 = vadd.s32 %v7754, 1
        %v7759 = vsel %vm7757, %v7758, %v7754
        %v7760 = vadd.s32 %v7755, %v7759
        %v7761 = vadd.s32 %v7760, 536870912
        %v7762 = vshrl.u32 %v7761, 30
        %v7763 = vshll.u32 %v7762, 30
        %v7764 = vsub.s32 %v7760, %v7763
        %vm7765 = vcmp.lt.s32.totalorder %v7764, 0
        %v7766 = vsub.s32 0, %v7764
        %v7767 = vsel %vm7765, %v7766, %v7764
        %v7768 = vclz %v7767
        %v7769 = vsub.s32 %v7768, 2
        %vm7770 = vcmp.gt.s32.totalorder 0, %v7769
        %v7771 = vsel %vm7770, 0, %v7769
        %v7772 = vsub.s32 32, %v7771
        %v7773 = vshll.u32 %v7764, %v7771
        %v7774 = vshrl.u32 %v7756, %v7772
        %v7775 = vor.u32 %v7773, %v7774
        %v7776 = vsub.s32 4294967266, %v7771
        %v7777 = vadd.s32 %v7776, 127
        %v7778 = vshll.u32 %v7777, 23
        %v7779 = vor.u32 4788187, %v7778
        %v7780 = vand.u32 2147483647, %v7779
        %v7782 = vcvt.s32.f32 %v7775
        %v7783 = vmul.f32 %v7782, %v7780
        %v7784 = vxor.u32 %v7783, 2147483648
        %v7785 = vsel %vm7664, %v7784, %v7783
        %v7786 = vsub.s32 4, %v7762
        %v7787 = vsel %vm7664, %v7786, %v7762
        %v7788 = vsel %vm7663, %v351, %v7785
        %v7789 = vsel %vm7663, 0, %v7787
        %v7790 = vmul.f32 %v7788, %v7788
        %v7791 = vmul.f32 %v7790, -0.001358992
        %v7792 = vadd.f32 %v7791, 0.041655596
        %v7793 = vmul.f32 %v7790, %v7792
        %v7794 = vadd.f32 %v7793, -0.4999988
        %v7795 = vmul.f32 %v7790, %v7794
        %v7796 = vadd.f32 1.0, %v7795
        %v7797 = vmul.f32 %v7788, %v7788
        %v7798 = vmul.f32 %v7797, -0.00019511016
        %v7799 = vadd.f32 %v7798, 0.008332121
        %v7800 = vmul.f32 %v7797, %v7799
        %v7801 = vadd.f32 %v7800, -0.16666654
        %v7802 = vmul.f32 %v7797, %v7801
        %v7803 = vadd.f32 %v7802, 1.0
        %v7804 = vmul.f32 %v7803, %v7788
        %vm7805 = vweird.f32 %v351
        %v7806 = vand.u32 %v7789, 3
        %vm7807 = vcmp.lt.s32.totalorder %v7806, 2
        %vm7808 = vcmp.eq.s32.totalorder %v7806, 0
        %v7809 = vxor.u32 %v7804, 2147483648
        %v7810 = vsel %vm7808, %v7796, %v7809
        %vm7811 = vcmp.eq.s32.totalorder %v7806, 2
        %v7812 = vxor.u32 %v7796, 2147483648
        %v7813 = vsel %vm7811, %v7812, %v7804
        %v7814 = vsel %vm7807, %v7810, %v7813
        %v7815 = vsel %vm7805, nan, %v7814
        %v7816 = vand.u32 2147483647, %v352
        %vm7817 = vcmp.le.f32.partialorder %v7816, 0.7853982
        %vm7818 = vcmp.lt.s32.totalorder %v352, 0
        %v7819 = vand.u32 %v352, 2139095040
        %v7820 = vshrl.u32 %v7819, 23
        %v7821 = vsub.s32 %v7820, 127
        %v7822 = vand.u32 2147483647, %v352
        %v7823 = vand.u32 %v7822, 8388607
        %v7824 = vor.u32 %v7823, 8388608
        %v7825 = vsub.s32 0, %v7824
        %v7826 = vadd.s32 %v7821, 1
        %vm7827 = vcmp.gt.s32.totalorder %v7826, 0
        %v7828 = vsel %vm7827, %v7826, 0
        %v7829 = vshrl.u32 %v7828, 5
        %v7830 = vand.u32 %v7828, 31
        %v7831 = vsub.s32 32, %v7830
        %v7832 = vshrl.u32 683565275, %v7831
        %v7833 = vshll.u32 683565275, %v7830
        %v7834 = vshrl.u32 2475754826, %v7831
        %v7835 = vor.u32 %v7833, %v7834
        %v7836 = vshll.u32 2475754826, %v7830
        %v7837 = vshrl.u32 2131351028, %v7831
        %v7838 = vor.u32 %v7836, %v7837
        %v7839 = vshll.u32 2131351028, %v7830
        %v7840 = vshrl.u32 2102212464, %v7831
        %v7841 = vor.u32 %v7839, %v7840
        %v7842 = vshll.u32 2102212464, %v7830
        %v7843 = vshrl.u32 920167782, %v7831
        %v7844 = vor.u32 %v7842, %v7843
        %v7845 = vshll.u32 920167782, %v7830
        %v7846 = vshrl.u32 1326507024, %v7831
        %v7847 = vor.u32 %v7845, %v7846
        %vm7848 = vcmp.lt.s32.totalorder %v7829, 1
        %vm7849 = vcmp.lt.s32.totalorder %v7829, 2
        %vm7850 = vcmp.lt.s32.totalorder %v7829, 3
        %vm7851 = vcmp.lt.s32.totalorder %v7829, 4
        %v7852 = vsel %vm7848, %v7832, %v7835
        %v7853 = vsel %vm7851, %v7841, 2102212464
        %v7854 = vsel %vm7850, %v7838, %v7853
        %v7855 = vsel %vm7849, %v7852, %v7854
        %v7856 = vsel %vm7848, %v7835, %v7838
        %v7857 = vsel %vm7851, %v7844, 920167782
        %v7858 = vsel %vm7850, %v7841, %v7857
        %v7859 = vsel %vm7849, %v7856, %v7858
        %v7860 = vsel %vm7848, %v7838, %v7841
        %v7861 = vsel %vm7851, %v7847, 1326507024
        %v7862 = vsel %vm7850, %v7844, %v7861
        %v7863 = vsel %vm7849, %v7860, %v7862
        %v7864 = vshll.u32 %v7824, 8
        %v7865 = vand.u32 %v7864, 65535
        %v7866 = vshrl.u32 %v7864, 16
        %v7867 = vand.u32 %v7863, 65535
        %v7868 = vshrl.u32 %v7863, 16
        %v7869 = vmul.u32 %v7865, %v7867
        %v7870 = vmul.u32 %v7865, %v7868
        %v7871 = vmul.u32 %v7866, %v7867
        %v7872 = vmul.u32 %v7866, %v7868
        %v7873 = vshll.u32 %v7870, 16
        %v7874 = vshrl.u32 %v7870, 16
        %v7875 = vshll.u32 %v7871, 16
        %v7876 = vshrl.u32 %v7871, 16
        %vm7877 = vc.u32 %v7869, %v7873
        %v7878 = vsel %vm7877, 1, 0
        %v7879 = vadd.s32 %v7869, %v7873
        %v7880 = vadd.s32 %v7872, %v7878
        %vm7881 = vc.u32 %v7879, %v7875
        %v7882 = vsel %vm7881, 1, 0
        %v7883 = vadd.s32 %v7879, %v7875
        %v7884 = vadd.s32 %v7880, %v7882
        %v7885 = vadd.s32 %v7884, %v7874
        %v7886 = vadd.s32 %v7885, %v7876
        %v7887 = vand.u32 %v7864, 65535
        %v7888 = vshrl.u32 %v7864, 16
        %v7889 = vand.u32 %v7859, 65535
        %v7890 = vshrl.u32 %v7859, 16
        %v7891 = vmul.u32 %v7887, %v7889
        %v7892 = vmul.u32 %v7887, %v7890
        %v7893 = vmul.u32 %v7888, %v7889
        %v7894 = vmul.u32 %v7888, %v7890
        %v7895 = vshll.u32 %v7892, 16
        %v7896 = vshrl.u32 %v7892, 16
        %v7897 = vshll.u32 %v7893, 16
        %v7898 = vshrl.u32 %v7893, 16
        %vm7899 = vc.u32 %v7891, %v7895
        %v7900 = vsel %vm7899, 1, 0
        %v7901 = vadd.s32 %v7891, %v7895
        %v7902 = vadd.s32 %v7894, %v7900
        %vm7903 = vc.u32 %v7901, %v7897
        %v7904 = vsel %vm7903, 1, 0
        %v7905 = vadd.s32 %v7901, %v7897
        %v7906 = vadd.s32 %v7902, %v7904
        %v7907 = vadd.s32 %v7906, %v7896
        %v7908 = vadd.s32 %v7907, %v7898
        %v7909 = vmul.u32 %v7864, %v7855
        %v7910 = vadd.s32 %v7886, %v7905
        %vm7911 = vc.u32 %v7886, %v7905
        %v7912 = vadd.s32 %v7908, 1
        %v7913 = vsel %vm7911, %v7912, %v7908
        %v7914 = vadd.s32 %v7909, %v7913
        %v7915 = vadd.s32 %v7914, 536870912
        %v7916 = vshrl.u32 %v7915, 30
        %v7917 = vshll.u32 %v7916, 30
        %v7918 = vsub.s32 %v7914, %v7917
        %vm7919 = vcmp.lt.s32.totalorder %v7918, 0
        %v7920 = vsub.s32 0, %v7918
        %v7921 = vsel %vm7919, %v7920, %v7918
        %v7922 = vclz %v7921
        %v7923 = vsub.s32 %v7922, 2
        %vm7924 = vcmp.gt.s32.totalorder 0, %v7923
        %v7925 = vsel %vm7924, 0, %v7923
        %v7926 = vsub.s32 32, %v7925
        %v7927 = vshll.u32 %v7918, %v7925
        %v7928 = vshrl.u32 %v7910, %v7926
        %v7929 = vor.u32 %v7927, %v7928
        %v7930 = vsub.s32 4294967266, %v7925
        %v7931 = vadd.s32 %v7930, 127
        %v7932 = vshll.u32 %v7931, 23
        %v7933 = vor.u32 4788187, %v7932
        %v7934 = vand.u32 2147483647, %v7933
        %v7936 = vcvt.s32.f32 %v7929
        %v7937 = vmul.f32 %v7936, %v7934
        %v7938 = vxor.u32 %v7937, 2147483648
        %v7939 = vsel %vm7818, %v7938, %v7937
        %v7940 = vsub.s32 4, %v7916
        %v7941 = vsel %vm7818, %v7940, %v7916
        %v7942 = vsel %vm7817, %v352, %v7939
        %v7943 = vsel %vm7817, 0, %v7941
        %v7944 = vmul.f32 %v7942, %v7942
        %v7945 = vmul.f32 %v7944, -0.001358992
        %v7946 = vadd.f32 %v7945, 0.041655596
        %v7947 = vmul.f32 %v7944, %v7946
        %v7948 = vadd.f32 %v7947, -0.4999988
        %v7949 = vmul.f32 %v7944, %v7948
        %v7950 = vadd.f32 1.0, %v7949
        %v7951 = vmul.f32 %v7942, %v7942
        %v7952 = vmul.f32 %v7951, -0.00019511016
        %v7953 = vadd.f32 %v7952, 0.008332121
        %v7954 = vmul.f32 %v7951, %v7953
        %v7955 = vadd.f32 %v7954, -0.16666654
        %v7956 = vmul.f32 %v7951, %v7955
        %v7957 = vadd.f32 %v7956, 1.0
        %v7958 = vmul.f32 %v7957, %v7942
        %vm7959 = vweird.f32 %v352
        %v7960 = vand.u32 %v7943, 3
        %vm7961 = vcmp.lt.s32.totalorder %v7960, 2
        %vm7962 = vcmp.eq.s32.totalorder %v7960, 0
        %v7963 = vxor.u32 %v7958, 2147483648
        %v7964 = vsel %vm7962, %v7950, %v7963
        %vm7965 = vcmp.eq.s32.totalorder %v7960, 2
        %v7966 = vxor.u32 %v7950, 2147483648
        %v7967 = vsel %vm7965, %v7966, %v7958
        %v7968 = vsel %vm7961, %v7964, %v7967
        %v7969 = vsel %vm7959, nan, %v7968
        %v7970 = vand.u32 2147483647, %v353
        %vm7971 = vcmp.le.f32.partialorder %v7970, 0.7853982
        %vm7972 = vcmp.lt.s32.totalorder %v353, 0
        %v7973 = vand.u32 %v353, 2139095040
        %v7974 = vshrl.u32 %v7973, 23
        %v7975 = vsub.s32 %v7974, 127
        %v7976 = vand.u32 2147483647, %v353
        %v7977 = vand.u32 %v7976, 8388607
        %v7978 = vor.u32 %v7977, 8388608
        %v7979 = vsub.s32 0, %v7978
        %v7980 = vadd.s32 %v7975, 1
        %vm7981 = vcmp.gt.s32.totalorder %v7980, 0
        %v7982 = vsel %vm7981, %v7980, 0
        %v7983 = vshrl.u32 %v7982, 5
        %v7984 = vand.u32 %v7982, 31
        %v7985 = vsub.s32 32, %v7984
        %v7986 = vshrl.u32 683565275, %v7985
        %v7987 = vshll.u32 683565275, %v7984
        %v7988 = vshrl.u32 2475754826, %v7985
        %v7989 = vor.u32 %v7987, %v7988
        %v7990 = vshll.u32 2475754826, %v7984
        %v7991 = vshrl.u32 2131351028, %v7985
        %v7992 = vor.u32 %v7990, %v7991
        %v7993 = vshll.u32 2131351028, %v7984
        %v7994 = vshrl.u32 2102212464, %v7985
        %v7995 = vor.u32 %v7993, %v7994
        %v7996 = vshll.u32 2102212464, %v7984
        %v7997 = vshrl.u32 920167782, %v7985
        %v7998 = vor.u32 %v7996, %v7997
        %v7999 = vshll.u32 920167782, %v7984
        %v8000 = vshrl.u32 1326507024, %v7985
        %v8001 = vor.u32 %v7999, %v8000
        %vm8002 = vcmp.lt.s32.totalorder %v7983, 1
        %vm8003 = vcmp.lt.s32.totalorder %v7983, 2
        %vm8004 = vcmp.lt.s32.totalorder %v7983, 3
        %vm8005 = vcmp.lt.s32.totalorder %v7983, 4
        %v8006 = vsel %vm8002, %v7986, %v7989
        %v8007 = vsel %vm8005, %v7995, 2102212464
        %v8008 = vsel %vm8004, %v7992, %v8007
        %v8009 = vsel %vm8003, %v8006, %v8008
        %v8010 = vsel %vm8002, %v7989, %v7992
        %v8011 = vsel %vm8005, %v7998, 920167782
        %v8012 = vsel %vm8004, %v7995, %v8011
        %v8013 = vsel %vm8003, %v8010, %v8012
        %v8014 = vsel %vm8002, %v7992, %v7995
        %v8015 = vsel %vm8005, %v8001, 1326507024
        %v8016 = vsel %vm8004, %v7998, %v8015
        %v8017 = vsel %vm8003, %v8014, %v8016
        %v8018 = vshll.u32 %v7978, 8
        %v8019 = vand.u32 %v8018, 65535
        %v8020 = vshrl.u32 %v8018, 16
        %v8021 = vand.u32 %v8017, 65535
        %v8022 = vshrl.u32 %v8017, 16
        %v8023 = vmul.u32 %v8019, %v8021
        %v8024 = vmul.u32 %v8019, %v8022
        %v8025 = vmul.u32 %v8020, %v8021
        %v8026 = vmul.u32 %v8020, %v8022
        %v8027 = vshll.u32 %v8024, 16
        %v8028 = vshrl.u32 %v8024, 16
        %v8029 = vshll.u32 %v8025, 16
        %v8030 = vshrl.u32 %v8025, 16
        %vm8031 = vc.u32 %v8023, %v8027
        %v8032 = vsel %vm8031, 1, 0
        %v8033 = vadd.s32 %v8023, %v8027
        %v8034 = vadd.s32 %v8026, %v8032
        %vm8035 = vc.u32 %v8033, %v8029
        %v8036 = vsel %vm8035, 1, 0
        %v8037 = vadd.s32 %v8033, %v8029
        %v8038 = vadd.s32 %v8034, %v8036
        %v8039 = vadd.s32 %v8038, %v8028
        %v8040 = vadd.s32 %v8039, %v8030
        %v8041 = vand.u32 %v8018, 65535
        %v8042 = vshrl.u32 %v8018, 16
        %v8043 = vand.u32 %v8013, 65535
        %v8044 = vshrl.u32 %v8013, 16
        %v8045 = vmul.u32 %v8041, %v8043
        %v8046 = vmul.u32 %v8041, %v8044
        %v8047 = vmul.u32 %v8042, %v8043
        %v8048 = vmul.u32 %v8042, %v8044
        %v8049 = vshll.u32 %v8046, 16
        %v8050 = vshrl.u32 %v8046, 16
        %v8051 = vshll.u32 %v8047, 16
        %v8052 = vshrl.u32 %v8047, 16
        %vm8053 = vc.u32 %v8045, %v8049
        %v8054 = vsel %vm8053, 1, 0
        %v8055 = vadd.s32 %v8045, %v8049
        %v8056 = vadd.s32 %v8048, %v8054
        %vm8057 = vc.u32 %v8055, %v8051
        %v8058 = vsel %vm8057, 1, 0
        %v8059 = vadd.s32 %v8055, %v8051
        %v8060 = vadd.s32 %v8056, %v8058
        %v8061 = vadd.s32 %v8060, %v8050
        %v8062 = vadd.s32 %v8061, %v8052
        %v8063 = vmul.u32 %v8018, %v8009
        %v8064 = vadd.s32 %v8040, %v8059
        %vm8065 = vc.u32 %v8040, %v8059
        %v8066 = vadd.s32 %v8062, 1
        %v8067 = vsel %vm8065, %v8066, %v8062
        %v8068 = vadd.s32 %v8063, %v8067
        %v8069 = vadd.s32 %v8068, 536870912
        %v8070 = vshrl.u32 %v8069, 30
        %v8071 = vshll.u32 %v8070, 30
        %v8072 = vsub.s32 %v8068, %v8071
        %vm8073 = vcmp.lt.s32.totalorder %v8072, 0
        %v8074 = vsub.s32 0, %v8072
        %v8075 = vsel %vm8073, %v8074, %v8072
        %v8076 = vclz %v8075
        %v8077 = vsub.s32 %v8076, 2
        %vm8078 = vcmp.gt.s32.totalorder 0, %v8077
        %v8079 = vsel %vm8078, 0, %v8077
        %v8080 = vsub.s32 32, %v8079
        %v8081 = vshll.u32 %v8072, %v8079
        %v8082 = vshrl.u32 %v8064, %v8080
        %v8083 = vor.u32 %v8081, %v8082
        %v8084 = vsub.s32 4294967266, %v8079
        %v8085 = vadd.s32 %v8084, 127
        %v8086 = vshll.u32 %v8085, 23
        %v8087 = vor.u32 4788187, %v8086
        %v8088 = vand.u32 2147483647, %v8087
        %v8090 = vcvt.s32.f32 %v8083
        %v8091 = vmul.f32 %v8090, %v8088
        %v8092 = vxor.u32 %v8091, 2147483648
        %v8093 = vsel %vm7972, %v8092, %v8091
        %v8094 = vsub.s32 4, %v8070
        %v8095 = vsel %vm7972, %v8094, %v8070
        %v8096 = vsel %vm7971, %v353, %v8093
        %v8097 = vsel %vm7971, 0, %v8095
        %v8098 = vmul.f32 %v8096, %v8096
        %v8099 = vmul.f32 %v8098, -0.001358992
        %v8100 = vadd.f32 %v8099, 0.041655596
        %v8101 = vmul.f32 %v8098, %v8100
        %v8102 = vadd.f32 %v8101, -0.4999988
        %v8103 = vmul.f32 %v8098, %v8102
        %v8104 = vadd.f32 1.0, %v8103
        %v8105 = vmul.f32 %v8096, %v8096
        %v8106 = vmul.f32 %v8105, -0.00019511016
        %v8107 = vadd.f32 %v8106, 0.008332121
        %v8108 = vmul.f32 %v8105, %v8107
        %v8109 = vadd.f32 %v8108, -0.16666654
        %v8110 = vmul.f32 %v8105, %v8109
        %v8111 = vadd.f32 %v8110, 1.0
        %v8112 = vmul.f32 %v8111, %v8096
        %vm8113 = vweird.f32 %v353
        %v8114 = vand.u32 %v8097, 3
        %vm8115 = vcmp.lt.s32.totalorder %v8114, 2
        %vm8116 = vcmp.eq.s32.totalorder %v8114, 0
        %v8117 = vxor.u32 %v8112, 2147483648
        %v8118 = vsel %vm8116, %v8104, %v8117
        %vm8119 = vcmp.eq.s32.totalorder %v8114, 2
        %v8120 = vxor.u32 %v8104, 2147483648
        %v8121 = vsel %vm8119, %v8120, %v8112
        %v8122 = vsel %vm8115, %v8118, %v8121
        %v8123 = vsel %vm8113, nan, %v8122
        %v8124 = vand.u32 2147483647, %v354
        %vm8125 = vcmp.le.f32.partialorder %v8124, 0.7853982
        %vm8126 = vcmp.lt.s32.totalorder %v354, 0
        %v8127 = vand.u32 %v354, 2139095040
        %v8128 = vshrl.u32 %v8127, 23
        %v8129 = vsub.s32 %v8128, 127
        %v8130 = vand.u32 2147483647, %v354
        %v8131 = vand.u32 %v8130, 8388607
        %v8132 = vor.u32 %v8131, 8388608
        %v8133 = vsub.s32 0, %v8132
        %v8134 = vadd.s32 %v8129, 1
        %vm8135 = vcmp.gt.s32.totalorder %v8134, 0
        %v8136 = vsel %vm8135, %v8134, 0
        %v8137 = vshrl.u32 %v8136, 5
        %v8138 = vand.u32 %v8136, 31
        %v8139 = vsub.s32 32, %v8138
        %v8140 = vshrl.u32 683565275, %v8139
        %v8141 = vshll.u32 683565275, %v8138
        %v8142 = vshrl.u32 2475754826, %v8139
        %v8143 = vor.u32 %v8141, %v8142
        %v8144 = vshll.u32 2475754826, %v8138
        %v8145 = vshrl.u32 2131351028, %v8139
        %v8146 = vor.u32 %v8144, %v8145
        %v8147 = vshll.u32 2131351028, %v8138
        %v8148 = vshrl.u32 2102212464, %v8139
        %v8149 = vor.u32 %v8147, %v8148
        %v8150 = vshll.u32 2102212464, %v8138
        %v8151 = vshrl.u32 920167782, %v8139
        %v8152 = vor.u32 %v8150, %v8151
        %v8153 = vshll.u32 920167782, %v8138
        %v8154 = vshrl.u32 1326507024, %v8139
        %v8155 = vor.u32 %v8153, %v8154
        %vm8156 = vcmp.lt.s32.totalorder %v8137, 1
        %vm8157 = vcmp.lt.s32.totalorder %v8137, 2
        %vm8158 = vcmp.lt.s32.totalorder %v8137, 3
        %vm8159 = vcmp.lt.s32.totalorder %v8137, 4
        %v8160 = vsel %vm8156, %v8140, %v8143
        %v8161 = vsel %vm8159, %v8149, 2102212464
        %v8162 = vsel %vm8158, %v8146, %v8161
        %v8163 = vsel %vm8157, %v8160, %v8162
        %v8164 = vsel %vm8156, %v8143, %v8146
        %v8165 = vsel %vm8159, %v8152, 920167782
        %v8166 = vsel %vm8158, %v8149, %v8165
        %v8167 = vsel %vm8157, %v8164, %v8166
        %v8168 = vsel %vm8156, %v8146, %v8149
        %v8169 = vsel %vm8159, %v8155, 1326507024
        %v8170 = vsel %vm8158, %v8152, %v8169
        %v8171 = vsel %vm8157, %v8168, %v8170
        %v8172 = vshll.u32 %v8132, 8
        %v8173 = vand.u32 %v8172, 65535
        %v8174 = vshrl.u32 %v8172, 16
        %v8175 = vand.u32 %v8171, 65535
        %v8176 = vshrl.u32 %v8171, 16
        %v8177 = vmul.u32 %v8173, %v8175
        %v8178 = vmul.u32 %v8173, %v8176
        %v8179 = vmul.u32 %v8174, %v8175
        %v8180 = vmul.u32 %v8174, %v8176
        %v8181 = vshll.u32 %v8178, 16
        %v8182 = vshrl.u32 %v8178, 16
        %v8183 = vshll.u32 %v8179, 16
        %v8184 = vshrl.u32 %v8179, 16
        %vm8185 = vc.u32 %v8177, %v8181
        %v8186 = vsel %vm8185, 1, 0
        %v8187 = vadd.s32 %v8177, %v8181
        %v8188 = vadd.s32 %v8180, %v8186
        %vm8189 = vc.u32 %v8187, %v8183
        %v8190 = vsel %vm8189, 1, 0
        %v8191 = vadd.s32 %v8187, %v8183
        %v8192 = vadd.s32 %v8188, %v8190
        %v8193 = vadd.s32 %v8192, %v8182
        %v8194 = vadd.s32 %v8193, %v8184
        %v8195 = vand.u32 %v8172, 65535
        %v8196 = vshrl.u32 %v8172, 16
        %v8197 = vand.u32 %v8167, 65535
        %v8198 = vshrl.u32 %v8167, 16
        %v8199 = vmul.u32 %v8195, %v8197
        %v8200 = vmul.u32 %v8195, %v8198
        %v8201 = vmul.u32 %v8196, %v8197
        %v8202 = vmul.u32 %v8196, %v8198
        %v8203 = vshll.u32 %v8200, 16
        %v8204 = vshrl.u32 %v8200, 16
        %v8205 = vshll.u32 %v8201, 16
        %v8206 = vshrl.u32 %v8201, 16
        %vm8207 = vc.u32 %v8199, %v8203
        %v8208 = vsel %vm8207, 1, 0
        %v8209 = vadd.s32 %v8199, %v8203
        %v8210 = vadd.s32 %v8202, %v8208
        %vm8211 = vc.u32 %v8209, %v8205
        %v8212 = vsel %vm8211, 1, 0
        %v8213 = vadd.s32 %v8209, %v8205
        %v8214 = vadd.s32 %v8210, %v8212
        %v8215 = vadd.s32 %v8214, %v8204
        %v8216 = vadd.s32 %v8215, %v8206
        %v8217 = vmul.u32 %v8172, %v8163
        %v8218 = vadd.s32 %v8194, %v8213
        %vm8219 = vc.u32 %v8194, %v8213
        %v8220 = vadd.s32 %v8216, 1
        %v8221 = vsel %vm8219, %v8220, %v8216
        %v8222 = vadd.s32 %v8217, %v8221
        %v8223 = vadd.s32 %v8222, 536870912
        %v8224 = vshrl.u32 %v8223, 30
        %v8225 = vshll.u32 %v8224, 30
        %v8226 = vsub.s32 %v8222, %v8225
        %vm8227 = vcmp.lt.s32.totalorder %v8226, 0
        %v8228 = vsub.s32 0, %v8226
        %v8229 = vsel %vm8227, %v8228, %v8226
        %v8230 = vclz %v8229
        %v8231 = vsub.s32 %v8230, 2
        %vm8232 = vcmp.gt.s32.totalorder 0, %v8231
        %v8233 = vsel %vm8232, 0, %v8231
        %v8234 = vsub.s32 32, %v8233
        %v8235 = vshll.u32 %v8226, %v8233
        %v8236 = vshrl.u32 %v8218, %v8234
        %v8237 = vor.u32 %v8235, %v8236
        %v8238 = vsub.s32 4294967266, %v8233
        %v8239 = vadd.s32 %v8238, 127
        %v8240 = vshll.u32 %v8239, 23
        %v8241 = vor.u32 4788187, %v8240
        %v8242 = vand.u32 2147483647, %v8241
        %v8244 = vcvt.s32.f32 %v8237
        %v8245 = vmul.f32 %v8244, %v8242
        %v8246 = vxor.u32 %v8245, 2147483648
        %v8247 = vsel %vm8126, %v8246, %v8245
        %v8248 = vsub.s32 4, %v8224
        %v8249 = vsel %vm8126, %v8248, %v8224
        %v8250 = vsel %vm8125, %v354, %v8247
        %v8251 = vsel %vm8125, 0, %v8249
        %v8252 = vmul.f32 %v8250, %v8250
        %v8253 = vmul.f32 %v8252, -0.001358992
        %v8254 = vadd.f32 %v8253, 0.041655596
        %v8255 = vmul.f32 %v8252, %v8254
        %v8256 = vadd.f32 %v8255, -0.4999988
        %v8257 = vmul.f32 %v8252, %v8256
        %v8258 = vadd.f32 1.0, %v8257
        %v8259 = vmul.f32 %v8250, %v8250
        %v8260 = vmul.f32 %v8259, -0.00019511016
        %v8261 = vadd.f32 %v8260, 0.008332121
        %v8262 = vmul.f32 %v8259, %v8261
        %v8263 = vadd.f32 %v8262, -0.16666654
        %v8264 = vmul.f32 %v8259, %v8263
        %v8265 = vadd.f32 %v8264, 1.0
        %v8266 = vmul.f32 %v8265, %v8250
        %vm8267 = vweird.f32 %v354
        %v8268 = vand.u32 %v8251, 3
        %vm8269 = vcmp.lt.s32.totalorder %v8268, 2
        %vm8270 = vcmp.eq.s32.totalorder %v8268, 0
        %v8271 = vxor.u32 %v8266, 2147483648
        %v8272 = vsel %vm8270, %v8258, %v8271
        %vm8273 = vcmp.eq.s32.totalorder %v8268, 2
        %v8274 = vxor.u32 %v8258, 2147483648
        %v8275 = vsel %vm8273, %v8274, %v8266
        %v8276 = vsel %vm8269, %v8272, %v8275
        %v8277 = vsel %vm8267, nan, %v8276
        %v8278 = vand.u32 2147483647, %v355
        %vm8279 = vcmp.le.f32.partialorder %v8278, 0.7853982
        %vm8280 = vcmp.lt.s32.totalorder %v355, 0
        %v8281 = vand.u32 %v355, 2139095040
        %v8282 = vshrl.u32 %v8281, 23
        %v8283 = vsub.s32 %v8282, 127
        %v8284 = vand.u32 2147483647, %v355
        %v8285 = vand.u32 %v8284, 8388607
        %v8286 = vor.u32 %v8285, 8388608
        %v8287 = vsub.s32 0, %v8286
        %v8288 = vadd.s32 %v8283, 1
        %vm8289 = vcmp.gt.s32.totalorder %v8288, 0
        %v8290 = vsel %vm8289, %v8288, 0
        %v8291 = vshrl.u32 %v8290, 5
        %v8292 = vand.u32 %v8290, 31
        %v8293 = vsub.s32 32, %v8292
        %v8294 = vshrl.u32 683565275, %v8293
        %v8295 = vshll.u32 683565275, %v8292
        %v8296 = vshrl.u32 2475754826, %v8293
        %v8297 = vor.u32 %v8295, %v8296
        %v8298 = vshll.u32 2475754826, %v8292
        %v8299 = vshrl.u32 2131351028, %v8293
        %v8300 = vor.u32 %v8298, %v8299
        %v8301 = vshll.u32 2131351028, %v8292
        %v8302 = vshrl.u32 2102212464, %v8293
        %v8303 = vor.u32 %v8301, %v8302
        %v8304 = vshll.u32 2102212464, %v8292
        %v8305 = vshrl.u32 920167782, %v8293
        %v8306 = vor.u32 %v8304, %v8305
        %v8307 = vshll.u32 920167782, %v8292
        %v8308 = vshrl.u32 1326507024, %v8293
        %v8309 = vor.u32 %v8307, %v8308
        %vm8310 = vcmp.lt.s32.totalorder %v8291, 1
        %vm8311 = vcmp.lt.s32.totalorder %v8291, 2
        %vm8312 = vcmp.lt.s32.totalorder %v8291, 3
        %vm8313 = vcmp.lt.s32.totalorder %v8291, 4
        %v8314 = vsel %vm8310, %v8294, %v8297
        %v8315 = vsel %vm8313, %v8303, 2102212464
        %v8316 = vsel %vm8312, %v8300, %v8315
        %v8317 = vsel %vm8311, %v8314, %v8316
        %v8318 = vsel %vm8310, %v8297, %v8300
        %v8319 = vsel %vm8313, %v8306, 920167782
        %v8320 = vsel %vm8312, %v8303, %v8319
        %v8321 = vsel %vm8311, %v8318, %v8320
        %v8322 = vsel %vm8310, %v8300, %v8303
        %v8323 = vsel %vm8313, %v8309, 1326507024
        %v8324 = vsel %vm8312, %v8306, %v8323
        %v8325 = vsel %vm8311, %v8322, %v8324
        %v8326 = vshll.u32 %v8286, 8
        %v8327 = vand.u32 %v8326, 65535
        %v8328 = vshrl.u32 %v8326, 16
        %v8329 = vand.u32 %v8325, 65535
        %v8330 = vshrl.u32 %v8325, 16
        %v8331 = vmul.u32 %v8327, %v8329
        %v8332 = vmul.u32 %v8327, %v8330
        %v8333 = vmul.u32 %v8328, %v8329
        %v8334 = vmul.u32 %v8328, %v8330
        %v8335 = vshll.u32 %v8332, 16
        %v8336 = vshrl.u32 %v8332, 16
        %v8337 = vshll.u32 %v8333, 16
        %v8338 = vshrl.u32 %v8333, 16
        %vm8339 = vc.u32 %v8331, %v8335
        %v8340 = vsel %vm8339, 1, 0
        %v8341 = vadd.s32 %v8331, %v8335
        %v8342 = vadd.s32 %v8334, %v8340
        %vm8343 = vc.u32 %v8341, %v8337
        %v8344 = vsel %vm8343, 1, 0
        %v8345 = vadd.s32 %v8341, %v8337
        %v8346 = vadd.s32 %v8342, %v8344
        %v8347 = vadd.s32 %v8346, %v8336
        %v8348 = vadd.s32 %v8347, %v8338
        %v8349 = vand.u32 %v8326, 65535
        %v8350 = vshrl.u32 %v8326, 16
        %v8351 = vand.u32 %v8321, 65535
        %v8352 = vshrl.u32 %v8321, 16
        %v8353 = vmul.u32 %v8349, %v8351
        %v8354 = vmul.u32 %v8349, %v8352
        %v8355 = vmul.u32 %v8350, %v8351
        %v8356 = vmul.u32 %v8350, %v8352
        %v8357 = vshll.u32 %v8354, 16
        %v8358 = vshrl.u32 %v8354, 16
        %v8359 = vshll.u32 %v8355, 16
        %v8360 = vshrl.u32 %v8355, 16
        %vm8361 = vc.u32 %v8353, %v8357
        %v8362 = vsel %vm8361, 1, 0
        %v8363 = vadd.s32 %v8353, %v8357
        %v8364 = vadd.s32 %v8356, %v8362
        %vm8365 = vc.u32 %v8363, %v8359
        %v8366 = vsel %vm8365, 1, 0
        %v8367 = vadd.s32 %v8363, %v8359
        %v8368 = vadd.s32 %v8364, %v8366
        %v8369 = vadd.s32 %v8368, %v8358
        %v8370 = vadd.s32 %v8369, %v8360
        %v8371 = vmul.u32 %v8326, %v8317
        %v8372 = vadd.s32 %v8348, %v8367
        %vm8373 = vc.u32 %v8348, %v8367
        %v8374 = vadd.s32 %v8370, 1
        %v8375 = vsel %vm8373, %v8374, %v8370
        %v8376 = vadd.s32 %v8371, %v8375
        %v8377 = vadd.s32 %v8376, 536870912
        %v8378 = vshrl.u32 %v8377, 30
        %v8379 = vshll.u32 %v8378, 30
        %v8380 = vsub.s32 %v8376, %v8379
        %vm8381 = vcmp.lt.s32.totalorder %v8380, 0
        %v8382 = vsub.s32 0, %v8380
        %v8383 = vsel %vm8381, %v8382, %v8380
        %v8384 = vclz %v8383
        %v8385 = vsub.s32 %v8384, 2
        %vm8386 = vcmp.gt.s32.totalorder 0, %v8385
        %v8387 = vsel %vm8386, 0, %v8385
        %v8388 = vsub.s32 32, %v8387
        %v8389 = vshll.u32 %v8380, %v8387
        %v8390 = vshrl.u32 %v8372, %v8388
        %v8391 = vor.u32 %v8389, %v8390
        %v8392 = vsub.s32 4294967266, %v8387
        %v8393 = vadd.s32 %v8392, 127
        %v8394 = vshll.u32 %v8393, 23
        %v8395 = vor.u32 4788187, %v8394
        %v8396 = vand.u32 2147483647, %v8395
        %v8398 = vcvt.s32.f32 %v8391
        %v8399 = vmul.f32 %v8398, %v8396
        %v8400 = vxor.u32 %v8399, 2147483648
        %v8401 = vsel %vm8280, %v8400, %v8399
        %v8402 = vsub.s32 4, %v8378
        %v8403 = vsel %vm8280, %v8402, %v8378
        %v8404 = vsel %vm8279, %v355, %v8401
        %v8405 = vsel %vm8279, 0, %v8403
        %v8406 = vmul.f32 %v8404, %v8404
        %v8407 = vmul.f32 %v8406, -0.001358992
        %v8408 = vadd.f32 %v8407, 0.041655596
        %v8409 = vmul.f32 %v8406, %v8408
        %v8410 = vadd.f32 %v8409, -0.4999988
        %v8411 = vmul.f32 %v8406, %v8410
        %v8412 = vadd.f32 1.0, %v8411
        %v8413 = vmul.f32 %v8404, %v8404
        %v8414 = vmul.f32 %v8413, -0.00019511016
        %v8415 = vadd.f32 %v8414, 0.008332121
        %v8416 = vmul.f32 %v8413, %v8415
        %v8417 = vadd.f32 %v8416, -0.16666654
        %v8418 = vmul.f32 %v8413, %v8417
        %v8419 = vadd.f32 %v8418, 1.0
        %v8420 = vmul.f32 %v8419, %v8404
        %vm8421 = vweird.f32 %v355
        %v8422 = vand.u32 %v8405, 3
        %vm8423 = vcmp.lt.s32.totalorder %v8422, 2
        %vm8424 = vcmp.eq.s32.totalorder %v8422, 0
        %v8425 = vxor.u32 %v8420, 2147483648
        %v8426 = vsel %vm8424, %v8412, %v8425
        %vm8427 = vcmp.eq.s32.totalorder %v8422, 2
        %v8428 = vxor.u32 %v8412, 2147483648
        %v8429 = vsel %vm8427, %v8428, %v8420
        %v8430 = vsel %vm8423, %v8426, %v8429
        %v8431 = vsel %vm8421, nan, %v8430
        %v8432 = vand.u32 2147483647, %v356
        %vm8433 = vcmp.le.f32.partialorder %v8432, 0.7853982
        %vm8434 = vcmp.lt.s32.totalorder %v356, 0
        %v8435 = vand.u32 %v356, 2139095040
        %v8436 = vshrl.u32 %v8435, 23
        %v8437 = vsub.s32 %v8436, 127
        %v8438 = vand.u32 2147483647, %v356
        %v8439 = vand.u32 %v8438, 8388607
        %v8440 = vor.u32 %v8439, 8388608
        %v8441 = vsub.s32 0, %v8440
        %v8442 = vadd.s32 %v8437, 1
        %vm8443 = vcmp.gt.s32.totalorder %v8442, 0
        %v8444 = vsel %vm8443, %v8442, 0
        %v8445 = vshrl.u32 %v8444, 5
        %v8446 = vand.u32 %v8444, 31
        %v8447 = vsub.s32 32, %v8446
        %v8448 = vshrl.u32 683565275, %v8447
        %v8449 = vshll.u32 683565275, %v8446
        %v8450 = vshrl.u32 2475754826, %v8447
        %v8451 = vor.u32 %v8449, %v8450
        %v8452 = vshll.u32 2475754826, %v8446
        %v8453 = vshrl.u32 2131351028, %v8447
        %v8454 = vor.u32 %v8452, %v8453
        %v8455 = vshll.u32 2131351028, %v8446
        %v8456 = vshrl.u32 2102212464, %v8447
        %v8457 = vor.u32 %v8455, %v8456
        %v8458 = vshll.u32 2102212464, %v8446
        %v8459 = vshrl.u32 920167782, %v8447
        %v8460 = vor.u32 %v8458, %v8459
        %v8461 = vshll.u32 920167782, %v8446
        %v8462 = vshrl.u32 1326507024, %v8447
        %v8463 = vor.u32 %v8461, %v8462
        %vm8464 = vcmp.lt.s32.totalorder %v8445, 1
        %vm8465 = vcmp.lt.s32.totalorder %v8445, 2
        %vm8466 = vcmp.lt.s32.totalorder %v8445, 3
        %vm8467 = vcmp.lt.s32.totalorder %v8445, 4
        %v8468 = vsel %vm8464, %v8448, %v8451
        %v8469 = vsel %vm8467, %v8457, 2102212464
        %v8470 = vsel %vm8466, %v8454, %v8469
        %v8471 = vsel %vm8465, %v8468, %v8470
        %v8472 = vsel %vm8464, %v8451, %v8454
        %v8473 = vsel %vm8467, %v8460, 920167782
        %v8474 = vsel %vm8466, %v8457, %v8473
        %v8475 = vsel %vm8465, %v8472, %v8474
        %v8476 = vsel %vm8464, %v8454, %v8457
        %v8477 = vsel %vm8467, %v8463, 1326507024
        %v8478 = vsel %vm8466, %v8460, %v8477
        %v8479 = vsel %vm8465, %v8476, %v8478
        %v8480 = vshll.u32 %v8440, 8
        %v8481 = vand.u32 %v8480, 65535
        %v8482 = vshrl.u32 %v8480, 16
        %v8483 = vand.u32 %v8479, 65535
        %v8484 = vshrl.u32 %v8479, 16
        %v8485 = vmul.u32 %v8481, %v8483
        %v8486 = vmul.u32 %v8481, %v8484
        %v8487 = vmul.u32 %v8482, %v8483
        %v8488 = vmul.u32 %v8482, %v8484
        %v8489 = vshll.u32 %v8486, 16
        %v8490 = vshrl.u32 %v8486, 16
        %v8491 = vshll.u32 %v8487, 16
        %v8492 = vshrl.u32 %v8487, 16
        %vm8493 = vc.u32 %v8485, %v8489
        %v8494 = vsel %vm8493, 1, 0
        %v8495 = vadd.s32 %v8485, %v8489
        %v8496 = vadd.s32 %v8488, %v8494
        %vm8497 = vc.u32 %v8495, %v8491
        %v8498 = vsel %vm8497, 1, 0
        %v8499 = vadd.s32 %v8495, %v8491
        %v8500 = vadd.s32 %v8496, %v8498
        %v8501 = vadd.s32 %v8500, %v8490
        %v8502 = vadd.s32 %v8501, %v8492
        %v8503 = vand.u32 %v8480, 65535
        %v8504 = vshrl.u32 %v8480, 16
        %v8505 = vand.u32 %v8475, 65535
        %v8506 = vshrl.u32 %v8475, 16
        %v8507 = vmul.u32 %v8503, %v8505
        %v8508 = vmul.u32 %v8503, %v8506
        %v8509 = vmul.u32 %v8504, %v8505
        %v8510 = vmul.u32 %v8504, %v8506
        %v8511 = vshll.u32 %v8508, 16
        %v8512 = vshrl.u32 %v8508, 16
        %v8513 = vshll.u32 %v8509, 16
        %v8514 = vshrl.u32 %v8509, 16
        %vm8515 = vc.u32 %v8507, %v8511
        %v8516 = vsel %vm8515, 1, 0
        %v8517 = vadd.s32 %v8507, %v8511
        %v8518 = vadd.s32 %v8510, %v8516
        %vm8519 = vc.u32 %v8517, %v8513
        %v8520 = vsel %vm8519, 1, 0
        %v8521 = vadd.s32 %v8517, %v8513
        %v8522 = vadd.s32 %v8518, %v8520
        %v8523 = vadd.s32 %v8522, %v8512
        %v8524 = vadd.s32 %v8523, %v8514
        %v8525 = vmul.u32 %v8480, %v8471
        %v8526 = vadd.s32 %v8502, %v8521
        %vm8527 = vc.u32 %v8502, %v8521
        %v8528 = vadd.s32 %v8524, 1
        %v8529 = vsel %vm8527, %v8528, %v8524
        %v8530 = vadd.s32 %v8525, %v8529
        %v8531 = vadd.s32 %v8530, 536870912
        %v8532 = vshrl.u32 %v8531, 30
        %v8533 = vshll.u32 %v8532, 30
        %v8534 = vsub.s32 %v8530, %v8533
        %vm8535 = vcmp.lt.s32.totalorder %v8534, 0
        %v8536 = vsub.s32 0, %v8534
        %v8537 = vsel %vm8535, %v8536, %v8534
        %v8538 = vclz %v8537
        %v8539 = vsub.s32 %v8538, 2
        %vm8540 = vcmp.gt.s32.totalorder 0, %v8539
        %v8541 = vsel %vm8540, 0, %v8539
        %v8542 = vsub.s32 32, %v8541
        %v8543 = vshll.u32 %v8534, %v8541
        %v8544 = vshrl.u32 %v8526, %v8542
        %v8545 = vor.u32 %v8543, %v8544
        %v8546 = vsub.s32 4294967266, %v8541
        %v8547 = vadd.s32 %v8546, 127
        %v8548 = vshll.u32 %v8547, 23
        %v8549 = vor.u32 4788187, %v8548
        %v8550 = vand.u32 2147483647, %v8549
        %v8552 = vcvt.s32.f32 %v8545
        %v8553 = vmul.f32 %v8552, %v8550
        %v8554 = vxor.u32 %v8553, 2147483648
        %v8555 = vsel %vm8434, %v8554, %v8553
        %v8556 = vsub.s32 4, %v8532
        %v8557 = vsel %vm8434, %v8556, %v8532
        %v8558 = vsel %vm8433, %v356, %v8555
        %v8559 = vsel %vm8433, 0, %v8557
        %v8560 = vmul.f32 %v8558, %v8558
        %v8561 = vmul.f32 %v8560, -0.001358992
        %v8562 = vadd.f32 %v8561, 0.041655596
        %v8563 = vmul.f32 %v8560, %v8562
        %v8564 = vadd.f32 %v8563, -0.4999988
        %v8565 = vmul.f32 %v8560, %v8564
        %v8566 = vadd.f32 1.0, %v8565
        %v8567 = vmul.f32 %v8558, %v8558
        %v8568 = vmul.f32 %v8567, -0.00019511016
        %v8569 = vadd.f32 %v8568, 0.008332121
        %v8570 = vmul.f32 %v8567, %v8569
        %v8571 = vadd.f32 %v8570, -0.16666654
        %v8572 = vmul.f32 %v8567, %v8571
        %v8573 = vadd.f32 %v8572, 1.0
        %v8574 = vmul.f32 %v8573, %v8558
        %vm8575 = vweird.f32 %v356
        %v8576 = vand.u32 %v8559, 3
        %vm8577 = vcmp.lt.s32.totalorder %v8576, 2
        %vm8578 = vcmp.eq.s32.totalorder %v8576, 0
        %v8579 = vxor.u32 %v8574, 2147483648
        %v8580 = vsel %vm8578, %v8566, %v8579
        %vm8581 = vcmp.eq.s32.totalorder %v8576, 2
        %v8582 = vxor.u32 %v8566, 2147483648
        %v8583 = vsel %vm8581, %v8582, %v8574
        %v8584 = vsel %vm8577, %v8580, %v8583
        %v8585 = vsel %vm8575, nan, %v8584
        %v8586 = vand.u32 2147483647, %v357
        %vm8587 = vcmp.le.f32.partialorder %v8586, 0.7853982
        %vm8588 = vcmp.lt.s32.totalorder %v357, 0
        %v8589 = vand.u32 %v357, 2139095040
        %v8590 = vshrl.u32 %v8589, 23
        %v8591 = vsub.s32 %v8590, 127
        %v8592 = vand.u32 2147483647, %v357
        %v8593 = vand.u32 %v8592, 8388607
        %v8594 = vor.u32 %v8593, 8388608
        %v8595 = vsub.s32 0, %v8594
        %v8596 = vadd.s32 %v8591, 1
        %vm8597 = vcmp.gt.s32.totalorder %v8596, 0
        %v8598 = vsel %vm8597, %v8596, 0
        %v8599 = vshrl.u32 %v8598, 5
        %v8600 = vand.u32 %v8598, 31
        %v8601 = vsub.s32 32, %v8600
        %v8602 = vshrl.u32 683565275, %v8601
        %v8603 = vshll.u32 683565275, %v8600
        %v8604 = vshrl.u32 2475754826, %v8601
        %v8605 = vor.u32 %v8603, %v8604
        %v8606 = vshll.u32 2475754826, %v8600
        %v8607 = vshrl.u32 2131351028, %v8601
        %v8608 = vor.u32 %v8606, %v8607
        %v8609 = vshll.u32 2131351028, %v8600
        %v8610 = vshrl.u32 2102212464, %v8601
        %v8611 = vor.u32 %v8609, %v8610
        %v8612 = vshll.u32 2102212464, %v8600
        %v8613 = vshrl.u32 920167782, %v8601
        %v8614 = vor.u32 %v8612, %v8613
        %v8615 = vshll.u32 920167782, %v8600
        %v8616 = vshrl.u32 1326507024, %v8601
        %v8617 = vor.u32 %v8615, %v8616
        %vm8618 = vcmp.lt.s32.totalorder %v8599, 1
        %vm8619 = vcmp.lt.s32.totalorder %v8599, 2
        %vm8620 = vcmp.lt.s32.totalorder %v8599, 3
        %vm8621 = vcmp.lt.s32.totalorder %v8599, 4
        %v8622 = vsel %vm8618, %v8602, %v8605
        %v8623 = vsel %vm8621, %v8611, 2102212464
        %v8624 = vsel %vm8620, %v8608, %v8623
        %v8625 = vsel %vm8619, %v8622, %v8624
        %v8626 = vsel %vm8618, %v8605, %v8608
        %v8627 = vsel %vm8621, %v8614, 920167782
        %v8628 = vsel %vm8620, %v8611, %v8627
        %v8629 = vsel %vm8619, %v8626, %v8628
        %v8630 = vsel %vm8618, %v8608, %v8611
        %v8631 = vsel %vm8621, %v8617, 1326507024
        %v8632 = vsel %vm8620, %v8614, %v8631
        %v8633 = vsel %vm8619, %v8630, %v8632
        %v8634 = vshll.u32 %v8594, 8
        %v8635 = vand.u32 %v8634, 65535
        %v8636 = vshrl.u32 %v8634, 16
        %v8637 = vand.u32 %v8633, 65535
        %v8638 = vshrl.u32 %v8633, 16
        %v8639 = vmul.u32 %v8635, %v8637
        %v8640 = vmul.u32 %v8635, %v8638
        %v8641 = vmul.u32 %v8636, %v8637
        %v8642 = vmul.u32 %v8636, %v8638
        %v8643 = vshll.u32 %v8640, 16
        %v8644 = vshrl.u32 %v8640, 16
        %v8645 = vshll.u32 %v8641, 16
        %v8646 = vshrl.u32 %v8641, 16
        %vm8647 = vc.u32 %v8639, %v8643
        %v8648 = vsel %vm8647, 1, 0
        %v8649 = vadd.s32 %v8639, %v8643
        %v8650 = vadd.s32 %v8642, %v8648
        %vm8651 = vc.u32 %v8649, %v8645
        %v8652 = vsel %vm8651, 1, 0
        %v8653 = vadd.s32 %v8649, %v8645
        %v8654 = vadd.s32 %v8650, %v8652
        %v8655 = vadd.s32 %v8654, %v8644
        %v8656 = vadd.s32 %v8655, %v8646
        %v8657 = vand.u32 %v8634, 65535
        %v8658 = vshrl.u32 %v8634, 16
        %v8659 = vand.u32 %v8629, 65535
        %v8660 = vshrl.u32 %v8629, 16
        %v8661 = vmul.u32 %v8657, %v8659
        %v8662 = vmul.u32 %v8657, %v8660
        %v8663 = vmul.u32 %v8658, %v8659
        %v8664 = vmul.u32 %v8658, %v8660
        %v8665 = vshll.u32 %v8662, 16
        %v8666 = vshrl.u32 %v8662, 16
        %v8667 = vshll.u32 %v8663, 16
        %v8668 = vshrl.u32 %v8663, 16
        %vm8669 = vc.u32 %v8661, %v8665
        %v8670 = vsel %vm8669, 1, 0
        %v8671 = vadd.s32 %v8661, %v8665
        %v8672 = vadd.s32 %v8664, %v8670
        %vm8673 = vc.u32 %v8671, %v8667
        %v8674 = vsel %vm8673, 1, 0
        %v8675 = vadd.s32 %v8671, %v8667
        %v8676 = vadd.s32 %v8672, %v8674
        %v8677 = vadd.s32 %v8676, %v8666
        %v8678 = vadd.s32 %v8677, %v8668
        %v8679 = vmul.u32 %v8634, %v8625
        %v8680 = vadd.s32 %v8656, %v8675
        %vm8681 = vc.u32 %v8656, %v8675
        %v8682 = vadd.s32 %v8678, 1
        %v8683 = vsel %vm8681, %v8682, %v8678
        %v8684 = vadd.s32 %v8679, %v8683
        %v8685 = vadd.s32 %v8684, 536870912
        %v8686 = vshrl.u32 %v8685, 30
        %v8687 = vshll.u32 %v8686, 30
        %v8688 = vsub.s32 %v8684, %v8687
        %vm8689 = vcmp.lt.s32.totalorder %v8688, 0
        %v8690 = vsub.s32 0, %v8688
        %v8691 = vsel %vm8689, %v8690, %v8688
        %v8692 = vclz %v8691
        %v8693 = vsub.s32 %v8692, 2
        %vm8694 = vcmp.gt.s32.totalorder 0, %v8693
        %v8695 = vsel %vm8694, 0, %v8693
        %v8696 = vsub.s32 32, %v8695
        %v8697 = vshll.u32 %v8688, %v8695
        %v8698 = vshrl.u32 %v8680, %v8696
        %v8699 = vor.u32 %v8697, %v8698
        %v8700 = vsub.s32 4294967266, %v8695
        %v8701 = vadd.s32 %v8700, 127
        %v8702 = vshll.u32 %v8701, 23
        %v8703 = vor.u32 4788187, %v8702
        %v8704 = vand.u32 2147483647, %v8703
        %v8706 = vcvt.s32.f32 %v8699
        %v8707 = vmul.f32 %v8706, %v8704
        %v8708 = vxor.u32 %v8707, 2147483648
        %v8709 = vsel %vm8588, %v8708, %v8707
        %v8710 = vsub.s32 4, %v8686
        %v8711 = vsel %vm8588, %v8710, %v8686
        %v8712 = vsel %vm8587, %v357, %v8709
        %v8713 = vsel %vm8587, 0, %v8711
        %v8714 = vmul.f32 %v8712, %v8712
        %v8715 = vmul.f32 %v8714, -0.001358992
        %v8716 = vadd.f32 %v8715, 0.041655596
        %v8717 = vmul.f32 %v8714, %v8716
        %v8718 = vadd.f32 %v8717, -0.4999988
        %v8719 = vmul.f32 %v8714, %v8718
        %v8720 = vadd.f32 1.0, %v8719
        %v8721 = vmul.f32 %v8712, %v8712
        %v8722 = vmul.f32 %v8721, -0.00019511016
        %v8723 = vadd.f32 %v8722, 0.008332121
        %v8724 = vmul.f32 %v8721, %v8723
        %v8725 = vadd.f32 %v8724, -0.16666654
        %v8726 = vmul.f32 %v8721, %v8725
        %v8727 = vadd.f32 %v8726, 1.0
        %v8728 = vmul.f32 %v8727, %v8712
        %vm8729 = vweird.f32 %v357
        %v8730 = vand.u32 %v8713, 3
        %vm8731 = vcmp.lt.s32.totalorder %v8730, 2
        %vm8732 = vcmp.eq.s32.totalorder %v8730, 0
        %v8733 = vxor.u32 %v8728, 2147483648
        %v8734 = vsel %vm8732, %v8720, %v8733
        %vm8735 = vcmp.eq.s32.totalorder %v8730, 2
        %v8736 = vxor.u32 %v8720, 2147483648
        %v8737 = vsel %vm8735, %v8736, %v8728
        %v8738 = vsel %vm8731, %v8734, %v8737
        %v8739 = vsel %vm8729, nan, %v8738
        %v8740 = vand.u32 2147483647, %v358
        %vm8741 = vcmp.le.f32.partialorder %v8740, 0.7853982
        %vm8742 = vcmp.lt.s32.totalorder %v358, 0
        %v8743 = vand.u32 %v358, 2139095040
        %v8744 = vshrl.u32 %v8743, 23
        %v8745 = vsub.s32 %v8744, 127
        %v8746 = vand.u32 2147483647, %v358
        %v8747 = vand.u32 %v8746, 8388607
        %v8748 = vor.u32 %v8747, 8388608
        %v8749 = vsub.s32 0, %v8748
        %v8750 = vadd.s32 %v8745, 1
        %vm8751 = vcmp.gt.s32.totalorder %v8750, 0
        %v8752 = vsel %vm8751, %v8750, 0
        %v8753 = vshrl.u32 %v8752, 5
        %v8754 = vand.u32 %v8752, 31
        %v8755 = vsub.s32 32, %v8754
        %v8756 = vshrl.u32 683565275, %v8755
        %v8757 = vshll.u32 683565275, %v8754
        %v8758 = vshrl.u32 2475754826, %v8755
        %v8759 = vor.u32 %v8757, %v8758
        %v8760 = vshll.u32 2475754826, %v8754
        %v8761 = vshrl.u32 2131351028, %v8755
        %v8762 = vor.u32 %v8760, %v8761
        %v8763 = vshll.u32 2131351028, %v8754
        %v8764 = vshrl.u32 2102212464, %v8755
        %v8765 = vor.u32 %v8763, %v8764
        %v8766 = vshll.u32 2102212464, %v8754
        %v8767 = vshrl.u32 920167782, %v8755
        %v8768 = vor.u32 %v8766, %v8767
        %v8769 = vshll.u32 920167782, %v8754
        %v8770 = vshrl.u32 1326507024, %v8755
        %v8771 = vor.u32 %v8769, %v8770
        %vm8772 = vcmp.lt.s32.totalorder %v8753, 1
        %vm8773 = vcmp.lt.s32.totalorder %v8753, 2
        %vm8774 = vcmp.lt.s32.totalorder %v8753, 3
        %vm8775 = vcmp.lt.s32.totalorder %v8753, 4
        %v8776 = vsel %vm8772, %v8756, %v8759
        %v8777 = vsel %vm8775, %v8765, 2102212464
        %v8778 = vsel %vm8774, %v8762, %v8777
        %v8779 = vsel %vm8773, %v8776, %v8778
        %v8780 = vsel %vm8772, %v8759, %v8762
        %v8781 = vsel %vm8775, %v8768, 920167782
        %v8782 = vsel %vm8774, %v8765, %v8781
        %v8783 = vsel %vm8773, %v8780, %v8782
        %v8784 = vsel %vm8772, %v8762, %v8765
        %v8785 = vsel %vm8775, %v8771, 1326507024
        %v8786 = vsel %vm8774, %v8768, %v8785
        %v8787 = vsel %vm8773, %v8784, %v8786
        %v8788 = vshll.u32 %v8748, 8
        %v8789 = vand.u32 %v8788, 65535
        %v8790 = vshrl.u32 %v8788, 16
        %v8791 = vand.u32 %v8787, 65535
        %v8792 = vshrl.u32 %v8787, 16
        %v8793 = vmul.u32 %v8789, %v8791
        %v8794 = vmul.u32 %v8789, %v8792
        %v8795 = vmul.u32 %v8790, %v8791
        %v8796 = vmul.u32 %v8790, %v8792
        %v8797 = vshll.u32 %v8794, 16
        %v8798 = vshrl.u32 %v8794, 16
        %v8799 = vshll.u32 %v8795, 16
        %v8800 = vshrl.u32 %v8795, 16
        %vm8801 = vc.u32 %v8793, %v8797
        %v8802 = vsel %vm8801, 1, 0
        %v8803 = vadd.s32 %v8793, %v8797
        %v8804 = vadd.s32 %v8796, %v8802
        %vm8805 = vc.u32 %v8803, %v8799
        %v8806 = vsel %vm8805, 1, 0
        %v8807 = vadd.s32 %v8803, %v8799
        %v8808 = vadd.s32 %v8804, %v8806
        %v8809 = vadd.s32 %v8808, %v8798
        %v8810 = vadd.s32 %v8809, %v8800
        %v8811 = vand.u32 %v8788, 65535
        %v8812 = vshrl.u32 %v8788, 16
        %v8813 = vand.u32 %v8783, 65535
        %v8814 = vshrl.u32 %v8783, 16
        %v8815 = vmul.u32 %v8811, %v8813
        %v8816 = vmul.u32 %v8811, %v8814
        %v8817 = vmul.u32 %v8812, %v8813
        %v8818 = vmul.u32 %v8812, %v8814
        %v8819 = vshll.u32 %v8816, 16
        %v8820 = vshrl.u32 %v8816, 16
        %v8821 = vshll.u32 %v8817, 16
        %v8822 = vshrl.u32 %v8817, 16
        %vm8823 = vc.u32 %v8815, %v8819
        %v8824 = vsel %vm8823, 1, 0
        %v8825 = vadd.s32 %v8815, %v8819
        %v8826 = vadd.s32 %v8818, %v8824
        %vm8827 = vc.u32 %v8825, %v8821
        %v8828 = vsel %vm8827, 1, 0
        %v8829 = vadd.s32 %v8825, %v8821
        %v8830 = vadd.s32 %v8826, %v8828
        %v8831 = vadd.s32 %v8830, %v8820
        %v8832 = vadd.s32 %v8831, %v8822
        %v8833 = vmul.u32 %v8788, %v8779
        %v8834 = vadd.s32 %v8810, %v8829
        %vm8835 = vc.u32 %v8810, %v8829
        %v8836 = vadd.s32 %v8832, 1
        %v8837 = vsel %vm8835, %v8836, %v8832
        %v8838 = vadd.s32 %v8833, %v8837
        %v8839 = vadd.s32 %v8838, 536870912
        %v8840 = vshrl.u32 %v8839, 30
        %v8841 = vshll.u32 %v8840, 30
        %v8842 = vsub.s32 %v8838, %v8841
        %vm8843 = vcmp.lt.s32.totalorder %v8842, 0
        %v8844 = vsub.s32 0, %v8842
        %v8845 = vsel %vm8843, %v8844, %v8842
        %v8846 = vclz %v8845
        %v8847 = vsub.s32 %v8846, 2
        %vm8848 = vcmp.gt.s32.totalorder 0, %v8847
        %v8849 = vsel %vm8848, 0, %v8847
        %v8850 = vsub.s32 32, %v8849
        %v8851 = vshll.u32 %v8842, %v8849
        %v8852 = vshrl.u32 %v8834, %v8850
        %v8853 = vor.u32 %v8851, %v8852
        %v8854 = vsub.s32 4294967266, %v8849
        %v8855 = vadd.s32 %v8854, 127
        %v8856 = vshll.u32 %v8855, 23
        %v8857 = vor.u32 4788187, %v8856
        %v8858 = vand.u32 2147483647, %v8857
        %v8860 = vcvt.s32.f32 %v8853
        %v8861 = vmul.f32 %v8860, %v8858
        %v8862 = vxor.u32 %v8861, 2147483648
        %v8863 = vsel %vm8742, %v8862, %v8861
        %v8864 = vsub.s32 4, %v8840
        %v8865 = vsel %vm8742, %v8864, %v8840
        %v8866 = vsel %vm8741, %v358, %v8863
        %v8867 = vsel %vm8741, 0, %v8865
        %v8868 = vmul.f32 %v8866, %v8866
        %v8869 = vmul.f32 %v8868, -0.001358992
        %v8870 = vadd.f32 %v8869, 0.041655596
        %v8871 = vmul.f32 %v8868, %v8870
        %v8872 = vadd.f32 %v8871, -0.4999988
        %v8873 = vmul.f32 %v8868, %v8872
        %v8874 = vadd.f32 1.0, %v8873
        %v8875 = vmul.f32 %v8866, %v8866
        %v8876 = vmul.f32 %v8875, -0.00019511016
        %v8877 = vadd.f32 %v8876, 0.008332121
        %v8878 = vmul.f32 %v8875, %v8877
        %v8879 = vadd.f32 %v8878, -0.16666654
        %v8880 = vmul.f32 %v8875, %v8879
        %v8881 = vadd.f32 %v8880, 1.0
        %v8882 = vmul.f32 %v8881, %v8866
        %vm8883 = vweird.f32 %v358
        %v8884 = vand.u32 %v8867, 3
        %vm8885 = vcmp.lt.s32.totalorder %v8884, 2
        %vm8886 = vcmp.eq.s32.totalorder %v8884, 0
        %v8887 = vxor.u32 %v8882, 2147483648
        %v8888 = vsel %vm8886, %v8874, %v8887
        %vm8889 = vcmp.eq.s32.totalorder %v8884, 2
        %v8890 = vxor.u32 %v8874, 2147483648
        %v8891 = vsel %vm8889, %v8890, %v8882
        %v8892 = vsel %vm8885, %v8888, %v8891
        %v8893 = vsel %vm8883, nan, %v8892
        %v8894 = vand.u32 2147483647, %v359
        %vm8895 = vcmp.le.f32.partialorder %v8894, 0.7853982
        %vm8896 = vcmp.lt.s32.totalorder %v359, 0
        %v8897 = vand.u32 %v359, 2139095040
        %v8898 = vshrl.u32 %v8897, 23
        %v8899 = vsub.s32 %v8898, 127
        %v8900 = vand.u32 2147483647, %v359
        %v8901 = vand.u32 %v8900, 8388607
        %v8902 = vor.u32 %v8901, 8388608
        %v8903 = vsub.s32 0, %v8902
        %v8904 = vadd.s32 %v8899, 1
        %vm8905 = vcmp.gt.s32.totalorder %v8904, 0
        %v8906 = vsel %vm8905, %v8904, 0
        %v8907 = vshrl.u32 %v8906, 5
        %v8908 = vand.u32 %v8906, 31
        %v8909 = vsub.s32 32, %v8908
        %v8910 = vshrl.u32 683565275, %v8909
        %v8911 = vshll.u32 683565275, %v8908
        %v8912 = vshrl.u32 2475754826, %v8909
        %v8913 = vor.u32 %v8911, %v8912
        %v8914 = vshll.u32 2475754826, %v8908
        %v8915 = vshrl.u32 2131351028, %v8909
        %v8916 = vor.u32 %v8914, %v8915
        %v8917 = vshll.u32 2131351028, %v8908
        %v8918 = vshrl.u32 2102212464, %v8909
        %v8919 = vor.u32 %v8917, %v8918
        %v8920 = vshll.u32 2102212464, %v8908
        %v8921 = vshrl.u32 920167782, %v8909
        %v8922 = vor.u32 %v8920, %v8921
        %v8923 = vshll.u32 920167782, %v8908
        %v8924 = vshrl.u32 1326507024, %v8909
        %v8925 = vor.u32 %v8923, %v8924
        %vm8926 = vcmp.lt.s32.totalorder %v8907, 1
        %vm8927 = vcmp.lt.s32.totalorder %v8907, 2
        %vm8928 = vcmp.lt.s32.totalorder %v8907, 3
        %vm8929 = vcmp.lt.s32.totalorder %v8907, 4
        %v8930 = vsel %vm8926, %v8910, %v8913
        %v8931 = vsel %vm8929, %v8919, 2102212464
        %v8932 = vsel %vm8928, %v8916, %v8931
        %v8933 = vsel %vm8927, %v8930, %v8932
        %v8934 = vsel %vm8926, %v8913, %v8916
        %v8935 = vsel %vm8929, %v8922, 920167782
        %v8936 = vsel %vm8928, %v8919, %v8935
        %v8937 = vsel %vm8927, %v8934, %v8936
        %v8938 = vsel %vm8926, %v8916, %v8919
        %v8939 = vsel %vm8929, %v8925, 1326507024
        %v8940 = vsel %vm8928, %v8922, %v8939
        %v8941 = vsel %vm8927, %v8938, %v8940
        %v8942 = vshll.u32 %v8902, 8
        %v8943 = vand.u32 %v8942, 65535
        %v8944 = vshrl.u32 %v8942, 16
        %v8945 = vand.u32 %v8941, 65535
        %v8946 = vshrl.u32 %v8941, 16
        %v8947 = vmul.u32 %v8943, %v8945
        %v8948 = vmul.u32 %v8943, %v8946
        %v8949 = vmul.u32 %v8944, %v8945
        %v8950 = vmul.u32 %v8944, %v8946
        %v8951 = vshll.u32 %v8948, 16
        %v8952 = vshrl.u32 %v8948, 16
        %v8953 = vshll.u32 %v8949, 16
        %v8954 = vshrl.u32 %v8949, 16
        %vm8955 = vc.u32 %v8947, %v8951
        %v8956 = vsel %vm8955, 1, 0
        %v8957 = vadd.s32 %v8947, %v8951
        %v8958 = vadd.s32 %v8950, %v8956
        %vm8959 = vc.u32 %v8957, %v8953
        %v8960 = vsel %vm8959, 1, 0
        %v8961 = vadd.s32 %v8957, %v8953
        %v8962 = vadd.s32 %v8958, %v8960
        %v8963 = vadd.s32 %v8962, %v8952
        %v8964 = vadd.s32 %v8963, %v8954
        %v8965 = vand.u32 %v8942, 65535
        %v8966 = vshrl.u32 %v8942, 16
        %v8967 = vand.u32 %v8937, 65535
        %v8968 = vshrl.u32 %v8937, 16
        %v8969 = vmul.u32 %v8965, %v8967
        %v8970 = vmul.u32 %v8965, %v8968
        %v8971 = vmul.u32 %v8966, %v8967
        %v8972 = vmul.u32 %v8966, %v8968
        %v8973 = vshll.u32 %v8970, 16
        %v8974 = vshrl.u32 %v8970, 16
        %v8975 = vshll.u32 %v8971, 16
        %v8976 = vshrl.u32 %v8971, 16
        %vm8977 = vc.u32 %v8969, %v8973
        %v8978 = vsel %vm8977, 1, 0
        %v8979 = vadd.s32 %v8969, %v8973
        %v8980 = vadd.s32 %v8972, %v8978
        %vm8981 = vc.u32 %v8979, %v8975
        %v8982 = vsel %vm8981, 1, 0
        %v8983 = vadd.s32 %v8979, %v8975
        %v8984 = vadd.s32 %v8980, %v8982
        %v8985 = vadd.s32 %v8984, %v8974
        %v8986 = vadd.s32 %v8985, %v8976
        %v8987 = vmul.u32 %v8942, %v8933
        %v8988 = vadd.s32 %v8964, %v8983
        %vm8989 = vc.u32 %v8964, %v8983
        %v8990 = vadd.s32 %v8986, 1
        %v8991 = vsel %vm8989, %v8990, %v8986
        %v8992 = vadd.s32 %v8987, %v8991
        %v8993 = vadd.s32 %v8992, 536870912
        %v8994 = vshrl.u32 %v8993, 30
        %v8995 = vshll.u32 %v8994, 30
        %v8996 = vsub.s32 %v8992, %v8995
        %vm8997 = vcmp.lt.s32.totalorder %v8996, 0
        %v8998 = vsub.s32 0, %v8996
        %v8999 = vsel %vm8997, %v8998, %v8996
        %v9000 = vclz %v8999
        %v9001 = vsub.s32 %v9000, 2
        %vm9002 = vcmp.gt.s32.totalorder 0, %v9001
        %v9003 = vsel %vm9002, 0, %v9001
        %v9004 = vsub.s32 32, %v9003
        %v9005 = vshll.u32 %v8996, %v9003
        %v9006 = vshrl.u32 %v8988, %v9004
        %v9007 = vor.u32 %v9005, %v9006
        %v9008 = vsub.s32 4294967266, %v9003
        %v9009 = vadd.s32 %v9008, 127
        %v9010 = vshll.u32 %v9009, 23
        %v9011 = vor.u32 4788187, %v9010
        %v9012 = vand.u32 2147483647, %v9011
        %v9014 = vcvt.s32.f32 %v9007
        %v9015 = vmul.f32 %v9014, %v9012
        %v9016 = vxor.u32 %v9015, 2147483648
        %v9017 = vsel %vm8896, %v9016, %v9015
        %v9018 = vsub.s32 4, %v8994
        %v9019 = vsel %vm8896, %v9018, %v8994
        %v9020 = vsel %vm8895, %v359, %v9017
        %v9021 = vsel %vm8895, 0, %v9019
        %v9022 = vmul.f32 %v9020, %v9020
        %v9023 = vmul.f32 %v9022, -0.001358992
        %v9024 = vadd.f32 %v9023, 0.041655596
        %v9025 = vmul.f32 %v9022, %v9024
        %v9026 = vadd.f32 %v9025, -0.4999988
        %v9027 = vmul.f32 %v9022, %v9026
        %v9028 = vadd.f32 1.0, %v9027
        %v9029 = vmul.f32 %v9020, %v9020
        %v9030 = vmul.f32 %v9029, -0.00019511016
        %v9031 = vadd.f32 %v9030, 0.008332121
        %v9032 = vmul.f32 %v9029, %v9031
        %v9033 = vadd.f32 %v9032, -0.16666654
        %v9034 = vmul.f32 %v9029, %v9033
        %v9035 = vadd.f32 %v9034, 1.0
        %v9036 = vmul.f32 %v9035, %v9020
        %vm9037 = vweird.f32 %v359
        %v9038 = vand.u32 %v9021, 3
        %vm9039 = vcmp.lt.s32.totalorder %v9038, 2
        %vm9040 = vcmp.eq.s32.totalorder %v9038, 0
        %v9041 = vxor.u32 %v9036, 2147483648
        %v9042 = vsel %vm9040, %v9028, %v9041
        %vm9043 = vcmp.eq.s32.totalorder %v9038, 2
        %v9044 = vxor.u32 %v9028, 2147483648
        %v9045 = vsel %vm9043, %v9044, %v9036
        %v9046 = vsel %vm9039, %v9042, %v9045
        %v9047 = vsel %vm9037, nan, %v9046
        %v9048 = vand.u32 2147483647, %v360
        %vm9049 = vcmp.le.f32.partialorder %v9048, 0.7853982
        %vm9050 = vcmp.lt.s32.totalorder %v360, 0
        %v9051 = vand.u32 %v360, 2139095040
        %v9052 = vshrl.u32 %v9051, 23
        %v9053 = vsub.s32 %v9052, 127
        %v9054 = vand.u32 2147483647, %v360
        %v9055 = vand.u32 %v9054, 8388607
        %v9056 = vor.u32 %v9055, 8388608
        %v9057 = vsub.s32 0, %v9056
        %v9058 = vadd.s32 %v9053, 1
        %vm9059 = vcmp.gt.s32.totalorder %v9058, 0
        %v9060 = vsel %vm9059, %v9058, 0
        %v9061 = vshrl.u32 %v9060, 5
        %v9062 = vand.u32 %v9060, 31
        %v9063 = vsub.s32 32, %v9062
        %v9064 = vshrl.u32 683565275, %v9063
        %v9065 = vshll.u32 683565275, %v9062
        %v9066 = vshrl.u32 2475754826, %v9063
        %v9067 = vor.u32 %v9065, %v9066
        %v9068 = vshll.u32 2475754826, %v9062
        %v9069 = vshrl.u32 2131351028, %v9063
        %v9070 = vor.u32 %v9068, %v9069
        %v9071 = vshll.u32 2131351028, %v9062
        %v9072 = vshrl.u32 2102212464, %v9063
        %v9073 = vor.u32 %v9071, %v9072
        %v9074 = vshll.u32 2102212464, %v9062
        %v9075 = vshrl.u32 920167782, %v9063
        %v9076 = vor.u32 %v9074, %v9075
        %v9077 = vshll.u32 920167782, %v9062
        %v9078 = vshrl.u32 1326507024, %v9063
        %v9079 = vor.u32 %v9077, %v9078
        %vm9080 = vcmp.lt.s32.totalorder %v9061, 1
        %vm9081 = vcmp.lt.s32.totalorder %v9061, 2
        %vm9082 = vcmp.lt.s32.totalorder %v9061, 3
        %vm9083 = vcmp.lt.s32.totalorder %v9061, 4
        %v9084 = vsel %vm9080, %v9064, %v9067
        %v9085 = vsel %vm9083, %v9073, 2102212464
        %v9086 = vsel %vm9082, %v9070, %v9085
        %v9087 = vsel %vm9081, %v9084, %v9086
        %v9088 = vsel %vm9080, %v9067, %v9070
        %v9089 = vsel %vm9083, %v9076, 920167782
        %v9090 = vsel %vm9082, %v9073, %v9089
        %v9091 = vsel %vm9081, %v9088, %v9090
        %v9092 = vsel %vm9080, %v9070, %v9073
        %v9093 = vsel %vm9083, %v9079, 1326507024
        %v9094 = vsel %vm9082, %v9076, %v9093
        %v9095 = vsel %vm9081, %v9092, %v9094
        %v9096 = vshll.u32 %v9056, 8
        %v9097 = vand.u32 %v9096, 65535
        %v9098 = vshrl.u32 %v9096, 16
        %v9099 = vand.u32 %v9095, 65535
        %v9100 = vshrl.u32 %v9095, 16
        %v9101 = vmul.u32 %v9097, %v9099
        %v9102 = vmul.u32 %v9097, %v9100
        %v9103 = vmul.u32 %v9098, %v9099
        %v9104 = vmul.u32 %v9098, %v9100
        %v9105 = vshll.u32 %v9102, 16
        %v9106 = vshrl.u32 %v9102, 16
        %v9107 = vshll.u32 %v9103, 16
        %v9108 = vshrl.u32 %v9103, 16
        %vm9109 = vc.u32 %v9101, %v9105
        %v9110 = vsel %vm9109, 1, 0
        %v9111 = vadd.s32 %v9101, %v9105
        %v9112 = vadd.s32 %v9104, %v9110
        %vm9113 = vc.u32 %v9111, %v9107
        %v9114 = vsel %vm9113, 1, 0
        %v9115 = vadd.s32 %v9111, %v9107
        %v9116 = vadd.s32 %v9112, %v9114
        %v9117 = vadd.s32 %v9116, %v9106
        %v9118 = vadd.s32 %v9117, %v9108
        %v9119 = vand.u32 %v9096, 65535
        %v9120 = vshrl.u32 %v9096, 16
        %v9121 = vand.u32 %v9091, 65535
        %v9122 = vshrl.u32 %v9091, 16
        %v9123 = vmul.u32 %v9119, %v9121
        %v9124 = vmul.u32 %v9119, %v9122
        %v9125 = vmul.u32 %v9120, %v9121
        %v9126 = vmul.u32 %v9120, %v9122
        %v9127 = vshll.u32 %v9124, 16
        %v9128 = vshrl.u32 %v9124, 16
        %v9129 = vshll.u32 %v9125, 16
        %v9130 = vshrl.u32 %v9125, 16
        %vm9131 = vc.u32 %v9123, %v9127
        %v9132 = vsel %vm9131, 1, 0
        %v9133 = vadd.s32 %v9123, %v9127
        %v9134 = vadd.s32 %v9126, %v9132
        %vm9135 = vc.u32 %v9133, %v9129
        %v9136 = vsel %vm9135, 1, 0
        %v9137 = vadd.s32 %v9133, %v9129
        %v9138 = vadd.s32 %v9134, %v9136
        %v9139 = vadd.s32 %v9138, %v9128
        %v9140 = vadd.s32 %v9139, %v9130
        %v9141 = vmul.u32 %v9096, %v9087
        %v9142 = vadd.s32 %v9118, %v9137
        %vm9143 = vc.u32 %v9118, %v9137
        %v9144 = vadd.s32 %v9140, 1
        %v9145 = vsel %vm9143, %v9144, %v9140
        %v9146 = vadd.s32 %v9141, %v9145
        %v9147 = vadd.s32 %v9146, 536870912
        %v9148 = vshrl.u32 %v9147, 30
        %v9149 = vshll.u32 %v9148, 30
        %v9150 = vsub.s32 %v9146, %v9149
        %vm9151 = vcmp.lt.s32.totalorder %v9150, 0
        %v9152 = vsub.s32 0, %v9150
        %v9153 = vsel %vm9151, %v9152, %v9150
        %v9154 = vclz %v9153
        %v9155 = vsub.s32 %v9154, 2
        %vm9156 = vcmp.gt.s32.totalorder 0, %v9155
        %v9157 = vsel %vm9156, 0, %v9155
        %v9158 = vsub.s32 32, %v9157
        %v9159 = vshll.u32 %v9150, %v9157
        %v9160 = vshrl.u32 %v9142, %v9158
        %v9161 = vor.u32 %v9159, %v9160
        %v9162 = vsub.s32 4294967266, %v9157
        %v9163 = vadd.s32 %v9162, 127
        %v9164 = vshll.u32 %v9163, 23
        %v9165 = vor.u32 4788187, %v9164
        %v9166 = vand.u32 2147483647, %v9165
        %v9168 = vcvt.s32.f32 %v9161
        %v9169 = vmul.f32 %v9168, %v9166
        %v9170 = vxor.u32 %v9169, 2147483648
        %v9171 = vsel %vm9050, %v9170, %v9169
        %v9172 = vsub.s32 4, %v9148
        %v9173 = vsel %vm9050, %v9172, %v9148
        %v9174 = vsel %vm9049, %v360, %v9171
        %v9175 = vsel %vm9049, 0, %v9173
        %v9176 = vmul.f32 %v9174, %v9174
        %v9177 = vmul.f32 %v9176, -0.001358992
        %v9178 = vadd.f32 %v9177, 0.041655596
        %v9179 = vmul.f32 %v9176, %v9178
        %v9180 = vadd.f32 %v9179, -0.4999988
        %v9181 = vmul.f32 %v9176, %v9180
        %v9182 = vadd.f32 1.0, %v9181
        %v9183 = vmul.f32 %v9174, %v9174
        %v9184 = vmul.f32 %v9183, -0.00019511016
        %v9185 = vadd.f32 %v9184, 0.008332121
        %v9186 = vmul.f32 %v9183, %v9185
        %v9187 = vadd.f32 %v9186, -0.16666654
        %v9188 = vmul.f32 %v9183, %v9187
        %v9189 = vadd.f32 %v9188, 1.0
        %v9190 = vmul.f32 %v9189, %v9174
        %vm9191 = vweird.f32 %v360
        %v9192 = vand.u32 %v9175, 3
        %vm9193 = vcmp.lt.s32.totalorder %v9192, 2
        %vm9194 = vcmp.eq.s32.totalorder %v9192, 0
        %v9195 = vxor.u32 %v9190, 2147483648
        %v9196 = vsel %vm9194, %v9182, %v9195
        %vm9197 = vcmp.eq.s32.totalorder %v9192, 2
        %v9198 = vxor.u32 %v9182, 2147483648
        %v9199 = vsel %vm9197, %v9198, %v9190
        %v9200 = vsel %vm9193, %v9196, %v9199
        %v9201 = vsel %vm9191, nan, %v9200
        %v9202 = vand.u32 2147483647, %v361
        %vm9203 = vcmp.le.f32.partialorder %v9202, 0.7853982
        %vm9204 = vcmp.lt.s32.totalorder %v361, 0
        %v9205 = vand.u32 %v361, 2139095040
        %v9206 = vshrl.u32 %v9205, 23
        %v9207 = vsub.s32 %v9206, 127
        %v9208 = vand.u32 2147483647, %v361
        %v9209 = vand.u32 %v9208, 8388607
        %v9210 = vor.u32 %v9209, 8388608
        %v9211 = vsub.s32 0, %v9210
        %v9212 = vadd.s32 %v9207, 1
        %vm9213 = vcmp.gt.s32.totalorder %v9212, 0
        %v9214 = vsel %vm9213, %v9212, 0
        %v9215 = vshrl.u32 %v9214, 5
        %v9216 = vand.u32 %v9214, 31
        %v9217 = vsub.s32 32, %v9216
        %v9218 = vshrl.u32 683565275, %v9217
        %v9219 = vshll.u32 683565275, %v9216
        %v9220 = vshrl.u32 2475754826, %v9217
        %v9221 = vor.u32 %v9219, %v9220
        %v9222 = vshll.u32 2475754826, %v9216
        %v9223 = vshrl.u32 2131351028, %v9217
        %v9224 = vor.u32 %v9222, %v9223
        %v9225 = vshll.u32 2131351028, %v9216
        %v9226 = vshrl.u32 2102212464, %v9217
        %v9227 = vor.u32 %v9225, %v9226
        %v9228 = vshll.u32 2102212464, %v9216
        %v9229 = vshrl.u32 920167782, %v9217
        %v9230 = vor.u32 %v9228, %v9229
        %v9231 = vshll.u32 920167782, %v9216
        %v9232 = vshrl.u32 1326507024, %v9217
        %v9233 = vor.u32 %v9231, %v9232
        %vm9234 = vcmp.lt.s32.totalorder %v9215, 1
        %vm9235 = vcmp.lt.s32.totalorder %v9215, 2
        %vm9236 = vcmp.lt.s32.totalorder %v9215, 3
        %vm9237 = vcmp.lt.s32.totalorder %v9215, 4
        %v9238 = vsel %vm9234, %v9218, %v9221
        %v9239 = vsel %vm9237, %v9227, 2102212464
        %v9240 = vsel %vm9236, %v9224, %v9239
        %v9241 = vsel %vm9235, %v9238, %v9240
        %v9242 = vsel %vm9234, %v9221, %v9224
        %v9243 = vsel %vm9237, %v9230, 920167782
        %v9244 = vsel %vm9236, %v9227, %v9243
        %v9245 = vsel %vm9235, %v9242, %v9244
        %v9246 = vsel %vm9234, %v9224, %v9227
        %v9247 = vsel %vm9237, %v9233, 1326507024
        %v9248 = vsel %vm9236, %v9230, %v9247
        %v9249 = vsel %vm9235, %v9246, %v9248
        %v9250 = vshll.u32 %v9210, 8
        %v9251 = vand.u32 %v9250, 65535
        %v9252 = vshrl.u32 %v9250, 16
        %v9253 = vand.u32 %v9249, 65535
        %v9254 = vshrl.u32 %v9249, 16
        %v9255 = vmul.u32 %v9251, %v9253
        %v9256 = vmul.u32 %v9251, %v9254
        %v9257 = vmul.u32 %v9252, %v9253
        %v9258 = vmul.u32 %v9252, %v9254
        %v9259 = vshll.u32 %v9256, 16
        %v9260 = vshrl.u32 %v9256, 16
        %v9261 = vshll.u32 %v9257, 16
        %v9262 = vshrl.u32 %v9257, 16
        %vm9263 = vc.u32 %v9255, %v9259
        %v9264 = vsel %vm9263, 1, 0
        %v9265 = vadd.s32 %v9255, %v9259
        %v9266 = vadd.s32 %v9258, %v9264
        %vm9267 = vc.u32 %v9265, %v9261
        %v9268 = vsel %vm9267, 1, 0
        %v9269 = vadd.s32 %v9265, %v9261
        %v9270 = vadd.s32 %v9266, %v9268
        %v9271 = vadd.s32 %v9270, %v9260
        %v9272 = vadd.s32 %v9271, %v9262
        %v9273 = vand.u32 %v9250, 65535
        %v9274 = vshrl.u32 %v9250, 16
        %v9275 = vand.u32 %v9245, 65535
        %v9276 = vshrl.u32 %v9245, 16
        %v9277 = vmul.u32 %v9273, %v9275
        %v9278 = vmul.u32 %v9273, %v9276
        %v9279 = vmul.u32 %v9274, %v9275
        %v9280 = vmul.u32 %v9274, %v9276
        %v9281 = vshll.u32 %v9278, 16
        %v9282 = vshrl.u32 %v9278, 16
        %v9283 = vshll.u32 %v9279, 16
        %v9284 = vshrl.u32 %v9279, 16
        %vm9285 = vc.u32 %v9277, %v9281
        %v9286 = vsel %vm9285, 1, 0
        %v9287 = vadd.s32 %v9277, %v9281
        %v9288 = vadd.s32 %v9280, %v9286
        %vm9289 = vc.u32 %v9287, %v9283
        %v9290 = vsel %vm9289, 1, 0
        %v9291 = vadd.s32 %v9287, %v9283
        %v9292 = vadd.s32 %v9288, %v9290
        %v9293 = vadd.s32 %v9292, %v9282
        %v9294 = vadd.s32 %v9293, %v9284
        %v9295 = vmul.u32 %v9250, %v9241
        %v9296 = vadd.s32 %v9272, %v9291
        %vm9297 = vc.u32 %v9272, %v9291
        %v9298 = vadd.s32 %v9294, 1
        %v9299 = vsel %vm9297, %v9298, %v9294
        %v9300 = vadd.s32 %v9295, %v9299
        %v9301 = vadd.s32 %v9300, 536870912
        %v9302 = vshrl.u32 %v9301, 30
        %v9303 = vshll.u32 %v9302, 30
        %v9304 = vsub.s32 %v9300, %v9303
        %vm9305 = vcmp.lt.s32.totalorder %v9304, 0
        %v9306 = vsub.s32 0, %v9304
        %v9307 = vsel %vm9305, %v9306, %v9304
        %v9308 = vclz %v9307
        %v9309 = vsub.s32 %v9308, 2
        %vm9310 = vcmp.gt.s32.totalorder 0, %v9309
        %v9311 = vsel %vm9310, 0, %v9309
        %v9312 = vsub.s32 32, %v9311
        %v9313 = vshll.u32 %v9304, %v9311
        %v9314 = vshrl.u32 %v9296, %v9312
        %v9315 = vor.u32 %v9313, %v9314
        %v9316 = vsub.s32 4294967266, %v9311
        %v9317 = vadd.s32 %v9316, 127
        %v9318 = vshll.u32 %v9317, 23
        %v9319 = vor.u32 4788187, %v9318
        %v9320 = vand.u32 2147483647, %v9319
        %v9322 = vcvt.s32.f32 %v9315
        %v9323 = vmul.f32 %v9322, %v9320
        %v9324 = vxor.u32 %v9323, 2147483648
        %v9325 = vsel %vm9204, %v9324, %v9323
        %v9326 = vsub.s32 4, %v9302
        %v9327 = vsel %vm9204, %v9326, %v9302
        %v9328 = vsel %vm9203, %v361, %v9325
        %v9329 = vsel %vm9203, 0, %v9327
        %v9330 = vmul.f32 %v9328, %v9328
        %v9331 = vmul.f32 %v9330, -0.001358992
        %v9332 = vadd.f32 %v9331, 0.041655596
        %v9333 = vmul.f32 %v9330, %v9332
        %v9334 = vadd.f32 %v9333, -0.4999988
        %v9335 = vmul.f32 %v9330, %v9334
        %v9336 = vadd.f32 1.0, %v9335
        %v9337 = vmul.f32 %v9328, %v9328
        %v9338 = vmul.f32 %v9337, -0.00019511016
        %v9339 = vadd.f32 %v9338, 0.008332121
        %v9340 = vmul.f32 %v9337, %v9339
        %v9341 = vadd.f32 %v9340, -0.16666654
        %v9342 = vmul.f32 %v9337, %v9341
        %v9343 = vadd.f32 %v9342, 1.0
        %v9344 = vmul.f32 %v9343, %v9328
        %vm9345 = vweird.f32 %v361
        %v9346 = vand.u32 %v9329, 3
        %vm9347 = vcmp.lt.s32.totalorder %v9346, 2
        %vm9348 = vcmp.eq.s32.totalorder %v9346, 0
        %v9349 = vxor.u32 %v9344, 2147483648
        %v9350 = vsel %vm9348, %v9336, %v9349
        %vm9351 = vcmp.eq.s32.totalorder %v9346, 2
        %v9352 = vxor.u32 %v9336, 2147483648
        %v9353 = vsel %vm9351, %v9352, %v9344
        %v9354 = vsel %vm9347, %v9350, %v9353
        %v9355 = vsel %vm9345, nan, %v9354
        %v9356 = vand.u32 2147483647, %v362
        %vm9357 = vcmp.le.f32.partialorder %v9356, 0.7853982
        %vm9358 = vcmp.lt.s32.totalorder %v362, 0
        %v9359 = vand.u32 %v362, 2139095040
        %v9360 = vshrl.u32 %v9359, 23
        %v9361 = vsub.s32 %v9360, 127
        %v9362 = vand.u32 2147483647, %v362
        %v9363 = vand.u32 %v9362, 8388607
        %v9364 = vor.u32 %v9363, 8388608
        %v9365 = vsub.s32 0, %v9364
        %v9366 = vadd.s32 %v9361, 1
        %vm9367 = vcmp.gt.s32.totalorder %v9366, 0
        %v9368 = vsel %vm9367, %v9366, 0
        %v9369 = vshrl.u32 %v9368, 5
        %v9370 = vand.u32 %v9368, 31
        %v9371 = vsub.s32 32, %v9370
        %v9372 = vshrl.u32 683565275, %v9371
        %v9373 = vshll.u32 683565275, %v9370
        %v9374 = vshrl.u32 2475754826, %v9371
        %v9375 = vor.u32 %v9373, %v9374
        %v9376 = vshll.u32 2475754826, %v9370
        %v9377 = vshrl.u32 2131351028, %v9371
        %v9378 = vor.u32 %v9376, %v9377
        %v9379 = vshll.u32 2131351028, %v9370
        %v9380 = vshrl.u32 2102212464, %v9371
        %v9381 = vor.u32 %v9379, %v9380
        %v9382 = vshll.u32 2102212464, %v9370
        %v9383 = vshrl.u32 920167782, %v9371
        %v9384 = vor.u32 %v9382, %v9383
        %v9385 = vshll.u32 920167782, %v9370
        %v9386 = vshrl.u32 1326507024, %v9371
        %v9387 = vor.u32 %v9385, %v9386
        %vm9388 = vcmp.lt.s32.totalorder %v9369, 1
        %vm9389 = vcmp.lt.s32.totalorder %v9369, 2
        %vm9390 = vcmp.lt.s32.totalorder %v9369, 3
        %vm9391 = vcmp.lt.s32.totalorder %v9369, 4
        %v9392 = vsel %vm9388, %v9372, %v9375
        %v9393 = vsel %vm9391, %v9381, 2102212464
        %v9394 = vsel %vm9390, %v9378, %v9393
        %v9395 = vsel %vm9389, %v9392, %v9394
        %v9396 = vsel %vm9388, %v9375, %v9378
        %v9397 = vsel %vm9391, %v9384, 920167782
        %v9398 = vsel %vm9390, %v9381, %v9397
        %v9399 = vsel %vm9389, %v9396, %v9398
        %v9400 = vsel %vm9388, %v9378, %v9381
        %v9401 = vsel %vm9391, %v9387, 1326507024
        %v9402 = vsel %vm9390, %v9384, %v9401
        %v9403 = vsel %vm9389, %v9400, %v9402
        %v9404 = vshll.u32 %v9364, 8
        %v9405 = vand.u32 %v9404, 65535
        %v9406 = vshrl.u32 %v9404, 16
        %v9407 = vand.u32 %v9403, 65535
        %v9408 = vshrl.u32 %v9403, 16
        %v9409 = vmul.u32 %v9405, %v9407
        %v9410 = vmul.u32 %v9405, %v9408
        %v9411 = vmul.u32 %v9406, %v9407
        %v9412 = vmul.u32 %v9406, %v9408
        %v9413 = vshll.u32 %v9410, 16
        %v9414 = vshrl.u32 %v9410, 16
        %v9415 = vshll.u32 %v9411, 16
        %v9416 = vshrl.u32 %v9411, 16
        %vm9417 = vc.u32 %v9409, %v9413
        %v9418 = vsel %vm9417, 1, 0
        %v9419 = vadd.s32 %v9409, %v9413
        %v9420 = vadd.s32 %v9412, %v9418
        %vm9421 = vc.u32 %v9419, %v9415
        %v9422 = vsel %vm9421, 1, 0
        %v9423 = vadd.s32 %v9419, %v9415
        %v9424 = vadd.s32 %v9420, %v9422
        %v9425 = vadd.s32 %v9424, %v9414
        %v9426 = vadd.s32 %v9425, %v9416
        %v9427 = vand.u32 %v9404, 65535
        %v9428 = vshrl.u32 %v9404, 16
        %v9429 = vand.u32 %v9399, 65535
        %v9430 = vshrl.u32 %v9399, 16
        %v9431 = vmul.u32 %v9427, %v9429
        %v9432 = vmul.u32 %v9427, %v9430
        %v9433 = vmul.u32 %v9428, %v9429
        %v9434 = vmul.u32 %v9428, %v9430
        %v9435 = vshll.u32 %v9432, 16
        %v9436 = vshrl.u32 %v9432, 16
        %v9437 = vshll.u32 %v9433, 16
        %v9438 = vshrl.u32 %v9433, 16
        %vm9439 = vc.u32 %v9431, %v9435
        %v9440 = vsel %vm9439, 1, 0
        %v9441 = vadd.s32 %v9431, %v9435
        %v9442 = vadd.s32 %v9434, %v9440
        %vm9443 = vc.u32 %v9441, %v9437
        %v9444 = vsel %vm9443, 1, 0
        %v9445 = vadd.s32 %v9441, %v9437
        %v9446 = vadd.s32 %v9442, %v9444
        %v9447 = vadd.s32 %v9446, %v9436
        %v9448 = vadd.s32 %v9447, %v9438
        %v9449 = vmul.u32 %v9404, %v9395
        %v9450 = vadd.s32 %v9426, %v9445
        %vm9451 = vc.u32 %v9426, %v9445
        %v9452 = vadd.s32 %v9448, 1
        %v9453 = vsel %vm9451, %v9452, %v9448
        %v9454 = vadd.s32 %v9449, %v9453
        %v9455 = vadd.s32 %v9454, 536870912
        %v9456 = vshrl.u32 %v9455, 30
        %v9457 = vshll.u32 %v9456, 30
        %v9458 = vsub.s32 %v9454, %v9457
        %vm9459 = vcmp.lt.s32.totalorder %v9458, 0
        %v9460 = vsub.s32 0, %v9458
        %v9461 = vsel %vm9459, %v9460, %v9458
        %v9462 = vclz %v9461
        %v9463 = vsub.s32 %v9462, 2
        %vm9464 = vcmp.gt.s32.totalorder 0, %v9463
        %v9465 = vsel %vm9464, 0, %v9463
        %v9466 = vsub.s32 32, %v9465
        %v9467 = vshll.u32 %v9458, %v9465
        %v9468 = vshrl.u32 %v9450, %v9466
        %v9469 = vor.u32 %v9467, %v9468
        %v9470 = vsub.s32 4294967266, %v9465
        %v9471 = vadd.s32 %v9470, 127
        %v9472 = vshll.u32 %v9471, 23
        %v9473 = vor.u32 4788187, %v9472
        %v9474 = vand.u32 2147483647, %v9473
        %v9476 = vcvt.s32.f32 %v9469
        %v9477 = vmul.f32 %v9476, %v9474
        %v9478 = vxor.u32 %v9477, 2147483648
        %v9479 = vsel %vm9358, %v9478, %v9477
        %v9480 = vsub.s32 4, %v9456
        %v9481 = vsel %vm9358, %v9480, %v9456
        %v9482 = vsel %vm9357, %v362, %v9479
        %v9483 = vsel %vm9357, 0, %v9481
        %v9484 = vmul.f32 %v9482, %v9482
        %v9485 = vmul.f32 %v9484, -0.001358992
        %v9486 = vadd.f32 %v9485, 0.041655596
        %v9487 = vmul.f32 %v9484, %v9486
        %v9488 = vadd.f32 %v9487, -0.4999988
        %v9489 = vmul.f32 %v9484, %v9488
        %v9490 = vadd.f32 1.0, %v9489
        %v9491 = vmul.f32 %v9482, %v9482
        %v9492 = vmul.f32 %v9491, -0.00019511016
        %v9493 = vadd.f32 %v9492, 0.008332121
        %v9494 = vmul.f32 %v9491, %v9493
        %v9495 = vadd.f32 %v9494, -0.16666654
        %v9496 = vmul.f32 %v9491, %v9495
        %v9497 = vadd.f32 %v9496, 1.0
        %v9498 = vmul.f32 %v9497, %v9482
        %vm9499 = vweird.f32 %v362
        %v9500 = vand.u32 %v9483, 3
        %vm9501 = vcmp.lt.s32.totalorder %v9500, 2
        %vm9502 = vcmp.eq.s32.totalorder %v9500, 0
        %v9503 = vxor.u32 %v9498, 2147483648
        %v9504 = vsel %vm9502, %v9490, %v9503
        %vm9505 = vcmp.eq.s32.totalorder %v9500, 2
        %v9506 = vxor.u32 %v9490, 2147483648
        %v9507 = vsel %vm9505, %v9506, %v9498
        %v9508 = vsel %vm9501, %v9504, %v9507
        %v9509 = vsel %vm9499, nan, %v9508
        %v9510 = vand.u32 2147483647, %v363
        %vm9511 = vcmp.le.f32.partialorder %v9510, 0.7853982
        %vm9512 = vcmp.lt.s32.totalorder %v363, 0
        %v9513 = vand.u32 %v363, 2139095040
        %v9514 = vshrl.u32 %v9513, 23
        %v9515 = vsub.s32 %v9514, 127
        %v9516 = vand.u32 2147483647, %v363
        %v9517 = vand.u32 %v9516, 8388607
        %v9518 = vor.u32 %v9517, 8388608
        %v9519 = vsub.s32 0, %v9518
        %v9520 = vadd.s32 %v9515, 1
        %vm9521 = vcmp.gt.s32.totalorder %v9520, 0
        %v9522 = vsel %vm9521, %v9520, 0
        %v9523 = vshrl.u32 %v9522, 5
        %v9524 = vand.u32 %v9522, 31
        %v9525 = vsub.s32 32, %v9524
        %v9526 = vshrl.u32 683565275, %v9525
        %v9527 = vshll.u32 683565275, %v9524
        %v9528 = vshrl.u32 2475754826, %v9525
        %v9529 = vor.u32 %v9527, %v9528
        %v9530 = vshll.u32 2475754826, %v9524
        %v9531 = vshrl.u32 2131351028, %v9525
        %v9532 = vor.u32 %v9530, %v9531
        %v9533 = vshll.u32 2131351028, %v9524
        %v9534 = vshrl.u32 2102212464, %v9525
        %v9535 = vor.u32 %v9533, %v9534
        %v9536 = vshll.u32 2102212464, %v9524
        %v9537 = vshrl.u32 920167782, %v9525
        %v9538 = vor.u32 %v9536, %v9537
        %v9539 = vshll.u32 920167782, %v9524
        %v9540 = vshrl.u32 1326507024, %v9525
        %v9541 = vor.u32 %v9539, %v9540
        %vm9542 = vcmp.lt.s32.totalorder %v9523, 1
        %vm9543 = vcmp.lt.s32.totalorder %v9523, 2
        %vm9544 = vcmp.lt.s32.totalorder %v9523, 3
        %vm9545 = vcmp.lt.s32.totalorder %v9523, 4
        %v9546 = vsel %vm9542, %v9526, %v9529
        %v9547 = vsel %vm9545, %v9535, 2102212464
        %v9548 = vsel %vm9544, %v9532, %v9547
        %v9549 = vsel %vm9543, %v9546, %v9548
        %v9550 = vsel %vm9542, %v9529, %v9532
        %v9551 = vsel %vm9545, %v9538, 920167782
        %v9552 = vsel %vm9544, %v9535, %v9551
        %v9553 = vsel %vm9543, %v9550, %v9552
        %v9554 = vsel %vm9542, %v9532, %v9535
        %v9555 = vsel %vm9545, %v9541, 1326507024
        %v9556 = vsel %vm9544, %v9538, %v9555
        %v9557 = vsel %vm9543, %v9554, %v9556
        %v9558 = vshll.u32 %v9518, 8
        %v9559 = vand.u32 %v9558, 65535
        %v9560 = vshrl.u32 %v9558, 16
        %v9561 = vand.u32 %v9557, 65535
        %v9562 = vshrl.u32 %v9557, 16
        %v9563 = vmul.u32 %v9559, %v9561
        %v9564 = vmul.u32 %v9559, %v9562
        %v9565 = vmul.u32 %v9560, %v9561
        %v9566 = vmul.u32 %v9560, %v9562
        %v9567 = vshll.u32 %v9564, 16
        %v9568 = vshrl.u32 %v9564, 16
        %v9569 = vshll.u32 %v9565, 16
        %v9570 = vshrl.u32 %v9565, 16
        %vm9571 = vc.u32 %v9563, %v9567
        %v9572 = vsel %vm9571, 1, 0
        %v9573 = vadd.s32 %v9563, %v9567
        %v9574 = vadd.s32 %v9566, %v9572
        %vm9575 = vc.u32 %v9573, %v9569
        %v9576 = vsel %vm9575, 1, 0
        %v9577 = vadd.s32 %v9573, %v9569
        %v9578 = vadd.s32 %v9574, %v9576
        %v9579 = vadd.s32 %v9578, %v9568
        %v9580 = vadd.s32 %v9579, %v9570
        %v9581 = vand.u32 %v9558, 65535
        %v9582 = vshrl.u32 %v9558, 16
        %v9583 = vand.u32 %v9553, 65535
        %v9584 = vshrl.u32 %v9553, 16
        %v9585 = vmul.u32 %v9581, %v9583
        %v9586 = vmul.u32 %v9581, %v9584
        %v9587 = vmul.u32 %v9582, %v9583
        %v9588 = vmul.u32 %v9582, %v9584
        %v9589 = vshll.u32 %v9586, 16
        %v9590 = vshrl.u32 %v9586, 16
        %v9591 = vshll.u32 %v9587, 16
        %v9592 = vshrl.u32 %v9587, 16
        %vm9593 = vc.u32 %v9585, %v9589
        %v9594 = vsel %vm9593, 1, 0
        %v9595 = vadd.s32 %v9585, %v9589
        %v9596 = vadd.s32 %v9588, %v9594
        %vm9597 = vc.u32 %v9595, %v9591
        %v9598 = vsel %vm9597, 1, 0
        %v9599 = vadd.s32 %v9595, %v9591
        %v9600 = vadd.s32 %v9596, %v9598
        %v9601 = vadd.s32 %v9600, %v9590
        %v9602 = vadd.s32 %v9601, %v9592
        %v9603 = vmul.u32 %v9558, %v9549
        %v9604 = vadd.s32 %v9580, %v9599
        %vm9605 = vc.u32 %v9580, %v9599
        %v9606 = vadd.s32 %v9602, 1
        %v9607 = vsel %vm9605, %v9606, %v9602
        %v9608 = vadd.s32 %v9603, %v9607
        %v9609 = vadd.s32 %v9608, 536870912
        %v9610 = vshrl.u32 %v9609, 30
        %v9611 = vshll.u32 %v9610, 30
        %v9612 = vsub.s32 %v9608, %v9611
        %vm9613 = vcmp.lt.s32.totalorder %v9612, 0
        %v9614 = vsub.s32 0, %v9612
        %v9615 = vsel %vm9613, %v9614, %v9612
        %v9616 = vclz %v9615
        %v9617 = vsub.s32 %v9616, 2
        %vm9618 = vcmp.gt.s32.totalorder 0, %v9617
        %v9619 = vsel %vm9618, 0, %v9617
        %v9620 = vsub.s32 32, %v9619
        %v9621 = vshll.u32 %v9612, %v9619
        %v9622 = vshrl.u32 %v9604, %v9620
        %v9623 = vor.u32 %v9621, %v9622
        %v9624 = vsub.s32 4294967266, %v9619
        %v9625 = vadd.s32 %v9624, 127
        %v9626 = vshll.u32 %v9625, 23
        %v9627 = vor.u32 4788187, %v9626
        %v9628 = vand.u32 2147483647, %v9627
        %v9630 = vcvt.s32.f32 %v9623
        %v9631 = vmul.f32 %v9630, %v9628
        %v9632 = vxor.u32 %v9631, 2147483648
        %v9633 = vsel %vm9512, %v9632, %v9631
        %v9634 = vsub.s32 4, %v9610
        %v9635 = vsel %vm9512, %v9634, %v9610
        %v9636 = vsel %vm9511, %v363, %v9633
        %v9637 = vsel %vm9511, 0, %v9635
        %v9638 = vmul.f32 %v9636, %v9636
        %v9639 = vmul.f32 %v9638, -0.001358992
        %v9640 = vadd.f32 %v9639, 0.041655596
        %v9641 = vmul.f32 %v9638, %v9640
        %v9642 = vadd.f32 %v9641, -0.4999988
        %v9643 = vmul.f32 %v9638, %v9642
        %v9644 = vadd.f32 1.0, %v9643
        %v9645 = vmul.f32 %v9636, %v9636
        %v9646 = vmul.f32 %v9645, -0.00019511016
        %v9647 = vadd.f32 %v9646, 0.008332121
        %v9648 = vmul.f32 %v9645, %v9647
        %v9649 = vadd.f32 %v9648, -0.16666654
        %v9650 = vmul.f32 %v9645, %v9649
        %v9651 = vadd.f32 %v9650, 1.0
        %v9652 = vmul.f32 %v9651, %v9636
        %vm9653 = vweird.f32 %v363
        %v9654 = vand.u32 %v9637, 3
        %vm9655 = vcmp.lt.s32.totalorder %v9654, 2
        %vm9656 = vcmp.eq.s32.totalorder %v9654, 0
        %v9657 = vxor.u32 %v9652, 2147483648
        %v9658 = vsel %vm9656, %v9644, %v9657
        %vm9659 = vcmp.eq.s32.totalorder %v9654, 2
        %v9660 = vxor.u32 %v9644, 2147483648
        %v9661 = vsel %vm9659, %v9660, %v9652
        %v9662 = vsel %vm9655, %v9658, %v9661
        %v9663 = vsel %vm9653, nan, %v9662
        %9664 = vst [vmem:[%s149 + $0x30] sm:$0xff] %v5197
        %9665 = vst [vmem:[%s149 + $0x38] sm:$0xff] %v5351
        %9666 = vst [vmem:[%s149 + $0x40] sm:$0xff] %v5505
        %9667 = vst [vmem:[%s149 + $0x48] sm:$0xff] %v5659
        %9668 = vst [vmem:[%s149 + $0x50] sm:$0xff] %v5813
        %9669 = vst [vmem:[%s149 + $0x58] sm:$0xff] %v5967
        %9670 = vst [vmem:[%s149 + $0x90] sm:$0xff] %v6121
        %9671 = vst [vmem:[%s149 + $0x98] sm:$0xff] %v6275
        %9672 = vst [vmem:[%s149 + $0xa0] sm:$0xff] %v6429
        %9673 = vst [vmem:[%s149 + $0xa8] sm:$0xff] %v6583
        %9674 = vst [vmem:[%s149 + $0xb0] sm:$0xff] %v6737
        %9675 = vst [vmem:[%s149 + $0xb8] sm:$0xff] %v6891
        %9676 = vst [vmem:[%s149 + $0xf0] sm:$0xff] %v7045
        %9677 = vst [vmem:[%s149 + $0xf8] sm:$0xff] %v7199
        %9678 = vst [vmem:[%s149 + $0x100] sm:$0xff] %v7353
        %9679 = vst [vmem:[%s149 + $0x108] sm:$0xff] %v7507
        %9680 = vst [vmem:[%s149 + $0x110] sm:$0xff] %v7661
        %9681 = vst [vmem:[%s149 + $0x118] sm:$0xff] %v7815
        %9682 = vst [vmem:[%s149 + $0x150] sm:$0xff] %v7969
        %9683 = vst [vmem:[%s149 + $0x158] sm:$0xff] %v8123
        %9684 = vst [vmem:[%s149 + $0x160] sm:$0xff] %v8277
        %9685 = vst [vmem:[%s149 + $0x168] sm:$0xff] %v8431
        %9686 = vst [vmem:[%s149 + $0x170] sm:$0xff] %v8585
        %9687 = vst [vmem:[%s149 + $0x178] sm:$0xff] %v8739
        %9688 = vst [vmem:[%s149 + $0x1b0] sm:$0xff] %v8893
        %9689 = vst [vmem:[%s149 + $0x1b8] sm:$0xff] %v9047
        %9690 = vst [vmem:[%s149 + $0x1c0] sm:$0xff] %v9201
        %9691 = vst [vmem:[%s149 + $0x1c8] sm:$0xff] %v9355
        %9692 = vst [vmem:[%s149 + $0x1d0] sm:$0xff] %v9509
        %9693 = vst [vmem:[%s149 + $0x1d8] sm:$0xff] %v9663
        %s9694 = sand.u32 %s71, 1
        %s9695 = scalar_lea.sflag [#allocation3], %s9694
        %s9696 = sand.u32 %s71, 1
        %s9697 = smul.addr %s9696, 480
        %s9698 = scalar_lea.vmem [#allocation2], %s9697
        // Predicated region
        $region29: #{tpu_custom_call.1} parent=27 // pred_check
          %p9699 = pneg %p81
        $region30: #{tpu_custom_call.1} parent=27 // pred_check_branch
          %9701 = sbr.rel (%p9699) target = $region32
        $region31: #{tpu_custom_call.1} parent=27 // pred_region
          %s9702 = smul.u32 5, %s16
          %s9703 = ssub.s32 9, %s9702
          %p9704 = scmp.lt.s32.totalorder %s9703, 5
          %s9705 = scalar_select %p9704, %s9703, 5
          %s9706 = smul.u32 8, %s9705
          %s9707 = smul.u32 %s9706, 12
          %s9708 = ssub.s32 480, %s9707
          %s9709 = sshll.u32 %s9708, 4
          %9710 = vsyncadd %s9695, %s9709
          %p9711 = scmp.ne.s32.totalorder 0, %s9707
          %s9712 = smul.addr %s9702, 12
          %s9713 = smul.addr %s9712, 8
          %s9714 = scalar_lea.hbm %s2, %s9713
          %s9715 = smul.u32 96, %s9705
          %s9716 = sshll.u32 %s9698, 4
          %s9717 = int_to_ptr.vmem [resolvable:$true] %s9716
          %s9718 = sshll.u32 %s9714, 4
          %s9719 = int_to_ptr.hbm [resolvable:$true] %s9718
          %s9720 = sshll.u32 %s9715, 4
          %9724 = dma.vmem_to_hbm [thread:$0]  (%p9711), %s9717, %s9720, %s9719, %s9695, 1536, 1536, 96
        $region32: #{tpu_custom_call.1} parent=27 // pred_fallthru
          _
      $region28: #{tpu_custom_call.1} parent=5 // pred_fallthru
        _
      %p9725 = scmp.le.s32.totalorder 2, %s11
      // Predicated region
      $region33: #{tpu_custom_call.1} parent=5 // pred_check
        %p9726 = pneg %p9725
      $region34: #{tpu_custom_call.1} parent=5 // pred_check_branch
        %9728 = sbr.rel (%p9726) target = $region36
      $region35: #{tpu_custom_call.1} parent=5 // pred_region
        %s9729 = ssub.s32 %s11, 2
        // Predicated region
        $region37: #{tpu_custom_call.1} parent=35 // pred_check
          %p9730 = pneg %p87
        $region38: #{tpu_custom_call.1} parent=35 // pred_check_branch
          %9732 = sbr.rel (%p9730) target = $region40
        $region39: #{tpu_custom_call.1} parent=35 // pred_region
          %s9733 = sand.u32 %s72, 1
          %s9734 = scalar_lea.sflag [#allocation3], %s9733
          %s9735 = sand.u32 %s72, 1
          %s9736 = smul.addr %s9735, 480
          %s9737 = scalar_lea.vmem [#allocation2], %s9736
          %9739 = dma.done %s9734, 7680
        $region40: #{tpu_custom_call.1} parent=35 // pred_fallthru
          _
      $region36: #{tpu_custom_call.1} parent=5 // pred_fallthru
        _
    $region6: #{tpu_custom_call.1} parent=1 // loop_footer
      %s15 = sadd.s32 1, %s11
    $region7: #{tpu_custom_call.1} parent=1 // loop_footer_branch
      %10 = sbr.rel target = $region3
    $region8: #{tpu_custom_call.1} parent=1 // loop_exit
      _
    %9740 = vsyncpa [#allocation3], 1
    %s9741 = scalar_lea.sflag [#allocation3], 1
    %9742 = vsyncpa %s9741, 1

</llo_original>
